<compile_context>
chip_gen: v6e
topology: v6e:2x2x1
jax: 0.10.0
libtpu: 0.0.40
codegen_flags: <defaults>
</compile_context>

<pallas_src>
import math
import jax
import jax.numpy as jnp
from jax.experimental import pallas as pl
from jax.experimental.pallas import tpu as pltpu

D_MODEL = 128
NHEAD = 8
HEAD_DIM = D_MODEL // NHEAD          # 16
N_LAYERS = 4
LN_EPS = 1e-5                        # nn.LayerNorm default
ATTN_EPS = 1e-6                      # LinearAttention default


def _layernorm(x, gamma, beta):
    mean = jnp.mean(x, axis=-1, keepdims=True)
    var = jnp.mean((x - mean) ** 2, axis=-1, keepdims=True)
    return (x - mean) * jax.lax.rsqrt(var + LN_EPS) * gamma + beta


def _phi(x):
    # elu(x) + 1 without the expm1-then-add double pass.
    return jnp.where(x > 0, x + 1.0, jnp.exp(x))


def loftr_fused_kernel(x_ref, mask_ref, wqkv_ref, wm_ref,
                       w1a_ref, w1b_ref, w2_ref, ln_ref, o_ref):
    """Runs all N_LAYERS 'self' LoFTREncoderLayers on G resident [L, C] sequences.

    Activation stays resident in VMEM across layers; all weight matmuls take
    bf16 operands with f32 MXU accumulation; elementwise math stays f32
    (v5e has no bf16 VALU).
    """
    G, L, C = x_ref.shape
    x = x_ref[...].astype(jnp.float32).reshape(G * L, C)   # [G*L, C]
    bd_mask = mask_ref[...]                                # [C, C] f32 0/1
    bd_mask_b = bd_mask.astype(jnp.bfloat16)               # hoisted, reused
    inv_len = 1.0 / float(L)

    # TODO(synk): switch to lax.fori_loop over layers if bundle dumps show
    #             VMEM-temp blow-up / spills from the static unroll at large L.
    for li in range(N_LAYERS):
        wqkv = wqkv_ref[li]                                # [C, 3C] bf16
        wm = wm_ref[li]; w1a = w1a_ref[li]; w1b = w1b_ref[li]; w2 = w2_ref[li]
        ln = ln_ref[li]                                    # [4, C] f32
        g1, b1, g2, b2 = ln[0:1], ln[1:2], ln[2:3], ln[3:4]

        xb = x.astype(jnp.bfloat16)

        # ---- fused q/k/v projection: one [G*L,128]x[128,384] MXU matmul ----
        qkv = jnp.dot(xb, wqkv, preferred_element_type=jnp.float32)
        Q = _phi(qkv[:, :C])                               # lane-aligned slices
        K = _phi(qkv[:, C:2 * C])                          # (self-attn: source == x)
        V = qkv[:, 2 * C:] * inv_len                       # values / v_length guard

        Qb = Q.astype(jnp.bfloat16)
        Kb = K.astype(jnp.bfloat16)
        Vb = V.astype(jnp.bfloat16)

        # ---- per-sequence linear attention (short unrolled loop over G) ----
        # TODO(synk): optional x_mask / source_mask path not implemented
        #             (masks are None in this forward).
        msgs = []
        for g in range(G):
            r0 = g * L
            Kg = Kb[r0:r0 + L]                             # [L, C] bf16
            Vg = Vb[r0:r0 + L]
            Qg = Qb[r0:r0 + L]

            # KV[d, dv] = sum_s K[s,d] * V[s,dv]  (bf16 in, f32 acc); the
            # block-diagonal mask keeps only the per-head [D, D] blocks.
            KV = jax.lax.dot_general(Kg, Vg, (((0,), (0,)), ((), ())),
                                     preferred_element_type=jnp.float32)
            KV_bd = (KV * bd_mask).astype(jnp.bfloat16)    # [C, C]

            msg_pre = jnp.dot(Qg, KV_bd,
                              preferred_element_type=jnp.float32)   # [L, C]

            # Per-head denominator sum_d Q[l,d]*Ksum[d], replicated across the
            # head's lanes via one bf16 matmul with the block-diagonal mask.
            Ksum = jnp.sum(K[r0:r0 + L], axis=0, keepdims=True)     # [1, C] f32
            den = jnp.dot((Q[r0:r0 + L] * Ksum).astype(jnp.bfloat16), bd_mask_b,
                          preferred_element_type=jnp.float32)       # [L, C]
            zinv = float(L) * pl.reciprocal(den + ATTN_EPS, approx=True)
            msgs.append(msg_pre * zinv)
        message = msgs[0] if G == 1 else jnp.concatenate(msgs, axis=0)

        # ---- merge + norm1 ----
        message = jnp.dot(message.astype(jnp.bfloat16), wm,
                          preferred_element_type=jnp.float32)
        message = _layernorm(message, g1, b1)

        # ---- mlp(concat([x, message])) without the lane-axis concat ----
        hdn = jnp.maximum(
            jnp.dot(xb, w1a, preferred_element_type=jnp.float32)
            + jnp.dot(message.astype(jnp.bfloat16), w1b,
                      preferred_element_type=jnp.float32),
            0.0)
        message = jnp.dot(hdn.astype(jnp.bfloat16), w2,
                          preferred_element_type=jnp.float32)
        message = _layernorm(message, g2, b2)

        # ---- residual ----
        x = x + message

    o_ref[...] = x.reshape(G, L, C).astype(o_ref.dtype)


def _vmem_bytes_estimate(G, L, C, p):
    rows = G * L
    act = rows * C * 4 * 16            # resident x + full-width f32 temporaries
    w = sum(int(p[k].size) * p[k].dtype.itemsize
            for k in ('wqkv', 'wm', 'w1a', 'w1b', 'w2', 'ln', 'bd_mask'))
    io = 2 * 2 * rows * C * 4          # double-buffered in/out blocks
    return act + 2 * w + io


def _loftr_self_stack(feats, p):
    """One pallas_call: all 4 self-attention layers for a [B, L, C] stack."""
    B, L, C = feats.shape
    assert C == D_MODEL, "feature dim must equal d_model=128"
    assert L % 8 == 0, "sequence length must be a multiple of 8 (pad L)"

    # Pack G sequences per grid step so small-L workloads still fill MXU rows;
    # production L (~4800) gives G=1 automatically.
    G = 1
    for g in range(1, B + 1):
        if B % g == 0 and g * L <= 512:
            G = g
    grid = (B // G,)

    def feat_spec():
        return pl.BlockSpec((G, L, C), lambda b: (b, 0, 0))

    def const_spec(shape):
        nd = len(shape)
        return pl.BlockSpec(shape, lambda b, _nd=nd: (0,) * _nd)

    in_specs = [
        feat_spec(),                                   # feats
        const_spec((C, C)),                            # block-diagonal head mask
        const_spec((N_LAYERS, C, 3 * C)),              # packed wq|wk|wv
        const_spec((N_LAYERS, C, C)),                  # wm (merge)
        const_spec((N_LAYERS, C, 2 * C)),              # w1 (x half)
        const_spec((N_LAYERS, C, 2 * C)),              # w1 (message half)
        const_spec((N_LAYERS, 2 * C, C)),              # w2
        const_spec((N_LAYERS, 4, C)),                  # packed LayerNorm params
    ]

    weight_bytes = sum(int(p[k].size) * p[k].dtype.itemsize
                       for k in ('wqkv', 'wm', 'w1a', 'w1b', 'w2', 'ln'))
    cost = pl.CostEstimate(
        flops=int(B * N_LAYERS * 26 * L * C * C),
        transcendentals=int(B * N_LAYERS * 3 * L * C),
        bytes_accessed=int(2 * B * L * C * 4 + weight_bytes + C * C * 4),
    )

    cp_kwargs = dict(dimension_semantics=("parallel",))
    est = _vmem_bytes_estimate(G, L, C, p)
    if est > 16 * 1024 * 1024:
        # Production-L insurance: exceed the 16 MiB (v5e) / 32 MiB (v6e/v7x)
        # scoped-VMEM defaults explicitly instead of letting the compiler shrink.
        cp_kwargs["vmem_limit_bytes"] = min(int(est * 1.25), 64 * 1024 * 1024)

    return pl.pallas_call(
        loftr_fused_kernel,
        out_shape=jax.ShapeDtypeStruct((B, L, C), feats.dtype),
        grid=grid,
        in_specs=in_specs,
        out_specs=feat_spec(),
        compiler_params=pltpu.CompilerParams(**cp_kwargs),
        cost_estimate=cost,
    )(feats, p['bd_mask'], p['wqkv'], p['wm'],
      p['w1a'], p['w1b'], p['w2'], p['ln'])


def local_feature_transformer(feat0, feat1, params):
    # layer_names = ['self'] * 4: both feature maps run the same self-attention
    # stack with the same weights, so stack them along batch (doubles parallel
    # grid work / feeds both v7x TensorCores) and do ONE fused 4-layer call.
    if feat0.shape[1] == feat1.shape[1]:
        n0 = feat0.shape[0]
        out = _loftr_self_stack(jnp.concatenate([feat0, feat1], axis=0), params)
        return out[:n0], out[n0:]
    # TODO(synk): unequal lengths could pad+stack into one call, but padded K/V
    #             rows must then be masked (elu(0)+1 = 1 pollutes KV/Ksum);
    #             keep two fused calls for correctness.
    return _loftr_self_stack(feat0, params), _loftr_self_stack(feat1, params)


# ---------------- parameter init (deterministic, xavier_uniform) ----------------

def _xavier_uniform(key, out_dim, in_dim):
    bound = math.sqrt(6.0 / (in_dim + out_dim))
    # PyTorch Linear weight layout [out, in]
    return jax.random.uniform(key, (out_dim, in_dim), jnp.float32, -bound, bound)


def init_params(key, weight_dtype=jnp.bfloat16):
    C = D_MODEL
    wqkv, wm, w1a, w1b, w2, ln = ([] for _ in range(6))
    for lk in jax.random.split(key, N_LAYERS):
        ks = jax.random.split(lk, 6)
        # pre-transpose to [in, out] so the kernel computes y = x @ W
        wq = _xavier_uniform(ks[0], C, C).T
        wk = _xavier_uniform(ks[1], C, C).T
        wv = _xavier_uniform(ks[2], C, C).T
        wqkv.append(jnp.concatenate([wq, wk, wv], axis=1))   # [C, 3C]
        wm.append(_xavier_uniform(ks[3], C, C).T)
        w1_t = _xavier_uniform(ks[4], 2 * C, 2 * C).T         # [2C_in, 2C_out]
        w1a.append(w1_t[:C])                                  # acts on x
        w1b.append(w1_t[C:])                                  # acts on message
        w2.append(_xavier_uniform(ks[5], C, 2 * C).T)          # [2C_in, C_out]
        # LayerNorm params keep default init (dim==1 -> no xavier in PyTorch)
        ln.append(jnp.stack([jnp.ones((C,)), jnp.zeros((C,)),
                             jnp.ones((C,)), jnp.zeros((C,))]).astype(jnp.float32))
    lane = jnp.arange(C) // HEAD_DIM
    bd_mask = (lane[:, None] == lane[None, :]).astype(jnp.float32)
    stack_w = lambda xs: jnp.stack(xs).astype(weight_dtype)
    return {
        'wqkv': stack_w(wqkv), 'wm': stack_w(wm),
        'w1a': stack_w(w1a), 'w1b': stack_w(w1b), 'w2': stack_w(w2),
        'ln': jnp.stack(ln), 'bd_mask': bd_mask,
    }


if __name__ == "__main__":
    key = jax.random.PRNGKey(0)
    k0, k1, kp = jax.random.split(key, 3)

    N, L, S, C = 2, 16, 16, D_MODEL
    feat0 = jax.random.normal(k0, (N, L, C), jnp.float32)
    feat1 = jax.random.normal(k1, (N, S, C), jnp.float32)

    params = init_params(kp)

    fwd = jax.jit(local_feature_transformer)
    out0, out1 = fwd(feat0, feat1, params)
    out0 = jax.block_until_ready(out0)
    out1 = jax.block_until_ready(out1)

    assert out0.shape == (N, L, C) and out1.shape == (N, S, C)
    assert bool(jnp.all(jnp.isfinite(out0))) and bool(jnp.all(jnp.isfinite(out1)))
    print("KERNEL_OK")
</pallas_src>

<mosaic_0001>
module attributes {stable_mosaic.version = 11 : i64} {
  func.func @loftr_fused_kernel(%arg0: i32, %arg1: memref<4x16x128xf32, #tpu.memory_space<vmem>>, %arg2: memref<128x128xf32, #tpu.memory_space<vmem>>, %arg3: memref<4x128x384xbf16, #tpu.memory_space<vmem>>, %arg4: memref<4x128x128xbf16, #tpu.memory_space<vmem>>, %arg5: memref<4x128x256xbf16, #tpu.memory_space<vmem>>, %arg6: memref<4x128x256xbf16, #tpu.memory_space<vmem>>, %arg7: memref<4x256x128xbf16, #tpu.memory_space<vmem>>, %arg8: memref<4x4x128xf32, #tpu.memory_space<vmem>>, %arg9: memref<4x16x128xf32, #tpu.memory_space<vmem>>) attributes {dimension_semantics = [#tpu.dimension_semantics<parallel>], iteration_bounds = array<i64: 1>, scalar_prefetch = 0 : i64, scratch_operands = 0 : i64, tpu.core_type = #tpu.core_type<tc>, window_params = [{transform_indices = @transform_0, window_bounds = array<i64: 4, 16, 128>}, {pipeline_mode = #tpu.pipeline_mode<synchronous>, transform_indices = @transform_1, window_bounds = array<i64: 128, 128>}, {pipeline_mode = #tpu.pipeline_mode<synchronous>, transform_indices = @transform_2, window_bounds = array<i64: 4, 128, 384>}, {pipeline_mode = #tpu.pipeline_mode<synchronous>, transform_indices = @transform_3, window_bounds = array<i64: 4, 128, 128>}, {pipeline_mode = #tpu.pipeline_mode<synchronous>, transform_indices = @transform_4, window_bounds = array<i64: 4, 128, 256>}, {pipeline_mode = #tpu.pipeline_mode<synchronous>, transform_indices = @transform_5, window_bounds = array<i64: 4, 128, 256>}, {pipeline_mode = #tpu.pipeline_mode<synchronous>, transform_indices = @transform_6, window_bounds = array<i64: 4, 256, 128>}, {pipeline_mode = #tpu.pipeline_mode<synchronous>, transform_indices = @transform_7, window_bounds = array<i64: 4, 4, 128>}, {transform_indices = @transform_8, window_bounds = array<i64: 4, 16, 128>}]} {
    %c0 = arith.constant 0 : index
    %c0_0 = arith.constant 0 : index
    %c0_1 = arith.constant 0 : index
    %0 = vector.load %arg1[%c0, %c0_0, %c0_1] : memref<4x16x128xf32, #tpu.memory_space<vmem>>, vector<4x16x128xf32>
    %1 = vector.shape_cast %0 : vector<4x16x128xf32> to vector<64x128xf32>
    %c0_2 = arith.constant 0 : index
    %c0_3 = arith.constant 0 : index
    %2 = vector.load %arg2[%c0_2, %c0_3] : memref<128x128xf32, #tpu.memory_space<vmem>>, vector<128x128xf32>
    %3 = arith.truncf %2 : vector<128x128xf32> to vector<128x128xbf16>
    %c0_4 = arith.constant 0 : index
    %c0_5 = arith.constant 0 : index
    %c0_6 = arith.constant 0 : index
    %4 = vector.load %arg3[%c0_4, %c0_5, %c0_6] : memref<4x128x384xbf16, #tpu.memory_space<vmem>>, vector<1x128x384xbf16>
    %5 = vector.shape_cast %4 : vector<1x128x384xbf16> to vector<128x384xbf16>
    %c0_7 = arith.constant 0 : index
    %c0_8 = arith.constant 0 : index
    %c0_9 = arith.constant 0 : index
    %6 = vector.load %arg4[%c0_7, %c0_8, %c0_9] : memref<4x128x128xbf16, #tpu.memory_space<vmem>>, vector<1x128x128xbf16>
    %7 = vector.shape_cast %6 : vector<1x128x128xbf16> to vector<128x128xbf16>
    %c0_10 = arith.constant 0 : index
    %c0_11 = arith.constant 0 : index
    %c0_12 = arith.constant 0 : index
    %8 = vector.load %arg5[%c0_10, %c0_11, %c0_12] : memref<4x128x256xbf16, #tpu.memory_space<vmem>>, vector<1x128x256xbf16>
    %9 = vector.shape_cast %8 : vector<1x128x256xbf16> to vector<128x256xbf16>
    %c0_13 = arith.constant 0 : index
    %c0_14 = arith.constant 0 : index
    %c0_15 = arith.constant 0 : index
    %10 = vector.load %arg6[%c0_13, %c0_14, %c0_15] : memref<4x128x256xbf16, #tpu.memory_space<vmem>>, vector<1x128x256xbf16>
    %11 = vector.shape_cast %10 : vector<1x128x256xbf16> to vector<128x256xbf16>
    %c0_16 = arith.constant 0 : index
    %c0_17 = arith.constant 0 : index
    %c0_18 = arith.constant 0 : index
    %12 = vector.load %arg7[%c0_16, %c0_17, %c0_18] : memref<4x256x128xbf16, #tpu.memory_space<vmem>>, vector<1x256x128xbf16>
    %13 = vector.shape_cast %12 : vector<1x256x128xbf16> to vector<256x128xbf16>
    %c0_19 = arith.constant 0 : index
    %c0_20 = arith.constant 0 : index
    %c0_21 = arith.constant 0 : index
    %14 = vector.load %arg8[%c0_19, %c0_20, %c0_21] : memref<4x4x128xf32, #tpu.memory_space<vmem>>, vector<1x4x128xf32>
    %15 = vector.shape_cast %14 : vector<1x4x128xf32> to vector<4x128xf32>
    %16 = vector.extract_strided_slice %15 {offsets = [0, 0], sizes = [1, 128], strides = [1, 1]} : vector<4x128xf32> to vector<1x128xf32>
    %17 = vector.extract_strided_slice %15 {offsets = [1, 0], sizes = [1, 128], strides = [1, 1]} : vector<4x128xf32> to vector<1x128xf32>
    %18 = vector.extract_strided_slice %15 {offsets = [2, 0], sizes = [1, 128], strides = [1, 1]} : vector<4x128xf32> to vector<1x128xf32>
    %19 = vector.extract_strided_slice %15 {offsets = [3, 0], sizes = [1, 128], strides = [1, 1]} : vector<4x128xf32> to vector<1x128xf32>
    %20 = arith.truncf %1 : vector<64x128xf32> to vector<64x128xbf16>
    %cst = arith.constant dense<0.000000e+00> : vector<64x384xf32>
    %21 = tpu.matmul %20, %5, %cst {dimension_numbers = #tpu.dot_dimension_numbers<[1], [0], [0], [1], [0, 0, 1, 1], [], []>} : vector<64x128xbf16>, vector<128x384xbf16>, vector<64x384xf32> -> vector<64x384xf32>
    %22 = vector.extract_strided_slice %21 {offsets = [0, 0], sizes = [64, 128], strides = [1, 1]} : vector<64x384xf32> to vector<64x128xf32>
    %cst_22 = arith.constant 0.000000e+00 : f32
    %23 = vector.broadcast %cst_22 : f32 to vector<64x128xf32>
    %24 = arith.cmpf ogt, %22, %23 : vector<64x128xf32>
    %cst_23 = arith.constant 1.000000e+00 : f32
    %25 = vector.broadcast %cst_23 : f32 to vector<64x128xf32>
    %26 = arith.addf %22, %25 : vector<64x128xf32>
    %27 = math.exp %22 : vector<64x128xf32>
    %28 = arith.select %24, %26, %27 : vector<64x128xi1>, vector<64x128xf32>
    %29 = vector.extract_strided_slice %21 {offsets = [0, 128], sizes = [64, 128], strides = [1, 1]} : vector<64x384xf32> to vector<64x128xf32>
    %cst_24 = arith.constant 0.000000e+00 : f32
    %30 = vector.broadcast %cst_24 : f32 to vector<64x128xf32>
    %31 = arith.cmpf ogt, %29, %30 : vector<64x128xf32>
    %cst_25 = arith.constant 1.000000e+00 : f32
    %32 = vector.broadcast %cst_25 : f32 to vector<64x128xf32>
    %33 = arith.addf %29, %32 : vector<64x128xf32>
    %34 = math.exp %29 : vector<64x128xf32>
    %35 = arith.select %31, %33, %34 : vector<64x128xi1>, vector<64x128xf32>
    %36 = vector.extract_strided_slice %21 {offsets = [0, 256], sizes = [64, 128], strides = [1, 1]} : vector<64x384xf32> to vector<64x128xf32>
    %cst_26 = arith.constant 6.250000e-02 : f32
    %37 = vector.broadcast %cst_26 : f32 to vector<64x128xf32>
    %38 = arith.mulf %36, %37 : vector<64x128xf32>
    %39 = arith.truncf %28 : vector<64x128xf32> to vector<64x128xbf16>
    %40 = arith.truncf %35 : vector<64x128xf32> to vector<64x128xbf16>
    %41 = arith.truncf %38 : vector<64x128xf32> to vector<64x128xbf16>
    %42 = vector.extract_strided_slice %40 {offsets = [0, 0], sizes = [16, 128], strides = [1, 1]} : vector<64x128xbf16> to vector<16x128xbf16>
    %43 = vector.extract_strided_slice %41 {offsets = [0, 0], sizes = [16, 128], strides = [1, 1]} : vector<64x128xbf16> to vector<16x128xbf16>
    %44 = vector.extract_strided_slice %39 {offsets = [0, 0], sizes = [16, 128], strides = [1, 1]} : vector<64x128xbf16> to vector<16x128xbf16>
    %cst_27 = arith.constant dense<0.000000e+00> : vector<128x128xf32>
    %45 = tpu.matmul %42, %43, %cst_27 {dimension_numbers = #tpu.dot_dimension_numbers<[0], [0], [1], [1], [0, 1, 1, 1], [], []>} : vector<16x128xbf16>, vector<16x128xbf16>, vector<128x128xf32> -> vector<128x128xf32>
    %46 = arith.mulf %45, %2 : vector<128x128xf32>
    %47 = arith.truncf %46 : vector<128x128xf32> to vector<128x128xbf16>
    %cst_28 = arith.constant dense<0.000000e+00> : vector<16x128xf32>
    %48 = tpu.matmul %44, %47, %cst_28 {dimension_numbers = #tpu.dot_dimension_numbers<[1], [0], [0], [1], [0, 0, 1, 1], [], []>} : vector<16x128xbf16>, vector<128x128xbf16>, vector<16x128xf32> -> vector<16x128xf32>
    %49 = vector.extract_strided_slice %35 {offsets = [0, 0], sizes = [16, 128], strides = [1, 1]} : vector<64x128xf32> to vector<16x128xf32>
    %cst_29 = arith.constant dense<0.000000e+00> : vector<128xf32>
    %50 = vector.multi_reduction <add>, %49, %cst_29 [0] : vector<16x128xf32> to vector<128xf32>
    %51 = vector.shape_cast %50 : vector<128xf32> to vector<1x128xf32>
    %52 = vector.extract_strided_slice %28 {offsets = [0, 0], sizes = [16, 128], strides = [1, 1]} : vector<64x128xf32> to vector<16x128xf32>
    %53 = vector.broadcast %51 : vector<1x128xf32> to vector<16x128xf32>
    %54 = arith.mulf %52, %53 : vector<16x128xf32>
    %55 = arith.truncf %54 : vector<16x128xf32> to vector<16x128xbf16>
    %cst_30 = arith.constant dense<0.000000e+00> : vector<16x128xf32>
    %56 = tpu.matmul %55, %3, %cst_30 {dimension_numbers = #tpu.dot_dimension_numbers<[1], [0], [0], [1], [0, 0, 1, 1], [], []>} : vector<16x128xbf16>, vector<128x128xbf16>, vector<16x128xf32> -> vector<16x128xf32>
    %cst_31 = arith.constant 9.99999997E-7 : f32
    %57 = vector.broadcast %cst_31 : f32 to vector<16x128xf32>
    %58 = arith.addf %56, %57 : vector<16x128xf32>
    %59 = tpu.reciprocal %58 {approx = true} : vector<16x128xf32> -> vector<16x128xf32>
    %cst_32 = arith.constant 1.600000e+01 : f32
    %60 = vector.broadcast %cst_32 : f32 to vector<16x128xf32>
    %61 = arith.mulf %60, %59 : vector<16x128xf32>
    %62 = arith.mulf %48, %61 : vector<16x128xf32>
    %63 = vector.extract_strided_slice %40 {offsets = [16, 0], sizes = [16, 128], strides = [1, 1]} : vector<64x128xbf16> to vector<16x128xbf16>
    %64 = vector.extract_strided_slice %41 {offsets = [16, 0], sizes = [16, 128], strides = [1, 1]} : vector<64x128xbf16> to vector<16x128xbf16>
    %65 = vector.extract_strided_slice %39 {offsets = [16, 0], sizes = [16, 128], strides = [1, 1]} : vector<64x128xbf16> to vector<16x128xbf16>
    %cst_33 = arith.constant dense<0.000000e+00> : vector<128x128xf32>
    %66 = tpu.matmul %63, %64, %cst_33 {dimension_numbers = #tpu.dot_dimension_numbers<[0], [0], [1], [1], [0, 1, 1, 1], [], []>} : vector<16x128xbf16>, vector<16x128xbf16>, vector<128x128xf32> -> vector<128x128xf32>
    %67 = arith.mulf %66, %2 : vector<128x128xf32>
    %68 = arith.truncf %67 : vector<128x128xf32> to vector<128x128xbf16>
    %cst_34 = arith.constant dense<0.000000e+00> : vector<16x128xf32>
    %69 = tpu.matmul %65, %68, %cst_34 {dimension_numbers = #tpu.dot_dimension_numbers<[1], [0], [0], [1], [0, 0, 1, 1], [], []>} : vector<16x128xbf16>, vector<128x128xbf16>, vector<16x128xf32> -> vector<16x128xf32>
    %70 = vector.extract_strided_slice %35 {offsets = [16, 0], sizes = [16, 128], strides = [1, 1]} : vector<64x128xf32> to vector<16x128xf32>
    %cst_35 = arith.constant dense<0.000000e+00> : vector<128xf32>
    %71 = vector.multi_reduction <add>, %70, %cst_35 [0] : vector<16x128xf32> to vector<128xf32>
    %72 = vector.shape_cast %71 : vector<128xf32> to vector<1x128xf32>
    %73 = vector.extract_strided_slice %28 {offsets = [16, 0], sizes = [16, 128], strides = [1, 1]} : vector<64x128xf32> to vector<16x128xf32>
    %74 = vector.broadcast %72 : vector<1x128xf32> to vector<16x128xf32>
    %75 = arith.mulf %73, %74 : vector<16x128xf32>
    %76 = arith.truncf %75 : vector<16x128xf32> to vector<16x128xbf16>
    %cst_36 = arith.constant dense<0.000000e+00> : vector<16x128xf32>
    %77 = tpu.matmul %76, %3, %cst_36 {dimension_numbers = #tpu.dot_dimension_numbers<[1], [0], [0], [1], [0, 0, 1, 1], [], []>} : vector<16x128xbf16>, vector<128x128xbf16>, vector<16x128xf32> -> vector<16x128xf32>
    %cst_37 = arith.constant 9.99999997E-7 : f32
    %78 = vector.broadcast %cst_37 : f32 to vector<16x128xf32>
    %79 = arith.addf %77, %78 : vector<16x128xf32>
    %80 = tpu.reciprocal %79 {approx = true} : vector<16x128xf32> -> vector<16x128xf32>
    %cst_38 = arith.constant 1.600000e+01 : f32
    %81 = vector.broadcast %cst_38 : f32 to vector<16x128xf32>
    %82 = arith.mulf %81, %80 : vector<16x128xf32>
    %83 = arith.mulf %69, %82 : vector<16x128xf32>
    %84 = vector.extract_strided_slice %40 {offsets = [32, 0], sizes = [16, 128], strides = [1, 1]} : vector<64x128xbf16> to vector<16x128xbf16>
    %85 = vector.extract_strided_slice %41 {offsets = [32, 0], sizes = [16, 128], strides = [1, 1]} : vector<64x128xbf16> to vector<16x128xbf16>
    %86 = vector.extract_strided_slice %39 {offsets = [32, 0], sizes = [16, 128], strides = [1, 1]} : vector<64x128xbf16> to vector<16x128xbf16>
    %cst_39 = arith.constant dense<0.000000e+00> : vector<128x128xf32>
    %87 = tpu.matmul %84, %85, %cst_39 {dimension_numbers = #tpu.dot_dimension_numbers<[0], [0], [1], [1], [0, 1, 1, 1], [], []>} : vector<16x128xbf16>, vector<16x128xbf16>, vector<128x128xf32> -> vector<128x128xf32>
    %88 = arith.mulf %87, %2 : vector<128x128xf32>
    %89 = arith.truncf %88 : vector<128x128xf32> to vector<128x128xbf16>
    %cst_40 = arith.constant dense<0.000000e+00> : vector<16x128xf32>
    %90 = tpu.matmul %86, %89, %cst_40 {dimension_numbers = #tpu.dot_dimension_numbers<[1], [0], [0], [1], [0, 0, 1, 1], [], []>} : vector<16x128xbf16>, vector<128x128xbf16>, vector<16x128xf32> -> vector<16x128xf32>
    %91 = vector.extract_strided_slice %35 {offsets = [32, 0], sizes = [16, 128], strides = [1, 1]} : vector<64x128xf32> to vector<16x128xf32>
    %cst_41 = arith.constant dense<0.000000e+00> : vector<128xf32>
    %92 = vector.multi_reduction <add>, %91, %cst_41 [0] : vector<16x128xf32> to vector<128xf32>
    %93 = vector.shape_cast %92 : vector<128xf32> to vector<1x128xf32>
    %94 = vector.extract_strided_slice %28 {offsets = [32, 0], sizes = [16, 128], strides = [1, 1]} : vector<64x128xf32> to vector<16x128xf32>
    %95 = vector.broadcast %93 : vector<1x128xf32> to vector<16x128xf32>
    %96 = arith.mulf %94, %95 : vector<16x128xf32>
    %97 = arith.truncf %96 : vector<16x128xf32> to vector<16x128xbf16>
    %cst_42 = arith.constant dense<0.000000e+00> : vector<16x128xf32>
    %98 = tpu.matmul %97, %3, %cst_42 {dimension_numbers = #tpu.dot_dimension_numbers<[1], [0], [0], [1], [0, 0, 1, 1], [], []>} : vector<16x128xbf16>, vector<128x128xbf16>, vector<16x128xf32> -> vector<16x128xf32>
    %cst_43 = arith.constant 9.99999997E-7 : f32
    %99 = vector.broadcast %cst_43 : f32 to vector<16x128xf32>
    %100 = arith.addf %98, %99 : vector<16x128xf32>
    %101 = tpu.reciprocal %100 {approx = true} : vector<16x128xf32> -> vector<16x128xf32>
    %cst_44 = arith.constant 1.600000e+01 : f32
    %102 = vector.broadcast %cst_44 : f32 to vector<16x128xf32>
    %103 = arith.mulf %102, %101 : vector<16x128xf32>
    %104 = arith.mulf %90, %103 : vector<16x128xf32>
    %105 = vector.extract_strided_slice %40 {offsets = [48, 0], sizes = [16, 128], strides = [1, 1]} : vector<64x128xbf16> to vector<16x128xbf16>
    %106 = vector.extract_strided_slice %41 {offsets = [48, 0], sizes = [16, 128], strides = [1, 1]} : vector<64x128xbf16> to vector<16x128xbf16>
    %107 = vector.extract_strided_slice %39 {offsets = [48, 0], sizes = [16, 128], strides = [1, 1]} : vector<64x128xbf16> to vector<16x128xbf16>
    %cst_45 = arith.constant dense<0.000000e+00> : vector<128x128xf32>
    %108 = tpu.matmul %105, %106, %cst_45 {dimension_numbers = #tpu.dot_dimension_numbers<[0], [0], [1], [1], [0, 1, 1, 1], [], []>} : vector<16x128xbf16>, vector<16x128xbf16>, vector<128x128xf32> -> vector<128x128xf32>
    %109 = arith.mulf %108, %2 : vector<128x128xf32>
    %110 = arith.truncf %109 : vector<128x128xf32> to vector<128x128xbf16>
    %cst_46 = arith.constant dense<0.000000e+00> : vector<16x128xf32>
    %111 = tpu.matmul %107, %110, %cst_46 {dimension_numbers = #tpu.dot_dimension_numbers<[1], [0], [0], [1], [0, 0, 1, 1], [], []>} : vector<16x128xbf16>, vector<128x128xbf16>, vector<16x128xf32> -> vector<16x128xf32>
    %112 = vector.extract_strided_slice %35 {offsets = [48, 0], sizes = [16, 128], strides = [1, 1]} : vector<64x128xf32> to vector<16x128xf32>
    %cst_47 = arith.constant dense<0.000000e+00> : vector<128xf32>
    %113 = vector.multi_reduction <add>, %112, %cst_47 [0] : vector<16x128xf32> to vector<128xf32>
    %114 = vector.shape_cast %113 : vector<128xf32> to vector<1x128xf32>
    %115 = vector.extract_strided_slice %28 {offsets = [48, 0], sizes = [16, 128], strides = [1, 1]} : vector<64x128xf32> to vector<16x128xf32>
    %116 = vector.broadcast %114 : vector<1x128xf32> to vector<16x128xf32>
    %117 = arith.mulf %115, %116 : vector<16x128xf32>
    %118 = arith.truncf %117 : vector<16x128xf32> to vector<16x128xbf16>
    %cst_48 = arith.constant dense<0.000000e+00> : vector<16x128xf32>
    %119 = tpu.matmul %118, %3, %cst_48 {dimension_numbers = #tpu.dot_dimension_numbers<[1], [0], [0], [1], [0, 0, 1, 1], [], []>} : vector<16x128xbf16>, vector<128x128xbf16>, vector<16x128xf32> -> vector<16x128xf32>
    %cst_49 = arith.constant 9.99999997E-7 : f32
    %120 = vector.broadcast %cst_49 : f32 to vector<16x128xf32>
    %121 = arith.addf %119, %120 : vector<16x128xf32>
    %122 = tpu.reciprocal %121 {approx = true} : vector<16x128xf32> -> vector<16x128xf32>
    %cst_50 = arith.constant 1.600000e+01 : f32
    %123 = vector.broadcast %cst_50 : f32 to vector<16x128xf32>
    %124 = arith.mulf %123, %122 : vector<16x128xf32>
    %125 = arith.mulf %111, %124 : vector<16x128xf32>
    %126 = tpu.concatenate %62, %83, %104, %125 in 0 : vector<16x128xf32>, vector<16x128xf32>, vector<16x128xf32>, vector<16x128xf32> -> vector<64x128xf32>
    %127 = arith.truncf %126 : vector<64x128xf32> to vector<64x128xbf16>
    %cst_51 = arith.constant dense<0.000000e+00> : vector<64x128xf32>
    %128 = tpu.matmul %127, %7, %cst_51 {dimension_numbers = #tpu.dot_dimension_numbers<[1], [0], [0], [1], [0, 0, 1, 1], [], []>} : vector<64x128xbf16>, vector<128x128xbf16>, vector<64x128xf32> -> vector<64x128xf32>
    %cst_52 = arith.constant dense<0.000000e+00> : vector<64xf32>
    %129 = vector.multi_reduction <add>, %128, %cst_52 [1] : vector<64x128xf32> to vector<64xf32>
    %130 = vector.shape_cast %129 : vector<64xf32> to vector<64x1xf32>
    %cst_53 = arith.constant 1.280000e+02 : f32
    %131 = vector.broadcast %cst_53 : f32 to vector<64x1xf32>
    %132 = arith.divf %130, %131 : vector<64x1xf32>
    %133 = vector.broadcast %132 : vector<64x1xf32> to vector<64x128xf32>
    %134 = arith.subf %128, %133 : vector<64x128xf32>
    %135 = arith.mulf %134, %134 : vector<64x128xf32>
    %cst_54 = arith.constant dense<0.000000e+00> : vector<64xf32>
    %136 = vector.multi_reduction <add>, %135, %cst_54 [1] : vector<64x128xf32> to vector<64xf32>
    %137 = vector.shape_cast %136 : vector<64xf32> to vector<64x1xf32>
    %cst_55 = arith.constant 1.280000e+02 : f32
    %138 = vector.broadcast %cst_55 : f32 to vector<64x1xf32>
    %139 = arith.divf %137, %138 : vector<64x1xf32>
    %140 = vector.broadcast %132 : vector<64x1xf32> to vector<64x128xf32>
    %141 = arith.subf %128, %140 : vector<64x128xf32>
    %cst_56 = arith.constant 9.99999974E-6 : f32
    %142 = vector.broadcast %cst_56 : f32 to vector<64x1xf32>
    %143 = arith.addf %139, %142 : vector<64x1xf32>
    %144 = math.rsqrt %143 : vector<64x1xf32>
    %145 = vector.broadcast %144 : vector<64x1xf32> to vector<64x128xf32>
    %146 = arith.mulf %141, %145 : vector<64x128xf32>
    %147 = vector.broadcast %16 : vector<1x128xf32> to vector<64x128xf32>
    %148 = arith.mulf %146, %147 : vector<64x128xf32>
    %149 = vector.broadcast %17 : vector<1x128xf32> to vector<64x128xf32>
    %150 = arith.addf %148, %149 : vector<64x128xf32>
    %cst_57 = arith.constant dense<0.000000e+00> : vector<64x256xf32>
    %151 = tpu.matmul %20, %9, %cst_57 {dimension_numbers = #tpu.dot_dimension_numbers<[1], [0], [0], [1], [0, 0, 1, 1], [], []>} : vector<64x128xbf16>, vector<128x256xbf16>, vector<64x256xf32> -> vector<64x256xf32>
    %152 = arith.truncf %150 : vector<64x128xf32> to vector<64x128xbf16>
    %cst_58 = arith.constant dense<0.000000e+00> : vector<64x256xf32>
    %153 = tpu.matmul %152, %11, %cst_58 {dimension_numbers = #tpu.dot_dimension_numbers<[1], [0], [0], [1], [0, 0, 1, 1], [], []>} : vector<64x128xbf16>, vector<128x256xbf16>, vector<64x256xf32> -> vector<64x256xf32>
    %154 = arith.addf %151, %153 : vector<64x256xf32>
    %cst_59 = arith.constant 0.000000e+00 : f32
    %155 = vector.broadcast %cst_59 : f32 to vector<64x256xf32>
    %156 = arith.maximumf %154, %155 : vector<64x256xf32>
    %157 = arith.truncf %156 : vector<64x256xf32> to vector<64x256xbf16>
    %cst_60 = arith.constant dense<0.000000e+00> : vector<64x128xf32>
    %158 = tpu.matmul %157, %13, %cst_60 {dimension_numbers = #tpu.dot_dimension_numbers<[1], [0], [0], [1], [0, 0, 1, 1], [], []>} : vector<64x256xbf16>, vector<256x128xbf16>, vector<64x128xf32> -> vector<64x128xf32>
    %cst_61 = arith.constant dense<0.000000e+00> : vector<64xf32>
    %159 = vector.multi_reduction <add>, %158, %cst_61 [1] : vector<64x128xf32> to vector<64xf32>
    %160 = vector.shape_cast %159 : vector<64xf32> to vector<64x1xf32>
    %cst_62 = arith.constant 1.280000e+02 : f32
    %161 = vector.broadcast %cst_62 : f32 to vector<64x1xf32>
    %162 = arith.divf %160, %161 : vector<64x1xf32>
    %163 = vector.broadcast %162 : vector<64x1xf32> to vector<64x128xf32>
    %164 = arith.subf %158, %163 : vector<64x128xf32>
    %165 = arith.mulf %164, %164 : vector<64x128xf32>
    %cst_63 = arith.constant dense<0.000000e+00> : vector<64xf32>
    %166 = vector.multi_reduction <add>, %165, %cst_63 [1] : vector<64x128xf32> to vector<64xf32>
    %167 = vector.shape_cast %166 : vector<64xf32> to vector<64x1xf32>
    %cst_64 = arith.constant 1.280000e+02 : f32
    %168 = vector.broadcast %cst_64 : f32 to vector<64x1xf32>
    %169 = arith.divf %167, %168 : vector<64x1xf32>
    %170 = vector.broadcast %162 : vector<64x1xf32> to vector<64x128xf32>
    %171 = arith.subf %158, %170 : vector<64x128xf32>
    %cst_65 = arith.constant 9.99999974E-6 : f32
    %172 = vector.broadcast %cst_65 : f32 to vector<64x1xf32>
    %173 = arith.addf %169, %172 : vector<64x1xf32>
    %174 = math.rsqrt %173 : vector<64x1xf32>
    %175 = vector.broadcast %174 : vector<64x1xf32> to vector<64x128xf32>
    %176 = arith.mulf %171, %175 : vector<64x128xf32>
    %177 = vector.broadcast %18 : vector<1x128xf32> to vector<64x128xf32>
    %178 = arith.mulf %176, %177 : vector<64x128xf32>
    %179 = vector.broadcast %19 : vector<1x128xf32> to vector<64x128xf32>
    %180 = arith.addf %178, %179 : vector<64x128xf32>
    %181 = arith.addf %1, %180 : vector<64x128xf32>
    %c1 = arith.constant 1 : index
    %c0_66 = arith.constant 0 : index
    %c0_67 = arith.constant 0 : index
    %182 = vector.load %arg3[%c1, %c0_66, %c0_67] : memref<4x128x384xbf16, #tpu.memory_space<vmem>>, vector<1x128x384xbf16>
    %183 = vector.shape_cast %182 : vector<1x128x384xbf16> to vector<128x384xbf16>
    %c1_68 = arith.constant 1 : index
    %c0_69 = arith.constant 0 : index
    %c0_70 = arith.constant 0 : index
    %184 = vector.load %arg4[%c1_68, %c0_69, %c0_70] : memref<4x128x128xbf16, #tpu.memory_space<vmem>>, vector<1x128x128xbf16>
    %185 = vector.shape_cast %184 : vector<1x128x128xbf16> to vector<128x128xbf16>
    %c1_71 = arith.constant 1 : index
    %c0_72 = arith.constant 0 : index
    %c0_73 = arith.constant 0 : index
    %186 = vector.load %arg5[%c1_71, %c0_72, %c0_73] : memref<4x128x256xbf16, #tpu.memory_space<vmem>>, vector<1x128x256xbf16>
    %187 = vector.shape_cast %186 : vector<1x128x256xbf16> to vector<128x256xbf16>
    %c1_74 = arith.constant 1 : index
    %c0_75 = arith.constant 0 : index
    %c0_76 = arith.constant 0 : index
    %188 = vector.load %arg6[%c1_74, %c0_75, %c0_76] : memref<4x128x256xbf16, #tpu.memory_space<vmem>>, vector<1x128x256xbf16>
    %189 = vector.shape_cast %188 : vector<1x128x256xbf16> to vector<128x256xbf16>
    %c1_77 = arith.constant 1 : index
    %c0_78 = arith.constant 0 : index
    %c0_79 = arith.constant 0 : index
    %190 = vector.load %arg7[%c1_77, %c0_78, %c0_79] : memref<4x256x128xbf16, #tpu.memory_space<vmem>>, vector<1x256x128xbf16>
    %191 = vector.shape_cast %190 : vector<1x256x128xbf16> to vector<256x128xbf16>
    %c1_80 = arith.constant 1 : index
    %c0_81 = arith.constant 0 : index
    %c0_82 = arith.constant 0 : index
    %192 = vector.load %arg8[%c1_80, %c0_81, %c0_82] : memref<4x4x128xf32, #tpu.memory_space<vmem>>, vector<1x4x128xf32>
    %193 = vector.shape_cast %192 : vector<1x4x128xf32> to vector<4x128xf32>
    %194 = vector.extract_strided_slice %193 {offsets = [0, 0], sizes = [1, 128], strides = [1, 1]} : vector<4x128xf32> to vector<1x128xf32>
    %195 = vector.extract_strided_slice %193 {offsets = [1, 0], sizes = [1, 128], strides = [1, 1]} : vector<4x128xf32> to vector<1x128xf32>
    %196 = vector.extract_strided_slice %193 {offsets = [2, 0], sizes = [1, 128], strides = [1, 1]} : vector<4x128xf32> to vector<1x128xf32>
    %197 = vector.extract_strided_slice %193 {offsets = [3, 0], sizes = [1, 128], strides = [1, 1]} : vector<4x128xf32> to vector<1x128xf32>
    %198 = arith.truncf %181 : vector<64x128xf32> to vector<64x128xbf16>
    %cst_83 = arith.constant dense<0.000000e+00> : vector<64x384xf32>
    %199 = tpu.matmul %198, %183, %cst_83 {dimension_numbers = #tpu.dot_dimension_numbers<[1], [0], [0], [1], [0, 0, 1, 1], [], []>} : vector<64x128xbf16>, vector<128x384xbf16>, vector<64x384xf32> -> vector<64x384xf32>
    %200 = vector.extract_strided_slice %199 {offsets = [0, 0], sizes = [64, 128], strides = [1, 1]} : vector<64x384xf32> to vector<64x128xf32>
    %cst_84 = arith.constant 0.000000e+00 : f32
    %201 = vector.broadcast %cst_84 : f32 to vector<64x128xf32>
    %202 = arith.cmpf ogt, %200, %201 : vector<64x128xf32>
    %cst_85 = arith.constant 1.000000e+00 : f32
    %203 = vector.broadcast %cst_85 : f32 to vector<64x128xf32>
    %204 = arith.addf %200, %203 : vector<64x128xf32>
    %205 = math.exp %200 : vector<64x128xf32>
    %206 = arith.select %202, %204, %205 : vector<64x128xi1>, vector<64x128xf32>
    %207 = vector.extract_strided_slice %199 {offsets = [0, 128], sizes = [64, 128], strides = [1, 1]} : vector<64x384xf32> to vector<64x128xf32>
    %cst_86 = arith.constant 0.000000e+00 : f32
    %208 = vector.broadcast %cst_86 : f32 to vector<64x128xf32>
    %209 = arith.cmpf ogt, %207, %208 : vector<64x128xf32>
    %cst_87 = arith.constant 1.000000e+00 : f32
    %210 = vector.broadcast %cst_87 : f32 to vector<64x128xf32>
    %211 = arith.addf %207, %210 : vector<64x128xf32>
    %212 = math.exp %207 : vector<64x128xf32>
    %213 = arith.select %209, %211, %212 : vector<64x128xi1>, vector<64x128xf32>
    %214 = vector.extract_strided_slice %199 {offsets = [0, 256], sizes = [64, 128], strides = [1, 1]} : vector<64x384xf32> to vector<64x128xf32>
    %cst_88 = arith.constant 6.250000e-02 : f32
    %215 = vector.broadcast %cst_88 : f32 to vector<64x128xf32>
    %216 = arith.mulf %214, %215 : vector<64x128xf32>
    %217 = arith.truncf %206 : vector<64x128xf32> to vector<64x128xbf16>
    %218 = arith.truncf %213 : vector<64x128xf32> to vector<64x128xbf16>
    %219 = arith.truncf %216 : vector<64x128xf32> to vector<64x128xbf16>
    %220 = vector.extract_strided_slice %218 {offsets = [0, 0], sizes = [16, 128], strides = [1, 1]} : vector<64x128xbf16> to vector<16x128xbf16>
    %221 = vector.extract_strided_slice %219 {offsets = [0, 0], sizes = [16, 128], strides = [1, 1]} : vector<64x128xbf16> to vector<16x128xbf16>
    %222 = vector.extract_strided_slice %217 {offsets = [0, 0], sizes = [16, 128], strides = [1, 1]} : vector<64x128xbf16> to vector<16x128xbf16>
    %cst_89 = arith.constant dense<0.000000e+00> : vector<128x128xf32>
    %223 = tpu.matmul %220, %221, %cst_89 {dimension_numbers = #tpu.dot_dimension_numbers<[0], [0], [1], [1], [0, 1, 1, 1], [], []>} : vector<16x128xbf16>, vector<16x128xbf16>, vector<128x128xf32> -> vector<128x128xf32>
    %224 = arith.mulf %223, %2 : vector<128x128xf32>
    %225 = arith.truncf %224 : vector<128x128xf32> to vector<128x128xbf16>
    %cst_90 = arith.constant dense<0.000000e+00> : vector<16x128xf32>
    %226 = tpu.matmul %222, %225, %cst_90 {dimension_numbers = #tpu.dot_dimension_numbers<[1], [0], [0], [1], [0, 0, 1, 1], [], []>} : vector<16x128xbf16>, vector<128x128xbf16>, vector<16x128xf32> -> vector<16x128xf32>
    %227 = vector.extract_strided_slice %213 {offsets = [0, 0], sizes = [16, 128], strides = [1, 1]} : vector<64x128xf32> to vector<16x128xf32>
    %cst_91 = arith.constant dense<0.000000e+00> : vector<128xf32>
    %228 = vector.multi_reduction <add>, %227, %cst_91 [0] : vector<16x128xf32> to vector<128xf32>
    %229 = vector.shape_cast %228 : vector<128xf32> to vector<1x128xf32>
    %230 = vector.extract_strided_slice %206 {offsets = [0, 0], sizes = [16, 128], strides = [1, 1]} : vector<64x128xf32> to vector<16x128xf32>
    %231 = vector.broadcast %229 : vector<1x128xf32> to vector<16x128xf32>
    %232 = arith.mulf %230, %231 : vector<16x128xf32>
    %233 = arith.truncf %232 : vector<16x128xf32> to vector<16x128xbf16>
    %cst_92 = arith.constant dense<0.000000e+00> : vector<16x128xf32>
    %234 = tpu.matmul %233, %3, %cst_92 {dimension_numbers = #tpu.dot_dimension_numbers<[1], [0], [0], [1], [0, 0, 1, 1], [], []>} : vector<16x128xbf16>, vector<128x128xbf16>, vector<16x128xf32> -> vector<16x128xf32>
    %cst_93 = arith.constant 9.99999997E-7 : f32
    %235 = vector.broadcast %cst_93 : f32 to vector<16x128xf32>
    %236 = arith.addf %234, %235 : vector<16x128xf32>
    %237 = tpu.reciprocal %236 {approx = true} : vector<16x128xf32> -> vector<16x128xf32>
    %cst_94 = arith.constant 1.600000e+01 : f32
    %238 = vector.broadcast %cst_94 : f32 to vector<16x128xf32>
    %239 = arith.mulf %238, %237 : vector<16x128xf32>
    %240 = arith.mulf %226, %239 : vector<16x128xf32>
    %241 = vector.extract_strided_slice %218 {offsets = [16, 0], sizes = [16, 128], strides = [1, 1]} : vector<64x128xbf16> to vector<16x128xbf16>
    %242 = vector.extract_strided_slice %219 {offsets = [16, 0], sizes = [16, 128], strides = [1, 1]} : vector<64x128xbf16> to vector<16x128xbf16>
    %243 = vector.extract_strided_slice %217 {offsets = [16, 0], sizes = [16, 128], strides = [1, 1]} : vector<64x128xbf16> to vector<16x128xbf16>
    %cst_95 = arith.constant dense<0.000000e+00> : vector<128x128xf32>
    %244 = tpu.matmul %241, %242, %cst_95 {dimension_numbers = #tpu.dot_dimension_numbers<[0], [0], [1], [1], [0, 1, 1, 1], [], []>} : vector<16x128xbf16>, vector<16x128xbf16>, vector<128x128xf32> -> vector<128x128xf32>
    %245 = arith.mulf %244, %2 : vector<128x128xf32>
    %246 = arith.truncf %245 : vector<128x128xf32> to vector<128x128xbf16>
    %cst_96 = arith.constant dense<0.000000e+00> : vector<16x128xf32>
    %247 = tpu.matmul %243, %246, %cst_96 {dimension_numbers = #tpu.dot_dimension_numbers<[1], [0], [0], [1], [0, 0, 1, 1], [], []>} : vector<16x128xbf16>, vector<128x128xbf16>, vector<16x128xf32> -> vector<16x128xf32>
    %248 = vector.extract_strided_slice %213 {offsets = [16, 0], sizes = [16, 128], strides = [1, 1]} : vector<64x128xf32> to vector<16x128xf32>
    %cst_97 = arith.constant dense<0.000000e+00> : vector<128xf32>
    %249 = vector.multi_reduction <add>, %248, %cst_97 [0] : vector<16x128xf32> to vector<128xf32>
    %250 = vector.shape_cast %249 : vector<128xf32> to vector<1x128xf32>
    %251 = vector.extract_strided_slice %206 {offsets = [16, 0], sizes = [16, 128], strides = [1, 1]} : vector<64x128xf32> to vector<16x128xf32>
    %252 = vector.broadcast %250 : vector<1x128xf32> to vector<16x128xf32>
    %253 = arith.mulf %251, %252 : vector<16x128xf32>
    %254 = arith.truncf %253 : vector<16x128xf32> to vector<16x128xbf16>
    %cst_98 = arith.constant dense<0.000000e+00> : vector<16x128xf32>
    %255 = tpu.matmul %254, %3, %cst_98 {dimension_numbers = #tpu.dot_dimension_numbers<[1], [0], [0], [1], [0, 0, 1, 1], [], []>} : vector<16x128xbf16>, vector<128x128xbf16>, vector<16x128xf32> -> vector<16x128xf32>
    %cst_99 = arith.constant 9.99999997E-7 : f32
    %256 = vector.broadcast %cst_99 : f32 to vector<16x128xf32>
    %257 = arith.addf %255, %256 : vector<16x128xf32>
    %258 = tpu.reciprocal %257 {approx = true} : vector<16x128xf32> -> vector<16x128xf32>
    %cst_100 = arith.constant 1.600000e+01 : f32
    %259 = vector.broadcast %cst_100 : f32 to vector<16x128xf32>
    %260 = arith.mulf %259, %258 : vector<16x128xf32>
    %261 = arith.mulf %247, %260 : vector<16x128xf32>
    %262 = vector.extract_strided_slice %218 {offsets = [32, 0], sizes = [16, 128], strides = [1, 1]} : vector<64x128xbf16> to vector<16x128xbf16>
    %263 = vector.extract_strided_slice %219 {offsets = [32, 0], sizes = [16, 128], strides = [1, 1]} : vector<64x128xbf16> to vector<16x128xbf16>
    %264 = vector.extract_strided_slice %217 {offsets = [32, 0], sizes = [16, 128], strides = [1, 1]} : vector<64x128xbf16> to vector<16x128xbf16>
    %cst_101 = arith.constant dense<0.000000e+00> : vector<128x128xf32>
    %265 = tpu.matmul %262, %263, %cst_101 {dimension_numbers = #tpu.dot_dimension_numbers<[0], [0], [1], [1], [0, 1, 1, 1], [], []>} : vector<16x128xbf16>, vector<16x128xbf16>, vector<128x128xf32> -> vector<128x128xf32>
    %266 = arith.mulf %265, %2 : vector<128x128xf32>
    %267 = arith.truncf %266 : vector<128x128xf32> to vector<128x128xbf16>
    %cst_102 = arith.constant dense<0.000000e+00> : vector<16x128xf32>
    %268 = tpu.matmul %264, %267, %cst_102 {dimension_numbers = #tpu.dot_dimension_numbers<[1], [0], [0], [1], [0, 0, 1, 1], [], []>} : vector<16x128xbf16>, vector<128x128xbf16>, vector<16x128xf32> -> vector<16x128xf32>
    %269 = vector.extract_strided_slice %213 {offsets = [32, 0], sizes = [16, 128], strides = [1, 1]} : vector<64x128xf32> to vector<16x128xf32>
    %cst_103 = arith.constant dense<0.000000e+00> : vector<128xf32>
    %270 = vector.multi_reduction <add>, %269, %cst_103 [0] : vector<16x128xf32> to vector<128xf32>
    %271 = vector.shape_cast %270 : vector<128xf32> to vector<1x128xf32>
    %272 = vector.extract_strided_slice %206 {offsets = [32, 0], sizes = [16, 128], strides = [1, 1]} : vector<64x128xf32> to vector<16x128xf32>
    %273 = vector.broadcast %271 : vector<1x128xf32> to vector<16x128xf32>
    %274 = arith.mulf %272, %273 : vector<16x128xf32>
    %275 = arith.truncf %274 : vector<16x128xf32> to vector<16x128xbf16>
    %cst_104 = arith.constant dense<0.000000e+00> : vector<16x128xf32>
    %276 = tpu.matmul %275, %3, %cst_104 {dimension_numbers = #tpu.dot_dimension_numbers<[1], [0], [0], [1], [0, 0, 1, 1], [], []>} : vector<16x128xbf16>, vector<128x128xbf16>, vector<16x128xf32> -> vector<16x128xf32>
    %cst_105 = arith.constant 9.99999997E-7 : f32
    %277 = vector.broadcast %cst_105 : f32 to vector<16x128xf32>
    %278 = arith.addf %276, %277 : vector<16x128xf32>
    %279 = tpu.reciprocal %278 {approx = true} : vector<16x128xf32> -> vector<16x128xf32>
    %cst_106 = arith.constant 1.600000e+01 : f32
    %280 = vector.broadcast %cst_106 : f32 to vector<16x128xf32>
    %281 = arith.mulf %280, %279 : vector<16x128xf32>
    %282 = arith.mulf %268, %281 : vector<16x128xf32>
    %283 = vector.extract_strided_slice %218 {offsets = [48, 0], sizes = [16, 128], strides = [1, 1]} : vector<64x128xbf16> to vector<16x128xbf16>
    %284 = vector.extract_strided_slice %219 {offsets = [48, 0], sizes = [16, 128], strides = [1, 1]} : vector<64x128xbf16> to vector<16x128xbf16>
    %285 = vector.extract_strided_slice %217 {offsets = [48, 0], sizes = [16, 128], strides = [1, 1]} : vector<64x128xbf16> to vector<16x128xbf16>
    %cst_107 = arith.constant dense<0.000000e+00> : vector<128x128xf32>
    %286 = tpu.matmul %283, %284, %cst_107 {dimension_numbers = #tpu.dot_dimension_numbers<[0], [0], [1], [1], [0, 1, 1, 1], [], []>} : vector<16x128xbf16>, vector<16x128xbf16>, vector<128x128xf32> -> vector<128x128xf32>
    %287 = arith.mulf %286, %2 : vector<128x128xf32>
    %288 = arith.truncf %287 : vector<128x128xf32> to vector<128x128xbf16>
    %cst_108 = arith.constant dense<0.000000e+00> : vector<16x128xf32>
    %289 = tpu.matmul %285, %288, %cst_108 {dimension_numbers = #tpu.dot_dimension_numbers<[1], [0], [0], [1], [0, 0, 1, 1], [], []>} : vector<16x128xbf16>, vector<128x128xbf16>, vector<16x128xf32> -> vector<16x128xf32>
    %290 = vector.extract_strided_slice %213 {offsets = [48, 0], sizes = [16, 128], strides = [1, 1]} : vector<64x128xf32> to vector<16x128xf32>
    %cst_109 = arith.constant dense<0.000000e+00> : vector<128xf32>
    %291 = vector.multi_reduction <add>, %290, %cst_109 [0] : vector<16x128xf32> to vector<128xf32>
    %292 = vector.shape_cast %291 : vector<128xf32> to vector<1x128xf32>
    %293 = vector.extract_strided_slice %206 {offsets = [48, 0], sizes = [16, 128], strides = [1, 1]} : vector<64x128xf32> to vector<16x128xf32>
    %294 = vector.broadcast %292 : vector<1x128xf32> to vector<16x128xf32>
    %295 = arith.mulf %293, %294 : vector<16x128xf32>
    %296 = arith.truncf %295 : vector<16x128xf32> to vector<16x128xbf16>
    %cst_110 = arith.constant dense<0.000000e+00> : vector<16x128xf32>
    %297 = tpu.matmul %296, %3, %cst_110 {dimension_numbers = #tpu.dot_dimension_numbers<[1], [0], [0], [1], [0, 0, 1, 1], [], []>} : vector<16x128xbf16>, vector<128x128xbf16>, vector<16x128xf32> -> vector<16x128xf32>
    %cst_111 = arith.constant 9.99999997E-7 : f32
    %298 = vector.broadcast %cst_111 : f32 to vector<16x128xf32>
    %299 = arith.addf %297, %298 : vector<16x128xf32>
    %300 = tpu.reciprocal %299 {approx = true} : vector<16x128xf32> -> vector<16x128xf32>
    %cst_112 = arith.constant 1.600000e+01 : f32
    %301 = vector.broadcast %cst_112 : f32 to vector<16x128xf32>
    %302 = arith.mulf %301, %300 : vector<16x128xf32>
    %303 = arith.mulf %289, %302 : vector<16x128xf32>
    %304 = tpu.concatenate %240, %261, %282, %303 in 0 : vector<16x128xf32>, vector<16x128xf32>, vector<16x128xf32>, vector<16x128xf32> -> vector<64x128xf32>
    %305 = arith.truncf %304 : vector<64x128xf32> to vector<64x128xbf16>
    %cst_113 = arith.constant dense<0.000000e+00> : vector<64x128xf32>
    %306 = tpu.matmul %305, %185, %cst_113 {dimension_numbers = #tpu.dot_dimension_numbers<[1], [0], [0], [1], [0, 0, 1, 1], [], []>} : vector<64x128xbf16>, vector<128x128xbf16>, vector<64x128xf32> -> vector<64x128xf32>
    %cst_114 = arith.constant dense<0.000000e+00> : vector<64xf32>
    %307 = vector.multi_reduction <add>, %306, %cst_114 [1] : vector<64x128xf32> to vector<64xf32>
    %308 = vector.shape_cast %307 : vector<64xf32> to vector<64x1xf32>
    %cst_115 = arith.constant 1.280000e+02 : f32
    %309 = vector.broadcast %cst_115 : f32 to vector<64x1xf32>
    %310 = arith.divf %308, %309 : vector<64x1xf32>
    %311 = vector.broadcast %310 : vector<64x1xf32> to vector<64x128xf32>
    %312 = arith.subf %306, %311 : vector<64x128xf32>
    %313 = arith.mulf %312, %312 : vector<64x128xf32>
    %cst_116 = arith.constant dense<0.000000e+00> : vector<64xf32>
    %314 = vector.multi_reduction <add>, %313, %cst_116 [1] : vector<64x128xf32> to vector<64xf32>
    %315 = vector.shape_cast %314 : vector<64xf32> to vector<64x1xf32>
    %cst_117 = arith.constant 1.280000e+02 : f32
    %316 = vector.broadcast %cst_117 : f32 to vector<64x1xf32>
    %317 = arith.divf %315, %316 : vector<64x1xf32>
    %318 = vector.broadcast %310 : vector<64x1xf32> to vector<64x128xf32>
    %319 = arith.subf %306, %318 : vector<64x128xf32>
    %cst_118 = arith.constant 9.99999974E-6 : f32
    %320 = vector.broadcast %cst_118 : f32 to vector<64x1xf32>
    %321 = arith.addf %317, %320 : vector<64x1xf32>
    %322 = math.rsqrt %321 : vector<64x1xf32>
    %323 = vector.broadcast %322 : vector<64x1xf32> to vector<64x128xf32>
    %324 = arith.mulf %319, %323 : vector<64x128xf32>
    %325 = vector.broadcast %194 : vector<1x128xf32> to vector<64x128xf32>
    %326 = arith.mulf %324, %325 : vector<64x128xf32>
    %327 = vector.broadcast %195 : vector<1x128xf32> to vector<64x128xf32>
    %328 = arith.addf %326, %327 : vector<64x128xf32>
    %cst_119 = arith.constant dense<0.000000e+00> : vector<64x256xf32>
    %329 = tpu.matmul %198, %187, %cst_119 {dimension_numbers = #tpu.dot_dimension_numbers<[1], [0], [0], [1], [0, 0, 1, 1], [], []>} : vector<64x128xbf16>, vector<128x256xbf16>, vector<64x256xf32> -> vector<64x256xf32>
    %330 = arith.truncf %328 : vector<64x128xf32> to vector<64x128xbf16>
    %cst_120 = arith.constant dense<0.000000e+00> : vector<64x256xf32>
    %331 = tpu.matmul %330, %189, %cst_120 {dimension_numbers = #tpu.dot_dimension_numbers<[1], [0], [0], [1], [0, 0, 1, 1], [], []>} : vector<64x128xbf16>, vector<128x256xbf16>, vector<64x256xf32> -> vector<64x256xf32>
    %332 = arith.addf %329, %331 : vector<64x256xf32>
    %cst_121 = arith.constant 0.000000e+00 : f32
    %333 = vector.broadcast %cst_121 : f32 to vector<64x256xf32>
    %334 = arith.maximumf %332, %333 : vector<64x256xf32>
    %335 = arith.truncf %334 : vector<64x256xf32> to vector<64x256xbf16>
    %cst_122 = arith.constant dense<0.000000e+00> : vector<64x128xf32>
    %336 = tpu.matmul %335, %191, %cst_122 {dimension_numbers = #tpu.dot_dimension_numbers<[1], [0], [0], [1], [0, 0, 1, 1], [], []>} : vector<64x256xbf16>, vector<256x128xbf16>, vector<64x128xf32> -> vector<64x128xf32>
    %cst_123 = arith.constant dense<0.000000e+00> : vector<64xf32>
    %337 = vector.multi_reduction <add>, %336, %cst_123 [1] : vector<64x128xf32> to vector<64xf32>
    %338 = vector.shape_cast %337 : vector<64xf32> to vector<64x1xf32>
    %cst_124 = arith.constant 1.280000e+02 : f32
    %339 = vector.broadcast %cst_124 : f32 to vector<64x1xf32>
    %340 = arith.divf %338, %339 : vector<64x1xf32>
    %341 = vector.broadcast %340 : vector<64x1xf32> to vector<64x128xf32>
    %342 = arith.subf %336, %341 : vector<64x128xf32>
    %343 = arith.mulf %342, %342 : vector<64x128xf32>
    %cst_125 = arith.constant dense<0.000000e+00> : vector<64xf32>
    %344 = vector.multi_reduction <add>, %343, %cst_125 [1] : vector<64x128xf32> to vector<64xf32>
    %345 = vector.shape_cast %344 : vector<64xf32> to vector<64x1xf32>
    %cst_126 = arith.constant 1.280000e+02 : f32
    %346 = vector.broadcast %cst_126 : f32 to vector<64x1xf32>
    %347 = arith.divf %345, %346 : vector<64x1xf32>
    %348 = vector.broadcast %340 : vector<64x1xf32> to vector<64x128xf32>
    %349 = arith.subf %336, %348 : vector<64x128xf32>
    %cst_127 = arith.constant 9.99999974E-6 : f32
    %350 = vector.broadcast %cst_127 : f32 to vector<64x1xf32>
    %351 = arith.addf %347, %350 : vector<64x1xf32>
    %352 = math.rsqrt %351 : vector<64x1xf32>
    %353 = vector.broadcast %352 : vector<64x1xf32> to vector<64x128xf32>
    %354 = arith.mulf %349, %353 : vector<64x128xf32>
    %355 = vector.broadcast %196 : vector<1x128xf32> to vector<64x128xf32>
    %356 = arith.mulf %354, %355 : vector<64x128xf32>
    %357 = vector.broadcast %197 : vector<1x128xf32> to vector<64x128xf32>
    %358 = arith.addf %356, %357 : vector<64x128xf32>
    %359 = arith.addf %181, %358 : vector<64x128xf32>
    %c2 = arith.constant 2 : index
    %c0_128 = arith.constant 0 : index
    %c0_129 = arith.constant 0 : index
    %360 = vector.load %arg3[%c2, %c0_128, %c0_129] : memref<4x128x384xbf16, #tpu.memory_space<vmem>>, vector<1x128x384xbf16>
    %361 = vector.shape_cast %360 : vector<1x128x384xbf16> to vector<128x384xbf16>
    %c2_130 = arith.constant 2 : index
    %c0_131 = arith.constant 0 : index
    %c0_132 = arith.constant 0 : index
    %362 = vector.load %arg4[%c2_130, %c0_131, %c0_132] : memref<4x128x128xbf16, #tpu.memory_space<vmem>>, vector<1x128x128xbf16>
    %363 = vector.shape_cast %362 : vector<1x128x128xbf16> to vector<128x128xbf16>
    %c2_133 = arith.constant 2 : index
    %c0_134 = arith.constant 0 : index
    %c0_135 = arith.constant 0 : index
    %364 = vector.load %arg5[%c2_133, %c0_134, %c0_135] : memref<4x128x256xbf16, #tpu.memory_space<vmem>>, vector<1x128x256xbf16>
    %365 = vector.shape_cast %364 : vector<1x128x256xbf16> to vector<128x256xbf16>
    %c2_136 = arith.constant 2 : index
    %c0_137 = arith.constant 0 : index
    %c0_138 = arith.constant 0 : index
    %366 = vector.load %arg6[%c2_136, %c0_137, %c0_138] : memref<4x128x256xbf16, #tpu.memory_space<vmem>>, vector<1x128x256xbf16>
    %367 = vector.shape_cast %366 : vector<1x128x256xbf16> to vector<128x256xbf16>
    %c2_139 = arith.constant 2 : index
    %c0_140 = arith.constant 0 : index
    %c0_141 = arith.constant 0 : index
    %368 = vector.load %arg7[%c2_139, %c0_140, %c0_141] : memref<4x256x128xbf16, #tpu.memory_space<vmem>>, vector<1x256x128xbf16>
    %369 = vector.shape_cast %368 : vector<1x256x128xbf16> to vector<256x128xbf16>
    %c2_142 = arith.constant 2 : index
    %c0_143 = arith.constant 0 : index
    %c0_144 = arith.constant 0 : index
    %370 = vector.load %arg8[%c2_142, %c0_143, %c0_144] : memref<4x4x128xf32, #tpu.memory_space<vmem>>, vector<1x4x128xf32>
    %371 = vector.shape_cast %370 : vector<1x4x128xf32> to vector<4x128xf32>
    %372 = vector.extract_strided_slice %371 {offsets = [0, 0], sizes = [1, 128], strides = [1, 1]} : vector<4x128xf32> to vector<1x128xf32>
    %373 = vector.extract_strided_slice %371 {offsets = [1, 0], sizes = [1, 128], strides = [1, 1]} : vector<4x128xf32> to vector<1x128xf32>
    %374 = vector.extract_strided_slice %371 {offsets = [2, 0], sizes = [1, 128], strides = [1, 1]} : vector<4x128xf32> to vector<1x128xf32>
    %375 = vector.extract_strided_slice %371 {offsets = [3, 0], sizes = [1, 128], strides = [1, 1]} : vector<4x128xf32> to vector<1x128xf32>
    %376 = arith.truncf %359 : vector<64x128xf32> to vector<64x128xbf16>
    %cst_145 = arith.constant dense<0.000000e+00> : vector<64x384xf32>
    %377 = tpu.matmul %376, %361, %cst_145 {dimension_numbers = #tpu.dot_dimension_numbers<[1], [0], [0], [1], [0, 0, 1, 1], [], []>} : vector<64x128xbf16>, vector<128x384xbf16>, vector<64x384xf32> -> vector<64x384xf32>
    %378 = vector.extract_strided_slice %377 {offsets = [0, 0], sizes = [64, 128], strides = [1, 1]} : vector<64x384xf32> to vector<64x128xf32>
    %cst_146 = arith.constant 0.000000e+00 : f32
    %379 = vector.broadcast %cst_146 : f32 to vector<64x128xf32>
    %380 = arith.cmpf ogt, %378, %379 : vector<64x128xf32>
    %cst_147 = arith.constant 1.000000e+00 : f32
    %381 = vector.broadcast %cst_147 : f32 to vector<64x128xf32>
    %382 = arith.addf %378, %381 : vector<64x128xf32>
    %383 = math.exp %378 : vector<64x128xf32>
    %384 = arith.select %380, %382, %383 : vector<64x128xi1>, vector<64x128xf32>
    %385 = vector.extract_strided_slice %377 {offsets = [0, 128], sizes = [64, 128], strides = [1, 1]} : vector<64x384xf32> to vector<64x128xf32>
    %cst_148 = arith.constant 0.000000e+00 : f32
    %386 = vector.broadcast %cst_148 : f32 to vector<64x128xf32>
    %387 = arith.cmpf ogt, %385, %386 : vector<64x128xf32>
    %cst_149 = arith.constant 1.000000e+00 : f32
    %388 = vector.broadcast %cst_149 : f32 to vector<64x128xf32>
    %389 = arith.addf %385, %388 : vector<64x128xf32>
    %390 = math.exp %385 : vector<64x128xf32>
    %391 = arith.select %387, %389, %390 : vector<64x128xi1>, vector<64x128xf32>
    %392 = vector.extract_strided_slice %377 {offsets = [0, 256], sizes = [64, 128], strides = [1, 1]} : vector<64x384xf32> to vector<64x128xf32>
    %cst_150 = arith.constant 6.250000e-02 : f32
    %393 = vector.broadcast %cst_150 : f32 to vector<64x128xf32>
    %394 = arith.mulf %392, %393 : vector<64x128xf32>
    %395 = arith.truncf %384 : vector<64x128xf32> to vector<64x128xbf16>
    %396 = arith.truncf %391 : vector<64x128xf32> to vector<64x128xbf16>
    %397 = arith.truncf %394 : vector<64x128xf32> to vector<64x128xbf16>
    %398 = vector.extract_strided_slice %396 {offsets = [0, 0], sizes = [16, 128], strides = [1, 1]} : vector<64x128xbf16> to vector<16x128xbf16>
    %399 = vector.extract_strided_slice %397 {offsets = [0, 0], sizes = [16, 128], strides = [1, 1]} : vector<64x128xbf16> to vector<16x128xbf16>
    %400 = vector.extract_strided_slice %395 {offsets = [0, 0], sizes = [16, 128], strides = [1, 1]} : vector<64x128xbf16> to vector<16x128xbf16>
    %cst_151 = arith.constant dense<0.000000e+00> : vector<128x128xf32>
    %401 = tpu.matmul %398, %399, %cst_151 {dimension_numbers = #tpu.dot_dimension_numbers<[0], [0], [1], [1], [0, 1, 1, 1], [], []>} : vector<16x128xbf16>, vector<16x128xbf16>, vector<128x128xf32> -> vector<128x128xf32>
    %402 = arith.mulf %401, %2 : vector<128x128xf32>
    %403 = arith.truncf %402 : vector<128x128xf32> to vector<128x128xbf16>
    %cst_152 = arith.constant dense<0.000000e+00> : vector<16x128xf32>
    %404 = tpu.matmul %400, %403, %cst_152 {dimension_numbers = #tpu.dot_dimension_numbers<[1], [0], [0], [1], [0, 0, 1, 1], [], []>} : vector<16x128xbf16>, vector<128x128xbf16>, vector<16x128xf32> -> vector<16x128xf32>
    %405 = vector.extract_strided_slice %391 {offsets = [0, 0], sizes = [16, 128], strides = [1, 1]} : vector<64x128xf32> to vector<16x128xf32>
    %cst_153 = arith.constant dense<0.000000e+00> : vector<128xf32>
    %406 = vector.multi_reduction <add>, %405, %cst_153 [0] : vector<16x128xf32> to vector<128xf32>
    %407 = vector.shape_cast %406 : vector<128xf32> to vector<1x128xf32>
    %408 = vector.extract_strided_slice %384 {offsets = [0, 0], sizes = [16, 128], strides = [1, 1]} : vector<64x128xf32> to vector<16x128xf32>
    %409 = vector.broadcast %407 : vector<1x128xf32> to vector<16x128xf32>
    %410 = arith.mulf %408, %409 : vector<16x128xf32>
    %411 = arith.truncf %410 : vector<16x128xf32> to vector<16x128xbf16>
    %cst_154 = arith.constant dense<0.000000e+00> : vector<16x128xf32>
    %412 = tpu.matmul %411, %3, %cst_154 {dimension_numbers = #tpu.dot_dimension_numbers<[1], [0], [0], [1], [0, 0, 1, 1], [], []>} : vector<16x128xbf16>, vector<128x128xbf16>, vector<16x128xf32> -> vector<16x128xf32>
    %cst_155 = arith.constant 9.99999997E-7 : f32
    %413 = vector.broadcast %cst_155 : f32 to vector<16x128xf32>
    %414 = arith.addf %412, %413 : vector<16x128xf32>
    %415 = tpu.reciprocal %414 {approx = true} : vector<16x128xf32> -> vector<16x128xf32>
    %cst_156 = arith.constant 1.600000e+01 : f32
    %416 = vector.broadcast %cst_156 : f32 to vector<16x128xf32>
    %417 = arith.mulf %416, %415 : vector<16x128xf32>
    %418 = arith.mulf %404, %417 : vector<16x128xf32>
    %419 = vector.extract_strided_slice %396 {offsets = [16, 0], sizes = [16, 128], strides = [1, 1]} : vector<64x128xbf16> to vector<16x128xbf16>
    %420 = vector.extract_strided_slice %397 {offsets = [16, 0], sizes = [16, 128], strides = [1, 1]} : vector<64x128xbf16> to vector<16x128xbf16>
    %421 = vector.extract_strided_slice %395 {offsets = [16, 0], sizes = [16, 128], strides = [1, 1]} : vector<64x128xbf16> to vector<16x128xbf16>
    %cst_157 = arith.constant dense<0.000000e+00> : vector<128x128xf32>
    %422 = tpu.matmul %419, %420, %cst_157 {dimension_numbers = #tpu.dot_dimension_numbers<[0], [0], [1], [1], [0, 1, 1, 1], [], []>} : vector<16x128xbf16>, vector<16x128xbf16>, vector<128x128xf32> -> vector<128x128xf32>
    %423 = arith.mulf %422, %2 : vector<128x128xf32>
    %424 = arith.truncf %423 : vector<128x128xf32> to vector<128x128xbf16>
    %cst_158 = arith.constant dense<0.000000e+00> : vector<16x128xf32>
    %425 = tpu.matmul %421, %424, %cst_158 {dimension_numbers = #tpu.dot_dimension_numbers<[1], [0], [0], [1], [0, 0, 1, 1], [], []>} : vector<16x128xbf16>, vector<128x128xbf16>, vector<16x128xf32> -> vector<16x128xf32>
    %426 = vector.extract_strided_slice %391 {offsets = [16, 0], sizes = [16, 128], strides = [1, 1]} : vector<64x128xf32> to vector<16x128xf32>
    %cst_159 = arith.constant dense<0.000000e+00> : vector<128xf32>
    %427 = vector.multi_reduction <add>, %426, %cst_159 [0] : vector<16x128xf32> to vector<128xf32>
    %428 = vector.shape_cast %427 : vector<128xf32> to vector<1x128xf32>
    %429 = vector.extract_strided_slice %384 {offsets = [16, 0], sizes = [16, 128], strides = [1, 1]} : vector<64x128xf32> to vector<16x128xf32>
    %430 = vector.broadcast %428 : vector<1x128xf32> to vector<16x128xf32>
    %431 = arith.mulf %429, %430 : vector<16x128xf32>
    %432 = arith.truncf %431 : vector<16x128xf32> to vector<16x128xbf16>
    %cst_160 = arith.constant dense<0.000000e+00> : vector<16x128xf32>
    %433 = tpu.matmul %432, %3, %cst_160 {dimension_numbers = #tpu.dot_dimension_numbers<[1], [0], [0], [1], [0, 0, 1, 1], [], []>} : vector<16x128xbf16>, vector<128x128xbf16>, vector<16x128xf32> -> vector<16x128xf32>
    %cst_161 = arith.constant 9.99999997E-7 : f32
    %434 = vector.broadcast %cst_161 : f32 to vector<16x128xf32>
    %435 = arith.addf %433, %434 : vector<16x128xf32>
    %436 = tpu.reciprocal %435 {approx = true} : vector<16x128xf32> -> vector<16x128xf32>
    %cst_162 = arith.constant 1.600000e+01 : f32
    %437 = vector.broadcast %cst_162 : f32 to vector<16x128xf32>
    %438 = arith.mulf %437, %436 : vector<16x128xf32>
    %439 = arith.mulf %425, %438 : vector<16x128xf32>
    %440 = vector.extract_strided_slice %396 {offsets = [32, 0], sizes = [16, 128], strides = [1, 1]} : vector<64x128xbf16> to vector<16x128xbf16>
    %441 = vector.extract_strided_slice %397 {offsets = [32, 0], sizes = [16, 128], strides = [1, 1]} : vector<64x128xbf16> to vector<16x128xbf16>
    %442 = vector.extract_strided_slice %395 {offsets = [32, 0], sizes = [16, 128], strides = [1, 1]} : vector<64x128xbf16> to vector<16x128xbf16>
    %cst_163 = arith.constant dense<0.000000e+00> : vector<128x128xf32>
    %443 = tpu.matmul %440, %441, %cst_163 {dimension_numbers = #tpu.dot_dimension_numbers<[0], [0], [1], [1], [0, 1, 1, 1], [], []>} : vector<16x128xbf16>, vector<16x128xbf16>, vector<128x128xf32> -> vector<128x128xf32>
    %444 = arith.mulf %443, %2 : vector<128x128xf32>
    %445 = arith.truncf %444 : vector<128x128xf32> to vector<128x128xbf16>
    %cst_164 = arith.constant dense<0.000000e+00> : vector<16x128xf32>
    %446 = tpu.matmul %442, %445, %cst_164 {dimension_numbers = #tpu.dot_dimension_numbers<[1], [0], [0], [1], [0, 0, 1, 1], [], []>} : vector<16x128xbf16>, vector<128x128xbf16>, vector<16x128xf32> -> vector<16x128xf32>
    %447 = vector.extract_strided_slice %391 {offsets = [32, 0], sizes = [16, 128], strides = [1, 1]} : vector<64x128xf32> to vector<16x128xf32>
    %cst_165 = arith.constant dense<0.000000e+00> : vector<128xf32>
    %448 = vector.multi_reduction <add>, %447, %cst_165 [0] : vector<16x128xf32> to vector<128xf32>
    %449 = vector.shape_cast %448 : vector<128xf32> to vector<1x128xf32>
    %450 = vector.extract_strided_slice %384 {offsets = [32, 0], sizes = [16, 128], strides = [1, 1]} : vector<64x128xf32> to vector<16x128xf32>
    %451 = vector.broadcast %449 : vector<1x128xf32> to vector<16x128xf32>
    %452 = arith.mulf %450, %451 : vector<16x128xf32>
    %453 = arith.truncf %452 : vector<16x128xf32> to vector<16x128xbf16>
    %cst_166 = arith.constant dense<0.000000e+00> : vector<16x128xf32>
    %454 = tpu.matmul %453, %3, %cst_166 {dimension_numbers = #tpu.dot_dimension_numbers<[1], [0], [0], [1], [0, 0, 1, 1], [], []>} : vector<16x128xbf16>, vector<128x128xbf16>, vector<16x128xf32> -> vector<16x128xf32>
    %cst_167 = arith.constant 9.99999997E-7 : f32
    %455 = vector.broadcast %cst_167 : f32 to vector<16x128xf32>
    %456 = arith.addf %454, %455 : vector<16x128xf32>
    %457 = tpu.reciprocal %456 {approx = true} : vector<16x128xf32> -> vector<16x128xf32>
    %cst_168 = arith.constant 1.600000e+01 : f32
    %458 = vector.broadcast %cst_168 : f32 to vector<16x128xf32>
    %459 = arith.mulf %458, %457 : vector<16x128xf32>
    %460 = arith.mulf %446, %459 : vector<16x128xf32>
    %461 = vector.extract_strided_slice %396 {offsets = [48, 0], sizes = [16, 128], strides = [1, 1]} : vector<64x128xbf16> to vector<16x128xbf16>
    %462 = vector.extract_strided_slice %397 {offsets = [48, 0], sizes = [16, 128], strides = [1, 1]} : vector<64x128xbf16> to vector<16x128xbf16>
    %463 = vector.extract_strided_slice %395 {offsets = [48, 0], sizes = [16, 128], strides = [1, 1]} : vector<64x128xbf16> to vector<16x128xbf16>
    %cst_169 = arith.constant dense<0.000000e+00> : vector<128x128xf32>
    %464 = tpu.matmul %461, %462, %cst_169 {dimension_numbers = #tpu.dot_dimension_numbers<[0], [0], [1], [1], [0, 1, 1, 1], [], []>} : vector<16x128xbf16>, vector<16x128xbf16>, vector<128x128xf32> -> vector<128x128xf32>
    %465 = arith.mulf %464, %2 : vector<128x128xf32>
    %466 = arith.truncf %465 : vector<128x128xf32> to vector<128x128xbf16>
    %cst_170 = arith.constant dense<0.000000e+00> : vector<16x128xf32>
    %467 = tpu.matmul %463, %466, %cst_170 {dimension_numbers = #tpu.dot_dimension_numbers<[1], [0], [0], [1], [0, 0, 1, 1], [], []>} : vector<16x128xbf16>, vector<128x128xbf16>, vector<16x128xf32> -> vector<16x128xf32>
    %468 = vector.extract_strided_slice %391 {offsets = [48, 0], sizes = [16, 128], strides = [1, 1]} : vector<64x128xf32> to vector<16x128xf32>
    %cst_171 = arith.constant dense<0.000000e+00> : vector<128xf32>
    %469 = vector.multi_reduction <add>, %468, %cst_171 [0] : vector<16x128xf32> to vector<128xf32>
    %470 = vector.shape_cast %469 : vector<128xf32> to vector<1x128xf32>
    %471 = vector.extract_strided_slice %384 {offsets = [48, 0], sizes = [16, 128], strides = [1, 1]} : vector<64x128xf32> to vector<16x128xf32>
    %472 = vector.broadcast %470 : vector<1x128xf32> to vector<16x128xf32>
    %473 = arith.mulf %471, %472 : vector<16x128xf32>
    %474 = arith.truncf %473 : vector<16x128xf32> to vector<16x128xbf16>
    %cst_172 = arith.constant dense<0.000000e+00> : vector<16x128xf32>
    %475 = tpu.matmul %474, %3, %cst_172 {dimension_numbers = #tpu.dot_dimension_numbers<[1], [0], [0], [1], [0, 0, 1, 1], [], []>} : vector<16x128xbf16>, vector<128x128xbf16>, vector<16x128xf32> -> vector<16x128xf32>
    %cst_173 = arith.constant 9.99999997E-7 : f32
    %476 = vector.broadcast %cst_173 : f32 to vector<16x128xf32>
    %477 = arith.addf %475, %476 : vector<16x128xf32>
    %478 = tpu.reciprocal %477 {approx = true} : vector<16x128xf32> -> vector<16x128xf32>
    %cst_174 = arith.constant 1.600000e+01 : f32
    %479 = vector.broadcast %cst_174 : f32 to vector<16x128xf32>
    %480 = arith.mulf %479, %478 : vector<16x128xf32>
    %481 = arith.mulf %467, %480 : vector<16x128xf32>
    %482 = tpu.concatenate %418, %439, %460, %481 in 0 : vector<16x128xf32>, vector<16x128xf32>, vector<16x128xf32>, vector<16x128xf32> -> vector<64x128xf32>
    %483 = arith.truncf %482 : vector<64x128xf32> to vector<64x128xbf16>
    %cst_175 = arith.constant dense<0.000000e+00> : vector<64x128xf32>
    %484 = tpu.matmul %483, %363, %cst_175 {dimension_numbers = #tpu.dot_dimension_numbers<[1], [0], [0], [1], [0, 0, 1, 1], [], []>} : vector<64x128xbf16>, vector<128x128xbf16>, vector<64x128xf32> -> vector<64x128xf32>
    %cst_176 = arith.constant dense<0.000000e+00> : vector<64xf32>
    %485 = vector.multi_reduction <add>, %484, %cst_176 [1] : vector<64x128xf32> to vector<64xf32>
    %486 = vector.shape_cast %485 : vector<64xf32> to vector<64x1xf32>
    %cst_177 = arith.constant 1.280000e+02 : f32
    %487 = vector.broadcast %cst_177 : f32 to vector<64x1xf32>
    %488 = arith.divf %486, %487 : vector<64x1xf32>
    %489 = vector.broadcast %488 : vector<64x1xf32> to vector<64x128xf32>
    %490 = arith.subf %484, %489 : vector<64x128xf32>
    %491 = arith.mulf %490, %490 : vector<64x128xf32>
    %cst_178 = arith.constant dense<0.000000e+00> : vector<64xf32>
    %492 = vector.multi_reduction <add>, %491, %cst_178 [1] : vector<64x128xf32> to vector<64xf32>
    %493 = vector.shape_cast %492 : vector<64xf32> to vector<64x1xf32>
    %cst_179 = arith.constant 1.280000e+02 : f32
    %494 = vector.broadcast %cst_179 : f32 to vector<64x1xf32>
    %495 = arith.divf %493, %494 : vector<64x1xf32>
    %496 = vector.broadcast %488 : vector<64x1xf32> to vector<64x128xf32>
    %497 = arith.subf %484, %496 : vector<64x128xf32>
    %cst_180 = arith.constant 9.99999974E-6 : f32
    %498 = vector.broadcast %cst_180 : f32 to vector<64x1xf32>
    %499 = arith.addf %495, %498 : vector<64x1xf32>
    %500 = math.rsqrt %499 : vector<64x1xf32>
    %501 = vector.broadcast %500 : vector<64x1xf32> to vector<64x128xf32>
    %502 = arith.mulf %497, %501 : vector<64x128xf32>
    %503 = vector.broadcast %372 : vector<1x128xf32> to vector<64x128xf32>
    %504 = arith.mulf %502, %503 : vector<64x128xf32>
    %505 = vector.broadcast %373 : vector<1x128xf32> to vector<64x128xf32>
    %506 = arith.addf %504, %505 : vector<64x128xf32>
    %cst_181 = arith.constant dense<0.000000e+00> : vector<64x256xf32>
    %507 = tpu.matmul %376, %365, %cst_181 {dimension_numbers = #tpu.dot_dimension_numbers<[1], [0], [0], [1], [0, 0, 1, 1], [], []>} : vector<64x128xbf16>, vector<128x256xbf16>, vector<64x256xf32> -> vector<64x256xf32>
    %508 = arith.truncf %506 : vector<64x128xf32> to vector<64x128xbf16>
    %cst_182 = arith.constant dense<0.000000e+00> : vector<64x256xf32>
    %509 = tpu.matmul %508, %367, %cst_182 {dimension_numbers = #tpu.dot_dimension_numbers<[1], [0], [0], [1], [0, 0, 1, 1], [], []>} : vector<64x128xbf16>, vector<128x256xbf16>, vector<64x256xf32> -> vector<64x256xf32>
    %510 = arith.addf %507, %509 : vector<64x256xf32>
    %cst_183 = arith.constant 0.000000e+00 : f32
    %511 = vector.broadcast %cst_183 : f32 to vector<64x256xf32>
    %512 = arith.maximumf %510, %511 : vector<64x256xf32>
    %513 = arith.truncf %512 : vector<64x256xf32> to vector<64x256xbf16>
    %cst_184 = arith.constant dense<0.000000e+00> : vector<64x128xf32>
    %514 = tpu.matmul %513, %369, %cst_184 {dimension_numbers = #tpu.dot_dimension_numbers<[1], [0], [0], [1], [0, 0, 1, 1], [], []>} : vector<64x256xbf16>, vector<256x128xbf16>, vector<64x128xf32> -> vector<64x128xf32>
    %cst_185 = arith.constant dense<0.000000e+00> : vector<64xf32>
    %515 = vector.multi_reduction <add>, %514, %cst_185 [1] : vector<64x128xf32> to vector<64xf32>
    %516 = vector.shape_cast %515 : vector<64xf32> to vector<64x1xf32>
    %cst_186 = arith.constant 1.280000e+02 : f32
    %517 = vector.broadcast %cst_186 : f32 to vector<64x1xf32>
    %518 = arith.divf %516, %517 : vector<64x1xf32>
    %519 = vector.broadcast %518 : vector<64x1xf32> to vector<64x128xf32>
    %520 = arith.subf %514, %519 : vector<64x128xf32>
    %521 = arith.mulf %520, %520 : vector<64x128xf32>
    %cst_187 = arith.constant dense<0.000000e+00> : vector<64xf32>
    %522 = vector.multi_reduction <add>, %521, %cst_187 [1] : vector<64x128xf32> to vector<64xf32>
    %523 = vector.shape_cast %522 : vector<64xf32> to vector<64x1xf32>
    %cst_188 = arith.constant 1.280000e+02 : f32
    %524 = vector.broadcast %cst_188 : f32 to vector<64x1xf32>
    %525 = arith.divf %523, %524 : vector<64x1xf32>
    %526 = vector.broadcast %518 : vector<64x1xf32> to vector<64x128xf32>
    %527 = arith.subf %514, %526 : vector<64x128xf32>
    %cst_189 = arith.constant 9.99999974E-6 : f32
    %528 = vector.broadcast %cst_189 : f32 to vector<64x1xf32>
    %529 = arith.addf %525, %528 : vector<64x1xf32>
    %530 = math.rsqrt %529 : vector<64x1xf32>
    %531 = vector.broadcast %530 : vector<64x1xf32> to vector<64x128xf32>
    %532 = arith.mulf %527, %531 : vector<64x128xf32>
    %533 = vector.broadcast %374 : vector<1x128xf32> to vector<64x128xf32>
    %534 = arith.mulf %532, %533 : vector<64x128xf32>
    %535 = vector.broadcast %375 : vector<1x128xf32> to vector<64x128xf32>
    %536 = arith.addf %534, %535 : vector<64x128xf32>
    %537 = arith.addf %359, %536 : vector<64x128xf32>
    %c3 = arith.constant 3 : index
    %c0_190 = arith.constant 0 : index
    %c0_191 = arith.constant 0 : index
    %538 = vector.load %arg3[%c3, %c0_190, %c0_191] : memref<4x128x384xbf16, #tpu.memory_space<vmem>>, vector<1x128x384xbf16>
    %539 = vector.shape_cast %538 : vector<1x128x384xbf16> to vector<128x384xbf16>
    %c3_192 = arith.constant 3 : index
    %c0_193 = arith.constant 0 : index
    %c0_194 = arith.constant 0 : index
    %540 = vector.load %arg4[%c3_192, %c0_193, %c0_194] : memref<4x128x128xbf16, #tpu.memory_space<vmem>>, vector<1x128x128xbf16>
    %541 = vector.shape_cast %540 : vector<1x128x128xbf16> to vector<128x128xbf16>
    %c3_195 = arith.constant 3 : index
    %c0_196 = arith.constant 0 : index
    %c0_197 = arith.constant 0 : index
    %542 = vector.load %arg5[%c3_195, %c0_196, %c0_197] : memref<4x128x256xbf16, #tpu.memory_space<vmem>>, vector<1x128x256xbf16>
    %543 = vector.shape_cast %542 : vector<1x128x256xbf16> to vector<128x256xbf16>
    %c3_198 = arith.constant 3 : index
    %c0_199 = arith.constant 0 : index
    %c0_200 = arith.constant 0 : index
    %544 = vector.load %arg6[%c3_198, %c0_199, %c0_200] : memref<4x128x256xbf16, #tpu.memory_space<vmem>>, vector<1x128x256xbf16>
    %545 = vector.shape_cast %544 : vector<1x128x256xbf16> to vector<128x256xbf16>
    %c3_201 = arith.constant 3 : index
    %c0_202 = arith.constant 0 : index
    %c0_203 = arith.constant 0 : index
    %546 = vector.load %arg7[%c3_201, %c0_202, %c0_203] : memref<4x256x128xbf16, #tpu.memory_space<vmem>>, vector<1x256x128xbf16>
    %547 = vector.shape_cast %546 : vector<1x256x128xbf16> to vector<256x128xbf16>
    %c3_204 = arith.constant 3 : index
    %c0_205 = arith.constant 0 : index
    %c0_206 = arith.constant 0 : index
    %548 = vector.load %arg8[%c3_204, %c0_205, %c0_206] : memref<4x4x128xf32, #tpu.memory_space<vmem>>, vector<1x4x128xf32>
    %549 = vector.shape_cast %548 : vector<1x4x128xf32> to vector<4x128xf32>
    %550 = vector.extract_strided_slice %549 {offsets = [0, 0], sizes = [1, 128], strides = [1, 1]} : vector<4x128xf32> to vector<1x128xf32>
    %551 = vector.extract_strided_slice %549 {offsets = [1, 0], sizes = [1, 128], strides = [1, 1]} : vector<4x128xf32> to vector<1x128xf32>
    %552 = vector.extract_strided_slice %549 {offsets = [2, 0], sizes = [1, 128], strides = [1, 1]} : vector<4x128xf32> to vector<1x128xf32>
    %553 = vector.extract_strided_slice %549 {offsets = [3, 0], sizes = [1, 128], strides = [1, 1]} : vector<4x128xf32> to vector<1x128xf32>
    %554 = arith.truncf %537 : vector<64x128xf32> to vector<64x128xbf16>
    %cst_207 = arith.constant dense<0.000000e+00> : vector<64x384xf32>
    %555 = tpu.matmul %554, %539, %cst_207 {dimension_numbers = #tpu.dot_dimension_numbers<[1], [0], [0], [1], [0, 0, 1, 1], [], []>} : vector<64x128xbf16>, vector<128x384xbf16>, vector<64x384xf32> -> vector<64x384xf32>
    %556 = vector.extract_strided_slice %555 {offsets = [0, 0], sizes = [64, 128], strides = [1, 1]} : vector<64x384xf32> to vector<64x128xf32>
    %cst_208 = arith.constant 0.000000e+00 : f32
    %557 = vector.broadcast %cst_208 : f32 to vector<64x128xf32>
    %558 = arith.cmpf ogt, %556, %557 : vector<64x128xf32>
    %cst_209 = arith.constant 1.000000e+00 : f32
    %559 = vector.broadcast %cst_209 : f32 to vector<64x128xf32>
    %560 = arith.addf %556, %559 : vector<64x128xf32>
    %561 = math.exp %556 : vector<64x128xf32>
    %562 = arith.select %558, %560, %561 : vector<64x128xi1>, vector<64x128xf32>
    %563 = vector.extract_strided_slice %555 {offsets = [0, 128], sizes = [64, 128], strides = [1, 1]} : vector<64x384xf32> to vector<64x128xf32>
    %cst_210 = arith.constant 0.000000e+00 : f32
    %564 = vector.broadcast %cst_210 : f32 to vector<64x128xf32>
    %565 = arith.cmpf ogt, %563, %564 : vector<64x128xf32>
    %cst_211 = arith.constant 1.000000e+00 : f32
    %566 = vector.broadcast %cst_211 : f32 to vector<64x128xf32>
    %567 = arith.addf %563, %566 : vector<64x128xf32>
    %568 = math.exp %563 : vector<64x128xf32>
    %569 = arith.select %565, %567, %568 : vector<64x128xi1>, vector<64x128xf32>
    %570 = vector.extract_strided_slice %555 {offsets = [0, 256], sizes = [64, 128], strides = [1, 1]} : vector<64x384xf32> to vector<64x128xf32>
    %cst_212 = arith.constant 6.250000e-02 : f32
    %571 = vector.broadcast %cst_212 : f32 to vector<64x128xf32>
    %572 = arith.mulf %570, %571 : vector<64x128xf32>
    %573 = arith.truncf %562 : vector<64x128xf32> to vector<64x128xbf16>
    %574 = arith.truncf %569 : vector<64x128xf32> to vector<64x128xbf16>
    %575 = arith.truncf %572 : vector<64x128xf32> to vector<64x128xbf16>
    %576 = vector.extract_strided_slice %574 {offsets = [0, 0], sizes = [16, 128], strides = [1, 1]} : vector<64x128xbf16> to vector<16x128xbf16>
    %577 = vector.extract_strided_slice %575 {offsets = [0, 0], sizes = [16, 128], strides = [1, 1]} : vector<64x128xbf16> to vector<16x128xbf16>
    %578 = vector.extract_strided_slice %573 {offsets = [0, 0], sizes = [16, 128], strides = [1, 1]} : vector<64x128xbf16> to vector<16x128xbf16>
    %cst_213 = arith.constant dense<0.000000e+00> : vector<128x128xf32>
    %579 = tpu.matmul %576, %577, %cst_213 {dimension_numbers = #tpu.dot_dimension_numbers<[0], [0], [1], [1], [0, 1, 1, 1], [], []>} : vector<16x128xbf16>, vector<16x128xbf16>, vector<128x128xf32> -> vector<128x128xf32>
    %580 = arith.mulf %579, %2 : vector<128x128xf32>
    %581 = arith.truncf %580 : vector<128x128xf32> to vector<128x128xbf16>
    %cst_214 = arith.constant dense<0.000000e+00> : vector<16x128xf32>
    %582 = tpu.matmul %578, %581, %cst_214 {dimension_numbers = #tpu.dot_dimension_numbers<[1], [0], [0], [1], [0, 0, 1, 1], [], []>} : vector<16x128xbf16>, vector<128x128xbf16>, vector<16x128xf32> -> vector<16x128xf32>
    %583 = vector.extract_strided_slice %569 {offsets = [0, 0], sizes = [16, 128], strides = [1, 1]} : vector<64x128xf32> to vector<16x128xf32>
    %cst_215 = arith.constant dense<0.000000e+00> : vector<128xf32>
    %584 = vector.multi_reduction <add>, %583, %cst_215 [0] : vector<16x128xf32> to vector<128xf32>
    %585 = vector.shape_cast %584 : vector<128xf32> to vector<1x128xf32>
    %586 = vector.extract_strided_slice %562 {offsets = [0, 0], sizes = [16, 128], strides = [1, 1]} : vector<64x128xf32> to vector<16x128xf32>
    %587 = vector.broadcast %585 : vector<1x128xf32> to vector<16x128xf32>
    %588 = arith.mulf %586, %587 : vector<16x128xf32>
    %589 = arith.truncf %588 : vector<16x128xf32> to vector<16x128xbf16>
    %cst_216 = arith.constant dense<0.000000e+00> : vector<16x128xf32>
    %590 = tpu.matmul %589, %3, %cst_216 {dimension_numbers = #tpu.dot_dimension_numbers<[1], [0], [0], [1], [0, 0, 1, 1], [], []>} : vector<16x128xbf16>, vector<128x128xbf16>, vector<16x128xf32> -> vector<16x128xf32>
    %cst_217 = arith.constant 9.99999997E-7 : f32
    %591 = vector.broadcast %cst_217 : f32 to vector<16x128xf32>
    %592 = arith.addf %590, %591 : vector<16x128xf32>
    %593 = tpu.reciprocal %592 {approx = true} : vector<16x128xf32> -> vector<16x128xf32>
    %cst_218 = arith.constant 1.600000e+01 : f32
    %594 = vector.broadcast %cst_218 : f32 to vector<16x128xf32>
    %595 = arith.mulf %594, %593 : vector<16x128xf32>
    %596 = arith.mulf %582, %595 : vector<16x128xf32>
    %597 = vector.extract_strided_slice %574 {offsets = [16, 0], sizes = [16, 128], strides = [1, 1]} : vector<64x128xbf16> to vector<16x128xbf16>
    %598 = vector.extract_strided_slice %575 {offsets = [16, 0], sizes = [16, 128], strides = [1, 1]} : vector<64x128xbf16> to vector<16x128xbf16>
    %599 = vector.extract_strided_slice %573 {offsets = [16, 0], sizes = [16, 128], strides = [1, 1]} : vector<64x128xbf16> to vector<16x128xbf16>
    %cst_219 = arith.constant dense<0.000000e+00> : vector<128x128xf32>
    %600 = tpu.matmul %597, %598, %cst_219 {dimension_numbers = #tpu.dot_dimension_numbers<[0], [0], [1], [1], [0, 1, 1, 1], [], []>} : vector<16x128xbf16>, vector<16x128xbf16>, vector<128x128xf32> -> vector<128x128xf32>
    %601 = arith.mulf %600, %2 : vector<128x128xf32>
    %602 = arith.truncf %601 : vector<128x128xf32> to vector<128x128xbf16>
    %cst_220 = arith.constant dense<0.000000e+00> : vector<16x128xf32>
    %603 = tpu.matmul %599, %602, %cst_220 {dimension_numbers = #tpu.dot_dimension_numbers<[1], [0], [0], [1], [0, 0, 1, 1], [], []>} : vector<16x128xbf16>, vector<128x128xbf16>, vector<16x128xf32> -> vector<16x128xf32>
    %604 = vector.extract_strided_slice %569 {offsets = [16, 0], sizes = [16, 128], strides = [1, 1]} : vector<64x128xf32> to vector<16x128xf32>
    %cst_221 = arith.constant dense<0.000000e+00> : vector<128xf32>
    %605 = vector.multi_reduction <add>, %604, %cst_221 [0] : vector<16x128xf32> to vector<128xf32>
    %606 = vector.shape_cast %605 : vector<128xf32> to vector<1x128xf32>
    %607 = vector.extract_strided_slice %562 {offsets = [16, 0], sizes = [16, 128], strides = [1, 1]} : vector<64x128xf32> to vector<16x128xf32>
    %608 = vector.broadcast %606 : vector<1x128xf32> to vector<16x128xf32>
    %609 = arith.mulf %607, %608 : vector<16x128xf32>
    %610 = arith.truncf %609 : vector<16x128xf32> to vector<16x128xbf16>
    %cst_222 = arith.constant dense<0.000000e+00> : vector<16x128xf32>
    %611 = tpu.matmul %610, %3, %cst_222 {dimension_numbers = #tpu.dot_dimension_numbers<[1], [0], [0], [1], [0, 0, 1, 1], [], []>} : vector<16x128xbf16>, vector<128x128xbf16>, vector<16x128xf32> -> vector<16x128xf32>
    %cst_223 = arith.constant 9.99999997E-7 : f32
    %612 = vector.broadcast %cst_223 : f32 to vector<16x128xf32>
    %613 = arith.addf %611, %612 : vector<16x128xf32>
    %614 = tpu.reciprocal %613 {approx = true} : vector<16x128xf32> -> vector<16x128xf32>
    %cst_224 = arith.constant 1.600000e+01 : f32
    %615 = vector.broadcast %cst_224 : f32 to vector<16x128xf32>
    %616 = arith.mulf %615, %614 : vector<16x128xf32>
    %617 = arith.mulf %603, %616 : vector<16x128xf32>
    %618 = vector.extract_strided_slice %574 {offsets = [32, 0], sizes = [16, 128], strides = [1, 1]} : vector<64x128xbf16> to vector<16x128xbf16>
    %619 = vector.extract_strided_slice %575 {offsets = [32, 0], sizes = [16, 128], strides = [1, 1]} : vector<64x128xbf16> to vector<16x128xbf16>
    %620 = vector.extract_strided_slice %573 {offsets = [32, 0], sizes = [16, 128], strides = [1, 1]} : vector<64x128xbf16> to vector<16x128xbf16>
    %cst_225 = arith.constant dense<0.000000e+00> : vector<128x128xf32>
    %621 = tpu.matmul %618, %619, %cst_225 {dimension_numbers = #tpu.dot_dimension_numbers<[0], [0], [1], [1], [0, 1, 1, 1], [], []>} : vector<16x128xbf16>, vector<16x128xbf16>, vector<128x128xf32> -> vector<128x128xf32>
    %622 = arith.mulf %621, %2 : vector<128x128xf32>
    %623 = arith.truncf %622 : vector<128x128xf32> to vector<128x128xbf16>
    %cst_226 = arith.constant dense<0.000000e+00> : vector<16x128xf32>
    %624 = tpu.matmul %620, %623, %cst_226 {dimension_numbers = #tpu.dot_dimension_numbers<[1], [0], [0], [1], [0, 0, 1, 1], [], []>} : vector<16x128xbf16>, vector<128x128xbf16>, vector<16x128xf32> -> vector<16x128xf32>
    %625 = vector.extract_strided_slice %569 {offsets = [32, 0], sizes = [16, 128], strides = [1, 1]} : vector<64x128xf32> to vector<16x128xf32>
    %cst_227 = arith.constant dense<0.000000e+00> : vector<128xf32>
    %626 = vector.multi_reduction <add>, %625, %cst_227 [0] : vector<16x128xf32> to vector<128xf32>
    %627 = vector.shape_cast %626 : vector<128xf32> to vector<1x128xf32>
    %628 = vector.extract_strided_slice %562 {offsets = [32, 0], sizes = [16, 128], strides = [1, 1]} : vector<64x128xf32> to vector<16x128xf32>
    %629 = vector.broadcast %627 : vector<1x128xf32> to vector<16x128xf32>
    %630 = arith.mulf %628, %629 : vector<16x128xf32>
    %631 = arith.truncf %630 : vector<16x128xf32> to vector<16x128xbf16>
    %cst_228 = arith.constant dense<0.000000e+00> : vector<16x128xf32>
    %632 = tpu.matmul %631, %3, %cst_228 {dimension_numbers = #tpu.dot_dimension_numbers<[1], [0], [0], [1], [0, 0, 1, 1], [], []>} : vector<16x128xbf16>, vector<128x128xbf16>, vector<16x128xf32> -> vector<16x128xf32>
    %cst_229 = arith.constant 9.99999997E-7 : f32
    %633 = vector.broadcast %cst_229 : f32 to vector<16x128xf32>
    %634 = arith.addf %632, %633 : vector<16x128xf32>
    %635 = tpu.reciprocal %634 {approx = true} : vector<16x128xf32> -> vector<16x128xf32>
    %cst_230 = arith.constant 1.600000e+01 : f32
    %636 = vector.broadcast %cst_230 : f32 to vector<16x128xf32>
    %637 = arith.mulf %636, %635 : vector<16x128xf32>
    %638 = arith.mulf %624, %637 : vector<16x128xf32>
    %639 = vector.extract_strided_slice %574 {offsets = [48, 0], sizes = [16, 128], strides = [1, 1]} : vector<64x128xbf16> to vector<16x128xbf16>
    %640 = vector.extract_strided_slice %575 {offsets = [48, 0], sizes = [16, 128], strides = [1, 1]} : vector<64x128xbf16> to vector<16x128xbf16>
    %641 = vector.extract_strided_slice %573 {offsets = [48, 0], sizes = [16, 128], strides = [1, 1]} : vector<64x128xbf16> to vector<16x128xbf16>
    %cst_231 = arith.constant dense<0.000000e+00> : vector<128x128xf32>
    %642 = tpu.matmul %639, %640, %cst_231 {dimension_numbers = #tpu.dot_dimension_numbers<[0], [0], [1], [1], [0, 1, 1, 1], [], []>} : vector<16x128xbf16>, vector<16x128xbf16>, vector<128x128xf32> -> vector<128x128xf32>
    %643 = arith.mulf %642, %2 : vector<128x128xf32>
    %644 = arith.truncf %643 : vector<128x128xf32> to vector<128x128xbf16>
    %cst_232 = arith.constant dense<0.000000e+00> : vector<16x128xf32>
    %645 = tpu.matmul %641, %644, %cst_232 {dimension_numbers = #tpu.dot_dimension_numbers<[1], [0], [0], [1], [0, 0, 1, 1], [], []>} : vector<16x128xbf16>, vector<128x128xbf16>, vector<16x128xf32> -> vector<16x128xf32>
    %646 = vector.extract_strided_slice %569 {offsets = [48, 0], sizes = [16, 128], strides = [1, 1]} : vector<64x128xf32> to vector<16x128xf32>
    %cst_233 = arith.constant dense<0.000000e+00> : vector<128xf32>
    %647 = vector.multi_reduction <add>, %646, %cst_233 [0] : vector<16x128xf32> to vector<128xf32>
    %648 = vector.shape_cast %647 : vector<128xf32> to vector<1x128xf32>
    %649 = vector.extract_strided_slice %562 {offsets = [48, 0], sizes = [16, 128], strides = [1, 1]} : vector<64x128xf32> to vector<16x128xf32>
    %650 = vector.broadcast %648 : vector<1x128xf32> to vector<16x128xf32>
    %651 = arith.mulf %649, %650 : vector<16x128xf32>
    %652 = arith.truncf %651 : vector<16x128xf32> to vector<16x128xbf16>
    %cst_234 = arith.constant dense<0.000000e+00> : vector<16x128xf32>
    %653 = tpu.matmul %652, %3, %cst_234 {dimension_numbers = #tpu.dot_dimension_numbers<[1], [0], [0], [1], [0, 0, 1, 1], [], []>} : vector<16x128xbf16>, vector<128x128xbf16>, vector<16x128xf32> -> vector<16x128xf32>
    %cst_235 = arith.constant 9.99999997E-7 : f32
    %654 = vector.broadcast %cst_235 : f32 to vector<16x128xf32>
    %655 = arith.addf %653, %654 : vector<16x128xf32>
    %656 = tpu.reciprocal %655 {approx = true} : vector<16x128xf32> -> vector<16x128xf32>
    %cst_236 = arith.constant 1.600000e+01 : f32
    %657 = vector.broadcast %cst_236 : f32 to vector<16x128xf32>
    %658 = arith.mulf %657, %656 : vector<16x128xf32>
    %659 = arith.mulf %645, %658 : vector<16x128xf32>
    %660 = tpu.concatenate %596, %617, %638, %659 in 0 : vector<16x128xf32>, vector<16x128xf32>, vector<16x128xf32>, vector<16x128xf32> -> vector<64x128xf32>
    %661 = arith.truncf %660 : vector<64x128xf32> to vector<64x128xbf16>
    %cst_237 = arith.constant dense<0.000000e+00> : vector<64x128xf32>
    %662 = tpu.matmul %661, %541, %cst_237 {dimension_numbers = #tpu.dot_dimension_numbers<[1], [0], [0], [1], [0, 0, 1, 1], [], []>} : vector<64x128xbf16>, vector<128x128xbf16>, vector<64x128xf32> -> vector<64x128xf32>
    %cst_238 = arith.constant dense<0.000000e+00> : vector<64xf32>
    %663 = vector.multi_reduction <add>, %662, %cst_238 [1] : vector<64x128xf32> to vector<64xf32>
    %664 = vector.shape_cast %663 : vector<64xf32> to vector<64x1xf32>
    %cst_239 = arith.constant 1.280000e+02 : f32
    %665 = vector.broadcast %cst_239 : f32 to vector<64x1xf32>
    %666 = arith.divf %664, %665 : vector<64x1xf32>
    %667 = vector.broadcast %666 : vector<64x1xf32> to vector<64x128xf32>
    %668 = arith.subf %662, %667 : vector<64x128xf32>
    %669 = arith.mulf %668, %668 : vector<64x128xf32>
    %cst_240 = arith.constant dense<0.000000e+00> : vector<64xf32>
    %670 = vector.multi_reduction <add>, %669, %cst_240 [1] : vector<64x128xf32> to vector<64xf32>
    %671 = vector.shape_cast %670 : vector<64xf32> to vector<64x1xf32>
    %cst_241 = arith.constant 1.280000e+02 : f32
    %672 = vector.broadcast %cst_241 : f32 to vector<64x1xf32>
    %673 = arith.divf %671, %672 : vector<64x1xf32>
    %674 = vector.broadcast %666 : vector<64x1xf32> to vector<64x128xf32>
    %675 = arith.subf %662, %674 : vector<64x128xf32>
    %cst_242 = arith.constant 9.99999974E-6 : f32
    %676 = vector.broadcast %cst_242 : f32 to vector<64x1xf32>
    %677 = arith.addf %673, %676 : vector<64x1xf32>
    %678 = math.rsqrt %677 : vector<64x1xf32>
    %679 = vector.broadcast %678 : vector<64x1xf32> to vector<64x128xf32>
    %680 = arith.mulf %675, %679 : vector<64x128xf32>
    %681 = vector.broadcast %550 : vector<1x128xf32> to vector<64x128xf32>
    %682 = arith.mulf %680, %681 : vector<64x128xf32>
    %683 = vector.broadcast %551 : vector<1x128xf32> to vector<64x128xf32>
    %684 = arith.addf %682, %683 : vector<64x128xf32>
    %cst_243 = arith.constant dense<0.000000e+00> : vector<64x256xf32>
    %685 = tpu.matmul %554, %543, %cst_243 {dimension_numbers = #tpu.dot_dimension_numbers<[1], [0], [0], [1], [0, 0, 1, 1], [], []>} : vector<64x128xbf16>, vector<128x256xbf16>, vector<64x256xf32> -> vector<64x256xf32>
    %686 = arith.truncf %684 : vector<64x128xf32> to vector<64x128xbf16>
    %cst_244 = arith.constant dense<0.000000e+00> : vector<64x256xf32>
    %687 = tpu.matmul %686, %545, %cst_244 {dimension_numbers = #tpu.dot_dimension_numbers<[1], [0], [0], [1], [0, 0, 1, 1], [], []>} : vector<64x128xbf16>, vector<128x256xbf16>, vector<64x256xf32> -> vector<64x256xf32>
    %688 = arith.addf %685, %687 : vector<64x256xf32>
    %cst_245 = arith.constant 0.000000e+00 : f32
    %689 = vector.broadcast %cst_245 : f32 to vector<64x256xf32>
    %690 = arith.maximumf %688, %689 : vector<64x256xf32>
    %691 = arith.truncf %690 : vector<64x256xf32> to vector<64x256xbf16>
    %cst_246 = arith.constant dense<0.000000e+00> : vector<64x128xf32>
    %692 = tpu.matmul %691, %547, %cst_246 {dimension_numbers = #tpu.dot_dimension_numbers<[1], [0], [0], [1], [0, 0, 1, 1], [], []>} : vector<64x256xbf16>, vector<256x128xbf16>, vector<64x128xf32> -> vector<64x128xf32>
    %cst_247 = arith.constant dense<0.000000e+00> : vector<64xf32>
    %693 = vector.multi_reduction <add>, %692, %cst_247 [1] : vector<64x128xf32> to vector<64xf32>
    %694 = vector.shape_cast %693 : vector<64xf32> to vector<64x1xf32>
    %cst_248 = arith.constant 1.280000e+02 : f32
    %695 = vector.broadcast %cst_248 : f32 to vector<64x1xf32>
    %696 = arith.divf %694, %695 : vector<64x1xf32>
    %697 = vector.broadcast %696 : vector<64x1xf32> to vector<64x128xf32>
    %698 = arith.subf %692, %697 : vector<64x128xf32>
    %699 = arith.mulf %698, %698 : vector<64x128xf32>
    %cst_249 = arith.constant dense<0.000000e+00> : vector<64xf32>
    %700 = vector.multi_reduction <add>, %699, %cst_249 [1] : vector<64x128xf32> to vector<64xf32>
    %701 = vector.shape_cast %700 : vector<64xf32> to vector<64x1xf32>
    %cst_250 = arith.constant 1.280000e+02 : f32
    %702 = vector.broadcast %cst_250 : f32 to vector<64x1xf32>
    %703 = arith.divf %701, %702 : vector<64x1xf32>
    %704 = vector.broadcast %696 : vector<64x1xf32> to vector<64x128xf32>
    %705 = arith.subf %692, %704 : vector<64x128xf32>
    %cst_251 = arith.constant 9.99999974E-6 : f32
    %706 = vector.broadcast %cst_251 : f32 to vector<64x1xf32>
    %707 = arith.addf %703, %706 : vector<64x1xf32>
    %708 = math.rsqrt %707 : vector<64x1xf32>
    %709 = vector.broadcast %708 : vector<64x1xf32> to vector<64x128xf32>
    %710 = arith.mulf %705, %709 : vector<64x128xf32>
    %711 = vector.broadcast %552 : vector<1x128xf32> to vector<64x128xf32>
    %712 = arith.mulf %710, %711 : vector<64x128xf32>
    %713 = vector.broadcast %553 : vector<1x128xf32> to vector<64x128xf32>
    %714 = arith.addf %712, %713 : vector<64x128xf32>
    %715 = arith.addf %537, %714 : vector<64x128xf32>
    %716 = vector.shape_cast %715 : vector<64x128xf32> to vector<4x16x128xf32>
    %c0_252 = arith.constant 0 : index
    %c0_253 = arith.constant 0 : index
    %c0_254 = arith.constant 0 : index
    %717 = vector.load %arg9[%c0_252, %c0_253, %c0_254] : memref<4x16x128xf32, #tpu.memory_space<vmem>>, vector<4x16x128xf32>
    tpu.vector_store %arg9[%c0_252, %c0_253, %c0_254], %716 {strides = array<i32>} : memref<4x16x128xf32, #tpu.memory_space<vmem>>, vector<4x16x128xf32>,
    return
  }
  func.func @transform_0(%arg0: i32) -> (i32, i32, i32) {
    %c0_i32 = arith.constant 0 : i32
    %c0_i32_0 = arith.constant 0 : i32
    %c0_i32_1 = arith.constant 0 : i32
    return %arg0, %c0_i32, %c0_i32_0 : i32, i32, i32
  }
  func.func @transform_1(%arg0: i32) -> (i32, i32) {
    %c0_i32 = arith.constant 0 : i32
    %c0_i32_0 = arith.constant 0 : i32
    %c0_i32_1 = arith.constant 0 : i32
    return %c0_i32, %c0_i32_0 : i32, i32
  }
  func.func @transform_2(%arg0: i32) -> (i32, i32, i32) {
    %c0_i32 = arith.constant 0 : i32
    %c0_i32_0 = arith.constant 0 : i32
    %c0_i32_1 = arith.constant 0 : i32
    %c0_i32_2 = arith.constant 0 : i32
    return %c0_i32, %c0_i32_0, %c0_i32_1 : i32, i32, i32
  }
  func.func @transform_3(%arg0: i32) -> (i32, i32, i32) {
    %c0_i32 = arith.constant 0 : i32
    %c0_i32_0 = arith.constant 0 : i32
    %c0_i32_1 = arith.constant 0 : i32
    %c0_i32_2 = arith.constant 0 : i32
    return %c0_i32, %c0_i32_0, %c0_i32_1 : i32, i32, i32
  }
  func.func @transform_4(%arg0: i32) -> (i32, i32, i32) {
    %c0_i32 = arith.constant 0 : i32
    %c0_i32_0 = arith.constant 0 : i32
    %c0_i32_1 = arith.constant 0 : i32
    %c0_i32_2 = arith.constant 0 : i32
    return %c0_i32, %c0_i32_0, %c0_i32_1 : i32, i32, i32
  }
  func.func @transform_5(%arg0: i32) -> (i32, i32, i32) {
    %c0_i32 = arith.constant 0 : i32
    %c0_i32_0 = arith.constant 0 : i32
    %c0_i32_1 = arith.constant 0 : i32
    %c0_i32_2 = arith.constant 0 : i32
    return %c0_i32, %c0_i32_0, %c0_i32_1 : i32, i32, i32
  }
  func.func @transform_6(%arg0: i32) -> (i32, i32, i32) {
    %c0_i32 = arith.constant 0 : i32
    %c0_i32_0 = arith.constant 0 : i32
    %c0_i32_1 = arith.constant 0 : i32
    %c0_i32_2 = arith.constant 0 : i32
    return %c0_i32, %c0_i32_0, %c0_i32_1 : i32, i32, i32
  }
  func.func @transform_7(%arg0: i32) -> (i32, i32, i32) {
    %c0_i32 = arith.constant 0 : i32
    %c0_i32_0 = arith.constant 0 : i32
    %c0_i32_1 = arith.constant 0 : i32
    %c0_i32_2 = arith.constant 0 : i32
    return %c0_i32, %c0_i32_0, %c0_i32_1 : i32, i32, i32
  }
  func.func @transform_8(%arg0: i32) -> (i32, i32, i32) {
    %c0_i32 = arith.constant 0 : i32
    %c0_i32_0 = arith.constant 0 : i32
    %c0_i32_1 = arith.constant 0 : i32
    return %arg0, %c0_i32, %c0_i32_0 : i32, i32, i32
  }
}

</mosaic_0001>

<llo_original>
// kernel: local_feature_transformer.1
$region0: #{local_feature_transformer.1}
  #allocation0 [shape = 'u32[]', space=smem, size = 0x4, offset = 0x4, fixed_abs, tag = 'smem constant byte address 0x4 - core index']
  #allocation1 [shape = 'u32[144,128]{1,0:T(1,128)}', space=vmem, size = 0x12000, scoped, tag = 'internal scratch']
  %s0 = inlined_call_operand.vmem [shape: f32[4,16,128], index: 0, kind: input, shape index: {}]
  %s1 = inlined_call_operand.vmem [shape: f32[128,128], index: 1, kind: input, shape index: {}]
  %s2 = inlined_call_operand.hbm [shape: bf16[4,128,384], index: 2, kind: input, shape index: {}]
  %s3 = inlined_call_operand.hbm [shape: bf16[4,128,128], index: 3, kind: input, shape index: {}]
  %s4 = inlined_call_operand.hbm [shape: bf16[4,128,256], index: 4, kind: input, shape index: {}]
  %s5 = inlined_call_operand.hbm [shape: bf16[4,128,256], index: 5, kind: input, shape index: {}]
  %s6 = inlined_call_operand.hbm [shape: bf16[4,256,128], index: 6, kind: input, shape index: {}]
  %s7 = inlined_call_operand.hbm [shape: f32[4,4,128], index: 7, kind: input, shape index: {}]
  %s8 = inlined_call_operand.vmem [shape: f32[4,16,128], index: 8, kind: output, shape index: {}]
  %s9 = sld [smem:[#allocation0]]
  $region66: #{local_feature_transformer.1} parent=0
    _
  %s11 = ssub.s32 1, %s9
  %s12 = scalar_select 0, %s11, %s9
  $region1: #{local_feature_transformer.1} parent=0
    #allocation2 [shape = 'u8[393216]{0}', space=vmem, size = 0x60000, scoped, tag = 'input window, operand 2, single buffered']
    #allocation3 [shape = 's32[1]{0}', space=sflag, size = 0x4, scoped, tag = 'scoped memory for local_feature_transformer.1']
    #allocation4 [shape = 'u8[131072]{0}', space=vmem, size = 0x20000, scoped, tag = 'input window, operand 3, single buffered']
    #allocation5 [shape = 's32[1]{0}', space=sflag, size = 0x4, scoped, tag = 'scoped memory for local_feature_transformer.1']
    #allocation6 [shape = 'u8[262144]{0}', space=vmem, size = 0x40000, scoped, tag = 'input window, operand 4, single buffered']
    #allocation7 [shape = 'u8[262144]{0}', space=vmem, size = 0x40000, scoped, tag = 'input window, operand 5, single buffered']
    #allocation8 [shape = 's32[1]{0}', space=sflag, size = 0x4, scoped, tag = 'scoped memory for local_feature_transformer.1']
    #allocation9 [shape = 'u8[262144]{0}', space=vmem, size = 0x40000, scoped, tag = 'input window, operand 6, single buffered']
    #allocation10 [shape = 'u8[8192]{0}', space=vmem, size = 0x2000, scoped, tag = 'input window, operand 7, single buffered']
    #allocation11 [shape = 's32[1]{0}', space=sflag, size = 0x4, scoped, tag = 'scoped memory for local_feature_transformer.1']
    %13 = vsyncpa [#allocation3], 0
    %14 = vsyncpa [#allocation5], 0
    %15 = vsyncpa [#allocation8], 0
    %16 = vsyncpa [#allocation11], 0
    // Predicated region
    $region2: #{local_feature_transformer.1} parent=1 // pred_check
      _
    $region3: #{local_feature_transformer.1} parent=1 // pred_check_branch
      %18 = sbr.rel (0) target = $region5
    $region4: #{local_feature_transformer.1} parent=1 // pred_region
      _
    $region5: #{local_feature_transformer.1} parent=1 // pred_fallthru
      _
    // Predicated region
    $region6: #{local_feature_transformer.1} parent=1 // pred_check
      _
    $region7: #{local_feature_transformer.1} parent=1 // pred_check_branch
      %20 = sbr.rel (0) target = $region9
    $region8: #{local_feature_transformer.1} parent=1 // pred_region
      _
    $region9: #{local_feature_transformer.1} parent=1 // pred_fallthru
      _
    // Predicated region
    $region10: #{local_feature_transformer.1} parent=1 // pred_check
      _
    $region11: #{local_feature_transformer.1} parent=1 // pred_check_branch
      %22 = sbr.rel (0) target = $region13
    $region12: #{local_feature_transformer.1} parent=1 // pred_region
      %s24 = ssub.s32 12288, 12288
      %25 = vsyncadd [#allocation3], %s24
      %s26 = sshll.u32 [#allocation2], 4
      %s27 = int_to_ptr.vmem [resolvable:$true] %s26
      %32 = dma.hbm_to_vmem [thread:$0]  %s2, 12288, %s27, [#allocation3], 192, 192, 12
    $region13: #{local_feature_transformer.1} parent=1 // pred_fallthru
      _
    // Predicated region
    $region14: #{local_feature_transformer.1} parent=1 // pred_check
      _
    $region15: #{local_feature_transformer.1} parent=1 // pred_check_branch
      %34 = sbr.rel (0) target = $region17
    $region16: #{local_feature_transformer.1} parent=1 // pred_region
      %s36 = ssub.s32 4096, 4096
      %37 = vsyncadd [#allocation5], %s36
      %s38 = sshll.u32 [#allocation4], 4
      %s39 = int_to_ptr.vmem [resolvable:$true] %s38
      %44 = dma.hbm_to_vmem [thread:$0]  %s3, 4096, %s39, [#allocation5], 64, 64, 4
    $region17: #{local_feature_transformer.1} parent=1 // pred_fallthru
      _
    // Predicated region
    $region18: #{local_feature_transformer.1} parent=1 // pred_check
      _
    $region19: #{local_feature_transformer.1} parent=1 // pred_check_branch
      %46 = sbr.rel (0) target = $region21
    $region20: #{local_feature_transformer.1} parent=1 // pred_region
      %s48 = ssub.s32 8192, 8192
      %49 = vsyncadd [#allocation5], %s48
      %s50 = sshll.u32 [#allocation6], 4
      %s51 = int_to_ptr.vmem [resolvable:$true] %s50
      %56 = dma.hbm_to_vmem [thread:$0]  %s4, 8192, %s51, [#allocation5], 128, 128, 8
    $region21: #{local_feature_transformer.1} parent=1 // pred_fallthru
      _
    // Predicated region
    $region22: #{local_feature_transformer.1} parent=1 // pred_check
      _
    $region23: #{local_feature_transformer.1} parent=1 // pred_check_branch
      %58 = sbr.rel (0) target = $region25
    $region24: #{local_feature_transformer.1} parent=1 // pred_region
      %s60 = ssub.s32 8192, 8192
      %61 = vsyncadd [#allocation8], %s60
      %s62 = sshll.u32 [#allocation7], 4
      %s63 = int_to_ptr.vmem [resolvable:$true] %s62
      %68 = dma.hbm_to_vmem [thread:$0]  %s5, 8192, %s63, [#allocation8], 128, 128, 8
    $region25: #{local_feature_transformer.1} parent=1 // pred_fallthru
      _
    // Predicated region
    $region26: #{local_feature_transformer.1} parent=1 // pred_check
      _
    $region27: #{local_feature_transformer.1} parent=1 // pred_check_branch
      %70 = sbr.rel (0) target = $region29
    $region28: #{local_feature_transformer.1} parent=1 // pred_region
      %s72 = ssub.s32 8192, 8192
      %73 = vsyncadd [#allocation8], %s72
      %s74 = sshll.u32 [#allocation9], 4
      %s75 = int_to_ptr.vmem [resolvable:$true] %s74
      %80 = dma.hbm_to_vmem [thread:$0]  %s6, 8192, %s75, [#allocation8], 64, 64, 4
    $region29: #{local_feature_transformer.1} parent=1 // pred_fallthru
      _
    // Predicated region
    $region30: #{local_feature_transformer.1} parent=1 // pred_check
      _
    $region31: #{local_feature_transformer.1} parent=1 // pred_check_branch
      %82 = sbr.rel (0) target = $region33
    $region32: #{local_feature_transformer.1} parent=1 // pred_region
      %s84 = ssub.s32 256, 256
      %85 = vsyncadd [#allocation11], %s84
      %s86 = sshll.u32 [#allocation10], 4
      %s87 = int_to_ptr.vmem [resolvable:$true] %s86
      %92 = dma.hbm_to_vmem [thread:$0]  %s7, 256, %s87, [#allocation11], 64, 64, 4
    $region33: #{local_feature_transformer.1} parent=1 // pred_fallthru
      _
    // Predicated region
    $region34: #{local_feature_transformer.1} parent=1 // pred_check
      _
    $region35: #{local_feature_transformer.1} parent=1 // pred_check_branch
      %94 = sbr.rel (0) target = $region37
    $region36: #{local_feature_transformer.1} parent=1 // pred_region
      %95 = dma.done [#allocation3], 12288
    $region37: #{local_feature_transformer.1} parent=1 // pred_fallthru
      _
    // Predicated region
    $region38: #{local_feature_transformer.1} parent=1 // pred_check
      _
    $region39: #{local_feature_transformer.1} parent=1 // pred_check_branch
      %97 = sbr.rel (0) target = $region41
    $region40: #{local_feature_transformer.1} parent=1 // pred_region
      %98 = dma.done [#allocation5], 4096
    $region41: #{local_feature_transformer.1} parent=1 // pred_fallthru
      _
    // Predicated region
    $region42: #{local_feature_transformer.1} parent=1 // pred_check
      _
    $region43: #{local_feature_transformer.1} parent=1 // pred_check_branch
      %100 = sbr.rel (0) target = $region45
    $region44: #{local_feature_transformer.1} parent=1 // pred_region
      %101 = dma.done [#allocation5], 8192
    $region45: #{local_feature_transformer.1} parent=1 // pred_fallthru
      _
    // Predicated region
    $region46: #{local_feature_transformer.1} parent=1 // pred_check
      _
    $region47: #{local_feature_transformer.1} parent=1 // pred_check_branch
      %103 = sbr.rel (0) target = $region49
    $region48: #{local_feature_transformer.1} parent=1 // pred_region
      %104 = dma.done [#allocation8], 8192
    $region49: #{local_feature_transformer.1} parent=1 // pred_fallthru
      _
    // Predicated region
    $region50: #{local_feature_transformer.1} parent=1 // pred_check
      _
    $region51: #{local_feature_transformer.1} parent=1 // pred_check_branch
      %106 = sbr.rel (0) target = $region53
    $region52: #{local_feature_transformer.1} parent=1 // pred_region
      %107 = dma.done [#allocation8], 8192
    $region53: #{local_feature_transformer.1} parent=1 // pred_fallthru
      _
    // Predicated region
    $region54: #{local_feature_transformer.1} parent=1 // pred_check
      _
    $region55: #{local_feature_transformer.1} parent=1 // pred_check_branch
      %109 = sbr.rel (0) target = $region57
    $region56: #{local_feature_transformer.1} parent=1 // pred_region
      %110 = dma.done [#allocation11], 256
    $region57: #{local_feature_transformer.1} parent=1 // pred_fallthru
      _
    %v112 = vld [vmem:[%s0] sm:$0xff]
    %v113 = vld [vmem:[%s0 + $0x8] sm:$0xff]
    %v114 = vld [vmem:[%s0 + $0x10] sm:$0xff]
    %v115 = vld [vmem:[%s0 + $0x18] sm:$0xff]
    %v116 = vld [vmem:[%s0 + $0x20] sm:$0xff]
    %v117 = vld [vmem:[%s0 + $0x28] sm:$0xff]
    %v118 = vld [vmem:[%s0 + $0x30] sm:$0xff]
    %v119 = vld [vmem:[%s0 + $0x38] sm:$0xff]
    %v120 = vld [vmem:[%s1] sm:$0xff]
    %v121 = vld [vmem:[%s1 + $0x8] sm:$0xff]
    %v122 = vld [vmem:[%s1 + $0x10] sm:$0xff]
    %v123 = vld [vmem:[%s1 + $0x18] sm:$0xff]
    %v124 = vld [vmem:[%s1 + $0x20] sm:$0xff]
    %v125 = vld [vmem:[%s1 + $0x28] sm:$0xff]
    %v126 = vld [vmem:[%s1 + $0x30] sm:$0xff]
    %v127 = vld [vmem:[%s1 + $0x38] sm:$0xff]
    %v128 = vld [vmem:[%s1 + $0x40] sm:$0xff]
    %v129 = vld [vmem:[%s1 + $0x48] sm:$0xff]
    %v130 = vld [vmem:[%s1 + $0x50] sm:$0xff]
    %v131 = vld [vmem:[%s1 + $0x58] sm:$0xff]
    %v132 = vld [vmem:[%s1 + $0x60] sm:$0xff]
    %v133 = vld [vmem:[%s1 + $0x68] sm:$0xff]
    %v134 = vld [vmem:[%s1 + $0x70] sm:$0xff]
    %v135 = vld [vmem:[%s1 + $0x78] sm:$0xff]
    %v136 = vpack.c.bf16 %v121, %v120
    %v137 = vpack.c.bf16 %v123, %v122
    %v138 = vpack.c.bf16 %v125, %v124
    %v139 = vpack.c.bf16 %v127, %v126
    %v140 = vpack.c.bf16 %v129, %v128
    %v141 = vpack.c.bf16 %v131, %v130
    %v142 = vpack.c.bf16 %v133, %v132
    %v143 = vpack.c.bf16 %v135, %v134
    %v144 = vld [vmem:[#allocation2] sm:$0xff]
    %v145 = vld [vmem:[#allocation2 + $0x8] sm:$0xf]
    %v146 = vld [vmem:[#allocation2 + $0xc] sm:$0xff]
    %v147 = vld [vmem:[#allocation2 + $0x14] sm:$0xf]
    %v148 = vld [vmem:[#allocation2 + $0x18] sm:$0xff]
    %v149 = vld [vmem:[#allocation2 + $0x20] sm:$0xf]
    %v150 = vld [vmem:[#allocation2 + $0x24] sm:$0xff]
    %v151 = vld [vmem:[#allocation2 + $0x2c] sm:$0xf]
    %v152 = vld [vmem:[#allocation2 + $0x30] sm:$0xff]
    %v153 = vld [vmem:[#allocation2 + $0x38] sm:$0xf]
    %v154 = vld [vmem:[#allocation2 + $0x3c] sm:$0xff]
    %v155 = vld [vmem:[#allocation2 + $0x44] sm:$0xf]
    %v156 = vld [vmem:[#allocation2 + $0x48] sm:$0xff]
    %v157 = vld [vmem:[#allocation2 + $0x50] sm:$0xf]
    %v158 = vld [vmem:[#allocation2 + $0x54] sm:$0xff]
    %v159 = vld [vmem:[#allocation2 + $0x5c] sm:$0xf]
    %v160 = vld [vmem:[#allocation2 + $0x60] sm:$0xff]
    %v161 = vld [vmem:[#allocation2 + $0x68] sm:$0xf]
    %v162 = vld [vmem:[#allocation2 + $0x6c] sm:$0xff]
    %v163 = vld [vmem:[#allocation2 + $0x74] sm:$0xf]
    %v164 = vld [vmem:[#allocation2 + $0x78] sm:$0xff]
    %v165 = vld [vmem:[#allocation2 + $0x80] sm:$0xf]
    %v166 = vld [vmem:[#allocation2 + $0x84] sm:$0xff]
    %v167 = vld [vmem:[#allocation2 + $0x8c] sm:$0xf]
    %v168 = vld [vmem:[#allocation2 + $0x90] sm:$0xff]
    %v169 = vld [vmem:[#allocation2 + $0x98] sm:$0xf]
    %v170 = vld [vmem:[#allocation2 + $0x9c] sm:$0xff]
    %v171 = vld [vmem:[#allocation2 + $0xa4] sm:$0xf]
    %v172 = vld [vmem:[#allocation2 + $0xa8] sm:$0xff]
    %v173 = vld [vmem:[#allocation2 + $0xb0] sm:$0xf]
    %v174 = vld [vmem:[#allocation2 + $0xb4] sm:$0xff]
    %v175 = vld [vmem:[#allocation2 + $0xbc] sm:$0xf]
    %v176 = vld [vmem:[#allocation4] sm:$0xf]
    %v177 = vld [vmem:[#allocation4 + $0x4] sm:$0xf]
    %v178 = vld [vmem:[#allocation4 + $0x8] sm:$0xf]
    %v179 = vld [vmem:[#allocation4 + $0xc] sm:$0xf]
    %v180 = vld [vmem:[#allocation4 + $0x10] sm:$0xf]
    %v181 = vld [vmem:[#allocation4 + $0x14] sm:$0xf]
    %v182 = vld [vmem:[#allocation4 + $0x18] sm:$0xf]
    %v183 = vld [vmem:[#allocation4 + $0x1c] sm:$0xf]
    %v184 = vld [vmem:[#allocation4 + $0x20] sm:$0xf]
    %v185 = vld [vmem:[#allocation4 + $0x24] sm:$0xf]
    %v186 = vld [vmem:[#allocation4 + $0x28] sm:$0xf]
    %v187 = vld [vmem:[#allocation4 + $0x2c] sm:$0xf]
    %v188 = vld [vmem:[#allocation4 + $0x30] sm:$0xf]
    %v189 = vld [vmem:[#allocation4 + $0x34] sm:$0xf]
    %v190 = vld [vmem:[#allocation4 + $0x38] sm:$0xf]
    %v191 = vld [vmem:[#allocation4 + $0x3c] sm:$0xf]
    %v192 = vld [vmem:[#allocation6] sm:$0xff]
    %v193 = vld [vmem:[#allocation6 + $0x8] sm:$0xff]
    %v194 = vld [vmem:[#allocation6 + $0x10] sm:$0xff]
    %v195 = vld [vmem:[#allocation6 + $0x18] sm:$0xff]
    %v196 = vld [vmem:[#allocation6 + $0x20] sm:$0xff]
    %v197 = vld [vmem:[#allocation6 + $0x28] sm:$0xff]
    %v198 = vld [vmem:[#allocation6 + $0x30] sm:$0xff]
    %v199 = vld [vmem:[#allocation6 + $0x38] sm:$0xff]
    %v200 = vld [vmem:[#allocation6 + $0x40] sm:$0xff]
    %v201 = vld [vmem:[#allocation6 + $0x48] sm:$0xff]
    %v202 = vld [vmem:[#allocation6 + $0x50] sm:$0xff]
    %v203 = vld [vmem:[#allocation6 + $0x58] sm:$0xff]
    %v204 = vld [vmem:[#allocation6 + $0x60] sm:$0xff]
    %v205 = vld [vmem:[#allocation6 + $0x68] sm:$0xff]
    %v206 = vld [vmem:[#allocation6 + $0x70] sm:$0xff]
    %v207 = vld [vmem:[#allocation6 + $0x78] sm:$0xff]
    %v208 = vld [vmem:[#allocation7] sm:$0xff]
    %v209 = vld [vmem:[#allocation7 + $0x8] sm:$0xff]
    %v210 = vld [vmem:[#allocation7 + $0x10] sm:$0xff]
    %v211 = vld [vmem:[#allocation7 + $0x18] sm:$0xff]
    %v212 = vld [vmem:[#allocation7 + $0x20] sm:$0xff]
    %v213 = vld [vmem:[#allocation7 + $0x28] sm:$0xff]
    %v214 = vld [vmem:[#allocation7 + $0x30] sm:$0xff]
    %v215 = vld [vmem:[#allocation7 + $0x38] sm:$0xff]
    %v216 = vld [vmem:[#allocation7 + $0x40] sm:$0xff]
    %v217 = vld [vmem:[#allocation7 + $0x48] sm:$0xff]
    %v218 = vld [vmem:[#allocation7 + $0x50] sm:$0xff]
    %v219 = vld [vmem:[#allocation7 + $0x58] sm:$0xff]
    %v220 = vld [vmem:[#allocation7 + $0x60] sm:$0xff]
    %v221 = vld [vmem:[#allocation7 + $0x68] sm:$0xff]
    %v222 = vld [vmem:[#allocation7 + $0x70] sm:$0xff]
    %v223 = vld [vmem:[#allocation7 + $0x78] sm:$0xff]
    %v224 = vld [vmem:[#allocation9] sm:$0xf]
    %v225 = vld [vmem:[#allocation9 + $0x4] sm:$0xf]
    %v226 = vld [vmem:[#allocation9 + $0x8] sm:$0xf]
    %v227 = vld [vmem:[#allocation9 + $0xc] sm:$0xf]
    %v228 = vld [vmem:[#allocation9 + $0x10] sm:$0xf]
    %v229 = vld [vmem:[#allocation9 + $0x14] sm:$0xf]
    %v230 = vld [vmem:[#allocation9 + $0x18] sm:$0xf]
    %v231 = vld [vmem:[#allocation9 + $0x1c] sm:$0xf]
    %v232 = vld [vmem:[#allocation9 + $0x20] sm:$0xf]
    %v233 = vld [vmem:[#allocation9 + $0x24] sm:$0xf]
    %v234 = vld [vmem:[#allocation9 + $0x28] sm:$0xf]
    %v235 = vld [vmem:[#allocation9 + $0x2c] sm:$0xf]
    %v236 = vld [vmem:[#allocation9 + $0x30] sm:$0xf]
    %v237 = vld [vmem:[#allocation9 + $0x34] sm:$0xf]
    %v238 = vld [vmem:[#allocation9 + $0x38] sm:$0xf]
    %v239 = vld [vmem:[#allocation9 + $0x3c] sm:$0xf]
    %v240 = vld [vmem:[#allocation9 + $0x40] sm:$0xf]
    %v241 = vld [vmem:[#allocation9 + $0x44] sm:$0xf]
    %v242 = vld [vmem:[#allocation9 + $0x48] sm:$0xf]
    %v243 = vld [vmem:[#allocation9 + $0x4c] sm:$0xf]
    %v244 = vld [vmem:[#allocation9 + $0x50] sm:$0xf]
    %v245 = vld [vmem:[#allocation9 + $0x54] sm:$0xf]
    %v246 = vld [vmem:[#allocation9 + $0x58] sm:$0xf]
    %v247 = vld [vmem:[#allocation9 + $0x5c] sm:$0xf]
    %v248 = vld [vmem:[#allocation9 + $0x60] sm:$0xf]
    %v249 = vld [vmem:[#allocation9 + $0x64] sm:$0xf]
    %v250 = vld [vmem:[#allocation9 + $0x68] sm:$0xf]
    %v251 = vld [vmem:[#allocation9 + $0x6c] sm:$0xf]
    %v252 = vld [vmem:[#allocation9 + $0x70] sm:$0xf]
    %v253 = vld [vmem:[#allocation9 + $0x74] sm:$0xf]
    %v254 = vld [vmem:[#allocation9 + $0x78] sm:$0xf]
    %v255 = vld [vmem:[#allocation9 + $0x7c] sm:$0xf]
    %v256 = vld [vmem:[#allocation10] sm:$0xf]
    %v257 = vpack.c.bf16 %v113, %v112
    %v258 = vpack.c.bf16 %v115, %v114
    %v259 = vpack.c.bf16 %v117, %v116
    %v260 = vpack.c.bf16 %v119, %v118
    %v293 = vunpack.c.l.b16 %v144
    %v294 = vunpack.c.h.b16 %v144
    %v295 = vunpack.c.l.b16 %v145
    %v296 = vunpack.c.l.b16 %v146
    %v297 = vunpack.c.h.b16 %v146
    %v298 = vunpack.c.l.b16 %v147
    %v299 = vunpack.c.l.b16 %v148
    %v300 = vunpack.c.h.b16 %v148
    %v301 = vunpack.c.l.b16 %v149
    %v302 = vunpack.c.l.b16 %v150
    %v303 = vunpack.c.h.b16 %v150
    %v304 = vunpack.c.l.b16 %v151
    %v305 = vunpack.c.l.b16 %v152
    %v306 = vunpack.c.h.b16 %v152
    %v307 = vunpack.c.l.b16 %v153
    %v308 = vunpack.c.l.b16 %v154
    %v309 = vunpack.c.h.b16 %v154
    %v310 = vunpack.c.l.b16 %v155
    %v311 = vunpack.c.l.b16 %v156
    %v312 = vunpack.c.h.b16 %v156
    %v313 = vunpack.c.l.b16 %v157
    %v314 = vunpack.c.l.b16 %v158
    %v315 = vunpack.c.h.b16 %v158
    %v316 = vunpack.c.l.b16 %v159
    %v317 = vunpack.c.l.b16 %v160
    %v318 = vunpack.c.h.b16 %v160
    %v319 = vunpack.c.l.b16 %v161
    %v320 = vunpack.c.l.b16 %v162
    %v321 = vunpack.c.h.b16 %v162
    %v322 = vunpack.c.l.b16 %v163
    %v323 = vunpack.c.l.b16 %v164
    %v324 = vunpack.c.h.b16 %v164
    %v325 = vunpack.c.l.b16 %v165
    %v326 = vunpack.c.l.b16 %v166
    %v327 = vunpack.c.h.b16 %v166
    %v328 = vunpack.c.l.b16 %v167
    %v329 = vunpack.c.l.b16 %v168
    %v330 = vunpack.c.h.b16 %v168
    %v331 = vunpack.c.l.b16 %v169
    %v332 = vunpack.c.l.b16 %v170
    %v333 = vunpack.c.h.b16 %v170
    %v334 = vunpack.c.l.b16 %v171
    %v335 = vunpack.c.l.b16 %v172
    %v336 = vunpack.c.h.b16 %v172
    %v337 = vunpack.c.l.b16 %v173
    %v338 = vunpack.c.l.b16 %v174
    %v339 = vunpack.c.h.b16 %v174
    %v340 = vunpack.c.l.b16 %v175
    %v341 = vpack.c.b16 %v296, %v293
    %v342 = vpack.c.b16 %v297, %v294
    %v343 = vpack.c.b16 %v298, %v295
    %v344 = vpack.c.b16 %v302, %v299
    %v345 = vpack.c.b16 %v303, %v300
    %v346 = vpack.c.b16 %v304, %v301
    %v347 = vpack.c.b16 %v308, %v305
    %v348 = vpack.c.b16 %v309, %v306
    %v349 = vpack.c.b16 %v310, %v307
    %v350 = vpack.c.b16 %v314, %v311
    %v351 = vpack.c.b16 %v315, %v312
    %v352 = vpack.c.b16 %v316, %v313
    %v353 = vpack.c.b16 %v320, %v317
    %v354 = vpack.c.b16 %v321, %v318
    %v355 = vpack.c.b16 %v322, %v319
    %v356 = vpack.c.b16 %v326, %v323
    %v357 = vpack.c.b16 %v327, %v324
    %v358 = vpack.c.b16 %v328, %v325
    %v359 = vpack.c.b16 %v332, %v329
    %v360 = vpack.c.b16 %v333, %v330
    %v361 = vpack.c.b16 %v334, %v331
    %v362 = vpack.c.b16 %v338, %v335
    %v363 = vpack.c.b16 %v339, %v336
    %v364 = vpack.c.b16 %v340, %v337
    %389 = vmatprep.subr.bf16.mxu0 %v363
    %390 = vmatpush1.bf16.msra.mxu0 %v362
    %391 = vmatprep.subr.bf16.mxu0 %v360
    %392 = vmatpush1.bf16.msra.mxu0 %v359
    %393 = vmatprep.subr.bf16.mxu0 %v357
    %394 = vmatpush1.bf16.msra.mxu0 %v356
    %395 = vmatprep.subr.bf16.mxu0 %v354
    %396 = vmatpush1.bf16.msra.mxu0 %v353
    %397 = vmatprep.subr.bf16.mxu0 %v351
    %398 = vmatpush1.bf16.msra.mxu0 %v350
    %399 = vmatprep.subr.bf16.mxu0 %v348
    %400 = vmatpush1.bf16.msra.mxu0 %v347
    %401 = vmatprep.subr.bf16.mxu0 %v345
    %402 = vmatpush1.bf16.msra.mxu0 %v344
    %403 = vmatprep.subr.bf16.mxu0 %v342
    %404 = vmatpush1.bf16.msra.mxu0 %v341
    %405 = vmatprep.subr.bf16.mxu0 0
    %406 = vmatpush2.bf16.msra.mxu0 0
    %407 = vmatprep.subr.bf16.mxu0 0
    %408 = vmatpush2.bf16.msra.mxu0 0
    %409 = vmatprep.subr.bf16.mxu0 0
    %410 = vmatpush2.bf16.msra.mxu0 0
    %411 = vmatprep.subr.bf16.mxu0 0
    %412 = vmatpush2.bf16.msra.mxu0 0
    %413 = vmatprep.subr.bf16.mxu0 0
    %414 = vmatpush2.bf16.msra.mxu0 0
    %415 = vmatprep.subr.bf16.mxu0 0
    %416 = vmatpush2.bf16.msra.mxu0 0
    %417 = vmatprep.subr.bf16.mxu0 0
    %418 = vmatpush2.bf16.msra.mxu0 0
    %419 = vmatprep.subr.bf16.mxu0 0
    %420 = vmatpush2.bf16.msra.mxu0 0
    %421 = vmatprep.mubr.bf16.mxu0 0
    %422 = vmatmul.mubr.bf16.gmra.mxu0 %v257
    %v423 = vpop.f32.mrf.mxu0
    %v424 = vadd.f32 0.0, %v423
    %v425 = vpop.f32.mrf.mxu0
    %v426 = vadd.f32 0.0, %v425
    %v427 = vpop.f32.mrf.mxu0
    %v428 = vadd.f32 0.0, %v427
    %v429 = vpop.f32.mrf.mxu0
    %v430 = vadd.f32 0.0, %v429
    %431 = vmatprep.mubr.bf16.mxu0 0
    %432 = vmatmul.mubr.bf16.gmra.mxu0 %v258
    %v433 = vpop.f32.mrf.mxu0
    %v434 = vadd.f32 0.0, %v433
    %v435 = vpop.f32.mrf.mxu0
    %v436 = vadd.f32 0.0, %v435
    %v437 = vpop.f32.mrf.mxu0
    %v438 = vadd.f32 0.0, %v437
    %v439 = vpop.f32.mrf.mxu0
    %v440 = vadd.f32 0.0, %v439
    %441 = vmatprep.mubr.bf16.mxu0 0
    %442 = vmatmul.mubr.bf16.gmra.mxu0 %v259
    %v443 = vpop.f32.mrf.mxu0
    %v444 = vadd.f32 0.0, %v443
    %v445 = vpop.f32.mrf.mxu0
    %v446 = vadd.f32 0.0, %v445
    %v447 = vpop.f32.mrf.mxu0
    %v448 = vadd.f32 0.0, %v447
    %v449 = vpop.f32.mrf.mxu0
    %v450 = vadd.f32 0.0, %v449
    %451 = vmatprep.mubr.bf16.mxu0 0
    %452 = vmatmul.mubr.bf16.gmra.mxu0 %v260
    %v453 = vpop.f32.mrf.mxu0
    %v454 = vadd.f32 0.0, %v453
    %v455 = vpop.f32.mrf.mxu0
    %v456 = vadd.f32 0.0, %v455
    %v457 = vpop.f32.mrf.mxu0
    %v458 = vadd.f32 0.0, %v457
    %v459 = vpop.f32.mrf.mxu0
    %v460 = vadd.f32 0.0, %v459
    %461 = vdwg.mxu0
    %462 = vmatprep.subr.bf16.mxu0 0
    %463 = vmatpush1.bf16.msra.mxu0 %v364
    %464 = vmatprep.subr.bf16.mxu0 0
    %465 = vmatpush1.bf16.msra.mxu0 %v361
    %466 = vmatprep.subr.bf16.mxu0 0
    %467 = vmatpush1.bf16.msra.mxu0 %v358
    %468 = vmatprep.subr.bf16.mxu0 0
    %469 = vmatpush1.bf16.msra.mxu0 %v355
    %470 = vmatprep.subr.bf16.mxu0 0
    %471 = vmatpush1.bf16.msra.mxu0 %v352
    %472 = vmatprep.subr.bf16.mxu0 0
    %473 = vmatpush1.bf16.msra.mxu0 %v349
    %474 = vmatprep.subr.bf16.mxu0 0
    %475 = vmatpush1.bf16.msra.mxu0 %v346
    %476 = vmatprep.subr.bf16.mxu0 0
    %477 = vmatpush1.bf16.msra.mxu0 %v343
    %478 = vmatprep.subr.bf16.mxu0 0
    %479 = vmatpush2.bf16.msra.mxu0 0
    %480 = vmatprep.subr.bf16.mxu0 0
    %481 = vmatpush2.bf16.msra.mxu0 0
    %482 = vmatprep.subr.bf16.mxu0 0
    %483 = vmatpush2.bf16.msra.mxu0 0
    %484 = vmatprep.subr.bf16.mxu0 0
    %485 = vmatpush2.bf16.msra.mxu0 0
    %486 = vmatprep.subr.bf16.mxu0 0
    %487 = vmatpush2.bf16.msra.mxu0 0
    %488 = vmatprep.subr.bf16.mxu0 0
    %489 = vmatpush2.bf16.msra.mxu0 0
    %490 = vmatprep.subr.bf16.mxu0 0
    %491 = vmatpush2.bf16.msra.mxu0 0
    %492 = vmatprep.subr.bf16.mxu0 0
    %493 = vmatpush2.bf16.msra.mxu0 0
    %494 = vmatprep.mubr.bf16.mxu0 0
    %495 = vmatmul.mubr.bf16.gmra.mxu0 %v257
    %v496 = vpop.f32.mrf.mxu0
    %v497 = vadd.f32 0.0, %v496
    %v498 = vpop.f32.mrf.mxu0
    %v499 = vpop.f32.mrf.mxu0
    %v500 = vadd.f32 0.0, %v499
    %v501 = vpop.f32.mrf.mxu0
    %502 = vmatprep.mubr.bf16.mxu0 0
    %503 = vmatmul.mubr.bf16.gmra.mxu0 %v258
    %v504 = vpop.f32.mrf.mxu0
    %v505 = vadd.f32 0.0, %v504
    %v506 = vpop.f32.mrf.mxu0
    %v507 = vpop.f32.mrf.mxu0
    %v508 = vadd.f32 0.0, %v507
    %v509 = vpop.f32.mrf.mxu0
    %510 = vmatprep.mubr.bf16.mxu0 0
    %511 = vmatmul.mubr.bf16.gmra.mxu0 %v259
    %v512 = vpop.f32.mrf.mxu0
    %v513 = vadd.f32 0.0, %v512
    %v514 = vpop.f32.mrf.mxu0
    %v515 = vpop.f32.mrf.mxu0
    %v516 = vadd.f32 0.0, %v515
    %v517 = vpop.f32.mrf.mxu0
    %518 = vmatprep.mubr.bf16.mxu0 0
    %519 = vmatmul.mubr.bf16.gmra.mxu0 %v260
    %v520 = vpop.f32.mrf.mxu0
    %v521 = vadd.f32 0.0, %v520
    %v522 = vpop.f32.mrf.mxu0
    %v523 = vpop.f32.mrf.mxu0
    %v524 = vadd.f32 0.0, %v523
    %v525 = vpop.f32.mrf.mxu0
    %526 = vdwg.mxu0
    %vm527 = vcmp.gt.f32.partialorder %v424, 0.0
    %vm528 = vcmp.gt.f32.partialorder %v428, 0.0
    %vm529 = vcmp.gt.f32.partialorder %v434, 0.0
    %vm530 = vcmp.gt.f32.partialorder %v438, 0.0
    %vm531 = vcmp.gt.f32.partialorder %v444, 0.0
    %vm532 = vcmp.gt.f32.partialorder %v448, 0.0
    %vm533 = vcmp.gt.f32.partialorder %v454, 0.0
    %vm534 = vcmp.gt.f32.partialorder %v458, 0.0
    %v535 = vadd.f32 %v424, 1.0
    %v536 = vadd.f32 %v428, 1.0
    %v537 = vadd.f32 %v434, 1.0
    %v538 = vadd.f32 %v438, 1.0
    %v539 = vadd.f32 %v444, 1.0
    %v540 = vadd.f32 %v448, 1.0
    %v541 = vadd.f32 %v454, 1.0
    %v542 = vadd.f32 %v458, 1.0
    %v543 = vmul.f32 %v424, 1.442695
    %v544 = vpow.pop %v543
    %v545 = vmul.f32 %v428, 1.442695
    %v546 = vpow.pop %v545
    %v547 = vmul.f32 %v434, 1.442695
    %v548 = vpow.pop %v547
    %v549 = vmul.f32 %v438, 1.442695
    %v550 = vpow.pop %v549
    %v551 = vmul.f32 %v444, 1.442695
    %v552 = vpow.pop %v551
    %v553 = vmul.f32 %v448, 1.442695
    %v554 = vpow.pop %v553
    %v555 = vmul.f32 %v454, 1.442695
    %v556 = vpow.pop %v555
    %v557 = vmul.f32 %v458, 1.442695
    %v558 = vpow.pop %v557
    %v559 = vsel %vm527, %v535, %v544
    %v560 = vsel %vm528, %v536, %v546
    %v561 = vsel %vm529, %v537, %v548
    %v562 = vsel %vm530, %v538, %v550
    %v563 = vsel %vm531, %v539, %v552
    %v564 = vsel %vm532, %v540, %v554
    %v565 = vsel %vm533, %v541, %v556
    %v566 = vsel %vm534, %v542, %v558
    %vm567 = vcmp.gt.f32.partialorder %v426, 0.0
    %vm568 = vcmp.gt.f32.partialorder %v430, 0.0
    %vm569 = vcmp.gt.f32.partialorder %v436, 0.0
    %vm570 = vcmp.gt.f32.partialorder %v440, 0.0
    %vm571 = vcmp.gt.f32.partialorder %v446, 0.0
    %vm572 = vcmp.gt.f32.partialorder %v450, 0.0
    %vm573 = vcmp.gt.f32.partialorder %v456, 0.0
    %vm574 = vcmp.gt.f32.partialorder %v460, 0.0
    %v575 = vadd.f32 %v426, 1.0
    %v576 = vadd.f32 %v430, 1.0
    %v577 = vadd.f32 %v436, 1.0
    %v578 = vadd.f32 %v440, 1.0
    %v579 = vadd.f32 %v446, 1.0
    %v580 = vadd.f32 %v450, 1.0
    %v581 = vadd.f32 %v456, 1.0
    %v582 = vadd.f32 %v460, 1.0
    %v583 = vmul.f32 %v426, 1.442695
    %v584 = vpow.pop %v583
    %v585 = vmul.f32 %v430, 1.442695
    %v586 = vpow.pop %v585
    %v587 = vmul.f32 %v436, 1.442695
    %v588 = vpow.pop %v587
    %v589 = vmul.f32 %v440, 1.442695
    %v590 = vpow.pop %v589
    %v591 = vmul.f32 %v446, 1.442695
    %v592 = vpow.pop %v591
    %v593 = vmul.f32 %v450, 1.442695
    %v594 = vpow.pop %v593
    %v595 = vmul.f32 %v456, 1.442695
    %v596 = vpow.pop %v595
    %v597 = vmul.f32 %v460, 1.442695
    %v598 = vpow.pop %v597
    %v599 = vsel %vm567, %v575, %v584
    %v600 = vsel %vm568, %v576, %v586
    %v601 = vsel %vm569, %v577, %v588
    %v602 = vsel %vm570, %v578, %v590
    %v603 = vsel %vm571, %v579, %v592
    %v604 = vsel %vm572, %v580, %v594
    %v605 = vsel %vm573, %v581, %v596
    %v606 = vsel %vm574, %v582, %v598
    %v607 = vmul.f32 %v497, 0.0625
    %v608 = vmul.f32 %v500, 0.0625
    %v609 = vmul.f32 %v505, 0.0625
    %v610 = vmul.f32 %v508, 0.0625
    %v611 = vmul.f32 %v513, 0.0625
    %v612 = vmul.f32 %v516, 0.0625
    %v613 = vmul.f32 %v521, 0.0625
    %v614 = vmul.f32 %v524, 0.0625
    %v615 = vpack.c.bf16 %v560, %v559
    %v616 = vpack.c.bf16 %v562, %v561
    %v617 = vpack.c.bf16 %v564, %v563
    %v618 = vpack.c.bf16 %v566, %v565
    %v619 = vpack.c.bf16 %v600, %v599
    %v620 = vpack.c.bf16 %v602, %v601
    %v621 = vpack.c.bf16 %v604, %v603
    %v622 = vpack.c.bf16 %v606, %v605
    %v623 = vpack.c.bf16 %v608, %v607
    %v624 = vpack.c.bf16 %v610, %v609
    %v625 = vpack.c.bf16 %v612, %v611
    %v626 = vpack.c.bf16 %v614, %v613
    %627 = vxpose.xlu0.c.b16.start [1/8] %v619, 128
    %628 = vxpose.xlu0.c.b16.cont [2/8] 0, 128
    %629 = vxpose.xlu0.c.b16.cont [3/8] 0, 128
    %630 = vxpose.xlu0.c.b16.cont [4/8] 0, 128
    %631 = vxpose.xlu0.c.b16.cont [5/8] 0, 128
    %632 = vxpose.xlu0.c.b16.cont [6/8] 0, 128
    %633 = vxpose.xlu0.c.b16.cont [7/8] 0, 128
    %634 = vxpose.xlu0.c.b16.end [8/8] 0, 128
    %v635 = vpop.trf.xlu0
    %v636 = vpop.trf.xlu0
    %v637 = vpop.trf.xlu0
    %v638 = vpop.trf.xlu0
    %v639 = vpop.trf.xlu0
    %v640 = vpop.trf.xlu0
    %v641 = vpop.trf.xlu0
    %v642 = vpop.trf.xlu0
    %vm643 = vcmask 130048
    %v645 = vsel %vm643, %v635, 0
    %v648 = vsel %vm643, %v636, 0
    %v651 = vsel %vm643, %v637, 0
    %v654 = vsel %vm643, %v638, 0
    %v657 = vsel %vm643, %v639, 0
    %v660 = vsel %vm643, %v640, 0
    %v663 = vsel %vm643, %v641, 0
    %v666 = vsel %vm643, %v642, 0
    %668 = vmatprep.subr.bf16.mxu0 0
    %669 = vmatpush1.bf16.msra.mxu0 0
    %670 = vmatprep.subr.bf16.mxu0 0
    %671 = vmatpush1.bf16.msra.mxu0 0
    %672 = vmatprep.subr.bf16.mxu0 0
    %673 = vmatpush1.bf16.msra.mxu0 0
    %674 = vmatprep.subr.bf16.mxu0 0
    %675 = vmatpush1.bf16.msra.mxu0 0
    %676 = vmatprep.subr.bf16.mxu0 0
    %677 = vmatpush1.bf16.msra.mxu0 0
    %678 = vmatprep.subr.bf16.mxu0 0
    %679 = vmatpush1.bf16.msra.mxu0 0
    %680 = vmatprep.subr.bf16.mxu0 0
    %681 = vmatpush1.bf16.msra.mxu0 0
    %682 = vmatprep.subr.bf16.mxu0 0
    %683 = vmatpush1.bf16.msra.mxu0 %v623
    %684 = vmatprep.subr.bf16.mxu0 0
    %685 = vmatpush2.bf16.msra.mxu0 0
    %686 = vmatprep.subr.bf16.mxu0 0
    %687 = vmatpush2.bf16.msra.mxu0 0
    %688 = vmatprep.subr.bf16.mxu0 0
    %689 = vmatpush2.bf16.msra.mxu0 0
    %690 = vmatprep.subr.bf16.mxu0 0
    %691 = vmatpush2.bf16.msra.mxu0 0
    %692 = vmatprep.subr.bf16.mxu0 0
    %693 = vmatpush2.bf16.msra.mxu0 0
    %694 = vmatprep.subr.bf16.mxu0 0
    %695 = vmatpush2.bf16.msra.mxu0 0
    %696 = vmatprep.subr.bf16.mxu0 0
    %697 = vmatpush2.bf16.msra.mxu0 0
    %698 = vmatprep.subr.bf16.mxu0 0
    %699 = vmatpush2.bf16.msra.mxu0 0
    %700 = vmatprep.mubr.bf16.mxu0 0
    %701 = vmatmul.mubr.bf16.gmra.mxu0 %v645
    %v702 = vpop.f32.mrf.mxu0
    %v703 = vadd.f32 0.0, %v702
    %v704 = vpop.f32.mrf.mxu0
    %v705 = vpop.f32.mrf.mxu0
    %v706 = vadd.f32 0.0, %v705
    %v707 = vpop.f32.mrf.mxu0
    %708 = vmatprep.mubr.bf16.mxu0 0
    %709 = vmatmul.mubr.bf16.gmra.mxu0 %v648
    %v710 = vpop.f32.mrf.mxu0
    %v711 = vadd.f32 0.0, %v710
    %v712 = vpop.f32.mrf.mxu0
    %v713 = vpop.f32.mrf.mxu0
    %v714 = vadd.f32 0.0, %v713
    %v715 = vpop.f32.mrf.mxu0
    %716 = vmatprep.mubr.bf16.mxu0 0
    %717 = vmatmul.mubr.bf16.gmra.mxu0 %v651
    %v718 = vpop.f32.mrf.mxu0
    %v719 = vadd.f32 0.0, %v718
    %v720 = vpop.f32.mrf.mxu0
    %v721 = vpop.f32.mrf.mxu0
    %v722 = vadd.f32 0.0, %v721
    %v723 = vpop.f32.mrf.mxu0
    %724 = vmatprep.mubr.bf16.mxu0 0
    %725 = vmatmul.mubr.bf16.gmra.mxu0 %v654
    %v726 = vpop.f32.mrf.mxu0
    %v727 = vadd.f32 0.0, %v726
    %v728 = vpop.f32.mrf.mxu0
    %v729 = vpop.f32.mrf.mxu0
    %v730 = vadd.f32 0.0, %v729
    %v731 = vpop.f32.mrf.mxu0
    %732 = vmatprep.mubr.bf16.mxu0 0
    %733 = vmatmul.mubr.bf16.gmra.mxu0 %v657
    %v734 = vpop.f32.mrf.mxu0
    %v735 = vadd.f32 0.0, %v734
    %v736 = vpop.f32.mrf.mxu0
    %v737 = vpop.f32.mrf.mxu0
    %v738 = vadd.f32 0.0, %v737
    %v739 = vpop.f32.mrf.mxu0
    %740 = vmatprep.mubr.bf16.mxu0 0
    %741 = vmatmul.mubr.bf16.gmra.mxu0 %v660
    %v742 = vpop.f32.mrf.mxu0
    %v743 = vadd.f32 0.0, %v742
    %v744 = vpop.f32.mrf.mxu0
    %v745 = vpop.f32.mrf.mxu0
    %v746 = vadd.f32 0.0, %v745
    %v747 = vpop.f32.mrf.mxu0
    %748 = vmatprep.mubr.bf16.mxu0 0
    %749 = vmatmul.mubr.bf16.gmra.mxu0 %v663
    %v750 = vpop.f32.mrf.mxu0
    %v751 = vadd.f32 0.0, %v750
    %v752 = vpop.f32.mrf.mxu0
    %v753 = vpop.f32.mrf.mxu0
    %v754 = vadd.f32 0.0, %v753
    %v755 = vpop.f32.mrf.mxu0
    %756 = vmatprep.mubr.bf16.mxu0 0
    %757 = vmatmul.mubr.bf16.gmra.mxu0 %v666
    %v758 = vpop.f32.mrf.mxu0
    %v759 = vadd.f32 0.0, %v758
    %v760 = vpop.f32.mrf.mxu0
    %v761 = vpop.f32.mrf.mxu0
    %v762 = vadd.f32 0.0, %v761
    %v763 = vpop.f32.mrf.mxu0
    %764 = vdwg.mxu0
    %v765 = vmul.f32 %v703, %v120
    %v766 = vmul.f32 %v706, %v121
    %v767 = vmul.f32 %v711, %v122
    %v768 = vmul.f32 %v714, %v123
    %v769 = vmul.f32 %v719, %v124
    %v770 = vmul.f32 %v722, %v125
    %v771 = vmul.f32 %v727, %v126
    %v772 = vmul.f32 %v730, %v127
    %v773 = vmul.f32 %v735, %v128
    %v774 = vmul.f32 %v738, %v129
    %v775 = vmul.f32 %v743, %v130
    %v776 = vmul.f32 %v746, %v131
    %v777 = vmul.f32 %v751, %v132
    %v778 = vmul.f32 %v754, %v133
    %v779 = vmul.f32 %v759, %v134
    %v780 = vmul.f32 %v762, %v135
    %v781 = vpack.c.bf16 %v766, %v765
    %v782 = vpack.c.bf16 %v768, %v767
    %v783 = vpack.c.bf16 %v770, %v769
    %v784 = vpack.c.bf16 %v772, %v771
    %v785 = vpack.c.bf16 %v774, %v773
    %v786 = vpack.c.bf16 %v776, %v775
    %v787 = vpack.c.bf16 %v778, %v777
    %v788 = vpack.c.bf16 %v780, %v779
    %789 = vmatprep.subr.bf16.mxu0 0
    %790 = vmatpush1.bf16.msra.mxu0 %v788
    %791 = vmatprep.subr.bf16.mxu0 0
    %792 = vmatpush1.bf16.msra.mxu0 %v787
    %793 = vmatprep.subr.bf16.mxu0 0
    %794 = vmatpush1.bf16.msra.mxu0 %v786
    %795 = vmatprep.subr.bf16.mxu0 0
    %796 = vmatpush1.bf16.msra.mxu0 %v785
    %797 = vmatprep.subr.bf16.mxu0 0
    %798 = vmatpush1.bf16.msra.mxu0 %v784
    %799 = vmatprep.subr.bf16.mxu0 0
    %800 = vmatpush1.bf16.msra.mxu0 %v783
    %801 = vmatprep.subr.bf16.mxu0 0
    %802 = vmatpush1.bf16.msra.mxu0 %v782
    %803 = vmatprep.subr.bf16.mxu0 0
    %804 = vmatpush1.bf16.msra.mxu0 %v781
    %805 = vmatprep.subr.bf16.mxu0 0
    %806 = vmatpush2.bf16.msra.mxu0 0
    %807 = vmatprep.subr.bf16.mxu0 0
    %808 = vmatpush2.bf16.msra.mxu0 0
    %809 = vmatprep.subr.bf16.mxu0 0
    %810 = vmatpush2.bf16.msra.mxu0 0
    %811 = vmatprep.subr.bf16.mxu0 0
    %812 = vmatpush2.bf16.msra.mxu0 0
    %813 = vmatprep.subr.bf16.mxu0 0
    %814 = vmatpush2.bf16.msra.mxu0 0
    %815 = vmatprep.subr.bf16.mxu0 0
    %816 = vmatpush2.bf16.msra.mxu0 0
    %817 = vmatprep.subr.bf16.mxu0 0
    %818 = vmatpush2.bf16.msra.mxu0 0
    %819 = vmatprep.subr.bf16.mxu0 0
    %820 = vmatpush2.bf16.msra.mxu0 0
    %821 = vmatprep.mubr.bf16.mxu0 0
    %822 = vmatmul.mubr.bf16.gmra.mxu0 %v615
    %v823 = vpop.f32.mrf.mxu0
    %v824 = vadd.f32 0.0, %v823
    %v825 = vpop.f32.mrf.mxu0
    %v826 = vpop.f32.mrf.mxu0
    %v827 = vadd.f32 0.0, %v826
    %v828 = vpop.f32.mrf.mxu0
    %829 = vdwg.mxu0
    %v830 = vadd.f32 %v599, %v600
    %v831 = vrot.slane %v830, 4
    %v832 = vadd.f32 %v830, %v831
    %v833 = vrot.slane %v832, 2
    %v834 = vadd.f32 %v832, %v833
    %v835 = vrot.slane %v834, 1
    %v836 = vadd.f32 %v834, %v835
    %v837 = vmul.f32 %v559, %v836
    %v838 = vmul.f32 %v560, %v836
    %v839 = vpack.c.bf16 %v838, %v837
    %840 = vmatprep.subr.bf16.mxu0 0
    %841 = vmatpush1.bf16.msra.mxu0 %v143
    %842 = vmatprep.subr.bf16.mxu0 0
    %843 = vmatpush1.bf16.msra.mxu0 %v142
    %844 = vmatprep.subr.bf16.mxu0 0
    %845 = vmatpush1.bf16.msra.mxu0 %v141
    %846 = vmatprep.subr.bf16.mxu0 0
    %847 = vmatpush1.bf16.msra.mxu0 %v140
    %848 = vmatprep.subr.bf16.mxu0 0
    %849 = vmatpush1.bf16.msra.mxu0 %v139
    %850 = vmatprep.subr.bf16.mxu0 0
    %851 = vmatpush1.bf16.msra.mxu0 %v138
    %852 = vmatprep.subr.bf16.mxu0 0
    %853 = vmatpush1.bf16.msra.mxu0 %v137
    %854 = vmatprep.subr.bf16.mxu0 0
    %855 = vmatpush1.bf16.msra.mxu0 %v136
    %856 = vmatprep.subr.bf16.mxu0 0
    %857 = vmatpush2.bf16.msra.mxu0 0
    %858 = vmatprep.subr.bf16.mxu0 0
    %859 = vmatpush2.bf16.msra.mxu0 0
    %860 = vmatprep.subr.bf16.mxu0 0
    %861 = vmatpush2.bf16.msra.mxu0 0
    %862 = vmatprep.subr.bf16.mxu0 0
    %863 = vmatpush2.bf16.msra.mxu0 0
    %864 = vmatprep.subr.bf16.mxu0 0
    %865 = vmatpush2.bf16.msra.mxu0 0
    %866 = vmatprep.subr.bf16.mxu0 0
    %867 = vmatpush2.bf16.msra.mxu0 0
    %868 = vmatprep.subr.bf16.mxu0 0
    %869 = vmatpush2.bf16.msra.mxu0 0
    %870 = vmatprep.subr.bf16.mxu0 0
    %871 = vmatpush2.bf16.msra.mxu0 0
    %872 = vmatprep.mubr.bf16.mxu0 0
    %873 = vmatmul.mubr.bf16.gmra.mxu0 %v839
    %v874 = vpop.f32.mrf.mxu0
    %v875 = vadd.f32 1e-06, %v874
    %v876 = vpop.f32.mrf.mxu0
    %v877 = vpop.f32.mrf.mxu0
    %v878 = vadd.f32 1e-06, %v877
    %v879 = vpop.f32.mrf.mxu0
    %880 = vdwg.mxu0
    %v881 = vrcp.pop %v875
    %v882 = vrcp.pop %v878
    %v883 = vmul.f32 %v881, 16.0
    %v884 = vmul.f32 %v882, 16.0
    %v885 = vmul.f32 %v824, %v883
    %v886 = vmul.f32 %v827, %v884
    %887 = vxpose.xlu0.c.b16.start [1/8] %v620, 128
    %888 = vxpose.xlu0.c.b16.cont [2/8] 0, 128
    %889 = vxpose.xlu0.c.b16.cont [3/8] 0, 128
    %890 = vxpose.xlu0.c.b16.cont [4/8] 0, 128
    %891 = vxpose.xlu0.c.b16.cont [5/8] 0, 128
    %892 = vxpose.xlu0.c.b16.cont [6/8] 0, 128
    %893 = vxpose.xlu0.c.b16.cont [7/8] 0, 128
    %894 = vxpose.xlu0.c.b16.end [8/8] 0, 128
    %v895 = vpop.trf.xlu0
    %v896 = vpop.trf.xlu0
    %v897 = vpop.trf.xlu0
    %v898 = vpop.trf.xlu0
    %v899 = vpop.trf.xlu0
    %v900 = vpop.trf.xlu0
    %v901 = vpop.trf.xlu0
    %v902 = vpop.trf.xlu0
    %v904 = vsel %vm643, %v895, 0
    %v907 = vsel %vm643, %v896, 0
    %v910 = vsel %vm643, %v897, 0
    %v913 = vsel %vm643, %v898, 0
    %v916 = vsel %vm643, %v899, 0
    %v919 = vsel %vm643, %v900, 0
    %v922 = vsel %vm643, %v901, 0
    %v925 = vsel %vm643, %v902, 0
    %927 = vmatprep.subr.bf16.mxu0 0
    %928 = vmatpush1.bf16.msra.mxu0 0
    %929 = vmatprep.subr.bf16.mxu0 0
    %930 = vmatpush1.bf16.msra.mxu0 0
    %931 = vmatprep.subr.bf16.mxu0 0
    %932 = vmatpush1.bf16.msra.mxu0 0
    %933 = vmatprep.subr.bf16.mxu0 0
    %934 = vmatpush1.bf16.msra.mxu0 0
    %935 = vmatprep.subr.bf16.mxu0 0
    %936 = vmatpush1.bf16.msra.mxu0 0
    %937 = vmatprep.subr.bf16.mxu0 0
    %938 = vmatpush1.bf16.msra.mxu0 0
    %939 = vmatprep.subr.bf16.mxu0 0
    %940 = vmatpush1.bf16.msra.mxu0 0
    %941 = vmatprep.subr.bf16.mxu0 0
    %942 = vmatpush1.bf16.msra.mxu0 %v624
    %943 = vmatprep.subr.bf16.mxu0 0
    %944 = vmatpush2.bf16.msra.mxu0 0
    %945 = vmatprep.subr.bf16.mxu0 0
    %946 = vmatpush2.bf16.msra.mxu0 0
    %947 = vmatprep.subr.bf16.mxu0 0
    %948 = vmatpush2.bf16.msra.mxu0 0
    %949 = vmatprep.subr.bf16.mxu0 0
    %950 = vmatpush2.bf16.msra.mxu0 0
    %951 = vmatprep.subr.bf16.mxu0 0
    %952 = vmatpush2.bf16.msra.mxu0 0
    %953 = vmatprep.subr.bf16.mxu0 0
    %954 = vmatpush2.bf16.msra.mxu0 0
    %955 = vmatprep.subr.bf16.mxu0 0
    %956 = vmatpush2.bf16.msra.mxu0 0
    %957 = vmatprep.subr.bf16.mxu0 0
    %958 = vmatpush2.bf16.msra.mxu0 0
    %959 = vmatprep.mubr.bf16.mxu0 0
    %960 = vmatmul.mubr.bf16.gmra.mxu0 %v904
    %v961 = vpop.f32.mrf.mxu0
    %v962 = vadd.f32 0.0, %v961
    %v963 = vpop.f32.mrf.mxu0
    %v964 = vpop.f32.mrf.mxu0
    %v965 = vadd.f32 0.0, %v964
    %v966 = vpop.f32.mrf.mxu0
    %967 = vmatprep.mubr.bf16.mxu0 0
    %968 = vmatmul.mubr.bf16.gmra.mxu0 %v907
    %v969 = vpop.f32.mrf.mxu0
    %v970 = vadd.f32 0.0, %v969
    %v971 = vpop.f32.mrf.mxu0
    %v972 = vpop.f32.mrf.mxu0
    %v973 = vadd.f32 0.0, %v972
    %v974 = vpop.f32.mrf.mxu0
    %975 = vmatprep.mubr.bf16.mxu0 0
    %976 = vmatmul.mubr.bf16.gmra.mxu0 %v910
    %v977 = vpop.f32.mrf.mxu0
    %v978 = vadd.f32 0.0, %v977
    %v979 = vpop.f32.mrf.mxu0
    %v980 = vpop.f32.mrf.mxu0
    %v981 = vadd.f32 0.0, %v980
    %v982 = vpop.f32.mrf.mxu0
    %983 = vmatprep.mubr.bf16.mxu0 0
    %984 = vmatmul.mubr.bf16.gmra.mxu0 %v913
    %v985 = vpop.f32.mrf.mxu0
    %v986 = vadd.f32 0.0, %v985
    %v987 = vpop.f32.mrf.mxu0
    %v988 = vpop.f32.mrf.mxu0
    %v989 = vadd.f32 0.0, %v988
    %v990 = vpop.f32.mrf.mxu0
    %991 = vmatprep.mubr.bf16.mxu0 0
    %992 = vmatmul.mubr.bf16.gmra.mxu0 %v916
    %v993 = vpop.f32.mrf.mxu0
    %v994 = vadd.f32 0.0, %v993
    %v995 = vpop.f32.mrf.mxu0
    %v996 = vpop.f32.mrf.mxu0
    %v997 = vadd.f32 0.0, %v996
    %v998 = vpop.f32.mrf.mxu0
    %999 = vmatprep.mubr.bf16.mxu0 0
    %1000 = vmatmul.mubr.bf16.gmra.mxu0 %v919
    %v1001 = vpop.f32.mrf.mxu0
    %v1002 = vadd.f32 0.0, %v1001
    %v1003 = vpop.f32.mrf.mxu0
    %v1004 = vpop.f32.mrf.mxu0
    %v1005 = vadd.f32 0.0, %v1004
    %v1006 = vpop.f32.mrf.mxu0
    %1007 = vmatprep.mubr.bf16.mxu0 0
    %1008 = vmatmul.mubr.bf16.gmra.mxu0 %v922
    %v1009 = vpop.f32.mrf.mxu0
    %v1010 = vadd.f32 0.0, %v1009
    %v1011 = vpop.f32.mrf.mxu0
    %v1012 = vpop.f32.mrf.mxu0
    %v1013 = vadd.f32 0.0, %v1012
    %v1014 = vpop.f32.mrf.mxu0
    %1015 = vmatprep.mubr.bf16.mxu0 0
    %1016 = vmatmul.mubr.bf16.gmra.mxu0 %v925
    %v1017 = vpop.f32.mrf.mxu0
    %v1018 = vadd.f32 0.0, %v1017
    %v1019 = vpop.f32.mrf.mxu0
    %v1020 = vpop.f32.mrf.mxu0
    %v1021 = vadd.f32 0.0, %v1020
    %v1022 = vpop.f32.mrf.mxu0
    %1023 = vdwg.mxu0
    %v1024 = vmul.f32 %v962, %v120
    %v1025 = vmul.f32 %v965, %v121
    %v1026 = vmul.f32 %v970, %v122
    %v1027 = vmul.f32 %v973, %v123
    %v1028 = vmul.f32 %v978, %v124
    %v1029 = vmul.f32 %v981, %v125
    %v1030 = vmul.f32 %v986, %v126
    %v1031 = vmul.f32 %v989, %v127
    %v1032 = vmul.f32 %v994, %v128
    %v1033 = vmul.f32 %v997, %v129
    %v1034 = vmul.f32 %v1002, %v130
    %v1035 = vmul.f32 %v1005, %v131
    %v1036 = vmul.f32 %v1010, %v132
    %v1037 = vmul.f32 %v1013, %v133
    %v1038 = vmul.f32 %v1018, %v134
    %v1039 = vmul.f32 %v1021, %v135
    %v1040 = vpack.c.bf16 %v1025, %v1024
    %v1041 = vpack.c.bf16 %v1027, %v1026
    %v1042 = vpack.c.bf16 %v1029, %v1028
    %v1043 = vpack.c.bf16 %v1031, %v1030
    %v1044 = vpack.c.bf16 %v1033, %v1032
    %v1045 = vpack.c.bf16 %v1035, %v1034
    %v1046 = vpack.c.bf16 %v1037, %v1036
    %v1047 = vpack.c.bf16 %v1039, %v1038
    %1048 = vmatprep.subr.bf16.mxu0 0
    %1049 = vmatpush1.bf16.msra.mxu0 %v1047
    %1050 = vmatprep.subr.bf16.mxu0 0
    %1051 = vmatpush1.bf16.msra.mxu0 %v1046
    %1052 = vmatprep.subr.bf16.mxu0 0
    %1053 = vmatpush1.bf16.msra.mxu0 %v1045
    %1054 = vmatprep.subr.bf16.mxu0 0
    %1055 = vmatpush1.bf16.msra.mxu0 %v1044
    %1056 = vmatprep.subr.bf16.mxu0 0
    %1057 = vmatpush1.bf16.msra.mxu0 %v1043
    %1058 = vmatprep.subr.bf16.mxu0 0
    %1059 = vmatpush1.bf16.msra.mxu0 %v1042
    %1060 = vmatprep.subr.bf16.mxu0 0
    %1061 = vmatpush1.bf16.msra.mxu0 %v1041
    %1062 = vmatprep.subr.bf16.mxu0 0
    %1063 = vmatpush1.bf16.msra.mxu0 %v1040
    %1064 = vmatprep.subr.bf16.mxu0 0
    %1065 = vmatpush2.bf16.msra.mxu0 0
    %1066 = vmatprep.subr.bf16.mxu0 0
    %1067 = vmatpush2.bf16.msra.mxu0 0
    %1068 = vmatprep.subr.bf16.mxu0 0
    %1069 = vmatpush2.bf16.msra.mxu0 0
    %1070 = vmatprep.subr.bf16.mxu0 0
    %1071 = vmatpush2.bf16.msra.mxu0 0
    %1072 = vmatprep.subr.bf16.mxu0 0
    %1073 = vmatpush2.bf16.msra.mxu0 0
    %1074 = vmatprep.subr.bf16.mxu0 0
    %1075 = vmatpush2.bf16.msra.mxu0 0
    %1076 = vmatprep.subr.bf16.mxu0 0
    %1077 = vmatpush2.bf16.msra.mxu0 0
    %1078 = vmatprep.subr.bf16.mxu0 0
    %1079 = vmatpush2.bf16.msra.mxu0 0
    %1080 = vmatprep.mubr.bf16.mxu0 0
    %1081 = vmatmul.mubr.bf16.gmra.mxu0 %v616
    %v1082 = vpop.f32.mrf.mxu0
    %v1083 = vadd.f32 0.0, %v1082
    %v1084 = vpop.f32.mrf.mxu0
    %v1085 = vpop.f32.mrf.mxu0
    %v1086 = vadd.f32 0.0, %v1085
    %v1087 = vpop.f32.mrf.mxu0
    %1088 = vdwg.mxu0
    %v1089 = vadd.f32 %v601, %v602
    %v1090 = vrot.slane %v1089, 4
    %v1091 = vadd.f32 %v1089, %v1090
    %v1092 = vrot.slane %v1091, 2
    %v1093 = vadd.f32 %v1091, %v1092
    %v1094 = vrot.slane %v1093, 1
    %v1095 = vadd.f32 %v1093, %v1094
    %v1096 = vmul.f32 %v561, %v1095
    %v1097 = vmul.f32 %v562, %v1095
    %v1098 = vpack.c.bf16 %v1097, %v1096
    %1099 = vmatprep.subr.bf16.mxu0 0
    %1100 = vmatpush1.bf16.msra.mxu0 %v143
    %1101 = vmatprep.subr.bf16.mxu0 0
    %1102 = vmatpush1.bf16.msra.mxu0 %v142
    %1103 = vmatprep.subr.bf16.mxu0 0
    %1104 = vmatpush1.bf16.msra.mxu0 %v141
    %1105 = vmatprep.subr.bf16.mxu0 0
    %1106 = vmatpush1.bf16.msra.mxu0 %v140
    %1107 = vmatprep.subr.bf16.mxu0 0
    %1108 = vmatpush1.bf16.msra.mxu0 %v139
    %1109 = vmatprep.subr.bf16.mxu0 0
    %1110 = vmatpush1.bf16.msra.mxu0 %v138
    %1111 = vmatprep.subr.bf16.mxu0 0
    %1112 = vmatpush1.bf16.msra.mxu0 %v137
    %1113 = vmatprep.subr.bf16.mxu0 0
    %1114 = vmatpush1.bf16.msra.mxu0 %v136
    %1115 = vmatprep.subr.bf16.mxu0 0
    %1116 = vmatpush2.bf16.msra.mxu0 0
    %1117 = vmatprep.subr.bf16.mxu0 0
    %1118 = vmatpush2.bf16.msra.mxu0 0
    %1119 = vmatprep.subr.bf16.mxu0 0
    %1120 = vmatpush2.bf16.msra.mxu0 0
    %1121 = vmatprep.subr.bf16.mxu0 0
    %1122 = vmatpush2.bf16.msra.mxu0 0
    %1123 = vmatprep.subr.bf16.mxu0 0
    %1124 = vmatpush2.bf16.msra.mxu0 0
    %1125 = vmatprep.subr.bf16.mxu0 0
    %1126 = vmatpush2.bf16.msra.mxu0 0
    %1127 = vmatprep.subr.bf16.mxu0 0
    %1128 = vmatpush2.bf16.msra.mxu0 0
    %1129 = vmatprep.subr.bf16.mxu0 0
    %1130 = vmatpush2.bf16.msra.mxu0 0
    %1131 = vmatprep.mubr.bf16.mxu0 0
    %1132 = vmatmul.mubr.bf16.gmra.mxu0 %v1098
    %v1133 = vpop.f32.mrf.mxu0
    %v1134 = vadd.f32 1e-06, %v1133
    %v1135 = vpop.f32.mrf.mxu0
    %v1136 = vpop.f32.mrf.mxu0
    %v1137 = vadd.f32 1e-06, %v1136
    %v1138 = vpop.f32.mrf.mxu0
    %1139 = vdwg.mxu0
    %v1140 = vrcp.pop %v1134
    %v1141 = vrcp.pop %v1137
    %v1142 = vmul.f32 %v1140, 16.0
    %v1143 = vmul.f32 %v1141, 16.0
    %v1144 = vmul.f32 %v1083, %v1142
    %v1145 = vmul.f32 %v1086, %v1143
    %1146 = vxpose.xlu0.c.b16.start [1/8] %v621, 128
    %1147 = vxpose.xlu0.c.b16.cont [2/8] 0, 128
    %1148 = vxpose.xlu0.c.b16.cont [3/8] 0, 128
    %1149 = vxpose.xlu0.c.b16.cont [4/8] 0, 128
    %1150 = vxpose.xlu0.c.b16.cont [5/8] 0, 128
    %1151 = vxpose.xlu0.c.b16.cont [6/8] 0, 128
    %1152 = vxpose.xlu0.c.b16.cont [7/8] 0, 128
    %1153 = vxpose.xlu0.c.b16.end [8/8] 0, 128
    %v1154 = vpop.trf.xlu0
    %v1155 = vpop.trf.xlu0
    %v1156 = vpop.trf.xlu0
    %v1157 = vpop.trf.xlu0
    %v1158 = vpop.trf.xlu0
    %v1159 = vpop.trf.xlu0
    %v1160 = vpop.trf.xlu0
    %v1161 = vpop.trf.xlu0
    %v1163 = vsel %vm643, %v1154, 0
    %v1166 = vsel %vm643, %v1155, 0
    %v1169 = vsel %vm643, %v1156, 0
    %v1172 = vsel %vm643, %v1157, 0
    %v1175 = vsel %vm643, %v1158, 0
    %v1178 = vsel %vm643, %v1159, 0
    %v1181 = vsel %vm643, %v1160, 0
    %v1184 = vsel %vm643, %v1161, 0
    %1186 = vmatprep.subr.bf16.mxu0 0
    %1187 = vmatpush1.bf16.msra.mxu0 0
    %1188 = vmatprep.subr.bf16.mxu0 0
    %1189 = vmatpush1.bf16.msra.mxu0 0
    %1190 = vmatprep.subr.bf16.mxu0 0
    %1191 = vmatpush1.bf16.msra.mxu0 0
    %1192 = vmatprep.subr.bf16.mxu0 0
    %1193 = vmatpush1.bf16.msra.mxu0 0
    %1194 = vmatprep.subr.bf16.mxu0 0
    %1195 = vmatpush1.bf16.msra.mxu0 0
    %1196 = vmatprep.subr.bf16.mxu0 0
    %1197 = vmatpush1.bf16.msra.mxu0 0
    %1198 = vmatprep.subr.bf16.mxu0 0
    %1199 = vmatpush1.bf16.msra.mxu0 0
    %1200 = vmatprep.subr.bf16.mxu0 0
    %1201 = vmatpush1.bf16.msra.mxu0 %v625
    %1202 = vmatprep.subr.bf16.mxu0 0
    %1203 = vmatpush2.bf16.msra.mxu0 0
    %1204 = vmatprep.subr.bf16.mxu0 0
    %1205 = vmatpush2.bf16.msra.mxu0 0
    %1206 = vmatprep.subr.bf16.mxu0 0
    %1207 = vmatpush2.bf16.msra.mxu0 0
    %1208 = vmatprep.subr.bf16.mxu0 0
    %1209 = vmatpush2.bf16.msra.mxu0 0
    %1210 = vmatprep.subr.bf16.mxu0 0
    %1211 = vmatpush2.bf16.msra.mxu0 0
    %1212 = vmatprep.subr.bf16.mxu0 0
    %1213 = vmatpush2.bf16.msra.mxu0 0
    %1214 = vmatprep.subr.bf16.mxu0 0
    %1215 = vmatpush2.bf16.msra.mxu0 0
    %1216 = vmatprep.subr.bf16.mxu0 0
    %1217 = vmatpush2.bf16.msra.mxu0 0
    %1218 = vmatprep.mubr.bf16.mxu0 0
    %1219 = vmatmul.mubr.bf16.gmra.mxu0 %v1163
    %v1220 = vpop.f32.mrf.mxu0
    %v1221 = vadd.f32 0.0, %v1220
    %v1222 = vpop.f32.mrf.mxu0
    %v1223 = vpop.f32.mrf.mxu0
    %v1224 = vadd.f32 0.0, %v1223
    %v1225 = vpop.f32.mrf.mxu0
    %1226 = vmatprep.mubr.bf16.mxu0 0
    %1227 = vmatmul.mubr.bf16.gmra.mxu0 %v1166
    %v1228 = vpop.f32.mrf.mxu0
    %v1229 = vadd.f32 0.0, %v1228
    %v1230 = vpop.f32.mrf.mxu0
    %v1231 = vpop.f32.mrf.mxu0
    %v1232 = vadd.f32 0.0, %v1231
    %v1233 = vpop.f32.mrf.mxu0
    %1234 = vmatprep.mubr.bf16.mxu0 0
    %1235 = vmatmul.mubr.bf16.gmra.mxu0 %v1169
    %v1236 = vpop.f32.mrf.mxu0
    %v1237 = vadd.f32 0.0, %v1236
    %v1238 = vpop.f32.mrf.mxu0
    %v1239 = vpop.f32.mrf.mxu0
    %v1240 = vadd.f32 0.0, %v1239
    %v1241 = vpop.f32.mrf.mxu0
    %1242 = vmatprep.mubr.bf16.mxu0 0
    %1243 = vmatmul.mubr.bf16.gmra.mxu0 %v1172
    %v1244 = vpop.f32.mrf.mxu0
    %v1245 = vadd.f32 0.0, %v1244
    %v1246 = vpop.f32.mrf.mxu0
    %v1247 = vpop.f32.mrf.mxu0
    %v1248 = vadd.f32 0.0, %v1247
    %v1249 = vpop.f32.mrf.mxu0
    %1250 = vmatprep.mubr.bf16.mxu0 0
    %1251 = vmatmul.mubr.bf16.gmra.mxu0 %v1175
    %v1252 = vpop.f32.mrf.mxu0
    %v1253 = vadd.f32 0.0, %v1252
    %v1254 = vpop.f32.mrf.mxu0
    %v1255 = vpop.f32.mrf.mxu0
    %v1256 = vadd.f32 0.0, %v1255
    %v1257 = vpop.f32.mrf.mxu0
    %1258 = vmatprep.mubr.bf16.mxu0 0
    %1259 = vmatmul.mubr.bf16.gmra.mxu0 %v1178
    %v1260 = vpop.f32.mrf.mxu0
    %v1261 = vadd.f32 0.0, %v1260
    %v1262 = vpop.f32.mrf.mxu0
    %v1263 = vpop.f32.mrf.mxu0
    %v1264 = vadd.f32 0.0, %v1263
    %v1265 = vpop.f32.mrf.mxu0
    %1266 = vmatprep.mubr.bf16.mxu0 0
    %1267 = vmatmul.mubr.bf16.gmra.mxu0 %v1181
    %v1268 = vpop.f32.mrf.mxu0
    %v1269 = vadd.f32 0.0, %v1268
    %v1270 = vpop.f32.mrf.mxu0
    %v1271 = vpop.f32.mrf.mxu0
    %v1272 = vadd.f32 0.0, %v1271
    %v1273 = vpop.f32.mrf.mxu0
    %1274 = vmatprep.mubr.bf16.mxu0 0
    %1275 = vmatmul.mubr.bf16.gmra.mxu0 %v1184
    %v1276 = vpop.f32.mrf.mxu0
    %v1277 = vadd.f32 0.0, %v1276
    %v1278 = vpop.f32.mrf.mxu0
    %v1279 = vpop.f32.mrf.mxu0
    %v1280 = vadd.f32 0.0, %v1279
    %v1281 = vpop.f32.mrf.mxu0
    %1282 = vdwg.mxu0
    %v1283 = vmul.f32 %v1221, %v120
    %v1284 = vmul.f32 %v1224, %v121
    %v1285 = vmul.f32 %v1229, %v122
    %v1286 = vmul.f32 %v1232, %v123
    %v1287 = vmul.f32 %v1237, %v124
    %v1288 = vmul.f32 %v1240, %v125
    %v1289 = vmul.f32 %v1245, %v126
    %v1290 = vmul.f32 %v1248, %v127
    %v1291 = vmul.f32 %v1253, %v128
    %v1292 = vmul.f32 %v1256, %v129
    %v1293 = vmul.f32 %v1261, %v130
    %v1294 = vmul.f32 %v1264, %v131
    %v1295 = vmul.f32 %v1269, %v132
    %v1296 = vmul.f32 %v1272, %v133
    %v1297 = vmul.f32 %v1277, %v134
    %v1298 = vmul.f32 %v1280, %v135
    %v1299 = vpack.c.bf16 %v1284, %v1283
    %v1300 = vpack.c.bf16 %v1286, %v1285
    %v1301 = vpack.c.bf16 %v1288, %v1287
    %v1302 = vpack.c.bf16 %v1290, %v1289
    %v1303 = vpack.c.bf16 %v1292, %v1291
    %v1304 = vpack.c.bf16 %v1294, %v1293
    %v1305 = vpack.c.bf16 %v1296, %v1295
    %v1306 = vpack.c.bf16 %v1298, %v1297
    %1307 = vmatprep.subr.bf16.mxu0 0
    %1308 = vmatpush1.bf16.msra.mxu0 %v1306
    %1309 = vmatprep.subr.bf16.mxu0 0
    %1310 = vmatpush1.bf16.msra.mxu0 %v1305
    %1311 = vmatprep.subr.bf16.mxu0 0
    %1312 = vmatpush1.bf16.msra.mxu0 %v1304
    %1313 = vmatprep.subr.bf16.mxu0 0
    %1314 = vmatpush1.bf16.msra.mxu0 %v1303
    %1315 = vmatprep.subr.bf16.mxu0 0
    %1316 = vmatpush1.bf16.msra.mxu0 %v1302
    %1317 = vmatprep.subr.bf16.mxu0 0
    %1318 = vmatpush1.bf16.msra.mxu0 %v1301
    %1319 = vmatprep.subr.bf16.mxu0 0
    %1320 = vmatpush1.bf16.msra.mxu0 %v1300
    %1321 = vmatprep.subr.bf16.mxu0 0
    %1322 = vmatpush1.bf16.msra.mxu0 %v1299
    %1323 = vmatprep.subr.bf16.mxu0 0
    %1324 = vmatpush2.bf16.msra.mxu0 0
    %1325 = vmatprep.subr.bf16.mxu0 0
    %1326 = vmatpush2.bf16.msra.mxu0 0
    %1327 = vmatprep.subr.bf16.mxu0 0
    %1328 = vmatpush2.bf16.msra.mxu0 0
    %1329 = vmatprep.subr.bf16.mxu0 0
    %1330 = vmatpush2.bf16.msra.mxu0 0
    %1331 = vmatprep.subr.bf16.mxu0 0
    %1332 = vmatpush2.bf16.msra.mxu0 0
    %1333 = vmatprep.subr.bf16.mxu0 0
    %1334 = vmatpush2.bf16.msra.mxu0 0
    %1335 = vmatprep.subr.bf16.mxu0 0
    %1336 = vmatpush2.bf16.msra.mxu0 0
    %1337 = vmatprep.subr.bf16.mxu0 0
    %1338 = vmatpush2.bf16.msra.mxu0 0
    %1339 = vmatprep.mubr.bf16.mxu0 0
    %1340 = vmatmul.mubr.bf16.gmra.mxu0 %v617
    %v1341 = vpop.f32.mrf.mxu0
    %v1342 = vadd.f32 0.0, %v1341
    %v1343 = vpop.f32.mrf.mxu0
    %v1344 = vpop.f32.mrf.mxu0
    %v1345 = vadd.f32 0.0, %v1344
    %v1346 = vpop.f32.mrf.mxu0
    %1347 = vdwg.mxu0
    %v1348 = vadd.f32 %v603, %v604
    %v1349 = vrot.slane %v1348, 4
    %v1350 = vadd.f32 %v1348, %v1349
    %v1351 = vrot.slane %v1350, 2
    %v1352 = vadd.f32 %v1350, %v1351
    %v1353 = vrot.slane %v1352, 1
    %v1354 = vadd.f32 %v1352, %v1353
    %v1355 = vmul.f32 %v563, %v1354
    %v1356 = vmul.f32 %v564, %v1354
    %v1357 = vpack.c.bf16 %v1356, %v1355
    %1358 = vmatprep.subr.bf16.mxu0 0
    %1359 = vmatpush1.bf16.msra.mxu0 %v143
    %1360 = vmatprep.subr.bf16.mxu0 0
    %1361 = vmatpush1.bf16.msra.mxu0 %v142
    %1362 = vmatprep.subr.bf16.mxu0 0
    %1363 = vmatpush1.bf16.msra.mxu0 %v141
    %1364 = vmatprep.subr.bf16.mxu0 0
    %1365 = vmatpush1.bf16.msra.mxu0 %v140
    %1366 = vmatprep.subr.bf16.mxu0 0
    %1367 = vmatpush1.bf16.msra.mxu0 %v139
    %1368 = vmatprep.subr.bf16.mxu0 0
    %1369 = vmatpush1.bf16.msra.mxu0 %v138
    %1370 = vmatprep.subr.bf16.mxu0 0
    %1371 = vmatpush1.bf16.msra.mxu0 %v137
    %1372 = vmatprep.subr.bf16.mxu0 0
    %1373 = vmatpush1.bf16.msra.mxu0 %v136
    %1374 = vmatprep.subr.bf16.mxu0 0
    %1375 = vmatpush2.bf16.msra.mxu0 0
    %1376 = vmatprep.subr.bf16.mxu0 0
    %1377 = vmatpush2.bf16.msra.mxu0 0
    %1378 = vmatprep.subr.bf16.mxu0 0
    %1379 = vmatpush2.bf16.msra.mxu0 0
    %1380 = vmatprep.subr.bf16.mxu0 0
    %1381 = vmatpush2.bf16.msra.mxu0 0
    %1382 = vmatprep.subr.bf16.mxu0 0
    %1383 = vmatpush2.bf16.msra.mxu0 0
    %1384 = vmatprep.subr.bf16.mxu0 0
    %1385 = vmatpush2.bf16.msra.mxu0 0
    %1386 = vmatprep.subr.bf16.mxu0 0
    %1387 = vmatpush2.bf16.msra.mxu0 0
    %1388 = vmatprep.subr.bf16.mxu0 0
    %1389 = vmatpush2.bf16.msra.mxu0 0
    %1390 = vmatprep.mubr.bf16.mxu0 0
    %1391 = vmatmul.mubr.bf16.gmra.mxu0 %v1357
    %v1392 = vpop.f32.mrf.mxu0
    %v1393 = vadd.f32 1e-06, %v1392
    %v1394 = vpop.f32.mrf.mxu0
    %v1395 = vpop.f32.mrf.mxu0
    %v1396 = vadd.f32 1e-06, %v1395
    %v1397 = vpop.f32.mrf.mxu0
    %1398 = vdwg.mxu0
    %v1399 = vrcp.pop %v1393
    %v1400 = vrcp.pop %v1396
    %v1401 = vmul.f32 %v1399, 16.0
    %v1402 = vmul.f32 %v1400, 16.0
    %v1403 = vmul.f32 %v1342, %v1401
    %v1404 = vmul.f32 %v1345, %v1402
    %1405 = vxpose.xlu0.c.b16.start [1/8] %v622, 128
    %1406 = vxpose.xlu0.c.b16.cont [2/8] 0, 128
    %1407 = vxpose.xlu0.c.b16.cont [3/8] 0, 128
    %1408 = vxpose.xlu0.c.b16.cont [4/8] 0, 128
    %1409 = vxpose.xlu0.c.b16.cont [5/8] 0, 128
    %1410 = vxpose.xlu0.c.b16.cont [6/8] 0, 128
    %1411 = vxpose.xlu0.c.b16.cont [7/8] 0, 128
    %1412 = vxpose.xlu0.c.b16.end [8/8] 0, 128
    %v1413 = vpop.trf.xlu0
    %v1414 = vpop.trf.xlu0
    %v1415 = vpop.trf.xlu0
    %v1416 = vpop.trf.xlu0
    %v1417 = vpop.trf.xlu0
    %v1418 = vpop.trf.xlu0
    %v1419 = vpop.trf.xlu0
    %v1420 = vpop.trf.xlu0
    %v1422 = vsel %vm643, %v1413, 0
    %v1425 = vsel %vm643, %v1414, 0
    %v1428 = vsel %vm643, %v1415, 0
    %v1431 = vsel %vm643, %v1416, 0
    %v1434 = vsel %vm643, %v1417, 0
    %v1437 = vsel %vm643, %v1418, 0
    %v1440 = vsel %vm643, %v1419, 0
    %v1443 = vsel %vm643, %v1420, 0
    %1445 = vmatprep.subr.bf16.mxu0 0
    %1446 = vmatpush1.bf16.msra.mxu0 0
    %1447 = vmatprep.subr.bf16.mxu0 0
    %1448 = vmatpush1.bf16.msra.mxu0 0
    %1449 = vmatprep.subr.bf16.mxu0 0
    %1450 = vmatpush1.bf16.msra.mxu0 0
    %1451 = vmatprep.subr.bf16.mxu0 0
    %1452 = vmatpush1.bf16.msra.mxu0 0
    %1453 = vmatprep.subr.bf16.mxu0 0
    %1454 = vmatpush1.bf16.msra.mxu0 0
    %1455 = vmatprep.subr.bf16.mxu0 0
    %1456 = vmatpush1.bf16.msra.mxu0 0
    %1457 = vmatprep.subr.bf16.mxu0 0
    %1458 = vmatpush1.bf16.msra.mxu0 0
    %1459 = vmatprep.subr.bf16.mxu0 0
    %1460 = vmatpush1.bf16.msra.mxu0 %v626
    %1461 = vmatprep.subr.bf16.mxu0 0
    %1462 = vmatpush2.bf16.msra.mxu0 0
    %1463 = vmatprep.subr.bf16.mxu0 0
    %1464 = vmatpush2.bf16.msra.mxu0 0
    %1465 = vmatprep.subr.bf16.mxu0 0
    %1466 = vmatpush2.bf16.msra.mxu0 0
    %1467 = vmatprep.subr.bf16.mxu0 0
    %1468 = vmatpush2.bf16.msra.mxu0 0
    %1469 = vmatprep.subr.bf16.mxu0 0
    %1470 = vmatpush2.bf16.msra.mxu0 0
    %1471 = vmatprep.subr.bf16.mxu0 0
    %1472 = vmatpush2.bf16.msra.mxu0 0
    %1473 = vmatprep.subr.bf16.mxu0 0
    %1474 = vmatpush2.bf16.msra.mxu0 0
    %1475 = vmatprep.subr.bf16.mxu0 0
    %1476 = vmatpush2.bf16.msra.mxu0 0
    %1477 = vmatprep.mubr.bf16.mxu0 0
    %1478 = vmatmul.mubr.bf16.gmra.mxu0 %v1422
    %v1479 = vpop.f32.mrf.mxu0
    %v1480 = vadd.f32 0.0, %v1479
    %v1481 = vpop.f32.mrf.mxu0
    %v1482 = vpop.f32.mrf.mxu0
    %v1483 = vadd.f32 0.0, %v1482
    %v1484 = vpop.f32.mrf.mxu0
    %1485 = vmatprep.mubr.bf16.mxu0 0
    %1486 = vmatmul.mubr.bf16.gmra.mxu0 %v1425
    %v1487 = vpop.f32.mrf.mxu0
    %v1488 = vadd.f32 0.0, %v1487
    %v1489 = vpop.f32.mrf.mxu0
    %v1490 = vpop.f32.mrf.mxu0
    %v1491 = vadd.f32 0.0, %v1490
    %v1492 = vpop.f32.mrf.mxu0
    %1493 = vmatprep.mubr.bf16.mxu0 0
    %1494 = vmatmul.mubr.bf16.gmra.mxu0 %v1428
    %v1495 = vpop.f32.mrf.mxu0
    %v1496 = vadd.f32 0.0, %v1495
    %v1497 = vpop.f32.mrf.mxu0
    %v1498 = vpop.f32.mrf.mxu0
    %v1499 = vadd.f32 0.0, %v1498
    %v1500 = vpop.f32.mrf.mxu0
    %1501 = vmatprep.mubr.bf16.mxu0 0
    %1502 = vmatmul.mubr.bf16.gmra.mxu0 %v1431
    %v1503 = vpop.f32.mrf.mxu0
    %v1504 = vadd.f32 0.0, %v1503
    %v1505 = vpop.f32.mrf.mxu0
    %v1506 = vpop.f32.mrf.mxu0
    %v1507 = vadd.f32 0.0, %v1506
    %v1508 = vpop.f32.mrf.mxu0
    %1509 = vmatprep.mubr.bf16.mxu0 0
    %1510 = vmatmul.mubr.bf16.gmra.mxu0 %v1434
    %v1511 = vpop.f32.mrf.mxu0
    %v1512 = vadd.f32 0.0, %v1511
    %v1513 = vpop.f32.mrf.mxu0
    %v1514 = vpop.f32.mrf.mxu0
    %v1515 = vadd.f32 0.0, %v1514
    %v1516 = vpop.f32.mrf.mxu0
    %1517 = vmatprep.mubr.bf16.mxu0 0
    %1518 = vmatmul.mubr.bf16.gmra.mxu0 %v1437
    %v1519 = vpop.f32.mrf.mxu0
    %v1520 = vadd.f32 0.0, %v1519
    %v1521 = vpop.f32.mrf.mxu0
    %v1522 = vpop.f32.mrf.mxu0
    %v1523 = vadd.f32 0.0, %v1522
    %v1524 = vpop.f32.mrf.mxu0
    %1525 = vmatprep.mubr.bf16.mxu0 0
    %1526 = vmatmul.mubr.bf16.gmra.mxu0 %v1440
    %v1527 = vpop.f32.mrf.mxu0
    %v1528 = vadd.f32 0.0, %v1527
    %v1529 = vpop.f32.mrf.mxu0
    %v1530 = vpop.f32.mrf.mxu0
    %v1531 = vadd.f32 0.0, %v1530
    %v1532 = vpop.f32.mrf.mxu0
    %1533 = vmatprep.mubr.bf16.mxu0 0
    %1534 = vmatmul.mubr.bf16.gmra.mxu0 %v1443
    %v1535 = vpop.f32.mrf.mxu0
    %v1536 = vadd.f32 0.0, %v1535
    %v1537 = vpop.f32.mrf.mxu0
    %v1538 = vpop.f32.mrf.mxu0
    %v1539 = vadd.f32 0.0, %v1538
    %v1540 = vpop.f32.mrf.mxu0
    %1541 = vdwg.mxu0
    %v1542 = vmul.f32 %v1480, %v120
    %v1543 = vmul.f32 %v1483, %v121
    %v1544 = vmul.f32 %v1488, %v122
    %v1545 = vmul.f32 %v1491, %v123
    %v1546 = vmul.f32 %v1496, %v124
    %v1547 = vmul.f32 %v1499, %v125
    %v1548 = vmul.f32 %v1504, %v126
    %v1549 = vmul.f32 %v1507, %v127
    %v1550 = vmul.f32 %v1512, %v128
    %v1551 = vmul.f32 %v1515, %v129
    %v1552 = vmul.f32 %v1520, %v130
    %v1553 = vmul.f32 %v1523, %v131
    %v1554 = vmul.f32 %v1528, %v132
    %v1555 = vmul.f32 %v1531, %v133
    %v1556 = vmul.f32 %v1536, %v134
    %v1557 = vmul.f32 %v1539, %v135
    %v1558 = vpack.c.bf16 %v1543, %v1542
    %v1559 = vpack.c.bf16 %v1545, %v1544
    %v1560 = vpack.c.bf16 %v1547, %v1546
    %v1561 = vpack.c.bf16 %v1549, %v1548
    %v1562 = vpack.c.bf16 %v1551, %v1550
    %v1563 = vpack.c.bf16 %v1553, %v1552
    %v1564 = vpack.c.bf16 %v1555, %v1554
    %v1565 = vpack.c.bf16 %v1557, %v1556
    %1566 = vmatprep.subr.bf16.mxu0 0
    %1567 = vmatpush1.bf16.msra.mxu0 %v1565
    %1568 = vmatprep.subr.bf16.mxu0 0
    %1569 = vmatpush1.bf16.msra.mxu0 %v1564
    %1570 = vmatprep.subr.bf16.mxu0 0
    %1571 = vmatpush1.bf16.msra.mxu0 %v1563
    %1572 = vmatprep.subr.bf16.mxu0 0
    %1573 = vmatpush1.bf16.msra.mxu0 %v1562
    %1574 = vmatprep.subr.bf16.mxu0 0
    %1575 = vmatpush1.bf16.msra.mxu0 %v1561
    %1576 = vmatprep.subr.bf16.mxu0 0
    %1577 = vmatpush1.bf16.msra.mxu0 %v1560
    %1578 = vmatprep.subr.bf16.mxu0 0
    %1579 = vmatpush1.bf16.msra.mxu0 %v1559
    %1580 = vmatprep.subr.bf16.mxu0 0
    %1581 = vmatpush1.bf16.msra.mxu0 %v1558
    %1582 = vmatprep.subr.bf16.mxu0 0
    %1583 = vmatpush2.bf16.msra.mxu0 0
    %1584 = vmatprep.subr.bf16.mxu0 0
    %1585 = vmatpush2.bf16.msra.mxu0 0
    %1586 = vmatprep.subr.bf16.mxu0 0
    %1587 = vmatpush2.bf16.msra.mxu0 0
    %1588 = vmatprep.subr.bf16.mxu0 0
    %1589 = vmatpush2.bf16.msra.mxu0 0
    %1590 = vmatprep.subr.bf16.mxu0 0
    %1591 = vmatpush2.bf16.msra.mxu0 0
    %1592 = vmatprep.subr.bf16.mxu0 0
    %1593 = vmatpush2.bf16.msra.mxu0 0
    %1594 = vmatprep.subr.bf16.mxu0 0
    %1595 = vmatpush2.bf16.msra.mxu0 0
    %1596 = vmatprep.subr.bf16.mxu0 0
    %1597 = vmatpush2.bf16.msra.mxu0 0
    %1598 = vmatprep.mubr.bf16.mxu0 0
    %1599 = vmatmul.mubr.bf16.gmra.mxu0 %v618
    %v1600 = vpop.f32.mrf.mxu0
    %v1601 = vadd.f32 0.0, %v1600
    %v1602 = vpop.f32.mrf.mxu0
    %v1603 = vpop.f32.mrf.mxu0
    %v1604 = vadd.f32 0.0, %v1603
    %v1605 = vpop.f32.mrf.mxu0
    %1606 = vdwg.mxu0
    %v1607 = vadd.f32 %v605, %v606
    %v1608 = vrot.slane %v1607, 4
    %v1609 = vadd.f32 %v1607, %v1608
    %v1610 = vrot.slane %v1609, 2
    %v1611 = vadd.f32 %v1609, %v1610
    %v1612 = vrot.slane %v1611, 1
    %v1613 = vadd.f32 %v1611, %v1612
    %v1614 = vmul.f32 %v565, %v1613
    %v1615 = vmul.f32 %v566, %v1613
    %v1616 = vpack.c.bf16 %v1615, %v1614
    %1617 = vmatprep.subr.bf16.mxu0 0
    %1618 = vmatpush1.bf16.msra.mxu0 %v143
    %1619 = vmatprep.subr.bf16.mxu0 0
    %1620 = vmatpush1.bf16.msra.mxu0 %v142
    %1621 = vmatprep.subr.bf16.mxu0 0
    %1622 = vmatpush1.bf16.msra.mxu0 %v141
    %1623 = vmatprep.subr.bf16.mxu0 0
    %1624 = vmatpush1.bf16.msra.mxu0 %v140
    %1625 = vmatprep.subr.bf16.mxu0 0
    %1626 = vmatpush1.bf16.msra.mxu0 %v139
    %1627 = vmatprep.subr.bf16.mxu0 0
    %1628 = vmatpush1.bf16.msra.mxu0 %v138
    %1629 = vmatprep.subr.bf16.mxu0 0
    %1630 = vmatpush1.bf16.msra.mxu0 %v137
    %1631 = vmatprep.subr.bf16.mxu0 0
    %1632 = vmatpush1.bf16.msra.mxu0 %v136
    %1633 = vmatprep.subr.bf16.mxu0 0
    %1634 = vmatpush2.bf16.msra.mxu0 0
    %1635 = vmatprep.subr.bf16.mxu0 0
    %1636 = vmatpush2.bf16.msra.mxu0 0
    %1637 = vmatprep.subr.bf16.mxu0 0
    %1638 = vmatpush2.bf16.msra.mxu0 0
    %1639 = vmatprep.subr.bf16.mxu0 0
    %1640 = vmatpush2.bf16.msra.mxu0 0
    %1641 = vmatprep.subr.bf16.mxu0 0
    %1642 = vmatpush2.bf16.msra.mxu0 0
    %1643 = vmatprep.subr.bf16.mxu0 0
    %1644 = vmatpush2.bf16.msra.mxu0 0
    %1645 = vmatprep.subr.bf16.mxu0 0
    %1646 = vmatpush2.bf16.msra.mxu0 0
    %1647 = vmatprep.subr.bf16.mxu0 0
    %1648 = vmatpush2.bf16.msra.mxu0 0
    %1649 = vmatprep.mubr.bf16.mxu0 0
    %1650 = vmatmul.mubr.bf16.gmra.mxu0 %v1616
    %v1651 = vpop.f32.mrf.mxu0
    %v1652 = vadd.f32 1e-06, %v1651
    %v1653 = vpop.f32.mrf.mxu0
    %v1654 = vpop.f32.mrf.mxu0
    %v1655 = vadd.f32 1e-06, %v1654
    %v1656 = vpop.f32.mrf.mxu0
    %1657 = vdwg.mxu0
    %v1658 = vrcp.pop %v1652
    %v1659 = vrcp.pop %v1655
    %v1660 = vmul.f32 %v1658, 16.0
    %v1661 = vmul.f32 %v1659, 16.0
    %v1662 = vmul.f32 %v1601, %v1660
    %v1663 = vmul.f32 %v1604, %v1661
    %v1664 = vpack.c.bf16 %v886, %v885
    %v1665 = vpack.c.bf16 %v1145, %v1144
    %v1666 = vpack.c.bf16 %v1404, %v1403
    %v1667 = vpack.c.bf16 %v1663, %v1662
    %v1684 = vunpack.c.l.b16 %v176
    %v1685 = vunpack.c.l.b16 %v177
    %v1686 = vunpack.c.l.b16 %v178
    %v1687 = vunpack.c.l.b16 %v179
    %v1688 = vunpack.c.l.b16 %v180
    %v1689 = vunpack.c.l.b16 %v181
    %v1690 = vunpack.c.l.b16 %v182
    %v1691 = vunpack.c.l.b16 %v183
    %v1692 = vunpack.c.l.b16 %v184
    %v1693 = vunpack.c.l.b16 %v185
    %v1694 = vunpack.c.l.b16 %v186
    %v1695 = vunpack.c.l.b16 %v187
    %v1696 = vunpack.c.l.b16 %v188
    %v1697 = vunpack.c.l.b16 %v189
    %v1698 = vunpack.c.l.b16 %v190
    %v1699 = vunpack.c.l.b16 %v191
    %v1700 = vpack.c.b16 %v1685, %v1684
    %v1701 = vpack.c.b16 %v1687, %v1686
    %v1702 = vpack.c.b16 %v1689, %v1688
    %v1703 = vpack.c.b16 %v1691, %v1690
    %v1704 = vpack.c.b16 %v1693, %v1692
    %v1705 = vpack.c.b16 %v1695, %v1694
    %v1706 = vpack.c.b16 %v1697, %v1696
    %v1707 = vpack.c.b16 %v1699, %v1698
    %1716 = vmatprep.subr.bf16.mxu0 0
    %1717 = vmatpush1.bf16.msra.mxu0 %v1707
    %1718 = vmatprep.subr.bf16.mxu0 0
    %1719 = vmatpush1.bf16.msra.mxu0 %v1706
    %1720 = vmatprep.subr.bf16.mxu0 0
    %1721 = vmatpush1.bf16.msra.mxu0 %v1705
    %1722 = vmatprep.subr.bf16.mxu0 0
    %1723 = vmatpush1.bf16.msra.mxu0 %v1704
    %1724 = vmatprep.subr.bf16.mxu0 0
    %1725 = vmatpush1.bf16.msra.mxu0 %v1703
    %1726 = vmatprep.subr.bf16.mxu0 0
    %1727 = vmatpush1.bf16.msra.mxu0 %v1702
    %1728 = vmatprep.subr.bf16.mxu0 0
    %1729 = vmatpush1.bf16.msra.mxu0 %v1701
    %1730 = vmatprep.subr.bf16.mxu0 0
    %1731 = vmatpush1.bf16.msra.mxu0 %v1700
    %1732 = vmatprep.subr.bf16.mxu0 0
    %1733 = vmatpush2.bf16.msra.mxu0 0
    %1734 = vmatprep.subr.bf16.mxu0 0
    %1735 = vmatpush2.bf16.msra.mxu0 0
    %1736 = vmatprep.subr.bf16.mxu0 0
    %1737 = vmatpush2.bf16.msra.mxu0 0
    %1738 = vmatprep.subr.bf16.mxu0 0
    %1739 = vmatpush2.bf16.msra.mxu0 0
    %1740 = vmatprep.subr.bf16.mxu0 0
    %1741 = vmatpush2.bf16.msra.mxu0 0
    %1742 = vmatprep.subr.bf16.mxu0 0
    %1743 = vmatpush2.bf16.msra.mxu0 0
    %1744 = vmatprep.subr.bf16.mxu0 0
    %1745 = vmatpush2.bf16.msra.mxu0 0
    %1746 = vmatprep.subr.bf16.mxu0 0
    %1747 = vmatpush2.bf16.msra.mxu0 0
    %1748 = vmatprep.mubr.bf16.mxu0 0
    %1749 = vmatmul.mubr.bf16.gmra.mxu0 %v1664
    %v1750 = vpop.f32.mrf.mxu0
    %v1751 = vadd.f32 0.0, %v1750
    %v1752 = vpop.f32.mrf.mxu0
    %v1753 = vpop.f32.mrf.mxu0
    %v1754 = vadd.f32 0.0, %v1753
    %v1755 = vpop.f32.mrf.mxu0
    %1756 = vmatprep.mubr.bf16.mxu0 0
    %1757 = vmatmul.mubr.bf16.gmra.mxu0 %v1665
    %v1758 = vpop.f32.mrf.mxu0
    %v1759 = vadd.f32 0.0, %v1758
    %v1760 = vpop.f32.mrf.mxu0
    %v1761 = vpop.f32.mrf.mxu0
    %v1762 = vadd.f32 0.0, %v1761
    %v1763 = vpop.f32.mrf.mxu0
    %1764 = vmatprep.mubr.bf16.mxu0 0
    %1765 = vmatmul.mubr.bf16.gmra.mxu0 %v1666
    %v1766 = vpop.f32.mrf.mxu0
    %v1767 = vadd.f32 0.0, %v1766
    %v1768 = vpop.f32.mrf.mxu0
    %v1769 = vpop.f32.mrf.mxu0
    %v1770 = vadd.f32 0.0, %v1769
    %v1771 = vpop.f32.mrf.mxu0
    %1772 = vmatprep.mubr.bf16.mxu0 0
    %1773 = vmatmul.mubr.bf16.gmra.mxu0 %v1667
    %v1774 = vpop.f32.mrf.mxu0
    %v1775 = vadd.f32 0.0, %v1774
    %v1776 = vpop.f32.mrf.mxu0
    %v1777 = vpop.f32.mrf.mxu0
    %v1778 = vadd.f32 0.0, %v1777
    %v1779 = vpop.f32.mrf.mxu0
    %1780 = vdwg.mxu0
    %1781 = vadd.xlane.f32.xlu0 %v1751
    %v1782 = vpop.xlane.xlu0 %1781
    %1783 = vadd.xlane.f32.xlu0 %v1754
    %v1784 = vpop.xlane.xlu0 %1783
    %1785 = vadd.xlane.f32.xlu0 %v1759
    %v1786 = vpop.xlane.xlu0 %1785
    %1787 = vadd.xlane.f32.xlu0 %v1762
    %v1788 = vpop.xlane.xlu0 %1787
    %1789 = vadd.xlane.f32.xlu0 %v1767
    %v1790 = vpop.xlane.xlu0 %1789
    %1791 = vadd.xlane.f32.xlu0 %v1770
    %v1792 = vpop.xlane.xlu0 %1791
    %1793 = vadd.xlane.f32.xlu0 %v1775
    %v1794 = vpop.xlane.xlu0 %1793
    %1795 = vadd.xlane.f32.xlu0 %v1778
    %v1796 = vpop.xlane.xlu0 %1795
    %v1797 = vrcp.pop 128.0
    %v1798 = vmul.f32 %v1782, %v1797
    %v1799 = vmul.f32 %v1784, %v1797
    %v1800 = vmul.f32 %v1786, %v1797
    %v1801 = vmul.f32 %v1788, %v1797
    %v1802 = vmul.f32 %v1790, %v1797
    %v1803 = vmul.f32 %v1792, %v1797
    %v1804 = vmul.f32 %v1794, %v1797
    %v1805 = vmul.f32 %v1796, %v1797
    %v1806 = vsub.f32 %v1751, %v1798
    %v1807 = vsub.f32 %v1754, %v1799
    %v1808 = vsub.f32 %v1759, %v1800
    %v1809 = vsub.f32 %v1762, %v1801
    %v1810 = vsub.f32 %v1767, %v1802
    %v1811 = vsub.f32 %v1770, %v1803
    %v1812 = vsub.f32 %v1775, %v1804
    %v1813 = vsub.f32 %v1778, %v1805
    %v1814 = vmul.f32 %v1806, %v1806
    %v1815 = vmul.f32 %v1807, %v1807
    %v1816 = vmul.f32 %v1808, %v1808
    %v1817 = vmul.f32 %v1809, %v1809
    %v1818 = vmul.f32 %v1810, %v1810
    %v1819 = vmul.f32 %v1811, %v1811
    %v1820 = vmul.f32 %v1812, %v1812
    %v1821 = vmul.f32 %v1813, %v1813
    %1822 = vadd.xlane.f32.xlu0 %v1814
    %v1823 = vpop.xlane.xlu0 %1822
    %1824 = vadd.xlane.f32.xlu0 %v1815
    %v1825 = vpop.xlane.xlu0 %1824
    %1826 = vadd.xlane.f32.xlu0 %v1816
    %v1827 = vpop.xlane.xlu0 %1826
    %1828 = vadd.xlane.f32.xlu0 %v1817
    %v1829 = vpop.xlane.xlu0 %1828
    %1830 = vadd.xlane.f32.xlu0 %v1818
    %v1831 = vpop.xlane.xlu0 %1830
    %1832 = vadd.xlane.f32.xlu0 %v1819
    %v1833 = vpop.xlane.xlu0 %1832
    %1834 = vadd.xlane.f32.xlu0 %v1820
    %v1835 = vpop.xlane.xlu0 %1834
    %1836 = vadd.xlane.f32.xlu0 %v1821
    %v1837 = vpop.xlane.xlu0 %1836
    %v1838 = vmul.f32 %v1823, %v1797
    %v1839 = vmul.f32 %v1825, %v1797
    %v1840 = vmul.f32 %v1827, %v1797
    %v1841 = vmul.f32 %v1829, %v1797
    %v1842 = vmul.f32 %v1831, %v1797
    %v1843 = vmul.f32 %v1833, %v1797
    %v1844 = vmul.f32 %v1835, %v1797
    %v1845 = vmul.f32 %v1837, %v1797
    %v1846 = vadd.f32 %v1838, 1e-05
    %v1847 = vadd.f32 %v1839, 1e-05
    %v1848 = vadd.f32 %v1840, 1e-05
    %v1849 = vadd.f32 %v1841, 1e-05
    %v1850 = vadd.f32 %v1842, 1e-05
    %v1851 = vadd.f32 %v1843, 1e-05
    %v1852 = vadd.f32 %v1844, 1e-05
    %v1853 = vadd.f32 %v1845, 1e-05
    %v1854 = vrsqrt.pop %v1846
    %v1855 = vrsqrt.pop %v1847
    %v1856 = vrsqrt.pop %v1848
    %v1857 = vrsqrt.pop %v1849
    %v1858 = vrsqrt.pop %v1850
    %v1859 = vrsqrt.pop %v1851
    %v1860 = vrsqrt.pop %v1852
    %v1861 = vrsqrt.pop %v1853
    %v1862 = vmul.f32 %v1806, %v1854
    %v1863 = vmul.f32 %v1807, %v1855
    %v1864 = vmul.f32 %v1808, %v1856
    %v1865 = vmul.f32 %v1809, %v1857
    %v1866 = vmul.f32 %v1810, %v1858
    %v1867 = vmul.f32 %v1811, %v1859
    %v1868 = vmul.f32 %v1812, %v1860
    %v1869 = vmul.f32 %v1813, %v1861
    %v1870 = vlaneseq
    %v1871 = vshrl.u32 %v1870, 7
    %v1872 = vsub.s32 0, %v1871
    %v1873 = vrot.slane %v256, %v1872
    %v1874 = vmul.f32 %v1862, %v1873
    %v1875 = vmul.f32 %v1863, %v1873
    %v1876 = vmul.f32 %v1864, %v1873
    %v1877 = vmul.f32 %v1865, %v1873
    %v1878 = vmul.f32 %v1866, %v1873
    %v1879 = vmul.f32 %v1867, %v1873
    %v1880 = vmul.f32 %v1868, %v1873
    %v1881 = vmul.f32 %v1869, %v1873
    %v1882 = vlaneseq
    %v1883 = vshrl.u32 %v1882, 7
    %v1884 = vsub.s32 1, %v1883
    %v1885 = vrot.slane %v256, %v1884
    %v1886 = vadd.f32 %v1874, %v1885
    %v1887 = vadd.f32 %v1875, %v1885
    %v1888 = vadd.f32 %v1876, %v1885
    %v1889 = vadd.f32 %v1877, %v1885
    %v1890 = vadd.f32 %v1878, %v1885
    %v1891 = vadd.f32 %v1879, %v1885
    %v1892 = vadd.f32 %v1880, %v1885
    %v1893 = vadd.f32 %v1881, %v1885
    %v1894 = vpack.c.bf16 %v1887, %v1886
    %v1895 = vpack.c.bf16 %v1889, %v1888
    %v1896 = vpack.c.bf16 %v1891, %v1890
    %v1897 = vpack.c.bf16 %v1893, %v1892
    %v1914 = vunpack.c.l.b16 %v208
    %v1915 = vunpack.c.h.b16 %v208
    %v1916 = vunpack.c.l.b16 %v209
    %v1917 = vunpack.c.h.b16 %v209
    %v1918 = vunpack.c.l.b16 %v210
    %v1919 = vunpack.c.h.b16 %v210
    %v1920 = vunpack.c.l.b16 %v211
    %v1921 = vunpack.c.h.b16 %v211
    %v1922 = vunpack.c.l.b16 %v212
    %v1923 = vunpack.c.h.b16 %v212
    %v1924 = vunpack.c.l.b16 %v213
    %v1925 = vunpack.c.h.b16 %v213
    %v1926 = vunpack.c.l.b16 %v214
    %v1927 = vunpack.c.h.b16 %v214
    %v1928 = vunpack.c.l.b16 %v215
    %v1929 = vunpack.c.h.b16 %v215
    %v1930 = vunpack.c.l.b16 %v216
    %v1931 = vunpack.c.h.b16 %v216
    %v1932 = vunpack.c.l.b16 %v217
    %v1933 = vunpack.c.h.b16 %v217
    %v1934 = vunpack.c.l.b16 %v218
    %v1935 = vunpack.c.h.b16 %v218
    %v1936 = vunpack.c.l.b16 %v219
    %v1937 = vunpack.c.h.b16 %v219
    %v1938 = vunpack.c.l.b16 %v220
    %v1939 = vunpack.c.h.b16 %v220
    %v1940 = vunpack.c.l.b16 %v221
    %v1941 = vunpack.c.h.b16 %v221
    %v1942 = vunpack.c.l.b16 %v222
    %v1943 = vunpack.c.h.b16 %v222
    %v1944 = vunpack.c.l.b16 %v223
    %v1945 = vunpack.c.h.b16 %v223
    %v1946 = vpack.c.b16 %v1916, %v1914
    %v1947 = vpack.c.b16 %v1917, %v1915
    %v1948 = vpack.c.b16 %v1920, %v1918
    %v1949 = vpack.c.b16 %v1921, %v1919
    %v1950 = vpack.c.b16 %v1924, %v1922
    %v1951 = vpack.c.b16 %v1925, %v1923
    %v1952 = vpack.c.b16 %v1928, %v1926
    %v1953 = vpack.c.b16 %v1929, %v1927
    %v1954 = vpack.c.b16 %v1932, %v1930
    %v1955 = vpack.c.b16 %v1933, %v1931
    %v1956 = vpack.c.b16 %v1936, %v1934
    %v1957 = vpack.c.b16 %v1937, %v1935
    %v1958 = vpack.c.b16 %v1940, %v1938
    %v1959 = vpack.c.b16 %v1941, %v1939
    %v1960 = vpack.c.b16 %v1944, %v1942
    %v1961 = vpack.c.b16 %v1945, %v1943
    %1978 = vmatprep.subr.bf16.mxu0 %v1961
    %1979 = vmatpush1.bf16.msra.mxu0 %v1960
    %1980 = vmatprep.subr.bf16.mxu0 %v1959
    %1981 = vmatpush1.bf16.msra.mxu0 %v1958
    %1982 = vmatprep.subr.bf16.mxu0 %v1957
    %1983 = vmatpush1.bf16.msra.mxu0 %v1956
    %1984 = vmatprep.subr.bf16.mxu0 %v1955
    %1985 = vmatpush1.bf16.msra.mxu0 %v1954
    %1986 = vmatprep.subr.bf16.mxu0 %v1953
    %1987 = vmatpush1.bf16.msra.mxu0 %v1952
    %1988 = vmatprep.subr.bf16.mxu0 %v1951
    %1989 = vmatpush1.bf16.msra.mxu0 %v1950
    %1990 = vmatprep.subr.bf16.mxu0 %v1949
    %1991 = vmatpush1.bf16.msra.mxu0 %v1948
    %1992 = vmatprep.subr.bf16.mxu0 %v1947
    %1993 = vmatpush1.bf16.msra.mxu0 %v1946
    %1994 = vmatprep.subr.bf16.mxu0 0
    %1995 = vmatpush2.bf16.msra.mxu0 0
    %1996 = vmatprep.subr.bf16.mxu0 0
    %1997 = vmatpush2.bf16.msra.mxu0 0
    %1998 = vmatprep.subr.bf16.mxu0 0
    %1999 = vmatpush2.bf16.msra.mxu0 0
    %2000 = vmatprep.subr.bf16.mxu0 0
    %2001 = vmatpush2.bf16.msra.mxu0 0
    %2002 = vmatprep.subr.bf16.mxu0 0
    %2003 = vmatpush2.bf16.msra.mxu0 0
    %2004 = vmatprep.subr.bf16.mxu0 0
    %2005 = vmatpush2.bf16.msra.mxu0 0
    %2006 = vmatprep.subr.bf16.mxu0 0
    %2007 = vmatpush2.bf16.msra.mxu0 0
    %2008 = vmatprep.subr.bf16.mxu0 0
    %2009 = vmatpush2.bf16.msra.mxu0 0
    %2010 = vmatprep.mubr.bf16.mxu0 0
    %2011 = vmatmul.mubr.bf16.gmra.mxu0 %v1894
    %v2012 = vpop.f32.mrf.mxu0
    %v2013 = vadd.f32 0.0, %v2012
    %v2014 = vpop.f32.mrf.mxu0
    %v2015 = vadd.f32 0.0, %v2014
    %v2016 = vpop.f32.mrf.mxu0
    %v2017 = vadd.f32 0.0, %v2016
    %v2018 = vpop.f32.mrf.mxu0
    %v2019 = vadd.f32 0.0, %v2018
    %2020 = vmatprep.mubr.bf16.mxu0 0
    %2021 = vmatmul.mubr.bf16.gmra.mxu0 %v1895
    %v2022 = vpop.f32.mrf.mxu0
    %v2023 = vadd.f32 0.0, %v2022
    %v2024 = vpop.f32.mrf.mxu0
    %v2025 = vadd.f32 0.0, %v2024
    %v2026 = vpop.f32.mrf.mxu0
    %v2027 = vadd.f32 0.0, %v2026
    %v2028 = vpop.f32.mrf.mxu0
    %v2029 = vadd.f32 0.0, %v2028
    %2030 = vmatprep.mubr.bf16.mxu0 0
    %2031 = vmatmul.mubr.bf16.gmra.mxu0 %v1896
    %v2032 = vpop.f32.mrf.mxu0
    %v2033 = vadd.f32 0.0, %v2032
    %v2034 = vpop.f32.mrf.mxu0
    %v2035 = vadd.f32 0.0, %v2034
    %v2036 = vpop.f32.mrf.mxu0
    %v2037 = vadd.f32 0.0, %v2036
    %v2038 = vpop.f32.mrf.mxu0
    %v2039 = vadd.f32 0.0, %v2038
    %2040 = vmatprep.mubr.bf16.mxu0 0
    %2041 = vmatmul.mubr.bf16.gmra.mxu0 %v1897
    %v2042 = vpop.f32.mrf.mxu0
    %v2043 = vadd.f32 0.0, %v2042
    %v2044 = vpop.f32.mrf.mxu0
    %v2045 = vadd.f32 0.0, %v2044
    %v2046 = vpop.f32.mrf.mxu0
    %v2047 = vadd.f32 0.0, %v2046
    %v2048 = vpop.f32.mrf.mxu0
    %v2049 = vadd.f32 0.0, %v2048
    %2050 = vdwg.mxu0
    %v2067 = vunpack.c.l.b16 %v192
    %v2068 = vunpack.c.h.b16 %v192
    %v2069 = vunpack.c.l.b16 %v193
    %v2070 = vunpack.c.h.b16 %v193
    %v2071 = vunpack.c.l.b16 %v194
    %v2072 = vunpack.c.h.b16 %v194
    %v2073 = vunpack.c.l.b16 %v195
    %v2074 = vunpack.c.h.b16 %v195
    %v2075 = vunpack.c.l.b16 %v196
    %v2076 = vunpack.c.h.b16 %v196
    %v2077 = vunpack.c.l.b16 %v197
    %v2078 = vunpack.c.h.b16 %v197
    %v2079 = vunpack.c.l.b16 %v198
    %v2080 = vunpack.c.h.b16 %v198
    %v2081 = vunpack.c.l.b16 %v199
    %v2082 = vunpack.c.h.b16 %v199
    %v2083 = vunpack.c.l.b16 %v200
    %v2084 = vunpack.c.h.b16 %v200
    %v2085 = vunpack.c.l.b16 %v201
    %v2086 = vunpack.c.h.b16 %v201
    %v2087 = vunpack.c.l.b16 %v202
    %v2088 = vunpack.c.h.b16 %v202
    %v2089 = vunpack.c.l.b16 %v203
    %v2090 = vunpack.c.h.b16 %v203
    %v2091 = vunpack.c.l.b16 %v204
    %v2092 = vunpack.c.h.b16 %v204
    %v2093 = vunpack.c.l.b16 %v205
    %v2094 = vunpack.c.h.b16 %v205
    %v2095 = vunpack.c.l.b16 %v206
    %v2096 = vunpack.c.h.b16 %v206
    %v2097 = vunpack.c.l.b16 %v207
    %v2098 = vunpack.c.h.b16 %v207
    %v2099 = vpack.c.b16 %v2069, %v2067
    %v2100 = vpack.c.b16 %v2070, %v2068
    %v2101 = vpack.c.b16 %v2073, %v2071
    %v2102 = vpack.c.b16 %v2074, %v2072
    %v2103 = vpack.c.b16 %v2077, %v2075
    %v2104 = vpack.c.b16 %v2078, %v2076
    %v2105 = vpack.c.b16 %v2081, %v2079
    %v2106 = vpack.c.b16 %v2082, %v2080
    %v2107 = vpack.c.b16 %v2085, %v2083
    %v2108 = vpack.c.b16 %v2086, %v2084
    %v2109 = vpack.c.b16 %v2089, %v2087
    %v2110 = vpack.c.b16 %v2090, %v2088
    %v2111 = vpack.c.b16 %v2093, %v2091
    %v2112 = vpack.c.b16 %v2094, %v2092
    %v2113 = vpack.c.b16 %v2097, %v2095
    %v2114 = vpack.c.b16 %v2098, %v2096
    %2131 = vmatprep.subr.bf16.mxu0 %v2114
    %2132 = vmatpush1.bf16.msra.mxu0 %v2113
    %2133 = vmatprep.subr.bf16.mxu0 %v2112
    %2134 = vmatpush1.bf16.msra.mxu0 %v2111
    %2135 = vmatprep.subr.bf16.mxu0 %v2110
    %2136 = vmatpush1.bf16.msra.mxu0 %v2109
    %2137 = vmatprep.subr.bf16.mxu0 %v2108
    %2138 = vmatpush1.bf16.msra.mxu0 %v2107
    %2139 = vmatprep.subr.bf16.mxu0 %v2106
    %2140 = vmatpush1.bf16.msra.mxu0 %v2105
    %2141 = vmatprep.subr.bf16.mxu0 %v2104
    %2142 = vmatpush1.bf16.msra.mxu0 %v2103
    %2143 = vmatprep.subr.bf16.mxu0 %v2102
    %2144 = vmatpush1.bf16.msra.mxu0 %v2101
    %2145 = vmatprep.subr.bf16.mxu0 %v2100
    %2146 = vmatpush1.bf16.msra.mxu0 %v2099
    %2147 = vmatprep.subr.bf16.mxu0 0
    %2148 = vmatpush2.bf16.msra.mxu0 0
    %2149 = vmatprep.subr.bf16.mxu0 0
    %2150 = vmatpush2.bf16.msra.mxu0 0
    %2151 = vmatprep.subr.bf16.mxu0 0
    %2152 = vmatpush2.bf16.msra.mxu0 0
    %2153 = vmatprep.subr.bf16.mxu0 0
    %2154 = vmatpush2.bf16.msra.mxu0 0
    %2155 = vmatprep.subr.bf16.mxu0 0
    %2156 = vmatpush2.bf16.msra.mxu0 0
    %2157 = vmatprep.subr.bf16.mxu0 0
    %2158 = vmatpush2.bf16.msra.mxu0 0
    %2159 = vmatprep.subr.bf16.mxu0 0
    %2160 = vmatpush2.bf16.msra.mxu0 0
    %2161 = vmatprep.subr.bf16.mxu0 0
    %2162 = vmatpush2.bf16.msra.mxu0 0
    %2163 = vmatprep.mubr.bf16.mxu0 0
    %2164 = vmatmul.mubr.bf16.gmra.mxu0 %v257
    %v2165 = vpop.f32.mrf.mxu0
    %v2166 = vadd.f32 %v2013, %v2165
    %v2167 = vpop.f32.mrf.mxu0
    %v2168 = vadd.f32 %v2015, %v2167
    %v2169 = vpop.f32.mrf.mxu0
    %v2170 = vadd.f32 %v2017, %v2169
    %v2171 = vpop.f32.mrf.mxu0
    %v2172 = vadd.f32 %v2019, %v2171
    %2173 = vmatprep.mubr.bf16.mxu0 0
    %2174 = vmatmul.mubr.bf16.gmra.mxu0 %v258
    %v2175 = vpop.f32.mrf.mxu0
    %v2176 = vadd.f32 %v2023, %v2175
    %v2177 = vpop.f32.mrf.mxu0
    %v2178 = vadd.f32 %v2025, %v2177
    %v2179 = vpop.f32.mrf.mxu0
    %v2180 = vadd.f32 %v2027, %v2179
    %v2181 = vpop.f32.mrf.mxu0
    %v2182 = vadd.f32 %v2029, %v2181
    %2183 = vmatprep.mubr.bf16.mxu0 0
    %2184 = vmatmul.mubr.bf16.gmra.mxu0 %v259
    %v2185 = vpop.f32.mrf.mxu0
    %v2186 = vadd.f32 %v2033, %v2185
    %v2187 = vpop.f32.mrf.mxu0
    %v2188 = vadd.f32 %v2035, %v2187
    %v2189 = vpop.f32.mrf.mxu0
    %v2190 = vadd.f32 %v2037, %v2189
    %v2191 = vpop.f32.mrf.mxu0
    %v2192 = vadd.f32 %v2039, %v2191
    %2193 = vmatprep.mubr.bf16.mxu0 0
    %2194 = vmatmul.mubr.bf16.gmra.mxu0 %v260
    %v2195 = vpop.f32.mrf.mxu0
    %v2196 = vadd.f32 %v2043, %v2195
    %v2197 = vpop.f32.mrf.mxu0
    %v2198 = vadd.f32 %v2045, %v2197
    %v2199 = vpop.f32.mrf.mxu0
    %v2200 = vadd.f32 %v2047, %v2199
    %v2201 = vpop.f32.mrf.mxu0
    %v2202 = vadd.f32 %v2049, %v2201
    %2203 = vdwg.mxu0
    %v2204 = vmax.f32 %v2166, 0.0
    %v2205 = vmax.f32 %v2168, 0.0
    %v2206 = vmax.f32 %v2170, 0.0
    %v2207 = vmax.f32 %v2172, 0.0
    %v2208 = vmax.f32 %v2176, 0.0
    %v2209 = vmax.f32 %v2178, 0.0
    %v2210 = vmax.f32 %v2180, 0.0
    %v2211 = vmax.f32 %v2182, 0.0
    %v2212 = vmax.f32 %v2186, 0.0
    %v2213 = vmax.f32 %v2188, 0.0
    %v2214 = vmax.f32 %v2190, 0.0
    %v2215 = vmax.f32 %v2192, 0.0
    %v2216 = vmax.f32 %v2196, 0.0
    %v2217 = vmax.f32 %v2198, 0.0
    %v2218 = vmax.f32 %v2200, 0.0
    %v2219 = vmax.f32 %v2202, 0.0
    %v2220 = vpack.c.bf16 %v2206, %v2204
    %v2221 = vpack.c.bf16 %v2207, %v2205
    %v2222 = vpack.c.bf16 %v2210, %v2208
    %v2223 = vpack.c.bf16 %v2211, %v2209
    %v2224 = vpack.c.bf16 %v2214, %v2212
    %v2225 = vpack.c.bf16 %v2215, %v2213
    %v2226 = vpack.c.bf16 %v2218, %v2216
    %v2227 = vpack.c.bf16 %v2219, %v2217
    %v2260 = vunpack.c.l.b16 %v224
    %v2261 = vunpack.c.l.b16 %v225
    %v2262 = vunpack.c.l.b16 %v226
    %v2263 = vunpack.c.l.b16 %v227
    %v2264 = vunpack.c.l.b16 %v228
    %v2265 = vunpack.c.l.b16 %v229
    %v2266 = vunpack.c.l.b16 %v230
    %v2267 = vunpack.c.l.b16 %v231
    %v2268 = vunpack.c.l.b16 %v232
    %v2269 = vunpack.c.l.b16 %v233
    %v2270 = vunpack.c.l.b16 %v234
    %v2271 = vunpack.c.l.b16 %v235
    %v2272 = vunpack.c.l.b16 %v236
    %v2273 = vunpack.c.l.b16 %v237
    %v2274 = vunpack.c.l.b16 %v238
    %v2275 = vunpack.c.l.b16 %v239
    %v2276 = vunpack.c.l.b16 %v240
    %v2277 = vunpack.c.l.b16 %v241
    %v2278 = vunpack.c.l.b16 %v242
    %v2279 = vunpack.c.l.b16 %v243
    %v2280 = vunpack.c.l.b16 %v244
    %v2281 = vunpack.c.l.b16 %v245
    %v2282 = vunpack.c.l.b16 %v246
    %v2283 = vunpack.c.l.b16 %v247
    %v2284 = vunpack.c.l.b16 %v248
    %v2285 = vunpack.c.l.b16 %v249
    %v2286 = vunpack.c.l.b16 %v250
    %v2287 = vunpack.c.l.b16 %v251
    %v2288 = vunpack.c.l.b16 %v252
    %v2289 = vunpack.c.l.b16 %v253
    %v2290 = vunpack.c.l.b16 %v254
    %v2291 = vunpack.c.l.b16 %v255
    %v2292 = vpack.c.b16 %v2261, %v2260
    %v2293 = vpack.c.b16 %v2263, %v2262
    %v2294 = vpack.c.b16 %v2265, %v2264
    %v2295 = vpack.c.b16 %v2267, %v2266
    %v2296 = vpack.c.b16 %v2269, %v2268
    %v2297 = vpack.c.b16 %v2271, %v2270
    %v2298 = vpack.c.b16 %v2273, %v2272
    %v2299 = vpack.c.b16 %v2275, %v2274
    %v2300 = vpack.c.b16 %v2277, %v2276
    %v2301 = vpack.c.b16 %v2279, %v2278
    %v2302 = vpack.c.b16 %v2281, %v2280
    %v2303 = vpack.c.b16 %v2283, %v2282
    %v2304 = vpack.c.b16 %v2285, %v2284
    %v2305 = vpack.c.b16 %v2287, %v2286
    %v2306 = vpack.c.b16 %v2289, %v2288
    %v2307 = vpack.c.b16 %v2291, %v2290
    %2324 = vmatprep.subr.bf16.mxu0 0
    %2325 = vmatpush1.bf16.msra.mxu0 %v2299
    %2326 = vmatprep.subr.bf16.mxu0 0
    %2327 = vmatpush1.bf16.msra.mxu0 %v2298
    %2328 = vmatprep.subr.bf16.mxu0 0
    %2329 = vmatpush1.bf16.msra.mxu0 %v2297
    %2330 = vmatprep.subr.bf16.mxu0 0
    %2331 = vmatpush1.bf16.msra.mxu0 %v2296
    %2332 = vmatprep.subr.bf16.mxu0 0
    %2333 = vmatpush1.bf16.msra.mxu0 %v2295
    %2334 = vmatprep.subr.bf16.mxu0 0
    %2335 = vmatpush1.bf16.msra.mxu0 %v2294
    %2336 = vmatprep.subr.bf16.mxu0 0
    %2337 = vmatpush1.bf16.msra.mxu0 %v2293
    %2338 = vmatprep.subr.bf16.mxu0 0
    %2339 = vmatpush1.bf16.msra.mxu0 %v2292
    %2340 = vmatprep.subr.bf16.mxu0 0
    %2341 = vmatpush2.bf16.msra.mxu0 %v2307
    %2342 = vmatprep.subr.bf16.mxu0 0
    %2343 = vmatpush2.bf16.msra.mxu0 %v2306
    %2344 = vmatprep.subr.bf16.mxu0 0
    %2345 = vmatpush2.bf16.msra.mxu0 %v2305
    %2346 = vmatprep.subr.bf16.mxu0 0
    %2347 = vmatpush2.bf16.msra.mxu0 %v2304
    %2348 = vmatprep.subr.bf16.mxu0 0
    %2349 = vmatpush2.bf16.msra.mxu0 %v2303
    %2350 = vmatprep.subr.bf16.mxu0 0
    %2351 = vmatpush2.bf16.msra.mxu0 %v2302
    %2352 = vmatprep.subr.bf16.mxu0 0
    %2353 = vmatpush2.bf16.msra.mxu0 %v2301
    %2354 = vmatprep.subr.bf16.mxu0 0
    %2355 = vmatpush2.bf16.msra.mxu0 %v2300
    %2356 = vmatprep.mubr.bf16.mxu0 %v2221
    %2357 = vmatmul.mubr.bf16.gmra.mxu0 %v2220
    %v2358 = vpop.f32.mrf.mxu0
    %v2359 = vadd.f32 0.0, %v2358
    %v2360 = vpop.f32.mrf.mxu0
    %v2361 = vpop.f32.mrf.mxu0
    %v2362 = vadd.f32 0.0, %v2361
    %v2363 = vpop.f32.mrf.mxu0
    %2364 = vmatprep.mubr.bf16.mxu0 %v2223
    %2365 = vmatmul.mubr.bf16.gmra.mxu0 %v2222
    %v2366 = vpop.f32.mrf.mxu0
    %v2367 = vadd.f32 0.0, %v2366
    %v2368 = vpop.f32.mrf.mxu0
    %v2369 = vpop.f32.mrf.mxu0
    %v2370 = vadd.f32 0.0, %v2369
    %v2371 = vpop.f32.mrf.mxu0
    %2372 = vmatprep.mubr.bf16.mxu0 %v2225
    %2373 = vmatmul.mubr.bf16.gmra.mxu0 %v2224
    %v2374 = vpop.f32.mrf.mxu0
    %v2375 = vadd.f32 0.0, %v2374
    %v2376 = vpop.f32.mrf.mxu0
    %v2377 = vpop.f32.mrf.mxu0
    %v2378 = vadd.f32 0.0, %v2377
    %v2379 = vpop.f32.mrf.mxu0
    %2380 = vmatprep.mubr.bf16.mxu0 %v2227
    %2381 = vmatmul.mubr.bf16.gmra.mxu0 %v2226
    %v2382 = vpop.f32.mrf.mxu0
    %v2383 = vadd.f32 0.0, %v2382
    %v2384 = vpop.f32.mrf.mxu0
    %v2385 = vpop.f32.mrf.mxu0
    %v2386 = vadd.f32 0.0, %v2385
    %v2387 = vpop.f32.mrf.mxu0
    %2388 = vdwg.mxu0
    %2389 = vadd.xlane.f32.xlu0 %v2359
    %v2390 = vpop.xlane.xlu0 %2389
    %2391 = vadd.xlane.f32.xlu0 %v2362
    %v2392 = vpop.xlane.xlu0 %2391
    %2393 = vadd.xlane.f32.xlu0 %v2367
    %v2394 = vpop.xlane.xlu0 %2393
    %2395 = vadd.xlane.f32.xlu0 %v2370
    %v2396 = vpop.xlane.xlu0 %2395
    %2397 = vadd.xlane.f32.xlu0 %v2375
    %v2398 = vpop.xlane.xlu0 %2397
    %2399 = vadd.xlane.f32.xlu0 %v2378
    %v2400 = vpop.xlane.xlu0 %2399
    %2401 = vadd.xlane.f32.xlu0 %v2383
    %v2402 = vpop.xlane.xlu0 %2401
    %2403 = vadd.xlane.f32.xlu0 %v2386
    %v2404 = vpop.xlane.xlu0 %2403
    %v2405 = vmul.f32 %v2390, %v1797
    %v2406 = vmul.f32 %v2392, %v1797
    %v2407 = vmul.f32 %v2394, %v1797
    %v2408 = vmul.f32 %v2396, %v1797
    %v2409 = vmul.f32 %v2398, %v1797
    %v2410 = vmul.f32 %v2400, %v1797
    %v2411 = vmul.f32 %v2402, %v1797
    %v2412 = vmul.f32 %v2404, %v1797
    %v2413 = vsub.f32 %v2359, %v2405
    %v2414 = vsub.f32 %v2362, %v2406
    %v2415 = vsub.f32 %v2367, %v2407
    %v2416 = vsub.f32 %v2370, %v2408
    %v2417 = vsub.f32 %v2375, %v2409
    %v2418 = vsub.f32 %v2378, %v2410
    %v2419 = vsub.f32 %v2383, %v2411
    %v2420 = vsub.f32 %v2386, %v2412
    %v2421 = vmul.f32 %v2413, %v2413
    %v2422 = vmul.f32 %v2414, %v2414
    %v2423 = vmul.f32 %v2415, %v2415
    %v2424 = vmul.f32 %v2416, %v2416
    %v2425 = vmul.f32 %v2417, %v2417
    %v2426 = vmul.f32 %v2418, %v2418
    %v2427 = vmul.f32 %v2419, %v2419
    %v2428 = vmul.f32 %v2420, %v2420
    %2429 = vadd.xlane.f32.xlu0 %v2421
    %v2430 = vpop.xlane.xlu0 %2429
    %2431 = vadd.xlane.f32.xlu0 %v2422
    %v2432 = vpop.xlane.xlu0 %2431
    %2433 = vadd.xlane.f32.xlu0 %v2423
    %v2434 = vpop.xlane.xlu0 %2433
    %2435 = vadd.xlane.f32.xlu0 %v2424
    %v2436 = vpop.xlane.xlu0 %2435
    %2437 = vadd.xlane.f32.xlu0 %v2425
    %v2438 = vpop.xlane.xlu0 %2437
    %2439 = vadd.xlane.f32.xlu0 %v2426
    %v2440 = vpop.xlane.xlu0 %2439
    %2441 = vadd.xlane.f32.xlu0 %v2427
    %v2442 = vpop.xlane.xlu0 %2441
    %2443 = vadd.xlane.f32.xlu0 %v2428
    %v2444 = vpop.xlane.xlu0 %2443
    %v2445 = vmul.f32 %v2430, %v1797
    %v2446 = vmul.f32 %v2432, %v1797
    %v2447 = vmul.f32 %v2434, %v1797
    %v2448 = vmul.f32 %v2436, %v1797
    %v2449 = vmul.f32 %v2438, %v1797
    %v2450 = vmul.f32 %v2440, %v1797
    %v2451 = vmul.f32 %v2442, %v1797
    %v2452 = vmul.f32 %v2444, %v1797
    %v2453 = vadd.f32 %v2445, 1e-05
    %v2454 = vadd.f32 %v2446, 1e-05
    %v2455 = vadd.f32 %v2447, 1e-05
    %v2456 = vadd.f32 %v2448, 1e-05
    %v2457 = vadd.f32 %v2449, 1e-05
    %v2458 = vadd.f32 %v2450, 1e-05
    %v2459 = vadd.f32 %v2451, 1e-05
    %v2460 = vadd.f32 %v2452, 1e-05
    %v2461 = vrsqrt.pop %v2453
    %v2462 = vrsqrt.pop %v2454
    %v2463 = vrsqrt.pop %v2455
    %v2464 = vrsqrt.pop %v2456
    %v2465 = vrsqrt.pop %v2457
    %v2466 = vrsqrt.pop %v2458
    %v2467 = vrsqrt.pop %v2459
    %v2468 = vrsqrt.pop %v2460
    %v2469 = vmul.f32 %v2413, %v2461
    %v2470 = vmul.f32 %v2414, %v2462
    %v2471 = vmul.f32 %v2415, %v2463
    %v2472 = vmul.f32 %v2416, %v2464
    %v2473 = vmul.f32 %v2417, %v2465
    %v2474 = vmul.f32 %v2418, %v2466
    %v2475 = vmul.f32 %v2419, %v2467
    %v2476 = vmul.f32 %v2420, %v2468
    %v2477 = vlaneseq
    %v2478 = vshrl.u32 %v2477, 7
    %v2479 = vsub.s32 2, %v2478
    %v2480 = vrot.slane %v256, %v2479
    %v2481 = vmul.f32 %v2469, %v2480
    %v2482 = vmul.f32 %v2470, %v2480
    %v2483 = vmul.f32 %v2471, %v2480
    %v2484 = vmul.f32 %v2472, %v2480
    %v2485 = vmul.f32 %v2473, %v2480
    %v2486 = vmul.f32 %v2474, %v2480
    %v2487 = vmul.f32 %v2475, %v2480
    %v2488 = vmul.f32 %v2476, %v2480
    %v2489 = vlaneseq
    %v2490 = vshrl.u32 %v2489, 7
    %v2491 = vsub.s32 3, %v2490
    %v2492 = vrot.slane %v256, %v2491
    %v2493 = vadd.f32 %v2481, %v2492
    %v2494 = vadd.f32 %v2482, %v2492
    %v2495 = vadd.f32 %v2483, %v2492
    %v2496 = vadd.f32 %v2484, %v2492
    %v2497 = vadd.f32 %v2485, %v2492
    %v2498 = vadd.f32 %v2486, %v2492
    %v2499 = vadd.f32 %v2487, %v2492
    %v2500 = vadd.f32 %v2488, %v2492
    %v2501 = vadd.f32 %v112, %v2493
    %v2502 = vadd.f32 %v113, %v2494
    %v2503 = vadd.f32 %v114, %v2495
    %v2504 = vadd.f32 %v115, %v2496
    %v2505 = vadd.f32 %v116, %v2497
    %v2506 = vadd.f32 %v117, %v2498
    %v2507 = vadd.f32 %v118, %v2499
    %v2508 = vadd.f32 %v119, %v2500
    %s2509 = scalar_lea.vmem [#allocation2], 192
    %v2510 = vld [vmem:[%s2509] sm:$0xff]
    %v2511 = vld [vmem:[%s2509 + $0x8] sm:$0xf]
    %v2512 = vld [vmem:[%s2509 + $0xc] sm:$0xff]
    %v2513 = vld [vmem:[%s2509 + $0x14] sm:$0xf]
    %v2514 = vld [vmem:[%s2509 + $0x18] sm:$0xff]
    %v2515 = vld [vmem:[%s2509 + $0x20] sm:$0xf]
    %v2516 = vld [vmem:[%s2509 + $0x24] sm:$0xff]
    %v2517 = vld [vmem:[%s2509 + $0x2c] sm:$0xf]
    %v2518 = vld [vmem:[%s2509 + $0x30] sm:$0xff]
    %v2519 = vld [vmem:[%s2509 + $0x38] sm:$0xf]
    %v2520 = vld [vmem:[%s2509 + $0x3c] sm:$0xff]
    %v2521 = vld [vmem:[%s2509 + $0x44] sm:$0xf]
    %v2522 = vld [vmem:[%s2509 + $0x48] sm:$0xff]
    %v2523 = vld [vmem:[%s2509 + $0x50] sm:$0xf]
    %v2524 = vld [vmem:[%s2509 + $0x54] sm:$0xff]
    %v2525 = vld [vmem:[%s2509 + $0x5c] sm:$0xf]
    %v2526 = vld [vmem:[%s2509 + $0x60] sm:$0xff]
    %v2527 = vld [vmem:[%s2509 + $0x68] sm:$0xf]
    %v2528 = vld [vmem:[%s2509 + $0x6c] sm:$0xff]
    %v2529 = vld [vmem:[%s2509 + $0x74] sm:$0xf]
    %v2530 = vld [vmem:[%s2509 + $0x78] sm:$0xff]
    %v2531 = vld [vmem:[%s2509 + $0x80] sm:$0xf]
    %v2532 = vld [vmem:[%s2509 + $0x84] sm:$0xff]
    %v2533 = vld [vmem:[%s2509 + $0x8c] sm:$0xf]
    %v2534 = vld [vmem:[%s2509 + $0x90] sm:$0xff]
    %v2535 = vld [vmem:[%s2509 + $0x98] sm:$0xf]
    %v2536 = vld [vmem:[%s2509 + $0x9c] sm:$0xff]
    %v2537 = vld [vmem:[%s2509 + $0xa4] sm:$0xf]
    %v2538 = vld [vmem:[%s2509 + $0xa8] sm:$0xff]
    %v2539 = vld [vmem:[%s2509 + $0xb0] sm:$0xf]
    %v2540 = vld [vmem:[%s2509 + $0xb4] sm:$0xff]
    %v2541 = vld [vmem:[%s2509 + $0xbc] sm:$0xf]
    %s2542 = scalar_lea.vmem [#allocation4], 64
    %v2543 = vld [vmem:[%s2542] sm:$0xf]
    %v2544 = vld [vmem:[%s2542 + $0x4] sm:$0xf]
    %v2545 = vld [vmem:[%s2542 + $0x8] sm:$0xf]
    %v2546 = vld [vmem:[%s2542 + $0xc] sm:$0xf]
    %v2547 = vld [vmem:[%s2542 + $0x10] sm:$0xf]
    %v2548 = vld [vmem:[%s2542 + $0x14] sm:$0xf]
    %v2549 = vld [vmem:[%s2542 + $0x18] sm:$0xf]
    %v2550 = vld [vmem:[%s2542 + $0x1c] sm:$0xf]
    %v2551 = vld [vmem:[%s2542 + $0x20] sm:$0xf]
    %v2552 = vld [vmem:[%s2542 + $0x24] sm:$0xf]
    %v2553 = vld [vmem:[%s2542 + $0x28] sm:$0xf]
    %v2554 = vld [vmem:[%s2542 + $0x2c] sm:$0xf]
    %v2555 = vld [vmem:[%s2542 + $0x30] sm:$0xf]
    %v2556 = vld [vmem:[%s2542 + $0x34] sm:$0xf]
    %v2557 = vld [vmem:[%s2542 + $0x38] sm:$0xf]
    %v2558 = vld [vmem:[%s2542 + $0x3c] sm:$0xf]
    %s2559 = scalar_lea.vmem [#allocation6], 128
    %v2560 = vld [vmem:[%s2559] sm:$0xff]
    %v2561 = vld [vmem:[%s2559 + $0x8] sm:$0xff]
    %v2562 = vld [vmem:[%s2559 + $0x10] sm:$0xff]
    %v2563 = vld [vmem:[%s2559 + $0x18] sm:$0xff]
    %v2564 = vld [vmem:[%s2559 + $0x20] sm:$0xff]
    %v2565 = vld [vmem:[%s2559 + $0x28] sm:$0xff]
    %v2566 = vld [vmem:[%s2559 + $0x30] sm:$0xff]
    %v2567 = vld [vmem:[%s2559 + $0x38] sm:$0xff]
    %v2568 = vld [vmem:[%s2559 + $0x40] sm:$0xff]
    %v2569 = vld [vmem:[%s2559 + $0x48] sm:$0xff]
    %v2570 = vld [vmem:[%s2559 + $0x50] sm:$0xff]
    %v2571 = vld [vmem:[%s2559 + $0x58] sm:$0xff]
    %v2572 = vld [vmem:[%s2559 + $0x60] sm:$0xff]
    %v2573 = vld [vmem:[%s2559 + $0x68] sm:$0xff]
    %v2574 = vld [vmem:[%s2559 + $0x70] sm:$0xff]
    %v2575 = vld [vmem:[%s2559 + $0x78] sm:$0xff]
    %s2576 = scalar_lea.vmem [#allocation7], 128
    %v2577 = vld [vmem:[%s2576] sm:$0xff]
    %v2578 = vld [vmem:[%s2576 + $0x8] sm:$0xff]
    %v2579 = vld [vmem:[%s2576 + $0x10] sm:$0xff]
    %v2580 = vld [vmem:[%s2576 + $0x18] sm:$0xff]
    %v2581 = vld [vmem:[%s2576 + $0x20] sm:$0xff]
    %v2582 = vld [vmem:[%s2576 + $0x28] sm:$0xff]
    %v2583 = vld [vmem:[%s2576 + $0x30] sm:$0xff]
    %v2584 = vld [vmem:[%s2576 + $0x38] sm:$0xff]
    %v2585 = vld [vmem:[%s2576 + $0x40] sm:$0xff]
    %v2586 = vld [vmem:[%s2576 + $0x48] sm:$0xff]
    %v2587 = vld [vmem:[%s2576 + $0x50] sm:$0xff]
    %v2588 = vld [vmem:[%s2576 + $0x58] sm:$0xff]
    %v2589 = vld [vmem:[%s2576 + $0x60] sm:$0xff]
    %v2590 = vld [vmem:[%s2576 + $0x68] sm:$0xff]
    %v2591 = vld [vmem:[%s2576 + $0x70] sm:$0xff]
    %v2592 = vld [vmem:[%s2576 + $0x78] sm:$0xff]
    %s2593 = scalar_lea.vmem [#allocation9], 128
    %v2594 = vld [vmem:[%s2593] sm:$0xf]
    %v2595 = vld [vmem:[%s2593 + $0x4] sm:$0xf]
    %v2596 = vld [vmem:[%s2593 + $0x8] sm:$0xf]
    %v2597 = vld [vmem:[%s2593 + $0xc] sm:$0xf]
    %v2598 = vld [vmem:[%s2593 + $0x10] sm:$0xf]
    %v2599 = vld [vmem:[%s2593 + $0x14] sm:$0xf]
    %v2600 = vld [vmem:[%s2593 + $0x18] sm:$0xf]
    %v2601 = vld [vmem:[%s2593 + $0x1c] sm:$0xf]
    %v2602 = vld [vmem:[%s2593 + $0x20] sm:$0xf]
    %v2603 = vld [vmem:[%s2593 + $0x24] sm:$0xf]
    %v2604 = vld [vmem:[%s2593 + $0x28] sm:$0xf]
    %v2605 = vld [vmem:[%s2593 + $0x2c] sm:$0xf]
    %v2606 = vld [vmem:[%s2593 + $0x30] sm:$0xf]
    %v2607 = vld [vmem:[%s2593 + $0x34] sm:$0xf]
    %v2608 = vld [vmem:[%s2593 + $0x38] sm:$0xf]
    %v2609 = vld [vmem:[%s2593 + $0x3c] sm:$0xf]
    %v2610 = vld [vmem:[%s2593 + $0x40] sm:$0xf]
    %v2611 = vld [vmem:[%s2593 + $0x44] sm:$0xf]
    %v2612 = vld [vmem:[%s2593 + $0x48] sm:$0xf]
    %v2613 = vld [vmem:[%s2593 + $0x4c] sm:$0xf]
    %v2614 = vld [vmem:[%s2593 + $0x50] sm:$0xf]
    %v2615 = vld [vmem:[%s2593 + $0x54] sm:$0xf]
    %v2616 = vld [vmem:[%s2593 + $0x58] sm:$0xf]
    %v2617 = vld [vmem:[%s2593 + $0x5c] sm:$0xf]
    %v2618 = vld [vmem:[%s2593 + $0x60] sm:$0xf]
    %v2619 = vld [vmem:[%s2593 + $0x64] sm:$0xf]
    %v2620 = vld [vmem:[%s2593 + $0x68] sm:$0xf]
    %v2621 = vld [vmem:[%s2593 + $0x6c] sm:$0xf]
    %v2622 = vld [vmem:[%s2593 + $0x70] sm:$0xf]
    %v2623 = vld [vmem:[%s2593 + $0x74] sm:$0xf]
    %v2624 = vld [vmem:[%s2593 + $0x78] sm:$0xf]
    %v2625 = vld [vmem:[%s2593 + $0x7c] sm:$0xf]
    %s2626 = scalar_lea.vmem [#allocation10], 4
    %v2627 = vld [vmem:[%s2626] sm:$0xf]
    %v2628 = vpack.c.bf16 %v2502, %v2501
    %v2629 = vpack.c.bf16 %v2504, %v2503
    %v2630 = vpack.c.bf16 %v2506, %v2505
    %v2631 = vpack.c.bf16 %v2508, %v2507
    %v2664 = vunpack.c.l.b16 %v2510
    %v2665 = vunpack.c.h.b16 %v2510
    %v2666 = vunpack.c.l.b16 %v2511
    %v2667 = vunpack.c.l.b16 %v2512
    %v2668 = vunpack.c.h.b16 %v2512
    %v2669 = vunpack.c.l.b16 %v2513
    %v2670 = vunpack.c.l.b16 %v2514
    %v2671 = vunpack.c.h.b16 %v2514
    %v2672 = vunpack.c.l.b16 %v2515
    %v2673 = vunpack.c.l.b16 %v2516
    %v2674 = vunpack.c.h.b16 %v2516
    %v2675 = vunpack.c.l.b16 %v2517
    %v2676 = vunpack.c.l.b16 %v2518
    %v2677 = vunpack.c.h.b16 %v2518
    %v2678 = vunpack.c.l.b16 %v2519
    %v2679 = vunpack.c.l.b16 %v2520
    %v2680 = vunpack.c.h.b16 %v2520
    %v2681 = vunpack.c.l.b16 %v2521
    %v2682 = vunpack.c.l.b16 %v2522
    %v2683 = vunpack.c.h.b16 %v2522
    %v2684 = vunpack.c.l.b16 %v2523
    %v2685 = vunpack.c.l.b16 %v2524
    %v2686 = vunpack.c.h.b16 %v2524
    %v2687 = vunpack.c.l.b16 %v2525
    %v2688 = vunpack.c.l.b16 %v2526
    %v2689 = vunpack.c.h.b16 %v2526
    %v2690 = vunpack.c.l.b16 %v2527
    %v2691 = vunpack.c.l.b16 %v2528
    %v2692 = vunpack.c.h.b16 %v2528
    %v2693 = vunpack.c.l.b16 %v2529
    %v2694 = vunpack.c.l.b16 %v2530
    %v2695 = vunpack.c.h.b16 %v2530
    %v2696 = vunpack.c.l.b16 %v2531
    %v2697 = vunpack.c.l.b16 %v2532
    %v2698 = vunpack.c.h.b16 %v2532
    %v2699 = vunpack.c.l.b16 %v2533
    %v2700 = vunpack.c.l.b16 %v2534
    %v2701 = vunpack.c.h.b16 %v2534
    %v2702 = vunpack.c.l.b16 %v2535
    %v2703 = vunpack.c.l.b16 %v2536
    %v2704 = vunpack.c.h.b16 %v2536
    %v2705 = vunpack.c.l.b16 %v2537
    %v2706 = vunpack.c.l.b16 %v2538
    %v2707 = vunpack.c.h.b16 %v2538
    %v2708 = vunpack.c.l.b16 %v2539
    %v2709 = vunpack.c.l.b16 %v2540
    %v2710 = vunpack.c.h.b16 %v2540
    %v2711 = vunpack.c.l.b16 %v2541
    %v2712 = vpack.c.b16 %v2667, %v2664
    %v2713 = vpack.c.b16 %v2668, %v2665
    %v2714 = vpack.c.b16 %v2669, %v2666
    %v2715 = vpack.c.b16 %v2673, %v2670
    %v2716 = vpack.c.b16 %v2674, %v2671
    %v2717 = vpack.c.b16 %v2675, %v2672
    %v2718 = vpack.c.b16 %v2679, %v2676
    %v2719 = vpack.c.b16 %v2680, %v2677
    %v2720 = vpack.c.b16 %v2681, %v2678
    %v2721 = vpack.c.b16 %v2685, %v2682
    %v2722 = vpack.c.b16 %v2686, %v2683
    %v2723 = vpack.c.b16 %v2687, %v2684
    %v2724 = vpack.c.b16 %v2691, %v2688
    %v2725 = vpack.c.b16 %v2692, %v2689
    %v2726 = vpack.c.b16 %v2693, %v2690
    %v2727 = vpack.c.b16 %v2697, %v2694
    %v2728 = vpack.c.b16 %v2698, %v2695
    %v2729 = vpack.c.b16 %v2699, %v2696
    %v2730 = vpack.c.b16 %v2703, %v2700
    %v2731 = vpack.c.b16 %v2704, %v2701
    %v2732 = vpack.c.b16 %v2705, %v2702
    %v2733 = vpack.c.b16 %v2709, %v2706
    %v2734 = vpack.c.b16 %v2710, %v2707
    %v2735 = vpack.c.b16 %v2711, %v2708
    %2760 = vmatprep.subr.bf16.mxu0 %v2734
    %2761 = vmatpush1.bf16.msra.mxu0 %v2733
    %2762 = vmatprep.subr.bf16.mxu0 %v2731
    %2763 = vmatpush1.bf16.msra.mxu0 %v2730
    %2764 = vmatprep.subr.bf16.mxu0 %v2728
    %2765 = vmatpush1.bf16.msra.mxu0 %v2727
    %2766 = vmatprep.subr.bf16.mxu0 %v2725
    %2767 = vmatpush1.bf16.msra.mxu0 %v2724
    %2768 = vmatprep.subr.bf16.mxu0 %v2722
    %2769 = vmatpush1.bf16.msra.mxu0 %v2721
    %2770 = vmatprep.subr.bf16.mxu0 %v2719
    %2771 = vmatpush1.bf16.msra.mxu0 %v2718
    %2772 = vmatprep.subr.bf16.mxu0 %v2716
    %2773 = vmatpush1.bf16.msra.mxu0 %v2715
    %2774 = vmatprep.subr.bf16.mxu0 %v2713
    %2775 = vmatpush1.bf16.msra.mxu0 %v2712
    %2776 = vmatprep.subr.bf16.mxu0 0
    %2777 = vmatpush2.bf16.msra.mxu0 0
    %2778 = vmatprep.subr.bf16.mxu0 0
    %2779 = vmatpush2.bf16.msra.mxu0 0
    %2780 = vmatprep.subr.bf16.mxu0 0
    %2781 = vmatpush2.bf16.msra.mxu0 0
    %2782 = vmatprep.subr.bf16.mxu0 0
    %2783 = vmatpush2.bf16.msra.mxu0 0
    %2784 = vmatprep.subr.bf16.mxu0 0
    %2785 = vmatpush2.bf16.msra.mxu0 0
    %2786 = vmatprep.subr.bf16.mxu0 0
    %2787 = vmatpush2.bf16.msra.mxu0 0
    %2788 = vmatprep.subr.bf16.mxu0 0
    %2789 = vmatpush2.bf16.msra.mxu0 0
    %2790 = vmatprep.subr.bf16.mxu0 0
    %2791 = vmatpush2.bf16.msra.mxu0 0
    %2792 = vmatprep.mubr.bf16.mxu0 0
    %2793 = vmatmul.mubr.bf16.gmra.mxu0 %v2628
    %v2794 = vpop.f32.mrf.mxu0
    %v2795 = vadd.f32 0.0, %v2794
    %v2796 = vpop.f32.mrf.mxu0
    %v2797 = vadd.f32 0.0, %v2796
    %v2798 = vpop.f32.mrf.mxu0
    %v2799 = vadd.f32 0.0, %v2798
    %v2800 = vpop.f32.mrf.mxu0
    %v2801 = vadd.f32 0.0, %v2800
    %2802 = vmatprep.mubr.bf16.mxu0 0
    %2803 = vmatmul.mubr.bf16.gmra.mxu0 %v2629
    %v2804 = vpop.f32.mrf.mxu0
    %v2805 = vadd.f32 0.0, %v2804
    %v2806 = vpop.f32.mrf.mxu0
    %v2807 = vadd.f32 0.0, %v2806
    %v2808 = vpop.f32.mrf.mxu0
    %v2809 = vadd.f32 0.0, %v2808
    %v2810 = vpop.f32.mrf.mxu0
    %v2811 = vadd.f32 0.0, %v2810
    %2812 = vmatprep.mubr.bf16.mxu0 0
    %2813 = vmatmul.mubr.bf16.gmra.mxu0 %v2630
    %v2814 = vpop.f32.mrf.mxu0
    %v2815 = vadd.f32 0.0, %v2814
    %v2816 = vpop.f32.mrf.mxu0
    %v2817 = vadd.f32 0.0, %v2816
    %v2818 = vpop.f32.mrf.mxu0
    %v2819 = vadd.f32 0.0, %v2818
    %v2820 = vpop.f32.mrf.mxu0
    %v2821 = vadd.f32 0.0, %v2820
    %2822 = vmatprep.mubr.bf16.mxu0 0
    %2823 = vmatmul.mubr.bf16.gmra.mxu0 %v2631
    %v2824 = vpop.f32.mrf.mxu0
    %v2825 = vadd.f32 0.0, %v2824
    %v2826 = vpop.f32.mrf.mxu0
    %v2827 = vadd.f32 0.0, %v2826
    %v2828 = vpop.f32.mrf.mxu0
    %v2829 = vadd.f32 0.0, %v2828
    %v2830 = vpop.f32.mrf.mxu0
    %v2831 = vadd.f32 0.0, %v2830
    %2832 = vdwg.mxu0
    %2833 = vmatprep.subr.bf16.mxu0 0
    %2834 = vmatpush1.bf16.msra.mxu0 %v2735
    %2835 = vmatprep.subr.bf16.mxu0 0
    %2836 = vmatpush1.bf16.msra.mxu0 %v2732
    %2837 = vmatprep.subr.bf16.mxu0 0
    %2838 = vmatpush1.bf16.msra.mxu0 %v2729
    %2839 = vmatprep.subr.bf16.mxu0 0
    %2840 = vmatpush1.bf16.msra.mxu0 %v2726
    %2841 = vmatprep.subr.bf16.mxu0 0
    %2842 = vmatpush1.bf16.msra.mxu0 %v2723
    %2843 = vmatprep.subr.bf16.mxu0 0
    %2844 = vmatpush1.bf16.msra.mxu0 %v2720
    %2845 = vmatprep.subr.bf16.mxu0 0
    %2846 = vmatpush1.bf16.msra.mxu0 %v2717
    %2847 = vmatprep.subr.bf16.mxu0 0
    %2848 = vmatpush1.bf16.msra.mxu0 %v2714
    %2849 = vmatprep.subr.bf16.mxu0 0
    %2850 = vmatpush2.bf16.msra.mxu0 0
    %2851 = vmatprep.subr.bf16.mxu0 0
    %2852 = vmatpush2.bf16.msra.mxu0 0
    %2853 = vmatprep.subr.bf16.mxu0 0
    %2854 = vmatpush2.bf16.msra.mxu0 0
    %2855 = vmatprep.subr.bf16.mxu0 0
    %2856 = vmatpush2.bf16.msra.mxu0 0
    %2857 = vmatprep.subr.bf16.mxu0 0
    %2858 = vmatpush2.bf16.msra.mxu0 0
    %2859 = vmatprep.subr.bf16.mxu0 0
    %2860 = vmatpush2.bf16.msra.mxu0 0
    %2861 = vmatprep.subr.bf16.mxu0 0
    %2862 = vmatpush2.bf16.msra.mxu0 0
    %2863 = vmatprep.subr.bf16.mxu0 0
    %2864 = vmatpush2.bf16.msra.mxu0 0
    %2865 = vmatprep.mubr.bf16.mxu0 0
    %2866 = vmatmul.mubr.bf16.gmra.mxu0 %v2628
    %v2867 = vpop.f32.mrf.mxu0
    %v2868 = vadd.f32 0.0, %v2867
    %v2869 = vpop.f32.mrf.mxu0
    %v2870 = vpop.f32.mrf.mxu0
    %v2871 = vadd.f32 0.0, %v2870
    %v2872 = vpop.f32.mrf.mxu0
    %2873 = vmatprep.mubr.bf16.mxu0 0
    %2874 = vmatmul.mubr.bf16.gmra.mxu0 %v2629
    %v2875 = vpop.f32.mrf.mxu0
    %v2876 = vadd.f32 0.0, %v2875
    %v2877 = vpop.f32.mrf.mxu0
    %v2878 = vpop.f32.mrf.mxu0
    %v2879 = vadd.f32 0.0, %v2878
    %v2880 = vpop.f32.mrf.mxu0
    %2881 = vmatprep.mubr.bf16.mxu0 0
    %2882 = vmatmul.mubr.bf16.gmra.mxu0 %v2630
    %v2883 = vpop.f32.mrf.mxu0
    %v2884 = vadd.f32 0.0, %v2883
    %v2885 = vpop.f32.mrf.mxu0
    %v2886 = vpop.f32.mrf.mxu0
    %v2887 = vadd.f32 0.0, %v2886
    %v2888 = vpop.f32.mrf.mxu0
    %2889 = vmatprep.mubr.bf16.mxu0 0
    %2890 = vmatmul.mubr.bf16.gmra.mxu0 %v2631
    %v2891 = vpop.f32.mrf.mxu0
    %v2892 = vadd.f32 0.0, %v2891
    %v2893 = vpop.f32.mrf.mxu0
    %v2894 = vpop.f32.mrf.mxu0
    %v2895 = vadd.f32 0.0, %v2894
    %v2896 = vpop.f32.mrf.mxu0
    %2897 = vdwg.mxu0
    %vm2898 = vcmp.gt.f32.partialorder %v2795, 0.0
    %vm2899 = vcmp.gt.f32.partialorder %v2799, 0.0
    %vm2900 = vcmp.gt.f32.partialorder %v2805, 0.0
    %vm2901 = vcmp.gt.f32.partialorder %v2809, 0.0
    %vm2902 = vcmp.gt.f32.partialorder %v2815, 0.0
    %vm2903 = vcmp.gt.f32.partialorder %v2819, 0.0
    %vm2904 = vcmp.gt.f32.partialorder %v2825, 0.0
    %vm2905 = vcmp.gt.f32.partialorder %v2829, 0.0
    %v2906 = vadd.f32 %v2795, 1.0
    %v2907 = vadd.f32 %v2799, 1.0
    %v2908 = vadd.f32 %v2805, 1.0
    %v2909 = vadd.f32 %v2809, 1.0
    %v2910 = vadd.f32 %v2815, 1.0
    %v2911 = vadd.f32 %v2819, 1.0
    %v2912 = vadd.f32 %v2825, 1.0
    %v2913 = vadd.f32 %v2829, 1.0
    %v2914 = vmul.f32 %v2795, 1.442695
    %v2915 = vpow.pop %v2914
    %v2916 = vmul.f32 %v2799, 1.442695
    %v2917 = vpow.pop %v2916
    %v2918 = vmul.f32 %v2805, 1.442695
    %v2919 = vpow.pop %v2918
    %v2920 = vmul.f32 %v2809, 1.442695
    %v2921 = vpow.pop %v2920
    %v2922 = vmul.f32 %v2815, 1.442695
    %v2923 = vpow.pop %v2922
    %v2924 = vmul.f32 %v2819, 1.442695
    %v2925 = vpow.pop %v2924
    %v2926 = vmul.f32 %v2825, 1.442695
    %v2927 = vpow.pop %v2926
    %v2928 = vmul.f32 %v2829, 1.442695
    %v2929 = vpow.pop %v2928
    %v2930 = vsel %vm2898, %v2906, %v2915
    %v2931 = vsel %vm2899, %v2907, %v2917
    %v2932 = vsel %vm2900, %v2908, %v2919
    %v2933 = vsel %vm2901, %v2909, %v2921
    %v2934 = vsel %vm2902, %v2910, %v2923
    %v2935 = vsel %vm2903, %v2911, %v2925
    %v2936 = vsel %vm2904, %v2912, %v2927
    %v2937 = vsel %vm2905, %v2913, %v2929
    %vm2938 = vcmp.gt.f32.partialorder %v2797, 0.0
    %vm2939 = vcmp.gt.f32.partialorder %v2801, 0.0
    %vm2940 = vcmp.gt.f32.partialorder %v2807, 0.0
    %vm2941 = vcmp.gt.f32.partialorder %v2811, 0.0
    %vm2942 = vcmp.gt.f32.partialorder %v2817, 0.0
    %vm2943 = vcmp.gt.f32.partialorder %v2821, 0.0
    %vm2944 = vcmp.gt.f32.partialorder %v2827, 0.0
    %vm2945 = vcmp.gt.f32.partialorder %v2831, 0.0
    %v2946 = vadd.f32 %v2797, 1.0
    %v2947 = vadd.f32 %v2801, 1.0
    %v2948 = vadd.f32 %v2807, 1.0
    %v2949 = vadd.f32 %v2811, 1.0
    %v2950 = vadd.f32 %v2817, 1.0
    %v2951 = vadd.f32 %v2821, 1.0
    %v2952 = vadd.f32 %v2827, 1.0
    %v2953 = vadd.f32 %v2831, 1.0
    %v2954 = vmul.f32 %v2797, 1.442695
    %v2955 = vpow.pop %v2954
    %v2956 = vmul.f32 %v2801, 1.442695
    %v2957 = vpow.pop %v2956
    %v2958 = vmul.f32 %v2807, 1.442695
    %v2959 = vpow.pop %v2958
    %v2960 = vmul.f32 %v2811, 1.442695
    %v2961 = vpow.pop %v2960
    %v2962 = vmul.f32 %v2817, 1.442695
    %v2963 = vpow.pop %v2962
    %v2964 = vmul.f32 %v2821, 1.442695
    %v2965 = vpow.pop %v2964
    %v2966 = vmul.f32 %v2827, 1.442695
    %v2967 = vpow.pop %v2966
    %v2968 = vmul.f32 %v2831, 1.442695
    %v2969 = vpow.pop %v2968
    %v2970 = vsel %vm2938, %v2946, %v2955
    %v2971 = vsel %vm2939, %v2947, %v2957
    %v2972 = vsel %vm2940, %v2948, %v2959
    %v2973 = vsel %vm2941, %v2949, %v2961
    %v2974 = vsel %vm2942, %v2950, %v2963
    %v2975 = vsel %vm2943, %v2951, %v2965
    %v2976 = vsel %vm2944, %v2952, %v2967
    %v2977 = vsel %vm2945, %v2953, %v2969
    %v2978 = vmul.f32 %v2868, 0.0625
    %v2979 = vmul.f32 %v2871, 0.0625
    %v2980 = vmul.f32 %v2876, 0.0625
    %v2981 = vmul.f32 %v2879, 0.0625
    %v2982 = vmul.f32 %v2884, 0.0625
    %v2983 = vmul.f32 %v2887, 0.0625
    %v2984 = vmul.f32 %v2892, 0.0625
    %v2985 = vmul.f32 %v2895, 0.0625
    %v2986 = vpack.c.bf16 %v2931, %v2930
    %v2987 = vpack.c.bf16 %v2933, %v2932
    %v2988 = vpack.c.bf16 %v2935, %v2934
    %v2989 = vpack.c.bf16 %v2937, %v2936
    %v2990 = vpack.c.bf16 %v2971, %v2970
    %v2991 = vpack.c.bf16 %v2973, %v2972
    %v2992 = vpack.c.bf16 %v2975, %v2974
    %v2993 = vpack.c.bf16 %v2977, %v2976
    %v2994 = vpack.c.bf16 %v2979, %v2978
    %v2995 = vpack.c.bf16 %v2981, %v2980
    %v2996 = vpack.c.bf16 %v2983, %v2982
    %v2997 = vpack.c.bf16 %v2985, %v2984
    %2998 = vxpose.xlu0.c.b16.start [1/8] %v2990, 128
    %2999 = vxpose.xlu0.c.b16.cont [2/8] 0, 128
    %3000 = vxpose.xlu0.c.b16.cont [3/8] 0, 128
    %3001 = vxpose.xlu0.c.b16.cont [4/8] 0, 128
    %3002 = vxpose.xlu0.c.b16.cont [5/8] 0, 128
    %3003 = vxpose.xlu0.c.b16.cont [6/8] 0, 128
    %3004 = vxpose.xlu0.c.b16.cont [7/8] 0, 128
    %3005 = vxpose.xlu0.c.b16.end [8/8] 0, 128
    %v3006 = vpop.trf.xlu0
    %v3007 = vpop.trf.xlu0
    %v3008 = vpop.trf.xlu0
    %v3009 = vpop.trf.xlu0
    %v3010 = vpop.trf.xlu0
    %v3011 = vpop.trf.xlu0
    %v3012 = vpop.trf.xlu0
    %v3013 = vpop.trf.xlu0
    %v3015 = vsel %vm643, %v3006, 0
    %v3018 = vsel %vm643, %v3007, 0
    %v3021 = vsel %vm643, %v3008, 0
    %v3024 = vsel %vm643, %v3009, 0
    %v3027 = vsel %vm643, %v3010, 0
    %v3030 = vsel %vm643, %v3011, 0
    %v3033 = vsel %vm643, %v3012, 0
    %v3036 = vsel %vm643, %v3013, 0
    %3038 = vmatprep.subr.bf16.mxu0 0
    %3039 = vmatpush1.bf16.msra.mxu0 0
    %3040 = vmatprep.subr.bf16.mxu0 0
    %3041 = vmatpush1.bf16.msra.mxu0 0
    %3042 = vmatprep.subr.bf16.mxu0 0
    %3043 = vmatpush1.bf16.msra.mxu0 0
    %3044 = vmatprep.subr.bf16.mxu0 0
    %3045 = vmatpush1.bf16.msra.mxu0 0
    %3046 = vmatprep.subr.bf16.mxu0 0
    %3047 = vmatpush1.bf16.msra.mxu0 0
    %3048 = vmatprep.subr.bf16.mxu0 0
    %3049 = vmatpush1.bf16.msra.mxu0 0
    %3050 = vmatprep.subr.bf16.mxu0 0
    %3051 = vmatpush1.bf16.msra.mxu0 0
    %3052 = vmatprep.subr.bf16.mxu0 0
    %3053 = vmatpush1.bf16.msra.mxu0 %v2994
    %3054 = vmatprep.subr.bf16.mxu0 0
    %3055 = vmatpush2.bf16.msra.mxu0 0
    %3056 = vmatprep.subr.bf16.mxu0 0
    %3057 = vmatpush2.bf16.msra.mxu0 0
    %3058 = vmatprep.subr.bf16.mxu0 0
    %3059 = vmatpush2.bf16.msra.mxu0 0
    %3060 = vmatprep.subr.bf16.mxu0 0
    %3061 = vmatpush2.bf16.msra.mxu0 0
    %3062 = vmatprep.subr.bf16.mxu0 0
    %3063 = vmatpush2.bf16.msra.mxu0 0
    %3064 = vmatprep.subr.bf16.mxu0 0
    %3065 = vmatpush2.bf16.msra.mxu0 0
    %3066 = vmatprep.subr.bf16.mxu0 0
    %3067 = vmatpush2.bf16.msra.mxu0 0
    %3068 = vmatprep.subr.bf16.mxu0 0
    %3069 = vmatpush2.bf16.msra.mxu0 0
    %3070 = vmatprep.mubr.bf16.mxu0 0
    %3071 = vmatmul.mubr.bf16.gmra.mxu0 %v3015
    %v3072 = vpop.f32.mrf.mxu0
    %v3073 = vadd.f32 0.0, %v3072
    %v3074 = vpop.f32.mrf.mxu0
    %v3075 = vpop.f32.mrf.mxu0
    %v3076 = vadd.f32 0.0, %v3075
    %v3077 = vpop.f32.mrf.mxu0
    %3078 = vmatprep.mubr.bf16.mxu0 0
    %3079 = vmatmul.mubr.bf16.gmra.mxu0 %v3018
    %v3080 = vpop.f32.mrf.mxu0
    %v3081 = vadd.f32 0.0, %v3080
    %v3082 = vpop.f32.mrf.mxu0
    %v3083 = vpop.f32.mrf.mxu0
    %v3084 = vadd.f32 0.0, %v3083
    %v3085 = vpop.f32.mrf.mxu0
    %3086 = vmatprep.mubr.bf16.mxu0 0
    %3087 = vmatmul.mubr.bf16.gmra.mxu0 %v3021
    %v3088 = vpop.f32.mrf.mxu0
    %v3089 = vadd.f32 0.0, %v3088
    %v3090 = vpop.f32.mrf.mxu0
    %v3091 = vpop.f32.mrf.mxu0
    %v3092 = vadd.f32 0.0, %v3091
    %v3093 = vpop.f32.mrf.mxu0
    %3094 = vmatprep.mubr.bf16.mxu0 0
    %3095 = vmatmul.mubr.bf16.gmra.mxu0 %v3024
    %v3096 = vpop.f32.mrf.mxu0
    %v3097 = vadd.f32 0.0, %v3096
    %v3098 = vpop.f32.mrf.mxu0
    %v3099 = vpop.f32.mrf.mxu0
    %v3100 = vadd.f32 0.0, %v3099
    %v3101 = vpop.f32.mrf.mxu0
    %3102 = vmatprep.mubr.bf16.mxu0 0
    %3103 = vmatmul.mubr.bf16.gmra.mxu0 %v3027
    %v3104 = vpop.f32.mrf.mxu0
    %v3105 = vadd.f32 0.0, %v3104
    %v3106 = vpop.f32.mrf.mxu0
    %v3107 = vpop.f32.mrf.mxu0
    %v3108 = vadd.f32 0.0, %v3107
    %v3109 = vpop.f32.mrf.mxu0
    %3110 = vmatprep.mubr.bf16.mxu0 0
    %3111 = vmatmul.mubr.bf16.gmra.mxu0 %v3030
    %v3112 = vpop.f32.mrf.mxu0
    %v3113 = vadd.f32 0.0, %v3112
    %v3114 = vpop.f32.mrf.mxu0
    %v3115 = vpop.f32.mrf.mxu0
    %v3116 = vadd.f32 0.0, %v3115
    %v3117 = vpop.f32.mrf.mxu0
    %3118 = vmatprep.mubr.bf16.mxu0 0
    %3119 = vmatmul.mubr.bf16.gmra.mxu0 %v3033
    %v3120 = vpop.f32.mrf.mxu0
    %v3121 = vadd.f32 0.0, %v3120
    %v3122 = vpop.f32.mrf.mxu0
    %v3123 = vpop.f32.mrf.mxu0
    %v3124 = vadd.f32 0.0, %v3123
    %v3125 = vpop.f32.mrf.mxu0
    %3126 = vmatprep.mubr.bf16.mxu0 0
    %3127 = vmatmul.mubr.bf16.gmra.mxu0 %v3036
    %v3128 = vpop.f32.mrf.mxu0
    %v3129 = vadd.f32 0.0, %v3128
    %v3130 = vpop.f32.mrf.mxu0
    %v3131 = vpop.f32.mrf.mxu0
    %v3132 = vadd.f32 0.0, %v3131
    %v3133 = vpop.f32.mrf.mxu0
    %3134 = vdwg.mxu0
    %v3135 = vmul.f32 %v3073, %v120
    %v3136 = vmul.f32 %v3076, %v121
    %v3137 = vmul.f32 %v3081, %v122
    %v3138 = vmul.f32 %v3084, %v123
    %v3139 = vmul.f32 %v3089, %v124
    %v3140 = vmul.f32 %v3092, %v125
    %v3141 = vmul.f32 %v3097, %v126
    %v3142 = vmul.f32 %v3100, %v127
    %v3143 = vmul.f32 %v3105, %v128
    %v3144 = vmul.f32 %v3108, %v129
    %v3145 = vmul.f32 %v3113, %v130
    %v3146 = vmul.f32 %v3116, %v131
    %v3147 = vmul.f32 %v3121, %v132
    %v3148 = vmul.f32 %v3124, %v133
    %v3149 = vmul.f32 %v3129, %v134
    %v3150 = vmul.f32 %v3132, %v135
    %v3151 = vpack.c.bf16 %v3136, %v3135
    %v3152 = vpack.c.bf16 %v3138, %v3137
    %v3153 = vpack.c.bf16 %v3140, %v3139
    %v3154 = vpack.c.bf16 %v3142, %v3141
    %v3155 = vpack.c.bf16 %v3144, %v3143
    %v3156 = vpack.c.bf16 %v3146, %v3145
    %v3157 = vpack.c.bf16 %v3148, %v3147
    %v3158 = vpack.c.bf16 %v3150, %v3149
    %3159 = vmatprep.subr.bf16.mxu0 0
    %3160 = vmatpush1.bf16.msra.mxu0 %v3158
    %3161 = vmatprep.subr.bf16.mxu0 0
    %3162 = vmatpush1.bf16.msra.mxu0 %v3157
    %3163 = vmatprep.subr.bf16.mxu0 0
    %3164 = vmatpush1.bf16.msra.mxu0 %v3156
    %3165 = vmatprep.subr.bf16.mxu0 0
    %3166 = vmatpush1.bf16.msra.mxu0 %v3155
    %3167 = vmatprep.subr.bf16.mxu0 0
    %3168 = vmatpush1.bf16.msra.mxu0 %v3154
    %3169 = vmatprep.subr.bf16.mxu0 0
    %3170 = vmatpush1.bf16.msra.mxu0 %v3153
    %3171 = vmatprep.subr.bf16.mxu0 0
    %3172 = vmatpush1.bf16.msra.mxu0 %v3152
    %3173 = vmatprep.subr.bf16.mxu0 0
    %3174 = vmatpush1.bf16.msra.mxu0 %v3151
    %3175 = vmatprep.subr.bf16.mxu0 0
    %3176 = vmatpush2.bf16.msra.mxu0 0
    %3177 = vmatprep.subr.bf16.mxu0 0
    %3178 = vmatpush2.bf16.msra.mxu0 0
    %3179 = vmatprep.subr.bf16.mxu0 0
    %3180 = vmatpush2.bf16.msra.mxu0 0
    %3181 = vmatprep.subr.bf16.mxu0 0
    %3182 = vmatpush2.bf16.msra.mxu0 0
    %3183 = vmatprep.subr.bf16.mxu0 0
    %3184 = vmatpush2.bf16.msra.mxu0 0
    %3185 = vmatprep.subr.bf16.mxu0 0
    %3186 = vmatpush2.bf16.msra.mxu0 0
    %3187 = vmatprep.subr.bf16.mxu0 0
    %3188 = vmatpush2.bf16.msra.mxu0 0
    %3189 = vmatprep.subr.bf16.mxu0 0
    %3190 = vmatpush2.bf16.msra.mxu0 0
    %3191 = vmatprep.mubr.bf16.mxu0 0
    %3192 = vmatmul.mubr.bf16.gmra.mxu0 %v2986
    %v3193 = vpop.f32.mrf.mxu0
    %v3194 = vadd.f32 0.0, %v3193
    %v3195 = vpop.f32.mrf.mxu0
    %v3196 = vpop.f32.mrf.mxu0
    %v3197 = vadd.f32 0.0, %v3196
    %v3198 = vpop.f32.mrf.mxu0
    %3199 = vdwg.mxu0
    %v3200 = vadd.f32 %v2970, %v2971
    %v3201 = vrot.slane %v3200, 4
    %v3202 = vadd.f32 %v3200, %v3201
    %v3203 = vrot.slane %v3202, 2
    %v3204 = vadd.f32 %v3202, %v3203
    %v3205 = vrot.slane %v3204, 1
    %v3206 = vadd.f32 %v3204, %v3205
    %v3207 = vmul.f32 %v2930, %v3206
    %v3208 = vmul.f32 %v2931, %v3206
    %v3209 = vpack.c.bf16 %v3208, %v3207
    %3210 = vmatprep.subr.bf16.mxu0 0
    %3211 = vmatpush1.bf16.msra.mxu0 %v143
    %3212 = vmatprep.subr.bf16.mxu0 0
    %3213 = vmatpush1.bf16.msra.mxu0 %v142
    %3214 = vmatprep.subr.bf16.mxu0 0
    %3215 = vmatpush1.bf16.msra.mxu0 %v141
    %3216 = vmatprep.subr.bf16.mxu0 0
    %3217 = vmatpush1.bf16.msra.mxu0 %v140
    %3218 = vmatprep.subr.bf16.mxu0 0
    %3219 = vmatpush1.bf16.msra.mxu0 %v139
    %3220 = vmatprep.subr.bf16.mxu0 0
    %3221 = vmatpush1.bf16.msra.mxu0 %v138
    %3222 = vmatprep.subr.bf16.mxu0 0
    %3223 = vmatpush1.bf16.msra.mxu0 %v137
    %3224 = vmatprep.subr.bf16.mxu0 0
    %3225 = vmatpush1.bf16.msra.mxu0 %v136
    %3226 = vmatprep.subr.bf16.mxu0 0
    %3227 = vmatpush2.bf16.msra.mxu0 0
    %3228 = vmatprep.subr.bf16.mxu0 0
    %3229 = vmatpush2.bf16.msra.mxu0 0
    %3230 = vmatprep.subr.bf16.mxu0 0
    %3231 = vmatpush2.bf16.msra.mxu0 0
    %3232 = vmatprep.subr.bf16.mxu0 0
    %3233 = vmatpush2.bf16.msra.mxu0 0
    %3234 = vmatprep.subr.bf16.mxu0 0
    %3235 = vmatpush2.bf16.msra.mxu0 0
    %3236 = vmatprep.subr.bf16.mxu0 0
    %3237 = vmatpush2.bf16.msra.mxu0 0
    %3238 = vmatprep.subr.bf16.mxu0 0
    %3239 = vmatpush2.bf16.msra.mxu0 0
    %3240 = vmatprep.subr.bf16.mxu0 0
    %3241 = vmatpush2.bf16.msra.mxu0 0
    %3242 = vmatprep.mubr.bf16.mxu0 0
    %3243 = vmatmul.mubr.bf16.gmra.mxu0 %v3209
    %v3244 = vpop.f32.mrf.mxu0
    %v3245 = vadd.f32 1e-06, %v3244
    %v3246 = vpop.f32.mrf.mxu0
    %v3247 = vpop.f32.mrf.mxu0
    %v3248 = vadd.f32 1e-06, %v3247
    %v3249 = vpop.f32.mrf.mxu0
    %3250 = vdwg.mxu0
    %v3251 = vrcp.pop %v3245
    %v3252 = vrcp.pop %v3248
    %v3253 = vmul.f32 %v3251, 16.0
    %v3254 = vmul.f32 %v3252, 16.0
    %v3255 = vmul.f32 %v3194, %v3253
    %v3256 = vmul.f32 %v3197, %v3254
    %3257 = vxpose.xlu0.c.b16.start [1/8] %v2991, 128
    %3258 = vxpose.xlu0.c.b16.cont [2/8] 0, 128
    %3259 = vxpose.xlu0.c.b16.cont [3/8] 0, 128
    %3260 = vxpose.xlu0.c.b16.cont [4/8] 0, 128
    %3261 = vxpose.xlu0.c.b16.cont [5/8] 0, 128
    %3262 = vxpose.xlu0.c.b16.cont [6/8] 0, 128
    %3263 = vxpose.xlu0.c.b16.cont [7/8] 0, 128
    %3264 = vxpose.xlu0.c.b16.end [8/8] 0, 128
    %v3265 = vpop.trf.xlu0
    %v3266 = vpop.trf.xlu0
    %v3267 = vpop.trf.xlu0
    %v3268 = vpop.trf.xlu0
    %v3269 = vpop.trf.xlu0
    %v3270 = vpop.trf.xlu0
    %v3271 = vpop.trf.xlu0
    %v3272 = vpop.trf.xlu0
    %v3274 = vsel %vm643, %v3265, 0
    %v3277 = vsel %vm643, %v3266, 0
    %v3280 = vsel %vm643, %v3267, 0
    %v3283 = vsel %vm643, %v3268, 0
    %v3286 = vsel %vm643, %v3269, 0
    %v3289 = vsel %vm643, %v3270, 0
    %v3292 = vsel %vm643, %v3271, 0
    %v3295 = vsel %vm643, %v3272, 0
    %3297 = vmatprep.subr.bf16.mxu0 0
    %3298 = vmatpush1.bf16.msra.mxu0 0
    %3299 = vmatprep.subr.bf16.mxu0 0
    %3300 = vmatpush1.bf16.msra.mxu0 0
    %3301 = vmatprep.subr.bf16.mxu0 0
    %3302 = vmatpush1.bf16.msra.mxu0 0
    %3303 = vmatprep.subr.bf16.mxu0 0
    %3304 = vmatpush1.bf16.msra.mxu0 0
    %3305 = vmatprep.subr.bf16.mxu0 0
    %3306 = vmatpush1.bf16.msra.mxu0 0
    %3307 = vmatprep.subr.bf16.mxu0 0
    %3308 = vmatpush1.bf16.msra.mxu0 0
    %3309 = vmatprep.subr.bf16.mxu0 0
    %3310 = vmatpush1.bf16.msra.mxu0 0
    %3311 = vmatprep.subr.bf16.mxu0 0
    %3312 = vmatpush1.bf16.msra.mxu0 %v2995
    %3313 = vmatprep.subr.bf16.mxu0 0
    %3314 = vmatpush2.bf16.msra.mxu0 0
    %3315 = vmatprep.subr.bf16.mxu0 0
    %3316 = vmatpush2.bf16.msra.mxu0 0
    %3317 = vmatprep.subr.bf16.mxu0 0
    %3318 = vmatpush2.bf16.msra.mxu0 0
    %3319 = vmatprep.subr.bf16.mxu0 0
    %3320 = vmatpush2.bf16.msra.mxu0 0
    %3321 = vmatprep.subr.bf16.mxu0 0
    %3322 = vmatpush2.bf16.msra.mxu0 0
    %3323 = vmatprep.subr.bf16.mxu0 0
    %3324 = vmatpush2.bf16.msra.mxu0 0
    %3325 = vmatprep.subr.bf16.mxu0 0
    %3326 = vmatpush2.bf16.msra.mxu0 0
    %3327 = vmatprep.subr.bf16.mxu0 0
    %3328 = vmatpush2.bf16.msra.mxu0 0
    %3329 = vmatprep.mubr.bf16.mxu0 0
    %3330 = vmatmul.mubr.bf16.gmra.mxu0 %v3274
    %v3331 = vpop.f32.mrf.mxu0
    %v3332 = vadd.f32 0.0, %v3331
    %v3333 = vpop.f32.mrf.mxu0
    %v3334 = vpop.f32.mrf.mxu0
    %v3335 = vadd.f32 0.0, %v3334
    %v3336 = vpop.f32.mrf.mxu0
    %3337 = vmatprep.mubr.bf16.mxu0 0
    %3338 = vmatmul.mubr.bf16.gmra.mxu0 %v3277
    %v3339 = vpop.f32.mrf.mxu0
    %v3340 = vadd.f32 0.0, %v3339
    %v3341 = vpop.f32.mrf.mxu0
    %v3342 = vpop.f32.mrf.mxu0
    %v3343 = vadd.f32 0.0, %v3342
    %v3344 = vpop.f32.mrf.mxu0
    %3345 = vmatprep.mubr.bf16.mxu0 0
    %3346 = vmatmul.mubr.bf16.gmra.mxu0 %v3280
    %v3347 = vpop.f32.mrf.mxu0
    %v3348 = vadd.f32 0.0, %v3347
    %v3349 = vpop.f32.mrf.mxu0
    %v3350 = vpop.f32.mrf.mxu0
    %v3351 = vadd.f32 0.0, %v3350
    %v3352 = vpop.f32.mrf.mxu0
    %3353 = vmatprep.mubr.bf16.mxu0 0
    %3354 = vmatmul.mubr.bf16.gmra.mxu0 %v3283
    %v3355 = vpop.f32.mrf.mxu0
    %v3356 = vadd.f32 0.0, %v3355
    %v3357 = vpop.f32.mrf.mxu0
    %v3358 = vpop.f32.mrf.mxu0
    %v3359 = vadd.f32 0.0, %v3358
    %v3360 = vpop.f32.mrf.mxu0
    %3361 = vmatprep.mubr.bf16.mxu0 0
    %3362 = vmatmul.mubr.bf16.gmra.mxu0 %v3286
    %v3363 = vpop.f32.mrf.mxu0
    %v3364 = vadd.f32 0.0, %v3363
    %v3365 = vpop.f32.mrf.mxu0
    %v3366 = vpop.f32.mrf.mxu0
    %v3367 = vadd.f32 0.0, %v3366
    %v3368 = vpop.f32.mrf.mxu0
    %3369 = vmatprep.mubr.bf16.mxu0 0
    %3370 = vmatmul.mubr.bf16.gmra.mxu0 %v3289
    %v3371 = vpop.f32.mrf.mxu0
    %v3372 = vadd.f32 0.0, %v3371
    %v3373 = vpop.f32.mrf.mxu0
    %v3374 = vpop.f32.mrf.mxu0
    %v3375 = vadd.f32 0.0, %v3374
    %v3376 = vpop.f32.mrf.mxu0
    %3377 = vmatprep.mubr.bf16.mxu0 0
    %3378 = vmatmul.mubr.bf16.gmra.mxu0 %v3292
    %v3379 = vpop.f32.mrf.mxu0
    %v3380 = vadd.f32 0.0, %v3379
    %v3381 = vpop.f32.mrf.mxu0
    %v3382 = vpop.f32.mrf.mxu0
    %v3383 = vadd.f32 0.0, %v3382
    %v3384 = vpop.f32.mrf.mxu0
    %3385 = vmatprep.mubr.bf16.mxu0 0
    %3386 = vmatmul.mubr.bf16.gmra.mxu0 %v3295
    %v3387 = vpop.f32.mrf.mxu0
    %v3388 = vadd.f32 0.0, %v3387
    %v3389 = vpop.f32.mrf.mxu0
    %v3390 = vpop.f32.mrf.mxu0
    %v3391 = vadd.f32 0.0, %v3390
    %v3392 = vpop.f32.mrf.mxu0
    %3393 = vdwg.mxu0
    %v3394 = vmul.f32 %v3332, %v120
    %v3395 = vmul.f32 %v3335, %v121
    %v3396 = vmul.f32 %v3340, %v122
    %v3397 = vmul.f32 %v3343, %v123
    %v3398 = vmul.f32 %v3348, %v124
    %v3399 = vmul.f32 %v3351, %v125
    %v3400 = vmul.f32 %v3356, %v126
    %v3401 = vmul.f32 %v3359, %v127
    %v3402 = vmul.f32 %v3364, %v128
    %v3403 = vmul.f32 %v3367, %v129
    %v3404 = vmul.f32 %v3372, %v130
    %v3405 = vmul.f32 %v3375, %v131
    %v3406 = vmul.f32 %v3380, %v132
    %v3407 = vmul.f32 %v3383, %v133
    %v3408 = vmul.f32 %v3388, %v134
    %v3409 = vmul.f32 %v3391, %v135
    %v3410 = vpack.c.bf16 %v3395, %v3394
    %v3411 = vpack.c.bf16 %v3397, %v3396
    %v3412 = vpack.c.bf16 %v3399, %v3398
    %v3413 = vpack.c.bf16 %v3401, %v3400
    %v3414 = vpack.c.bf16 %v3403, %v3402
    %v3415 = vpack.c.bf16 %v3405, %v3404
    %v3416 = vpack.c.bf16 %v3407, %v3406
    %v3417 = vpack.c.bf16 %v3409, %v3408
    %3418 = vmatprep.subr.bf16.mxu0 0
    %3419 = vmatpush1.bf16.msra.mxu0 %v3417
    %3420 = vmatprep.subr.bf16.mxu0 0
    %3421 = vmatpush1.bf16.msra.mxu0 %v3416
    %3422 = vmatprep.subr.bf16.mxu0 0
    %3423 = vmatpush1.bf16.msra.mxu0 %v3415
    %3424 = vmatprep.subr.bf16.mxu0 0
    %3425 = vmatpush1.bf16.msra.mxu0 %v3414
    %3426 = vmatprep.subr.bf16.mxu0 0
    %3427 = vmatpush1.bf16.msra.mxu0 %v3413
    %3428 = vmatprep.subr.bf16.mxu0 0
    %3429 = vmatpush1.bf16.msra.mxu0 %v3412
    %3430 = vmatprep.subr.bf16.mxu0 0
    %3431 = vmatpush1.bf16.msra.mxu0 %v3411
    %3432 = vmatprep.subr.bf16.mxu0 0
    %3433 = vmatpush1.bf16.msra.mxu0 %v3410
    %3434 = vmatprep.subr.bf16.mxu0 0
    %3435 = vmatpush2.bf16.msra.mxu0 0
    %3436 = vmatprep.subr.bf16.mxu0 0
    %3437 = vmatpush2.bf16.msra.mxu0 0
    %3438 = vmatprep.subr.bf16.mxu0 0
    %3439 = vmatpush2.bf16.msra.mxu0 0
    %3440 = vmatprep.subr.bf16.mxu0 0
    %3441 = vmatpush2.bf16.msra.mxu0 0
    %3442 = vmatprep.subr.bf16.mxu0 0
    %3443 = vmatpush2.bf16.msra.mxu0 0
    %3444 = vmatprep.subr.bf16.mxu0 0
    %3445 = vmatpush2.bf16.msra.mxu0 0
    %3446 = vmatprep.subr.bf16.mxu0 0
    %3447 = vmatpush2.bf16.msra.mxu0 0
    %3448 = vmatprep.subr.bf16.mxu0 0
    %3449 = vmatpush2.bf16.msra.mxu0 0
    %3450 = vmatprep.mubr.bf16.mxu0 0
    %3451 = vmatmul.mubr.bf16.gmra.mxu0 %v2987
    %v3452 = vpop.f32.mrf.mxu0
    %v3453 = vadd.f32 0.0, %v3452
    %v3454 = vpop.f32.mrf.mxu0
    %v3455 = vpop.f32.mrf.mxu0
    %v3456 = vadd.f32 0.0, %v3455
    %v3457 = vpop.f32.mrf.mxu0
    %3458 = vdwg.mxu0
    %v3459 = vadd.f32 %v2972, %v2973
    %v3460 = vrot.slane %v3459, 4
    %v3461 = vadd.f32 %v3459, %v3460
    %v3462 = vrot.slane %v3461, 2
    %v3463 = vadd.f32 %v3461, %v3462
    %v3464 = vrot.slane %v3463, 1
    %v3465 = vadd.f32 %v3463, %v3464
    %v3466 = vmul.f32 %v2932, %v3465
    %v3467 = vmul.f32 %v2933, %v3465
    %v3468 = vpack.c.bf16 %v3467, %v3466
    %3469 = vmatprep.subr.bf16.mxu0 0
    %3470 = vmatpush1.bf16.msra.mxu0 %v143
    %3471 = vmatprep.subr.bf16.mxu0 0
    %3472 = vmatpush1.bf16.msra.mxu0 %v142
    %3473 = vmatprep.subr.bf16.mxu0 0
    %3474 = vmatpush1.bf16.msra.mxu0 %v141
    %3475 = vmatprep.subr.bf16.mxu0 0
    %3476 = vmatpush1.bf16.msra.mxu0 %v140
    %3477 = vmatprep.subr.bf16.mxu0 0
    %3478 = vmatpush1.bf16.msra.mxu0 %v139
    %3479 = vmatprep.subr.bf16.mxu0 0
    %3480 = vmatpush1.bf16.msra.mxu0 %v138
    %3481 = vmatprep.subr.bf16.mxu0 0
    %3482 = vmatpush1.bf16.msra.mxu0 %v137
    %3483 = vmatprep.subr.bf16.mxu0 0
    %3484 = vmatpush1.bf16.msra.mxu0 %v136
    %3485 = vmatprep.subr.bf16.mxu0 0
    %3486 = vmatpush2.bf16.msra.mxu0 0
    %3487 = vmatprep.subr.bf16.mxu0 0
    %3488 = vmatpush2.bf16.msra.mxu0 0
    %3489 = vmatprep.subr.bf16.mxu0 0
    %3490 = vmatpush2.bf16.msra.mxu0 0
    %3491 = vmatprep.subr.bf16.mxu0 0
    %3492 = vmatpush2.bf16.msra.mxu0 0
    %3493 = vmatprep.subr.bf16.mxu0 0
    %3494 = vmatpush2.bf16.msra.mxu0 0
    %3495 = vmatprep.subr.bf16.mxu0 0
    %3496 = vmatpush2.bf16.msra.mxu0 0
    %3497 = vmatprep.subr.bf16.mxu0 0
    %3498 = vmatpush2.bf16.msra.mxu0 0
    %3499 = vmatprep.subr.bf16.mxu0 0
    %3500 = vmatpush2.bf16.msra.mxu0 0
    %3501 = vmatprep.mubr.bf16.mxu0 0
    %3502 = vmatmul.mubr.bf16.gmra.mxu0 %v3468
    %v3503 = vpop.f32.mrf.mxu0
    %v3504 = vadd.f32 1e-06, %v3503
    %v3505 = vpop.f32.mrf.mxu0
    %v3506 = vpop.f32.mrf.mxu0
    %v3507 = vadd.f32 1e-06, %v3506
    %v3508 = vpop.f32.mrf.mxu0
    %3509 = vdwg.mxu0
    %v3510 = vrcp.pop %v3504
    %v3511 = vrcp.pop %v3507
    %v3512 = vmul.f32 %v3510, 16.0
    %v3513 = vmul.f32 %v3511, 16.0
    %v3514 = vmul.f32 %v3453, %v3512
    %v3515 = vmul.f32 %v3456, %v3513
    %3516 = vxpose.xlu0.c.b16.start [1/8] %v2992, 128
    %3517 = vxpose.xlu0.c.b16.cont [2/8] 0, 128
    %3518 = vxpose.xlu0.c.b16.cont [3/8] 0, 128
    %3519 = vxpose.xlu0.c.b16.cont [4/8] 0, 128
    %3520 = vxpose.xlu0.c.b16.cont [5/8] 0, 128
    %3521 = vxpose.xlu0.c.b16.cont [6/8] 0, 128
    %3522 = vxpose.xlu0.c.b16.cont [7/8] 0, 128
    %3523 = vxpose.xlu0.c.b16.end [8/8] 0, 128
    %v3524 = vpop.trf.xlu0
    %v3525 = vpop.trf.xlu0
    %v3526 = vpop.trf.xlu0
    %v3527 = vpop.trf.xlu0
    %v3528 = vpop.trf.xlu0
    %v3529 = vpop.trf.xlu0
    %v3530 = vpop.trf.xlu0
    %v3531 = vpop.trf.xlu0
    %v3533 = vsel %vm643, %v3524, 0
    %v3536 = vsel %vm643, %v3525, 0
    %v3539 = vsel %vm643, %v3526, 0
    %v3542 = vsel %vm643, %v3527, 0
    %v3545 = vsel %vm643, %v3528, 0
    %v3548 = vsel %vm643, %v3529, 0
    %v3551 = vsel %vm643, %v3530, 0
    %v3554 = vsel %vm643, %v3531, 0
    %3556 = vmatprep.subr.bf16.mxu0 0
    %3557 = vmatpush1.bf16.msra.mxu0 0
    %3558 = vmatprep.subr.bf16.mxu0 0
    %3559 = vmatpush1.bf16.msra.mxu0 0
    %3560 = vmatprep.subr.bf16.mxu0 0
    %3561 = vmatpush1.bf16.msra.mxu0 0
    %3562 = vmatprep.subr.bf16.mxu0 0
    %3563 = vmatpush1.bf16.msra.mxu0 0
    %3564 = vmatprep.subr.bf16.mxu0 0
    %3565 = vmatpush1.bf16.msra.mxu0 0
    %3566 = vmatprep.subr.bf16.mxu0 0
    %3567 = vmatpush1.bf16.msra.mxu0 0
    %3568 = vmatprep.subr.bf16.mxu0 0
    %3569 = vmatpush1.bf16.msra.mxu0 0
    %3570 = vmatprep.subr.bf16.mxu0 0
    %3571 = vmatpush1.bf16.msra.mxu0 %v2996
    %3572 = vmatprep.subr.bf16.mxu0 0
    %3573 = vmatpush2.bf16.msra.mxu0 0
    %3574 = vmatprep.subr.bf16.mxu0 0
    %3575 = vmatpush2.bf16.msra.mxu0 0
    %3576 = vmatprep.subr.bf16.mxu0 0
    %3577 = vmatpush2.bf16.msra.mxu0 0
    %3578 = vmatprep.subr.bf16.mxu0 0
    %3579 = vmatpush2.bf16.msra.mxu0 0
    %3580 = vmatprep.subr.bf16.mxu0 0
    %3581 = vmatpush2.bf16.msra.mxu0 0
    %3582 = vmatprep.subr.bf16.mxu0 0
    %3583 = vmatpush2.bf16.msra.mxu0 0
    %3584 = vmatprep.subr.bf16.mxu0 0
    %3585 = vmatpush2.bf16.msra.mxu0 0
    %3586 = vmatprep.subr.bf16.mxu0 0
    %3587 = vmatpush2.bf16.msra.mxu0 0
    %3588 = vmatprep.mubr.bf16.mxu0 0
    %3589 = vmatmul.mubr.bf16.gmra.mxu0 %v3533
    %v3590 = vpop.f32.mrf.mxu0
    %v3591 = vadd.f32 0.0, %v3590
    %v3592 = vpop.f32.mrf.mxu0
    %v3593 = vpop.f32.mrf.mxu0
    %v3594 = vadd.f32 0.0, %v3593
    %v3595 = vpop.f32.mrf.mxu0
    %3596 = vmatprep.mubr.bf16.mxu0 0
    %3597 = vmatmul.mubr.bf16.gmra.mxu0 %v3536
    %v3598 = vpop.f32.mrf.mxu0
    %v3599 = vadd.f32 0.0, %v3598
    %v3600 = vpop.f32.mrf.mxu0
    %v3601 = vpop.f32.mrf.mxu0
    %v3602 = vadd.f32 0.0, %v3601
    %v3603 = vpop.f32.mrf.mxu0
    %3604 = vmatprep.mubr.bf16.mxu0 0
    %3605 = vmatmul.mubr.bf16.gmra.mxu0 %v3539
    %v3606 = vpop.f32.mrf.mxu0
    %v3607 = vadd.f32 0.0, %v3606
    %v3608 = vpop.f32.mrf.mxu0
    %v3609 = vpop.f32.mrf.mxu0
    %v3610 = vadd.f32 0.0, %v3609
    %v3611 = vpop.f32.mrf.mxu0
    %3612 = vmatprep.mubr.bf16.mxu0 0
    %3613 = vmatmul.mubr.bf16.gmra.mxu0 %v3542
    %v3614 = vpop.f32.mrf.mxu0
    %v3615 = vadd.f32 0.0, %v3614
    %v3616 = vpop.f32.mrf.mxu0
    %v3617 = vpop.f32.mrf.mxu0
    %v3618 = vadd.f32 0.0, %v3617
    %v3619 = vpop.f32.mrf.mxu0
    %3620 = vmatprep.mubr.bf16.mxu0 0
    %3621 = vmatmul.mubr.bf16.gmra.mxu0 %v3545
    %v3622 = vpop.f32.mrf.mxu0
    %v3623 = vadd.f32 0.0, %v3622
    %v3624 = vpop.f32.mrf.mxu0
    %v3625 = vpop.f32.mrf.mxu0
    %v3626 = vadd.f32 0.0, %v3625
    %v3627 = vpop.f32.mrf.mxu0
    %3628 = vmatprep.mubr.bf16.mxu0 0
    %3629 = vmatmul.mubr.bf16.gmra.mxu0 %v3548
    %v3630 = vpop.f32.mrf.mxu0
    %v3631 = vadd.f32 0.0, %v3630
    %v3632 = vpop.f32.mrf.mxu0
    %v3633 = vpop.f32.mrf.mxu0
    %v3634 = vadd.f32 0.0, %v3633
    %v3635 = vpop.f32.mrf.mxu0
    %3636 = vmatprep.mubr.bf16.mxu0 0
    %3637 = vmatmul.mubr.bf16.gmra.mxu0 %v3551
    %v3638 = vpop.f32.mrf.mxu0
    %v3639 = vadd.f32 0.0, %v3638
    %v3640 = vpop.f32.mrf.mxu0
    %v3641 = vpop.f32.mrf.mxu0
    %v3642 = vadd.f32 0.0, %v3641
    %v3643 = vpop.f32.mrf.mxu0
    %3644 = vmatprep.mubr.bf16.mxu0 0
    %3645 = vmatmul.mubr.bf16.gmra.mxu0 %v3554
    %v3646 = vpop.f32.mrf.mxu0
    %v3647 = vadd.f32 0.0, %v3646
    %v3648 = vpop.f32.mrf.mxu0
    %v3649 = vpop.f32.mrf.mxu0
    %v3650 = vadd.f32 0.0, %v3649
    %v3651 = vpop.f32.mrf.mxu0
    %3652 = vdwg.mxu0
    %v3653 = vmul.f32 %v3591, %v120
    %v3654 = vmul.f32 %v3594, %v121
    %v3655 = vmul.f32 %v3599, %v122
    %v3656 = vmul.f32 %v3602, %v123
    %v3657 = vmul.f32 %v3607, %v124
    %v3658 = vmul.f32 %v3610, %v125
    %v3659 = vmul.f32 %v3615, %v126
    %v3660 = vmul.f32 %v3618, %v127
    %v3661 = vmul.f32 %v3623, %v128
    %v3662 = vmul.f32 %v3626, %v129
    %v3663 = vmul.f32 %v3631, %v130
    %v3664 = vmul.f32 %v3634, %v131
    %v3665 = vmul.f32 %v3639, %v132
    %v3666 = vmul.f32 %v3642, %v133
    %v3667 = vmul.f32 %v3647, %v134
    %v3668 = vmul.f32 %v3650, %v135
    %v3669 = vpack.c.bf16 %v3654, %v3653
    %v3670 = vpack.c.bf16 %v3656, %v3655
    %v3671 = vpack.c.bf16 %v3658, %v3657
    %v3672 = vpack.c.bf16 %v3660, %v3659
    %v3673 = vpack.c.bf16 %v3662, %v3661
    %v3674 = vpack.c.bf16 %v3664, %v3663
    %v3675 = vpack.c.bf16 %v3666, %v3665
    %v3676 = vpack.c.bf16 %v3668, %v3667
    %3677 = vmatprep.subr.bf16.mxu0 0
    %3678 = vmatpush1.bf16.msra.mxu0 %v3676
    %3679 = vmatprep.subr.bf16.mxu0 0
    %3680 = vmatpush1.bf16.msra.mxu0 %v3675
    %3681 = vmatprep.subr.bf16.mxu0 0
    %3682 = vmatpush1.bf16.msra.mxu0 %v3674
    %3683 = vmatprep.subr.bf16.mxu0 0
    %3684 = vmatpush1.bf16.msra.mxu0 %v3673
    %3685 = vmatprep.subr.bf16.mxu0 0
    %3686 = vmatpush1.bf16.msra.mxu0 %v3672
    %3687 = vmatprep.subr.bf16.mxu0 0
    %3688 = vmatpush1.bf16.msra.mxu0 %v3671
    %3689 = vmatprep.subr.bf16.mxu0 0
    %3690 = vmatpush1.bf16.msra.mxu0 %v3670
    %3691 = vmatprep.subr.bf16.mxu0 0
    %3692 = vmatpush1.bf16.msra.mxu0 %v3669
    %3693 = vmatprep.subr.bf16.mxu0 0
    %3694 = vmatpush2.bf16.msra.mxu0 0
    %3695 = vmatprep.subr.bf16.mxu0 0
    %3696 = vmatpush2.bf16.msra.mxu0 0
    %3697 = vmatprep.subr.bf16.mxu0 0
    %3698 = vmatpush2.bf16.msra.mxu0 0
    %3699 = vmatprep.subr.bf16.mxu0 0
    %3700 = vmatpush2.bf16.msra.mxu0 0
    %3701 = vmatprep.subr.bf16.mxu0 0
    %3702 = vmatpush2.bf16.msra.mxu0 0
    %3703 = vmatprep.subr.bf16.mxu0 0
    %3704 = vmatpush2.bf16.msra.mxu0 0
    %3705 = vmatprep.subr.bf16.mxu0 0
    %3706 = vmatpush2.bf16.msra.mxu0 0
    %3707 = vmatprep.subr.bf16.mxu0 0
    %3708 = vmatpush2.bf16.msra.mxu0 0
    %3709 = vmatprep.mubr.bf16.mxu0 0
    %3710 = vmatmul.mubr.bf16.gmra.mxu0 %v2988
    %v3711 = vpop.f32.mrf.mxu0
    %v3712 = vadd.f32 0.0, %v3711
    %v3713 = vpop.f32.mrf.mxu0
    %v3714 = vpop.f32.mrf.mxu0
    %v3715 = vadd.f32 0.0, %v3714
    %v3716 = vpop.f32.mrf.mxu0
    %3717 = vdwg.mxu0
    %v3718 = vadd.f32 %v2974, %v2975
    %v3719 = vrot.slane %v3718, 4
    %v3720 = vadd.f32 %v3718, %v3719
    %v3721 = vrot.slane %v3720, 2
    %v3722 = vadd.f32 %v3720, %v3721
    %v3723 = vrot.slane %v3722, 1
    %v3724 = vadd.f32 %v3722, %v3723
    %v3725 = vmul.f32 %v2934, %v3724
    %v3726 = vmul.f32 %v2935, %v3724
    %v3727 = vpack.c.bf16 %v3726, %v3725
    %3728 = vmatprep.subr.bf16.mxu0 0
    %3729 = vmatpush1.bf16.msra.mxu0 %v143
    %3730 = vmatprep.subr.bf16.mxu0 0
    %3731 = vmatpush1.bf16.msra.mxu0 %v142
    %3732 = vmatprep.subr.bf16.mxu0 0
    %3733 = vmatpush1.bf16.msra.mxu0 %v141
    %3734 = vmatprep.subr.bf16.mxu0 0
    %3735 = vmatpush1.bf16.msra.mxu0 %v140
    %3736 = vmatprep.subr.bf16.mxu0 0
    %3737 = vmatpush1.bf16.msra.mxu0 %v139
    %3738 = vmatprep.subr.bf16.mxu0 0
    %3739 = vmatpush1.bf16.msra.mxu0 %v138
    %3740 = vmatprep.subr.bf16.mxu0 0
    %3741 = vmatpush1.bf16.msra.mxu0 %v137
    %3742 = vmatprep.subr.bf16.mxu0 0
    %3743 = vmatpush1.bf16.msra.mxu0 %v136
    %3744 = vmatprep.subr.bf16.mxu0 0
    %3745 = vmatpush2.bf16.msra.mxu0 0
    %3746 = vmatprep.subr.bf16.mxu0 0
    %3747 = vmatpush2.bf16.msra.mxu0 0
    %3748 = vmatprep.subr.bf16.mxu0 0
    %3749 = vmatpush2.bf16.msra.mxu0 0
    %3750 = vmatprep.subr.bf16.mxu0 0
    %3751 = vmatpush2.bf16.msra.mxu0 0
    %3752 = vmatprep.subr.bf16.mxu0 0
    %3753 = vmatpush2.bf16.msra.mxu0 0
    %3754 = vmatprep.subr.bf16.mxu0 0
    %3755 = vmatpush2.bf16.msra.mxu0 0
    %3756 = vmatprep.subr.bf16.mxu0 0
    %3757 = vmatpush2.bf16.msra.mxu0 0
    %3758 = vmatprep.subr.bf16.mxu0 0
    %3759 = vmatpush2.bf16.msra.mxu0 0
    %3760 = vmatprep.mubr.bf16.mxu0 0
    %3761 = vmatmul.mubr.bf16.gmra.mxu0 %v3727
    %v3762 = vpop.f32.mrf.mxu0
    %v3763 = vadd.f32 1e-06, %v3762
    %v3764 = vpop.f32.mrf.mxu0
    %v3765 = vpop.f32.mrf.mxu0
    %v3766 = vadd.f32 1e-06, %v3765
    %v3767 = vpop.f32.mrf.mxu0
    %3768 = vdwg.mxu0
    %v3769 = vrcp.pop %v3763
    %v3770 = vrcp.pop %v3766
    %v3771 = vmul.f32 %v3769, 16.0
    %v3772 = vmul.f32 %v3770, 16.0
    %v3773 = vmul.f32 %v3712, %v3771
    %v3774 = vmul.f32 %v3715, %v3772
    %3775 = vxpose.xlu0.c.b16.start [1/8] %v2993, 128
    %3776 = vxpose.xlu0.c.b16.cont [2/8] 0, 128
    %3777 = vxpose.xlu0.c.b16.cont [3/8] 0, 128
    %3778 = vxpose.xlu0.c.b16.cont [4/8] 0, 128
    %3779 = vxpose.xlu0.c.b16.cont [5/8] 0, 128
    %3780 = vxpose.xlu0.c.b16.cont [6/8] 0, 128
    %3781 = vxpose.xlu0.c.b16.cont [7/8] 0, 128
    %3782 = vxpose.xlu0.c.b16.end [8/8] 0, 128
    %v3783 = vpop.trf.xlu0
    %v3784 = vpop.trf.xlu0
    %v3785 = vpop.trf.xlu0
    %v3786 = vpop.trf.xlu0
    %v3787 = vpop.trf.xlu0
    %v3788 = vpop.trf.xlu0
    %v3789 = vpop.trf.xlu0
    %v3790 = vpop.trf.xlu0
    %v3792 = vsel %vm643, %v3783, 0
    %v3795 = vsel %vm643, %v3784, 0
    %v3798 = vsel %vm643, %v3785, 0
    %v3801 = vsel %vm643, %v3786, 0
    %v3804 = vsel %vm643, %v3787, 0
    %v3807 = vsel %vm643, %v3788, 0
    %v3810 = vsel %vm643, %v3789, 0
    %v3813 = vsel %vm643, %v3790, 0
    %3815 = vmatprep.subr.bf16.mxu0 0
    %3816 = vmatpush1.bf16.msra.mxu0 0
    %3817 = vmatprep.subr.bf16.mxu0 0
    %3818 = vmatpush1.bf16.msra.mxu0 0
    %3819 = vmatprep.subr.bf16.mxu0 0
    %3820 = vmatpush1.bf16.msra.mxu0 0
    %3821 = vmatprep.subr.bf16.mxu0 0
    %3822 = vmatpush1.bf16.msra.mxu0 0
    %3823 = vmatprep.subr.bf16.mxu0 0
    %3824 = vmatpush1.bf16.msra.mxu0 0
    %3825 = vmatprep.subr.bf16.mxu0 0
    %3826 = vmatpush1.bf16.msra.mxu0 0
    %3827 = vmatprep.subr.bf16.mxu0 0
    %3828 = vmatpush1.bf16.msra.mxu0 0
    %3829 = vmatprep.subr.bf16.mxu0 0
    %3830 = vmatpush1.bf16.msra.mxu0 %v2997
    %3831 = vmatprep.subr.bf16.mxu0 0
    %3832 = vmatpush2.bf16.msra.mxu0 0
    %3833 = vmatprep.subr.bf16.mxu0 0
    %3834 = vmatpush2.bf16.msra.mxu0 0
    %3835 = vmatprep.subr.bf16.mxu0 0
    %3836 = vmatpush2.bf16.msra.mxu0 0
    %3837 = vmatprep.subr.bf16.mxu0 0
    %3838 = vmatpush2.bf16.msra.mxu0 0
    %3839 = vmatprep.subr.bf16.mxu0 0
    %3840 = vmatpush2.bf16.msra.mxu0 0
    %3841 = vmatprep.subr.bf16.mxu0 0
    %3842 = vmatpush2.bf16.msra.mxu0 0
    %3843 = vmatprep.subr.bf16.mxu0 0
    %3844 = vmatpush2.bf16.msra.mxu0 0
    %3845 = vmatprep.subr.bf16.mxu0 0
    %3846 = vmatpush2.bf16.msra.mxu0 0
    %3847 = vmatprep.mubr.bf16.mxu0 0
    %3848 = vmatmul.mubr.bf16.gmra.mxu0 %v3792
    %v3849 = vpop.f32.mrf.mxu0
    %v3850 = vadd.f32 0.0, %v3849
    %v3851 = vpop.f32.mrf.mxu0
    %v3852 = vpop.f32.mrf.mxu0
    %v3853 = vadd.f32 0.0, %v3852
    %v3854 = vpop.f32.mrf.mxu0
    %3855 = vmatprep.mubr.bf16.mxu0 0
    %3856 = vmatmul.mubr.bf16.gmra.mxu0 %v3795
    %v3857 = vpop.f32.mrf.mxu0
    %v3858 = vadd.f32 0.0, %v3857
    %v3859 = vpop.f32.mrf.mxu0
    %v3860 = vpop.f32.mrf.mxu0
    %v3861 = vadd.f32 0.0, %v3860
    %v3862 = vpop.f32.mrf.mxu0
    %3863 = vmatprep.mubr.bf16.mxu0 0
    %3864 = vmatmul.mubr.bf16.gmra.mxu0 %v3798
    %v3865 = vpop.f32.mrf.mxu0
    %v3866 = vadd.f32 0.0, %v3865
    %v3867 = vpop.f32.mrf.mxu0
    %v3868 = vpop.f32.mrf.mxu0
    %v3869 = vadd.f32 0.0, %v3868
    %v3870 = vpop.f32.mrf.mxu0
    %3871 = vmatprep.mubr.bf16.mxu0 0
    %3872 = vmatmul.mubr.bf16.gmra.mxu0 %v3801
    %v3873 = vpop.f32.mrf.mxu0
    %v3874 = vadd.f32 0.0, %v3873
    %v3875 = vpop.f32.mrf.mxu0
    %v3876 = vpop.f32.mrf.mxu0
    %v3877 = vadd.f32 0.0, %v3876
    %v3878 = vpop.f32.mrf.mxu0
    %3879 = vmatprep.mubr.bf16.mxu0 0
    %3880 = vmatmul.mubr.bf16.gmra.mxu0 %v3804
    %v3881 = vpop.f32.mrf.mxu0
    %v3882 = vadd.f32 0.0, %v3881
    %v3883 = vpop.f32.mrf.mxu0
    %v3884 = vpop.f32.mrf.mxu0
    %v3885 = vadd.f32 0.0, %v3884
    %v3886 = vpop.f32.mrf.mxu0
    %3887 = vmatprep.mubr.bf16.mxu0 0
    %3888 = vmatmul.mubr.bf16.gmra.mxu0 %v3807
    %v3889 = vpop.f32.mrf.mxu0
    %v3890 = vadd.f32 0.0, %v3889
    %v3891 = vpop.f32.mrf.mxu0
    %v3892 = vpop.f32.mrf.mxu0
    %v3893 = vadd.f32 0.0, %v3892
    %v3894 = vpop.f32.mrf.mxu0
    %3895 = vmatprep.mubr.bf16.mxu0 0
    %3896 = vmatmul.mubr.bf16.gmra.mxu0 %v3810
    %v3897 = vpop.f32.mrf.mxu0
    %v3898 = vadd.f32 0.0, %v3897
    %v3899 = vpop.f32.mrf.mxu0
    %v3900 = vpop.f32.mrf.mxu0
    %v3901 = vadd.f32 0.0, %v3900
    %v3902 = vpop.f32.mrf.mxu0
    %3903 = vmatprep.mubr.bf16.mxu0 0
    %3904 = vmatmul.mubr.bf16.gmra.mxu0 %v3813
    %v3905 = vpop.f32.mrf.mxu0
    %v3906 = vadd.f32 0.0, %v3905
    %v3907 = vpop.f32.mrf.mxu0
    %v3908 = vpop.f32.mrf.mxu0
    %v3909 = vadd.f32 0.0, %v3908
    %v3910 = vpop.f32.mrf.mxu0
    %3911 = vdwg.mxu0
    %v3912 = vmul.f32 %v3850, %v120
    %v3913 = vmul.f32 %v3853, %v121
    %v3914 = vmul.f32 %v3858, %v122
    %v3915 = vmul.f32 %v3861, %v123
    %v3916 = vmul.f32 %v3866, %v124
    %v3917 = vmul.f32 %v3869, %v125
    %v3918 = vmul.f32 %v3874, %v126
    %v3919 = vmul.f32 %v3877, %v127
    %v3920 = vmul.f32 %v3882, %v128
    %v3921 = vmul.f32 %v3885, %v129
    %v3922 = vmul.f32 %v3890, %v130
    %v3923 = vmul.f32 %v3893, %v131
    %v3924 = vmul.f32 %v3898, %v132
    %v3925 = vmul.f32 %v3901, %v133
    %v3926 = vmul.f32 %v3906, %v134
    %v3927 = vmul.f32 %v3909, %v135
    %v3928 = vpack.c.bf16 %v3913, %v3912
    %v3929 = vpack.c.bf16 %v3915, %v3914
    %v3930 = vpack.c.bf16 %v3917, %v3916
    %v3931 = vpack.c.bf16 %v3919, %v3918
    %v3932 = vpack.c.bf16 %v3921, %v3920
    %v3933 = vpack.c.bf16 %v3923, %v3922
    %v3934 = vpack.c.bf16 %v3925, %v3924
    %v3935 = vpack.c.bf16 %v3927, %v3926
    %3936 = vmatprep.subr.bf16.mxu0 0
    %3937 = vmatpush1.bf16.msra.mxu0 %v3935
    %3938 = vmatprep.subr.bf16.mxu0 0
    %3939 = vmatpush1.bf16.msra.mxu0 %v3934
    %3940 = vmatprep.subr.bf16.mxu0 0
    %3941 = vmatpush1.bf16.msra.mxu0 %v3933
    %3942 = vmatprep.subr.bf16.mxu0 0
    %3943 = vmatpush1.bf16.msra.mxu0 %v3932
    %3944 = vmatprep.subr.bf16.mxu0 0
    %3945 = vmatpush1.bf16.msra.mxu0 %v3931
    %3946 = vmatprep.subr.bf16.mxu0 0
    %3947 = vmatpush1.bf16.msra.mxu0 %v3930
    %3948 = vmatprep.subr.bf16.mxu0 0
    %3949 = vmatpush1.bf16.msra.mxu0 %v3929
    %3950 = vmatprep.subr.bf16.mxu0 0
    %3951 = vmatpush1.bf16.msra.mxu0 %v3928
    %3952 = vmatprep.subr.bf16.mxu0 0
    %3953 = vmatpush2.bf16.msra.mxu0 0
    %3954 = vmatprep.subr.bf16.mxu0 0
    %3955 = vmatpush2.bf16.msra.mxu0 0
    %3956 = vmatprep.subr.bf16.mxu0 0
    %3957 = vmatpush2.bf16.msra.mxu0 0
    %3958 = vmatprep.subr.bf16.mxu0 0
    %3959 = vmatpush2.bf16.msra.mxu0 0
    %3960 = vmatprep.subr.bf16.mxu0 0
    %3961 = vmatpush2.bf16.msra.mxu0 0
    %3962 = vmatprep.subr.bf16.mxu0 0
    %3963 = vmatpush2.bf16.msra.mxu0 0
    %3964 = vmatprep.subr.bf16.mxu0 0
    %3965 = vmatpush2.bf16.msra.mxu0 0
    %3966 = vmatprep.subr.bf16.mxu0 0
    %3967 = vmatpush2.bf16.msra.mxu0 0
    %3968 = vmatprep.mubr.bf16.mxu0 0
    %3969 = vmatmul.mubr.bf16.gmra.mxu0 %v2989
    %v3970 = vpop.f32.mrf.mxu0
    %v3971 = vadd.f32 0.0, %v3970
    %v3972 = vpop.f32.mrf.mxu0
    %v3973 = vpop.f32.mrf.mxu0
    %v3974 = vadd.f32 0.0, %v3973
    %v3975 = vpop.f32.mrf.mxu0
    %3976 = vdwg.mxu0
    %v3977 = vadd.f32 %v2976, %v2977
    %v3978 = vrot.slane %v3977, 4
    %v3979 = vadd.f32 %v3977, %v3978
    %v3980 = vrot.slane %v3979, 2
    %v3981 = vadd.f32 %v3979, %v3980
    %v3982 = vrot.slane %v3981, 1
    %v3983 = vadd.f32 %v3981, %v3982
    %v3984 = vmul.f32 %v2936, %v3983
    %v3985 = vmul.f32 %v2937, %v3983
    %v3986 = vpack.c.bf16 %v3985, %v3984
    %3987 = vmatprep.subr.bf16.mxu0 0
    %3988 = vmatpush1.bf16.msra.mxu0 %v143
    %3989 = vmatprep.subr.bf16.mxu0 0
    %3990 = vmatpush1.bf16.msra.mxu0 %v142
    %3991 = vmatprep.subr.bf16.mxu0 0
    %3992 = vmatpush1.bf16.msra.mxu0 %v141
    %3993 = vmatprep.subr.bf16.mxu0 0
    %3994 = vmatpush1.bf16.msra.mxu0 %v140
    %3995 = vmatprep.subr.bf16.mxu0 0
    %3996 = vmatpush1.bf16.msra.mxu0 %v139
    %3997 = vmatprep.subr.bf16.mxu0 0
    %3998 = vmatpush1.bf16.msra.mxu0 %v138
    %3999 = vmatprep.subr.bf16.mxu0 0
    %4000 = vmatpush1.bf16.msra.mxu0 %v137
    %4001 = vmatprep.subr.bf16.mxu0 0
    %4002 = vmatpush1.bf16.msra.mxu0 %v136
    %4003 = vmatprep.subr.bf16.mxu0 0
    %4004 = vmatpush2.bf16.msra.mxu0 0
    %4005 = vmatprep.subr.bf16.mxu0 0
    %4006 = vmatpush2.bf16.msra.mxu0 0
    %4007 = vmatprep.subr.bf16.mxu0 0
    %4008 = vmatpush2.bf16.msra.mxu0 0
    %4009 = vmatprep.subr.bf16.mxu0 0
    %4010 = vmatpush2.bf16.msra.mxu0 0
    %4011 = vmatprep.subr.bf16.mxu0 0
    %4012 = vmatpush2.bf16.msra.mxu0 0
    %4013 = vmatprep.subr.bf16.mxu0 0
    %4014 = vmatpush2.bf16.msra.mxu0 0
    %4015 = vmatprep.subr.bf16.mxu0 0
    %4016 = vmatpush2.bf16.msra.mxu0 0
    %4017 = vmatprep.subr.bf16.mxu0 0
    %4018 = vmatpush2.bf16.msra.mxu0 0
    %4019 = vmatprep.mubr.bf16.mxu0 0
    %4020 = vmatmul.mubr.bf16.gmra.mxu0 %v3986
    %v4021 = vpop.f32.mrf.mxu0
    %v4022 = vadd.f32 1e-06, %v4021
    %v4023 = vpop.f32.mrf.mxu0
    %v4024 = vpop.f32.mrf.mxu0
    %v4025 = vadd.f32 1e-06, %v4024
    %v4026 = vpop.f32.mrf.mxu0
    %4027 = vdwg.mxu0
    %v4028 = vrcp.pop %v4022
    %v4029 = vrcp.pop %v4025
    %v4030 = vmul.f32 %v4028, 16.0
    %v4031 = vmul.f32 %v4029, 16.0
    %v4032 = vmul.f32 %v3971, %v4030
    %v4033 = vmul.f32 %v3974, %v4031
    %v4034 = vpack.c.bf16 %v3256, %v3255
    %v4035 = vpack.c.bf16 %v3515, %v3514
    %v4036 = vpack.c.bf16 %v3774, %v3773
    %v4037 = vpack.c.bf16 %v4033, %v4032
    %v4054 = vunpack.c.l.b16 %v2543
    %v4055 = vunpack.c.l.b16 %v2544
    %v4056 = vunpack.c.l.b16 %v2545
    %v4057 = vunpack.c.l.b16 %v2546
    %v4058 = vunpack.c.l.b16 %v2547
    %v4059 = vunpack.c.l.b16 %v2548
    %v4060 = vunpack.c.l.b16 %v2549
    %v4061 = vunpack.c.l.b16 %v2550
    %v4062 = vunpack.c.l.b16 %v2551
    %v4063 = vunpack.c.l.b16 %v2552
    %v4064 = vunpack.c.l.b16 %v2553
    %v4065 = vunpack.c.l.b16 %v2554
    %v4066 = vunpack.c.l.b16 %v2555
    %v4067 = vunpack.c.l.b16 %v2556
    %v4068 = vunpack.c.l.b16 %v2557
    %v4069 = vunpack.c.l.b16 %v2558
    %v4070 = vpack.c.b16 %v4055, %v4054
    %v4071 = vpack.c.b16 %v4057, %v4056
    %v4072 = vpack.c.b16 %v4059, %v4058
    %v4073 = vpack.c.b16 %v4061, %v4060
    %v4074 = vpack.c.b16 %v4063, %v4062
    %v4075 = vpack.c.b16 %v4065, %v4064
    %v4076 = vpack.c.b16 %v4067, %v4066
    %v4077 = vpack.c.b16 %v4069, %v4068
    %4086 = vmatprep.subr.bf16.mxu0 0
    %4087 = vmatpush1.bf16.msra.mxu0 %v4077
    %4088 = vmatprep.subr.bf16.mxu0 0
    %4089 = vmatpush1.bf16.msra.mxu0 %v4076
    %4090 = vmatprep.subr.bf16.mxu0 0
    %4091 = vmatpush1.bf16.msra.mxu0 %v4075
    %4092 = vmatprep.subr.bf16.mxu0 0
    %4093 = vmatpush1.bf16.msra.mxu0 %v4074
    %4094 = vmatprep.subr.bf16.mxu0 0
    %4095 = vmatpush1.bf16.msra.mxu0 %v4073
    %4096 = vmatprep.subr.bf16.mxu0 0
    %4097 = vmatpush1.bf16.msra.mxu0 %v4072
    %4098 = vmatprep.subr.bf16.mxu0 0
    %4099 = vmatpush1.bf16.msra.mxu0 %v4071
    %4100 = vmatprep.subr.bf16.mxu0 0
    %4101 = vmatpush1.bf16.msra.mxu0 %v4070
    %4102 = vmatprep.subr.bf16.mxu0 0
    %4103 = vmatpush2.bf16.msra.mxu0 0
    %4104 = vmatprep.subr.bf16.mxu0 0
    %4105 = vmatpush2.bf16.msra.mxu0 0
    %4106 = vmatprep.subr.bf16.mxu0 0
    %4107 = vmatpush2.bf16.msra.mxu0 0
    %4108 = vmatprep.subr.bf16.mxu0 0
    %4109 = vmatpush2.bf16.msra.mxu0 0
    %4110 = vmatprep.subr.bf16.mxu0 0
    %4111 = vmatpush2.bf16.msra.mxu0 0
    %4112 = vmatprep.subr.bf16.mxu0 0
    %4113 = vmatpush2.bf16.msra.mxu0 0
    %4114 = vmatprep.subr.bf16.mxu0 0
    %4115 = vmatpush2.bf16.msra.mxu0 0
    %4116 = vmatprep.subr.bf16.mxu0 0
    %4117 = vmatpush2.bf16.msra.mxu0 0
    %4118 = vmatprep.mubr.bf16.mxu0 0
    %4119 = vmatmul.mubr.bf16.gmra.mxu0 %v4034
    %v4120 = vpop.f32.mrf.mxu0
    %v4121 = vadd.f32 0.0, %v4120
    %v4122 = vpop.f32.mrf.mxu0
    %v4123 = vpop.f32.mrf.mxu0
    %v4124 = vadd.f32 0.0, %v4123
    %v4125 = vpop.f32.mrf.mxu0
    %4126 = vmatprep.mubr.bf16.mxu0 0
    %4127 = vmatmul.mubr.bf16.gmra.mxu0 %v4035
    %v4128 = vpop.f32.mrf.mxu0
    %v4129 = vadd.f32 0.0, %v4128
    %v4130 = vpop.f32.mrf.mxu0
    %v4131 = vpop.f32.mrf.mxu0
    %v4132 = vadd.f32 0.0, %v4131
    %v4133 = vpop.f32.mrf.mxu0
    %4134 = vmatprep.mubr.bf16.mxu0 0
    %4135 = vmatmul.mubr.bf16.gmra.mxu0 %v4036
    %v4136 = vpop.f32.mrf.mxu0
    %v4137 = vadd.f32 0.0, %v4136
    %v4138 = vpop.f32.mrf.mxu0
    %v4139 = vpop.f32.mrf.mxu0
    %v4140 = vadd.f32 0.0, %v4139
    %v4141 = vpop.f32.mrf.mxu0
    %4142 = vmatprep.mubr.bf16.mxu0 0
    %4143 = vmatmul.mubr.bf16.gmra.mxu0 %v4037
    %v4144 = vpop.f32.mrf.mxu0
    %v4145 = vadd.f32 0.0, %v4144
    %v4146 = vpop.f32.mrf.mxu0
    %v4147 = vpop.f32.mrf.mxu0
    %v4148 = vadd.f32 0.0, %v4147
    %v4149 = vpop.f32.mrf.mxu0
    %4150 = vdwg.mxu0
    %4151 = vadd.xlane.f32.xlu0 %v4121
    %v4152 = vpop.xlane.xlu0 %4151
    %4153 = vadd.xlane.f32.xlu0 %v4124
    %v4154 = vpop.xlane.xlu0 %4153
    %4155 = vadd.xlane.f32.xlu0 %v4129
    %v4156 = vpop.xlane.xlu0 %4155
    %4157 = vadd.xlane.f32.xlu0 %v4132
    %v4158 = vpop.xlane.xlu0 %4157
    %4159 = vadd.xlane.f32.xlu0 %v4137
    %v4160 = vpop.xlane.xlu0 %4159
    %4161 = vadd.xlane.f32.xlu0 %v4140
    %v4162 = vpop.xlane.xlu0 %4161
    %4163 = vadd.xlane.f32.xlu0 %v4145
    %v4164 = vpop.xlane.xlu0 %4163
    %4165 = vadd.xlane.f32.xlu0 %v4148
    %v4166 = vpop.xlane.xlu0 %4165
    %v4167 = vmul.f32 %v4152, %v1797
    %v4168 = vmul.f32 %v4154, %v1797
    %v4169 = vmul.f32 %v4156, %v1797
    %v4170 = vmul.f32 %v4158, %v1797
    %v4171 = vmul.f32 %v4160, %v1797
    %v4172 = vmul.f32 %v4162, %v1797
    %v4173 = vmul.f32 %v4164, %v1797
    %v4174 = vmul.f32 %v4166, %v1797
    %v4175 = vsub.f32 %v4121, %v4167
    %v4176 = vsub.f32 %v4124, %v4168
    %v4177 = vsub.f32 %v4129, %v4169
    %v4178 = vsub.f32 %v4132, %v4170
    %v4179 = vsub.f32 %v4137, %v4171
    %v4180 = vsub.f32 %v4140, %v4172
    %v4181 = vsub.f32 %v4145, %v4173
    %v4182 = vsub.f32 %v4148, %v4174
    %v4183 = vmul.f32 %v4175, %v4175
    %v4184 = vmul.f32 %v4176, %v4176
    %v4185 = vmul.f32 %v4177, %v4177
    %v4186 = vmul.f32 %v4178, %v4178
    %v4187 = vmul.f32 %v4179, %v4179
    %v4188 = vmul.f32 %v4180, %v4180
    %v4189 = vmul.f32 %v4181, %v4181
    %v4190 = vmul.f32 %v4182, %v4182
    %4191 = vadd.xlane.f32.xlu0 %v4183
    %v4192 = vpop.xlane.xlu0 %4191
    %4193 = vadd.xlane.f32.xlu0 %v4184
    %v4194 = vpop.xlane.xlu0 %4193
    %4195 = vadd.xlane.f32.xlu0 %v4185
    %v4196 = vpop.xlane.xlu0 %4195
    %4197 = vadd.xlane.f32.xlu0 %v4186
    %v4198 = vpop.xlane.xlu0 %4197
    %4199 = vadd.xlane.f32.xlu0 %v4187
    %v4200 = vpop.xlane.xlu0 %4199
    %4201 = vadd.xlane.f32.xlu0 %v4188
    %v4202 = vpop.xlane.xlu0 %4201
    %4203 = vadd.xlane.f32.xlu0 %v4189
    %v4204 = vpop.xlane.xlu0 %4203
    %4205 = vadd.xlane.f32.xlu0 %v4190
    %v4206 = vpop.xlane.xlu0 %4205
    %v4207 = vmul.f32 %v4192, %v1797
    %v4208 = vmul.f32 %v4194, %v1797
    %v4209 = vmul.f32 %v4196, %v1797
    %v4210 = vmul.f32 %v4198, %v1797
    %v4211 = vmul.f32 %v4200, %v1797
    %v4212 = vmul.f32 %v4202, %v1797
    %v4213 = vmul.f32 %v4204, %v1797
    %v4214 = vmul.f32 %v4206, %v1797
    %v4215 = vadd.f32 %v4207, 1e-05
    %v4216 = vadd.f32 %v4208, 1e-05
    %v4217 = vadd.f32 %v4209, 1e-05
    %v4218 = vadd.f32 %v4210, 1e-05
    %v4219 = vadd.f32 %v4211, 1e-05
    %v4220 = vadd.f32 %v4212, 1e-05
    %v4221 = vadd.f32 %v4213, 1e-05
    %v4222 = vadd.f32 %v4214, 1e-05
    %v4223 = vrsqrt.pop %v4215
    %v4224 = vrsqrt.pop %v4216
    %v4225 = vrsqrt.pop %v4217
    %v4226 = vrsqrt.pop %v4218
    %v4227 = vrsqrt.pop %v4219
    %v4228 = vrsqrt.pop %v4220
    %v4229 = vrsqrt.pop %v4221
    %v4230 = vrsqrt.pop %v4222
    %v4231 = vmul.f32 %v4175, %v4223
    %v4232 = vmul.f32 %v4176, %v4224
    %v4233 = vmul.f32 %v4177, %v4225
    %v4234 = vmul.f32 %v4178, %v4226
    %v4235 = vmul.f32 %v4179, %v4227
    %v4236 = vmul.f32 %v4180, %v4228
    %v4237 = vmul.f32 %v4181, %v4229
    %v4238 = vmul.f32 %v4182, %v4230
    %v4239 = vlaneseq
    %v4240 = vshrl.u32 %v4239, 7
    %v4241 = vsub.s32 0, %v4240
    %v4242 = vrot.slane %v2627, %v4241
    %v4243 = vmul.f32 %v4231, %v4242
    %v4244 = vmul.f32 %v4232, %v4242
    %v4245 = vmul.f32 %v4233, %v4242
    %v4246 = vmul.f32 %v4234, %v4242
    %v4247 = vmul.f32 %v4235, %v4242
    %v4248 = vmul.f32 %v4236, %v4242
    %v4249 = vmul.f32 %v4237, %v4242
    %v4250 = vmul.f32 %v4238, %v4242
    %v4251 = vlaneseq
    %v4252 = vshrl.u32 %v4251, 7
    %v4253 = vsub.s32 1, %v4252
    %v4254 = vrot.slane %v2627, %v4253
    %v4255 = vadd.f32 %v4243, %v4254
    %v4256 = vadd.f32 %v4244, %v4254
    %v4257 = vadd.f32 %v4245, %v4254
    %v4258 = vadd.f32 %v4246, %v4254
    %v4259 = vadd.f32 %v4247, %v4254
    %v4260 = vadd.f32 %v4248, %v4254
    %v4261 = vadd.f32 %v4249, %v4254
    %v4262 = vadd.f32 %v4250, %v4254
    %v4263 = vpack.c.bf16 %v4256, %v4255
    %v4264 = vpack.c.bf16 %v4258, %v4257
    %v4265 = vpack.c.bf16 %v4260, %v4259
    %v4266 = vpack.c.bf16 %v4262, %v4261
    %v4283 = vunpack.c.l.b16 %v2577
    %v4284 = vunpack.c.h.b16 %v2577
    %v4285 = vunpack.c.l.b16 %v2578
    %v4286 = vunpack.c.h.b16 %v2578
    %v4287 = vunpack.c.l.b16 %v2579
    %v4288 = vunpack.c.h.b16 %v2579
    %v4289 = vunpack.c.l.b16 %v2580
    %v4290 = vunpack.c.h.b16 %v2580
    %v4291 = vunpack.c.l.b16 %v2581
    %v4292 = vunpack.c.h.b16 %v2581
    %v4293 = vunpack.c.l.b16 %v2582
    %v4294 = vunpack.c.h.b16 %v2582
    %v4295 = vunpack.c.l.b16 %v2583
    %v4296 = vunpack.c.h.b16 %v2583
    %v4297 = vunpack.c.l.b16 %v2584
    %v4298 = vunpack.c.h.b16 %v2584
    %v4299 = vunpack.c.l.b16 %v2585
    %v4300 = vunpack.c.h.b16 %v2585
    %v4301 = vunpack.c.l.b16 %v2586
    %v4302 = vunpack.c.h.b16 %v2586
    %v4303 = vunpack.c.l.b16 %v2587
    %v4304 = vunpack.c.h.b16 %v2587
    %v4305 = vunpack.c.l.b16 %v2588
    %v4306 = vunpack.c.h.b16 %v2588
    %v4307 = vunpack.c.l.b16 %v2589
    %v4308 = vunpack.c.h.b16 %v2589
    %v4309 = vunpack.c.l.b16 %v2590
    %v4310 = vunpack.c.h.b16 %v2590
    %v4311 = vunpack.c.l.b16 %v2591
    %v4312 = vunpack.c.h.b16 %v2591
    %v4313 = vunpack.c.l.b16 %v2592
    %v4314 = vunpack.c.h.b16 %v2592
    %v4315 = vpack.c.b16 %v4285, %v4283
    %v4316 = vpack.c.b16 %v4286, %v4284
    %v4317 = vpack.c.b16 %v4289, %v4287
    %v4318 = vpack.c.b16 %v4290, %v4288
    %v4319 = vpack.c.b16 %v4293, %v4291
    %v4320 = vpack.c.b16 %v4294, %v4292
    %v4321 = vpack.c.b16 %v4297, %v4295
    %v4322 = vpack.c.b16 %v4298, %v4296
    %v4323 = vpack.c.b16 %v4301, %v4299
    %v4324 = vpack.c.b16 %v4302, %v4300
    %v4325 = vpack.c.b16 %v4305, %v4303
    %v4326 = vpack.c.b16 %v4306, %v4304
    %v4327 = vpack.c.b16 %v4309, %v4307
    %v4328 = vpack.c.b16 %v4310, %v4308
    %v4329 = vpack.c.b16 %v4313, %v4311
    %v4330 = vpack.c.b16 %v4314, %v4312
    %4347 = vmatprep.subr.bf16.mxu0 %v4330
    %4348 = vmatpush1.bf16.msra.mxu0 %v4329
    %4349 = vmatprep.subr.bf16.mxu0 %v4328
    %4350 = vmatpush1.bf16.msra.mxu0 %v4327
    %4351 = vmatprep.subr.bf16.mxu0 %v4326
    %4352 = vmatpush1.bf16.msra.mxu0 %v4325
    %4353 = vmatprep.subr.bf16.mxu0 %v4324
    %4354 = vmatpush1.bf16.msra.mxu0 %v4323
    %4355 = vmatprep.subr.bf16.mxu0 %v4322
    %4356 = vmatpush1.bf16.msra.mxu0 %v4321
    %4357 = vmatprep.subr.bf16.mxu0 %v4320
    %4358 = vmatpush1.bf16.msra.mxu0 %v4319
    %4359 = vmatprep.subr.bf16.mxu0 %v4318
    %4360 = vmatpush1.bf16.msra.mxu0 %v4317
    %4361 = vmatprep.subr.bf16.mxu0 %v4316
    %4362 = vmatpush1.bf16.msra.mxu0 %v4315
    %4363 = vmatprep.subr.bf16.mxu0 0
    %4364 = vmatpush2.bf16.msra.mxu0 0
    %4365 = vmatprep.subr.bf16.mxu0 0
    %4366 = vmatpush2.bf16.msra.mxu0 0
    %4367 = vmatprep.subr.bf16.mxu0 0
    %4368 = vmatpush2.bf16.msra.mxu0 0
    %4369 = vmatprep.subr.bf16.mxu0 0
    %4370 = vmatpush2.bf16.msra.mxu0 0
    %4371 = vmatprep.subr.bf16.mxu0 0
    %4372 = vmatpush2.bf16.msra.mxu0 0
    %4373 = vmatprep.subr.bf16.mxu0 0
    %4374 = vmatpush2.bf16.msra.mxu0 0
    %4375 = vmatprep.subr.bf16.mxu0 0
    %4376 = vmatpush2.bf16.msra.mxu0 0
    %4377 = vmatprep.subr.bf16.mxu0 0
    %4378 = vmatpush2.bf16.msra.mxu0 0
    %4379 = vmatprep.mubr.bf16.mxu0 0
    %4380 = vmatmul.mubr.bf16.gmra.mxu0 %v4263
    %v4381 = vpop.f32.mrf.mxu0
    %v4382 = vadd.f32 0.0, %v4381
    %v4383 = vpop.f32.mrf.mxu0
    %v4384 = vadd.f32 0.0, %v4383
    %v4385 = vpop.f32.mrf.mxu0
    %v4386 = vadd.f32 0.0, %v4385
    %v4387 = vpop.f32.mrf.mxu0
    %v4388 = vadd.f32 0.0, %v4387
    %4389 = vmatprep.mubr.bf16.mxu0 0
    %4390 = vmatmul.mubr.bf16.gmra.mxu0 %v4264
    %v4391 = vpop.f32.mrf.mxu0
    %v4392 = vadd.f32 0.0, %v4391
    %v4393 = vpop.f32.mrf.mxu0
    %v4394 = vadd.f32 0.0, %v4393
    %v4395 = vpop.f32.mrf.mxu0
    %v4396 = vadd.f32 0.0, %v4395
    %v4397 = vpop.f32.mrf.mxu0
    %v4398 = vadd.f32 0.0, %v4397
    %4399 = vmatprep.mubr.bf16.mxu0 0
    %4400 = vmatmul.mubr.bf16.gmra.mxu0 %v4265
    %v4401 = vpop.f32.mrf.mxu0
    %v4402 = vadd.f32 0.0, %v4401
    %v4403 = vpop.f32.mrf.mxu0
    %v4404 = vadd.f32 0.0, %v4403
    %v4405 = vpop.f32.mrf.mxu0
    %v4406 = vadd.f32 0.0, %v4405
    %v4407 = vpop.f32.mrf.mxu0
    %v4408 = vadd.f32 0.0, %v4407
    %4409 = vmatprep.mubr.bf16.mxu0 0
    %4410 = vmatmul.mubr.bf16.gmra.mxu0 %v4266
    %v4411 = vpop.f32.mrf.mxu0
    %v4412 = vadd.f32 0.0, %v4411
    %v4413 = vpop.f32.mrf.mxu0
    %v4414 = vadd.f32 0.0, %v4413
    %v4415 = vpop.f32.mrf.mxu0
    %v4416 = vadd.f32 0.0, %v4415
    %v4417 = vpop.f32.mrf.mxu0
    %v4418 = vadd.f32 0.0, %v4417
    %4419 = vdwg.mxu0
    %v4436 = vunpack.c.l.b16 %v2560
    %v4437 = vunpack.c.h.b16 %v2560
    %v4438 = vunpack.c.l.b16 %v2561
    %v4439 = vunpack.c.h.b16 %v2561
    %v4440 = vunpack.c.l.b16 %v2562
    %v4441 = vunpack.c.h.b16 %v2562
    %v4442 = vunpack.c.l.b16 %v2563
    %v4443 = vunpack.c.h.b16 %v2563
    %v4444 = vunpack.c.l.b16 %v2564
    %v4445 = vunpack.c.h.b16 %v2564
    %v4446 = vunpack.c.l.b16 %v2565
    %v4447 = vunpack.c.h.b16 %v2565
    %v4448 = vunpack.c.l.b16 %v2566
    %v4449 = vunpack.c.h.b16 %v2566
    %v4450 = vunpack.c.l.b16 %v2567
    %v4451 = vunpack.c.h.b16 %v2567
    %v4452 = vunpack.c.l.b16 %v2568
    %v4453 = vunpack.c.h.b16 %v2568
    %v4454 = vunpack.c.l.b16 %v2569
    %v4455 = vunpack.c.h.b16 %v2569
    %v4456 = vunpack.c.l.b16 %v2570
    %v4457 = vunpack.c.h.b16 %v2570
    %v4458 = vunpack.c.l.b16 %v2571
    %v4459 = vunpack.c.h.b16 %v2571
    %v4460 = vunpack.c.l.b16 %v2572
    %v4461 = vunpack.c.h.b16 %v2572
    %v4462 = vunpack.c.l.b16 %v2573
    %v4463 = vunpack.c.h.b16 %v2573
    %v4464 = vunpack.c.l.b16 %v2574
    %v4465 = vunpack.c.h.b16 %v2574
    %v4466 = vunpack.c.l.b16 %v2575
    %v4467 = vunpack.c.h.b16 %v2575
    %v4468 = vpack.c.b16 %v4438, %v4436
    %v4469 = vpack.c.b16 %v4439, %v4437
    %v4470 = vpack.c.b16 %v4442, %v4440
    %v4471 = vpack.c.b16 %v4443, %v4441
    %v4472 = vpack.c.b16 %v4446, %v4444
    %v4473 = vpack.c.b16 %v4447, %v4445
    %v4474 = vpack.c.b16 %v4450, %v4448
    %v4475 = vpack.c.b16 %v4451, %v4449
    %v4476 = vpack.c.b16 %v4454, %v4452
    %v4477 = vpack.c.b16 %v4455, %v4453
    %v4478 = vpack.c.b16 %v4458, %v4456
    %v4479 = vpack.c.b16 %v4459, %v4457
    %v4480 = vpack.c.b16 %v4462, %v4460
    %v4481 = vpack.c.b16 %v4463, %v4461
    %v4482 = vpack.c.b16 %v4466, %v4464
    %v4483 = vpack.c.b16 %v4467, %v4465
    %4500 = vmatprep.subr.bf16.mxu0 %v4483
    %4501 = vmatpush1.bf16.msra.mxu0 %v4482
    %4502 = vmatprep.subr.bf16.mxu0 %v4481
    %4503 = vmatpush1.bf16.msra.mxu0 %v4480
    %4504 = vmatprep.subr.bf16.mxu0 %v4479
    %4505 = vmatpush1.bf16.msra.mxu0 %v4478
    %4506 = vmatprep.subr.bf16.mxu0 %v4477
    %4507 = vmatpush1.bf16.msra.mxu0 %v4476
    %4508 = vmatprep.subr.bf16.mxu0 %v4475
    %4509 = vmatpush1.bf16.msra.mxu0 %v4474
    %4510 = vmatprep.subr.bf16.mxu0 %v4473
    %4511 = vmatpush1.bf16.msra.mxu0 %v4472
    %4512 = vmatprep.subr.bf16.mxu0 %v4471
    %4513 = vmatpush1.bf16.msra.mxu0 %v4470
    %4514 = vmatprep.subr.bf16.mxu0 %v4469
    %4515 = vmatpush1.bf16.msra.mxu0 %v4468
    %4516 = vmatprep.subr.bf16.mxu0 0
    %4517 = vmatpush2.bf16.msra.mxu0 0
    %4518 = vmatprep.subr.bf16.mxu0 0
    %4519 = vmatpush2.bf16.msra.mxu0 0
    %4520 = vmatprep.subr.bf16.mxu0 0
    %4521 = vmatpush2.bf16.msra.mxu0 0
    %4522 = vmatprep.subr.bf16.mxu0 0
    %4523 = vmatpush2.bf16.msra.mxu0 0
    %4524 = vmatprep.subr.bf16.mxu0 0
    %4525 = vmatpush2.bf16.msra.mxu0 0
    %4526 = vmatprep.subr.bf16.mxu0 0
    %4527 = vmatpush2.bf16.msra.mxu0 0
    %4528 = vmatprep.subr.bf16.mxu0 0
    %4529 = vmatpush2.bf16.msra.mxu0 0
    %4530 = vmatprep.subr.bf16.mxu0 0
    %4531 = vmatpush2.bf16.msra.mxu0 0
    %4532 = vmatprep.mubr.bf16.mxu0 0
    %4533 = vmatmul.mubr.bf16.gmra.mxu0 %v2628
    %v4534 = vpop.f32.mrf.mxu0
    %v4535 = vadd.f32 %v4382, %v4534
    %v4536 = vpop.f32.mrf.mxu0
    %v4537 = vadd.f32 %v4384, %v4536
    %v4538 = vpop.f32.mrf.mxu0
    %v4539 = vadd.f32 %v4386, %v4538
    %v4540 = vpop.f32.mrf.mxu0
    %v4541 = vadd.f32 %v4388, %v4540
    %4542 = vmatprep.mubr.bf16.mxu0 0
    %4543 = vmatmul.mubr.bf16.gmra.mxu0 %v2629
    %v4544 = vpop.f32.mrf.mxu0
    %v4545 = vadd.f32 %v4392, %v4544
    %v4546 = vpop.f32.mrf.mxu0
    %v4547 = vadd.f32 %v4394, %v4546
    %v4548 = vpop.f32.mrf.mxu0
    %v4549 = vadd.f32 %v4396, %v4548
    %v4550 = vpop.f32.mrf.mxu0
    %v4551 = vadd.f32 %v4398, %v4550
    %4552 = vmatprep.mubr.bf16.mxu0 0
    %4553 = vmatmul.mubr.bf16.gmra.mxu0 %v2630
    %v4554 = vpop.f32.mrf.mxu0
    %v4555 = vadd.f32 %v4402, %v4554
    %v4556 = vpop.f32.mrf.mxu0
    %v4557 = vadd.f32 %v4404, %v4556
    %v4558 = vpop.f32.mrf.mxu0
    %v4559 = vadd.f32 %v4406, %v4558
    %v4560 = vpop.f32.mrf.mxu0
    %v4561 = vadd.f32 %v4408, %v4560
    %4562 = vmatprep.mubr.bf16.mxu0 0
    %4563 = vmatmul.mubr.bf16.gmra.mxu0 %v2631
    %v4564 = vpop.f32.mrf.mxu0
    %v4565 = vadd.f32 %v4412, %v4564
    %v4566 = vpop.f32.mrf.mxu0
    %v4567 = vadd.f32 %v4414, %v4566
    %v4568 = vpop.f32.mrf.mxu0
    %v4569 = vadd.f32 %v4416, %v4568
    %v4570 = vpop.f32.mrf.mxu0
    %v4571 = vadd.f32 %v4418, %v4570
    %4572 = vdwg.mxu0
    %v4573 = vmax.f32 %v4535, 0.0
    %v4574 = vmax.f32 %v4537, 0.0
    %v4575 = vmax.f32 %v4539, 0.0
    %v4576 = vmax.f32 %v4541, 0.0
    %v4577 = vmax.f32 %v4545, 0.0
    %v4578 = vmax.f32 %v4547, 0.0
    %v4579 = vmax.f32 %v4549, 0.0
    %v4580 = vmax.f32 %v4551, 0.0
    %v4581 = vmax.f32 %v4555, 0.0
    %v4582 = vmax.f32 %v4557, 0.0
    %v4583 = vmax.f32 %v4559, 0.0
    %v4584 = vmax.f32 %v4561, 0.0
    %v4585 = vmax.f32 %v4565, 0.0
    %v4586 = vmax.f32 %v4567, 0.0
    %v4587 = vmax.f32 %v4569, 0.0
    %v4588 = vmax.f32 %v4571, 0.0
    %v4589 = vpack.c.bf16 %v4575, %v4573
    %v4590 = vpack.c.bf16 %v4576, %v4574
    %v4591 = vpack.c.bf16 %v4579, %v4577
    %v4592 = vpack.c.bf16 %v4580, %v4578
    %v4593 = vpack.c.bf16 %v4583, %v4581
    %v4594 = vpack.c.bf16 %v4584, %v4582
    %v4595 = vpack.c.bf16 %v4587, %v4585
    %v4596 = vpack.c.bf16 %v4588, %v4586
    %v4629 = vunpack.c.l.b16 %v2594
    %v4630 = vunpack.c.l.b16 %v2595
    %v4631 = vunpack.c.l.b16 %v2596
    %v4632 = vunpack.c.l.b16 %v2597
    %v4633 = vunpack.c.l.b16 %v2598
    %v4634 = vunpack.c.l.b16 %v2599
    %v4635 = vunpack.c.l.b16 %v2600
    %v4636 = vunpack.c.l.b16 %v2601
    %v4637 = vunpack.c.l.b16 %v2602
    %v4638 = vunpack.c.l.b16 %v2603
    %v4639 = vunpack.c.l.b16 %v2604
    %v4640 = vunpack.c.l.b16 %v2605
    %v4641 = vunpack.c.l.b16 %v2606
    %v4642 = vunpack.c.l.b16 %v2607
    %v4643 = vunpack.c.l.b16 %v2608
    %v4644 = vunpack.c.l.b16 %v2609
    %v4645 = vunpack.c.l.b16 %v2610
    %v4646 = vunpack.c.l.b16 %v2611
    %v4647 = vunpack.c.l.b16 %v2612
    %v4648 = vunpack.c.l.b16 %v2613
    %v4649 = vunpack.c.l.b16 %v2614
    %v4650 = vunpack.c.l.b16 %v2615
    %v4651 = vunpack.c.l.b16 %v2616
    %v4652 = vunpack.c.l.b16 %v2617
    %v4653 = vunpack.c.l.b16 %v2618
    %v4654 = vunpack.c.l.b16 %v2619
    %v4655 = vunpack.c.l.b16 %v2620
    %v4656 = vunpack.c.l.b16 %v2621
    %v4657 = vunpack.c.l.b16 %v2622
    %v4658 = vunpack.c.l.b16 %v2623
    %v4659 = vunpack.c.l.b16 %v2624
    %v4660 = vunpack.c.l.b16 %v2625
    %v4661 = vpack.c.b16 %v4630, %v4629
    %v4662 = vpack.c.b16 %v4632, %v4631
    %v4663 = vpack.c.b16 %v4634, %v4633
    %v4664 = vpack.c.b16 %v4636, %v4635
    %v4665 = vpack.c.b16 %v4638, %v4637
    %v4666 = vpack.c.b16 %v4640, %v4639
    %v4667 = vpack.c.b16 %v4642, %v4641
    %v4668 = vpack.c.b16 %v4644, %v4643
    %v4669 = vpack.c.b16 %v4646, %v4645
    %v4670 = vpack.c.b16 %v4648, %v4647
    %v4671 = vpack.c.b16 %v4650, %v4649
    %v4672 = vpack.c.b16 %v4652, %v4651
    %v4673 = vpack.c.b16 %v4654, %v4653
    %v4674 = vpack.c.b16 %v4656, %v4655
    %v4675 = vpack.c.b16 %v4658, %v4657
    %v4676 = vpack.c.b16 %v4660, %v4659
    %4693 = vmatprep.subr.bf16.mxu0 0
    %4694 = vmatpush1.bf16.msra.mxu0 %v4668
    %4695 = vmatprep.subr.bf16.mxu0 0
    %4696 = vmatpush1.bf16.msra.mxu0 %v4667
    %4697 = vmatprep.subr.bf16.mxu0 0
    %4698 = vmatpush1.bf16.msra.mxu0 %v4666
    %4699 = vmatprep.subr.bf16.mxu0 0
    %4700 = vmatpush1.bf16.msra.mxu0 %v4665
    %4701 = vmatprep.subr.bf16.mxu0 0
    %4702 = vmatpush1.bf16.msra.mxu0 %v4664
    %4703 = vmatprep.subr.bf16.mxu0 0
    %4704 = vmatpush1.bf16.msra.mxu0 %v4663
    %4705 = vmatprep.subr.bf16.mxu0 0
    %4706 = vmatpush1.bf16.msra.mxu0 %v4662
    %4707 = vmatprep.subr.bf16.mxu0 0
    %4708 = vmatpush1.bf16.msra.mxu0 %v4661
    %4709 = vmatprep.subr.bf16.mxu0 0
    %4710 = vmatpush2.bf16.msra.mxu0 %v4676
    %4711 = vmatprep.subr.bf16.mxu0 0
    %4712 = vmatpush2.bf16.msra.mxu0 %v4675
    %4713 = vmatprep.subr.bf16.mxu0 0
    %4714 = vmatpush2.bf16.msra.mxu0 %v4674
    %4715 = vmatprep.subr.bf16.mxu0 0
    %4716 = vmatpush2.bf16.msra.mxu0 %v4673
    %4717 = vmatprep.subr.bf16.mxu0 0
    %4718 = vmatpush2.bf16.msra.mxu0 %v4672
    %4719 = vmatprep.subr.bf16.mxu0 0
    %4720 = vmatpush2.bf16.msra.mxu0 %v4671
    %4721 = vmatprep.subr.bf16.mxu0 0
    %4722 = vmatpush2.bf16.msra.mxu0 %v4670
    %4723 = vmatprep.subr.bf16.mxu0 0
    %4724 = vmatpush2.bf16.msra.mxu0 %v4669
    %4725 = vmatprep.mubr.bf16.mxu0 %v4590
    %4726 = vmatmul.mubr.bf16.gmra.mxu0 %v4589
    %v4727 = vpop.f32.mrf.mxu0
    %v4728 = vadd.f32 0.0, %v4727
    %v4729 = vpop.f32.mrf.mxu0
    %v4730 = vpop.f32.mrf.mxu0
    %v4731 = vadd.f32 0.0, %v4730
    %v4732 = vpop.f32.mrf.mxu0
    %4733 = vmatprep.mubr.bf16.mxu0 %v4592
    %4734 = vmatmul.mubr.bf16.gmra.mxu0 %v4591
    %v4735 = vpop.f32.mrf.mxu0
    %v4736 = vadd.f32 0.0, %v4735
    %v4737 = vpop.f32.mrf.mxu0
    %v4738 = vpop.f32.mrf.mxu0
    %v4739 = vadd.f32 0.0, %v4738
    %v4740 = vpop.f32.mrf.mxu0
    %4741 = vmatprep.mubr.bf16.mxu0 %v4594
    %4742 = vmatmul.mubr.bf16.gmra.mxu0 %v4593
    %v4743 = vpop.f32.mrf.mxu0
    %v4744 = vadd.f32 0.0, %v4743
    %v4745 = vpop.f32.mrf.mxu0
    %v4746 = vpop.f32.mrf.mxu0
    %v4747 = vadd.f32 0.0, %v4746
    %v4748 = vpop.f32.mrf.mxu0
    %4749 = vmatprep.mubr.bf16.mxu0 %v4596
    %4750 = vmatmul.mubr.bf16.gmra.mxu0 %v4595
    %v4751 = vpop.f32.mrf.mxu0
    %v4752 = vadd.f32 0.0, %v4751
    %v4753 = vpop.f32.mrf.mxu0
    %v4754 = vpop.f32.mrf.mxu0
    %v4755 = vadd.f32 0.0, %v4754
    %v4756 = vpop.f32.mrf.mxu0
    %4757 = vdwg.mxu0
    %4758 = vadd.xlane.f32.xlu0 %v4728
    %v4759 = vpop.xlane.xlu0 %4758
    %4760 = vadd.xlane.f32.xlu0 %v4731
    %v4761 = vpop.xlane.xlu0 %4760
    %4762 = vadd.xlane.f32.xlu0 %v4736
    %v4763 = vpop.xlane.xlu0 %4762
    %4764 = vadd.xlane.f32.xlu0 %v4739
    %v4765 = vpop.xlane.xlu0 %4764
    %4766 = vadd.xlane.f32.xlu0 %v4744
    %v4767 = vpop.xlane.xlu0 %4766
    %4768 = vadd.xlane.f32.xlu0 %v4747
    %v4769 = vpop.xlane.xlu0 %4768
    %4770 = vadd.xlane.f32.xlu0 %v4752
    %v4771 = vpop.xlane.xlu0 %4770
    %4772 = vadd.xlane.f32.xlu0 %v4755
    %v4773 = vpop.xlane.xlu0 %4772
    %v4774 = vmul.f32 %v4759, %v1797
    %v4775 = vmul.f32 %v4761, %v1797
    %v4776 = vmul.f32 %v4763, %v1797
    %v4777 = vmul.f32 %v4765, %v1797
    %v4778 = vmul.f32 %v4767, %v1797
    %v4779 = vmul.f32 %v4769, %v1797
    %v4780 = vmul.f32 %v4771, %v1797
    %v4781 = vmul.f32 %v4773, %v1797
    %v4782 = vsub.f32 %v4728, %v4774
    %v4783 = vsub.f32 %v4731, %v4775
    %v4784 = vsub.f32 %v4736, %v4776
    %v4785 = vsub.f32 %v4739, %v4777
    %v4786 = vsub.f32 %v4744, %v4778
    %v4787 = vsub.f32 %v4747, %v4779
    %v4788 = vsub.f32 %v4752, %v4780
    %v4789 = vsub.f32 %v4755, %v4781
    %v4790 = vmul.f32 %v4782, %v4782
    %v4791 = vmul.f32 %v4783, %v4783
    %v4792 = vmul.f32 %v4784, %v4784
    %v4793 = vmul.f32 %v4785, %v4785
    %v4794 = vmul.f32 %v4786, %v4786
    %v4795 = vmul.f32 %v4787, %v4787
    %v4796 = vmul.f32 %v4788, %v4788
    %v4797 = vmul.f32 %v4789, %v4789
    %4798 = vadd.xlane.f32.xlu0 %v4790
    %v4799 = vpop.xlane.xlu0 %4798
    %4800 = vadd.xlane.f32.xlu0 %v4791
    %v4801 = vpop.xlane.xlu0 %4800
    %4802 = vadd.xlane.f32.xlu0 %v4792
    %v4803 = vpop.xlane.xlu0 %4802
    %4804 = vadd.xlane.f32.xlu0 %v4793
    %v4805 = vpop.xlane.xlu0 %4804
    %4806 = vadd.xlane.f32.xlu0 %v4794
    %v4807 = vpop.xlane.xlu0 %4806
    %4808 = vadd.xlane.f32.xlu0 %v4795
    %v4809 = vpop.xlane.xlu0 %4808
    %4810 = vadd.xlane.f32.xlu0 %v4796
    %v4811 = vpop.xlane.xlu0 %4810
    %4812 = vadd.xlane.f32.xlu0 %v4797
    %v4813 = vpop.xlane.xlu0 %4812
    %v4814 = vmul.f32 %v4799, %v1797
    %v4815 = vmul.f32 %v4801, %v1797
    %v4816 = vmul.f32 %v4803, %v1797
    %v4817 = vmul.f32 %v4805, %v1797
    %v4818 = vmul.f32 %v4807, %v1797
    %v4819 = vmul.f32 %v4809, %v1797
    %v4820 = vmul.f32 %v4811, %v1797
    %v4821 = vmul.f32 %v4813, %v1797
    %v4822 = vadd.f32 %v4814, 1e-05
    %v4823 = vadd.f32 %v4815, 1e-05
    %v4824 = vadd.f32 %v4816, 1e-05
    %v4825 = vadd.f32 %v4817, 1e-05
    %v4826 = vadd.f32 %v4818, 1e-05
    %v4827 = vadd.f32 %v4819, 1e-05
    %v4828 = vadd.f32 %v4820, 1e-05
    %v4829 = vadd.f32 %v4821, 1e-05
    %v4830 = vrsqrt.pop %v4822
    %v4831 = vrsqrt.pop %v4823
    %v4832 = vrsqrt.pop %v4824
    %v4833 = vrsqrt.pop %v4825
    %v4834 = vrsqrt.pop %v4826
    %v4835 = vrsqrt.pop %v4827
    %v4836 = vrsqrt.pop %v4828
    %v4837 = vrsqrt.pop %v4829
    %v4838 = vmul.f32 %v4782, %v4830
    %v4839 = vmul.f32 %v4783, %v4831
    %v4840 = vmul.f32 %v4784, %v4832
    %v4841 = vmul.f32 %v4785, %v4833
    %v4842 = vmul.f32 %v4786, %v4834
    %v4843 = vmul.f32 %v4787, %v4835
    %v4844 = vmul.f32 %v4788, %v4836
    %v4845 = vmul.f32 %v4789, %v4837
    %v4846 = vlaneseq
    %v4847 = vshrl.u32 %v4846, 7
    %v4848 = vsub.s32 2, %v4847
    %v4849 = vrot.slane %v2627, %v4848
    %v4850 = vmul.f32 %v4838, %v4849
    %v4851 = vmul.f32 %v4839, %v4849
    %v4852 = vmul.f32 %v4840, %v4849
    %v4853 = vmul.f32 %v4841, %v4849
    %v4854 = vmul.f32 %v4842, %v4849
    %v4855 = vmul.f32 %v4843, %v4849
    %v4856 = vmul.f32 %v4844, %v4849
    %v4857 = vmul.f32 %v4845, %v4849
    %v4858 = vlaneseq
    %v4859 = vshrl.u32 %v4858, 7
    %v4860 = vsub.s32 3, %v4859
    %v4861 = vrot.slane %v2627, %v4860
    %v4862 = vadd.f32 %v4850, %v4861
    %v4863 = vadd.f32 %v4851, %v4861
    %v4864 = vadd.f32 %v4852, %v4861
    %v4865 = vadd.f32 %v4853, %v4861
    %v4866 = vadd.f32 %v4854, %v4861
    %v4867 = vadd.f32 %v4855, %v4861
    %v4868 = vadd.f32 %v4856, %v4861
    %v4869 = vadd.f32 %v4857, %v4861
    %v4870 = vadd.f32 %v2501, %v4862
    %v4871 = vadd.f32 %v2502, %v4863
    %v4872 = vadd.f32 %v2503, %v4864
    %v4873 = vadd.f32 %v2504, %v4865
    %v4874 = vadd.f32 %v2505, %v4866
    %v4875 = vadd.f32 %v2506, %v4867
    %v4876 = vadd.f32 %v2507, %v4868
    %v4877 = vadd.f32 %v2508, %v4869
    %s4878 = scalar_lea.vmem [#allocation2], 384
    %v4879 = vld [vmem:[%s4878] sm:$0xff]
    %v4880 = vld [vmem:[%s4878 + $0x8] sm:$0xf]
    %v4881 = vld [vmem:[%s4878 + $0xc] sm:$0xff]
    %v4882 = vld [vmem:[%s4878 + $0x14] sm:$0xf]
    %v4883 = vld [vmem:[%s4878 + $0x18] sm:$0xff]
    %v4884 = vld [vmem:[%s4878 + $0x20] sm:$0xf]
    %v4885 = vld [vmem:[%s4878 + $0x24] sm:$0xff]
    %v4886 = vld [vmem:[%s4878 + $0x2c] sm:$0xf]
    %v4887 = vld [vmem:[%s4878 + $0x30] sm:$0xff]
    %v4888 = vld [vmem:[%s4878 + $0x38] sm:$0xf]
    %v4889 = vld [vmem:[%s4878 + $0x3c] sm:$0xff]
    %v4890 = vld [vmem:[%s4878 + $0x44] sm:$0xf]
    %v4891 = vld [vmem:[%s4878 + $0x48] sm:$0xff]
    %v4892 = vld [vmem:[%s4878 + $0x50] sm:$0xf]
    %v4893 = vld [vmem:[%s4878 + $0x54] sm:$0xff]
    %v4894 = vld [vmem:[%s4878 + $0x5c] sm:$0xf]
    %v4895 = vld [vmem:[%s4878 + $0x60] sm:$0xff]
    %v4896 = vld [vmem:[%s4878 + $0x68] sm:$0xf]
    %v4897 = vld [vmem:[%s4878 + $0x6c] sm:$0xff]
    %v4898 = vld [vmem:[%s4878 + $0x74] sm:$0xf]
    %v4899 = vld [vmem:[%s4878 + $0x78] sm:$0xff]
    %v4900 = vld [vmem:[%s4878 + $0x80] sm:$0xf]
    %v4901 = vld [vmem:[%s4878 + $0x84] sm:$0xff]
    %v4902 = vld [vmem:[%s4878 + $0x8c] sm:$0xf]
    %v4903 = vld [vmem:[%s4878 + $0x90] sm:$0xff]
    %v4904 = vld [vmem:[%s4878 + $0x98] sm:$0xf]
    %v4905 = vld [vmem:[%s4878 + $0x9c] sm:$0xff]
    %v4906 = vld [vmem:[%s4878 + $0xa4] sm:$0xf]
    %v4907 = vld [vmem:[%s4878 + $0xa8] sm:$0xff]
    %v4908 = vld [vmem:[%s4878 + $0xb0] sm:$0xf]
    %v4909 = vld [vmem:[%s4878 + $0xb4] sm:$0xff]
    %v4910 = vld [vmem:[%s4878 + $0xbc] sm:$0xf]
    %s4911 = scalar_lea.vmem [#allocation4], 128
    %v4912 = vld [vmem:[%s4911] sm:$0xf]
    %v4913 = vld [vmem:[%s4911 + $0x4] sm:$0xf]
    %v4914 = vld [vmem:[%s4911 + $0x8] sm:$0xf]
    %v4915 = vld [vmem:[%s4911 + $0xc] sm:$0xf]
    %v4916 = vld [vmem:[%s4911 + $0x10] sm:$0xf]
    %v4917 = vld [vmem:[%s4911 + $0x14] sm:$0xf]
    %v4918 = vld [vmem:[%s4911 + $0x18] sm:$0xf]
    %v4919 = vld [vmem:[%s4911 + $0x1c] sm:$0xf]
    %v4920 = vld [vmem:[%s4911 + $0x20] sm:$0xf]
    %v4921 = vld [vmem:[%s4911 + $0x24] sm:$0xf]
    %v4922 = vld [vmem:[%s4911 + $0x28] sm:$0xf]
    %v4923 = vld [vmem:[%s4911 + $0x2c] sm:$0xf]
    %v4924 = vld [vmem:[%s4911 + $0x30] sm:$0xf]
    %v4925 = vld [vmem:[%s4911 + $0x34] sm:$0xf]
    %v4926 = vld [vmem:[%s4911 + $0x38] sm:$0xf]
    %v4927 = vld [vmem:[%s4911 + $0x3c] sm:$0xf]
    %s4928 = scalar_lea.vmem [#allocation6], 256
    %v4929 = vld [vmem:[%s4928] sm:$0xff]
    %v4930 = vld [vmem:[%s4928 + $0x8] sm:$0xff]
    %v4931 = vld [vmem:[%s4928 + $0x10] sm:$0xff]
    %v4932 = vld [vmem:[%s4928 + $0x18] sm:$0xff]
    %v4933 = vld [vmem:[%s4928 + $0x20] sm:$0xff]
    %v4934 = vld [vmem:[%s4928 + $0x28] sm:$0xff]
    %v4935 = vld [vmem:[%s4928 + $0x30] sm:$0xff]
    %v4936 = vld [vmem:[%s4928 + $0x38] sm:$0xff]
    %v4937 = vld [vmem:[%s4928 + $0x40] sm:$0xff]
    %v4938 = vld [vmem:[%s4928 + $0x48] sm:$0xff]
    %v4939 = vld [vmem:[%s4928 + $0x50] sm:$0xff]
    %v4940 = vld [vmem:[%s4928 + $0x58] sm:$0xff]
    %v4941 = vld [vmem:[%s4928 + $0x60] sm:$0xff]
    %v4942 = vld [vmem:[%s4928 + $0x68] sm:$0xff]
    %v4943 = vld [vmem:[%s4928 + $0x70] sm:$0xff]
    %v4944 = vld [vmem:[%s4928 + $0x78] sm:$0xff]
    %s4945 = scalar_lea.vmem [#allocation7], 256
    %v4946 = vld [vmem:[%s4945] sm:$0xff]
    %v4947 = vld [vmem:[%s4945 + $0x8] sm:$0xff]
    %v4948 = vld [vmem:[%s4945 + $0x10] sm:$0xff]
    %v4949 = vld [vmem:[%s4945 + $0x18] sm:$0xff]
    %v4950 = vld [vmem:[%s4945 + $0x20] sm:$0xff]
    %v4951 = vld [vmem:[%s4945 + $0x28] sm:$0xff]
    %v4952 = vld [vmem:[%s4945 + $0x30] sm:$0xff]
    %v4953 = vld [vmem:[%s4945 + $0x38] sm:$0xff]
    %v4954 = vld [vmem:[%s4945 + $0x40] sm:$0xff]
    %v4955 = vld [vmem:[%s4945 + $0x48] sm:$0xff]
    %v4956 = vld [vmem:[%s4945 + $0x50] sm:$0xff]
    %v4957 = vld [vmem:[%s4945 + $0x58] sm:$0xff]
    %v4958 = vld [vmem:[%s4945 + $0x60] sm:$0xff]
    %v4959 = vld [vmem:[%s4945 + $0x68] sm:$0xff]
    %v4960 = vld [vmem:[%s4945 + $0x70] sm:$0xff]
    %v4961 = vld [vmem:[%s4945 + $0x78] sm:$0xff]
    %s4962 = scalar_lea.vmem [#allocation9], 256
    %v4963 = vld [vmem:[%s4962] sm:$0xf]
    %v4964 = vld [vmem:[%s4962 + $0x4] sm:$0xf]
    %v4965 = vld [vmem:[%s4962 + $0x8] sm:$0xf]
    %v4966 = vld [vmem:[%s4962 + $0xc] sm:$0xf]
    %v4967 = vld [vmem:[%s4962 + $0x10] sm:$0xf]
    %v4968 = vld [vmem:[%s4962 + $0x14] sm:$0xf]
    %v4969 = vld [vmem:[%s4962 + $0x18] sm:$0xf]
    %v4970 = vld [vmem:[%s4962 + $0x1c] sm:$0xf]
    %v4971 = vld [vmem:[%s4962 + $0x20] sm:$0xf]
    %v4972 = vld [vmem:[%s4962 + $0x24] sm:$0xf]
    %v4973 = vld [vmem:[%s4962 + $0x28] sm:$0xf]
    %v4974 = vld [vmem:[%s4962 + $0x2c] sm:$0xf]
    %v4975 = vld [vmem:[%s4962 + $0x30] sm:$0xf]
    %v4976 = vld [vmem:[%s4962 + $0x34] sm:$0xf]
    %v4977 = vld [vmem:[%s4962 + $0x38] sm:$0xf]
    %v4978 = vld [vmem:[%s4962 + $0x3c] sm:$0xf]
    %v4979 = vld [vmem:[%s4962 + $0x40] sm:$0xf]
    %v4980 = vld [vmem:[%s4962 + $0x44] sm:$0xf]
    %v4981 = vld [vmem:[%s4962 + $0x48] sm:$0xf]
    %v4982 = vld [vmem:[%s4962 + $0x4c] sm:$0xf]
    %v4983 = vld [vmem:[%s4962 + $0x50] sm:$0xf]
    %v4984 = vld [vmem:[%s4962 + $0x54] sm:$0xf]
    %v4985 = vld [vmem:[%s4962 + $0x58] sm:$0xf]
    %v4986 = vld [vmem:[%s4962 + $0x5c] sm:$0xf]
    %v4987 = vld [vmem:[%s4962 + $0x60] sm:$0xf]
    %v4988 = vld [vmem:[%s4962 + $0x64] sm:$0xf]
    %v4989 = vld [vmem:[%s4962 + $0x68] sm:$0xf]
    %v4990 = vld [vmem:[%s4962 + $0x6c] sm:$0xf]
    %v4991 = vld [vmem:[%s4962 + $0x70] sm:$0xf]
    %v4992 = vld [vmem:[%s4962 + $0x74] sm:$0xf]
    %v4993 = vld [vmem:[%s4962 + $0x78] sm:$0xf]
    %v4994 = vld [vmem:[%s4962 + $0x7c] sm:$0xf]
    %s4995 = scalar_lea.vmem [#allocation10], 8
    %v4996 = vld [vmem:[%s4995] sm:$0xf]
    %v4997 = vpack.c.bf16 %v4871, %v4870
    %v4998 = vpack.c.bf16 %v4873, %v4872
    %v4999 = vpack.c.bf16 %v4875, %v4874
    %v5000 = vpack.c.bf16 %v4877, %v4876
    %v5033 = vunpack.c.l.b16 %v4879
    %v5034 = vunpack.c.h.b16 %v4879
    %v5035 = vunpack.c.l.b16 %v4880
    %v5036 = vunpack.c.l.b16 %v4881
    %v5037 = vunpack.c.h.b16 %v4881
    %v5038 = vunpack.c.l.b16 %v4882
    %v5039 = vunpack.c.l.b16 %v4883
    %v5040 = vunpack.c.h.b16 %v4883
    %v5041 = vunpack.c.l.b16 %v4884
    %v5042 = vunpack.c.l.b16 %v4885
    %v5043 = vunpack.c.h.b16 %v4885
    %v5044 = vunpack.c.l.b16 %v4886
    %v5045 = vunpack.c.l.b16 %v4887
    %v5046 = vunpack.c.h.b16 %v4887
    %v5047 = vunpack.c.l.b16 %v4888
    %v5048 = vunpack.c.l.b16 %v4889
    %v5049 = vunpack.c.h.b16 %v4889
    %v5050 = vunpack.c.l.b16 %v4890
    %v5051 = vunpack.c.l.b16 %v4891
    %v5052 = vunpack.c.h.b16 %v4891
    %v5053 = vunpack.c.l.b16 %v4892
    %v5054 = vunpack.c.l.b16 %v4893
    %v5055 = vunpack.c.h.b16 %v4893
    %v5056 = vunpack.c.l.b16 %v4894
    %v5057 = vunpack.c.l.b16 %v4895
    %v5058 = vunpack.c.h.b16 %v4895
    %v5059 = vunpack.c.l.b16 %v4896
    %v5060 = vunpack.c.l.b16 %v4897
    %v5061 = vunpack.c.h.b16 %v4897
    %v5062 = vunpack.c.l.b16 %v4898
    %v5063 = vunpack.c.l.b16 %v4899
    %v5064 = vunpack.c.h.b16 %v4899
    %v5065 = vunpack.c.l.b16 %v4900
    %v5066 = vunpack.c.l.b16 %v4901
    %v5067 = vunpack.c.h.b16 %v4901
    %v5068 = vunpack.c.l.b16 %v4902
    %v5069 = vunpack.c.l.b16 %v4903
    %v5070 = vunpack.c.h.b16 %v4903
    %v5071 = vunpack.c.l.b16 %v4904
    %v5072 = vunpack.c.l.b16 %v4905
    %v5073 = vunpack.c.h.b16 %v4905
    %v5074 = vunpack.c.l.b16 %v4906
    %v5075 = vunpack.c.l.b16 %v4907
    %v5076 = vunpack.c.h.b16 %v4907
    %v5077 = vunpack.c.l.b16 %v4908
    %v5078 = vunpack.c.l.b16 %v4909
    %v5079 = vunpack.c.h.b16 %v4909
    %v5080 = vunpack.c.l.b16 %v4910
    %v5081 = vpack.c.b16 %v5036, %v5033
    %v5082 = vpack.c.b16 %v5037, %v5034
    %v5083 = vpack.c.b16 %v5038, %v5035
    %v5084 = vpack.c.b16 %v5042, %v5039
    %v5085 = vpack.c.b16 %v5043, %v5040
    %v5086 = vpack.c.b16 %v5044, %v5041
    %v5087 = vpack.c.b16 %v5048, %v5045
    %v5088 = vpack.c.b16 %v5049, %v5046
    %v5089 = vpack.c.b16 %v5050, %v5047
    %v5090 = vpack.c.b16 %v5054, %v5051
    %v5091 = vpack.c.b16 %v5055, %v5052
    %v5092 = vpack.c.b16 %v5056, %v5053
    %v5093 = vpack.c.b16 %v5060, %v5057
    %v5094 = vpack.c.b16 %v5061, %v5058
    %v5095 = vpack.c.b16 %v5062, %v5059
    %v5096 = vpack.c.b16 %v5066, %v5063
    %v5097 = vpack.c.b16 %v5067, %v5064
    %v5098 = vpack.c.b16 %v5068, %v5065
    %v5099 = vpack.c.b16 %v5072, %v5069
    %v5100 = vpack.c.b16 %v5073, %v5070
    %v5101 = vpack.c.b16 %v5074, %v5071
    %v5102 = vpack.c.b16 %v5078, %v5075
    %v5103 = vpack.c.b16 %v5079, %v5076
    %v5104 = vpack.c.b16 %v5080, %v5077
    %5129 = vmatprep.subr.bf16.mxu0 %v5103
    %5130 = vmatpush1.bf16.msra.mxu0 %v5102
    %5131 = vmatprep.subr.bf16.mxu0 %v5100
    %5132 = vmatpush1.bf16.msra.mxu0 %v5099
    %5133 = vmatprep.subr.bf16.mxu0 %v5097
    %5134 = vmatpush1.bf16.msra.mxu0 %v5096
    %5135 = vmatprep.subr.bf16.mxu0 %v5094
    %5136 = vmatpush1.bf16.msra.mxu0 %v5093
    %5137 = vmatprep.subr.bf16.mxu0 %v5091
    %5138 = vmatpush1.bf16.msra.mxu0 %v5090
    %5139 = vmatprep.subr.bf16.mxu0 %v5088
    %5140 = vmatpush1.bf16.msra.mxu0 %v5087
    %5141 = vmatprep.subr.bf16.mxu0 %v5085
    %5142 = vmatpush1.bf16.msra.mxu0 %v5084
    %5143 = vmatprep.subr.bf16.mxu0 %v5082
    %5144 = vmatpush1.bf16.msra.mxu0 %v5081
    %5145 = vmatprep.subr.bf16.mxu0 0
    %5146 = vmatpush2.bf16.msra.mxu0 0
    %5147 = vmatprep.subr.bf16.mxu0 0
    %5148 = vmatpush2.bf16.msra.mxu0 0
    %5149 = vmatprep.subr.bf16.mxu0 0
    %5150 = vmatpush2.bf16.msra.mxu0 0
    %5151 = vmatprep.subr.bf16.mxu0 0
    %5152 = vmatpush2.bf16.msra.mxu0 0
    %5153 = vmatprep.subr.bf16.mxu0 0
    %5154 = vmatpush2.bf16.msra.mxu0 0
    %5155 = vmatprep.subr.bf16.mxu0 0
    %5156 = vmatpush2.bf16.msra.mxu0 0
    %5157 = vmatprep.subr.bf16.mxu0 0
    %5158 = vmatpush2.bf16.msra.mxu0 0
    %5159 = vmatprep.subr.bf16.mxu0 0
    %5160 = vmatpush2.bf16.msra.mxu0 0
    %5161 = vmatprep.mubr.bf16.mxu0 0
    %5162 = vmatmul.mubr.bf16.gmra.mxu0 %v4997
    %v5163 = vpop.f32.mrf.mxu0
    %v5164 = vadd.f32 0.0, %v5163
    %v5165 = vpop.f32.mrf.mxu0
    %v5166 = vadd.f32 0.0, %v5165
    %v5167 = vpop.f32.mrf.mxu0
    %v5168 = vadd.f32 0.0, %v5167
    %v5169 = vpop.f32.mrf.mxu0
    %v5170 = vadd.f32 0.0, %v5169
    %5171 = vmatprep.mubr.bf16.mxu0 0
    %5172 = vmatmul.mubr.bf16.gmra.mxu0 %v4998
    %v5173 = vpop.f32.mrf.mxu0
    %v5174 = vadd.f32 0.0, %v5173
    %v5175 = vpop.f32.mrf.mxu0
    %v5176 = vadd.f32 0.0, %v5175
    %v5177 = vpop.f32.mrf.mxu0
    %v5178 = vadd.f32 0.0, %v5177
    %v5179 = vpop.f32.mrf.mxu0
    %v5180 = vadd.f32 0.0, %v5179
    %5181 = vmatprep.mubr.bf16.mxu0 0
    %5182 = vmatmul.mubr.bf16.gmra.mxu0 %v4999
    %v5183 = vpop.f32.mrf.mxu0
    %v5184 = vadd.f32 0.0, %v5183
    %v5185 = vpop.f32.mrf.mxu0
    %v5186 = vadd.f32 0.0, %v5185
    %v5187 = vpop.f32.mrf.mxu0
    %v5188 = vadd.f32 0.0, %v5187
    %v5189 = vpop.f32.mrf.mxu0
    %v5190 = vadd.f32 0.0, %v5189
    %5191 = vmatprep.mubr.bf16.mxu0 0
    %5192 = vmatmul.mubr.bf16.gmra.mxu0 %v5000
    %v5193 = vpop.f32.mrf.mxu0
    %v5194 = vadd.f32 0.0, %v5193
    %v5195 = vpop.f32.mrf.mxu0
    %v5196 = vadd.f32 0.0, %v5195
    %v5197 = vpop.f32.mrf.mxu0
    %v5198 = vadd.f32 0.0, %v5197
    %v5199 = vpop.f32.mrf.mxu0
    %v5200 = vadd.f32 0.0, %v5199
    %5201 = vdwg.mxu0
    %5202 = vmatprep.subr.bf16.mxu0 0
    %5203 = vmatpush1.bf16.msra.mxu0 %v5104
    %5204 = vmatprep.subr.bf16.mxu0 0
    %5205 = vmatpush1.bf16.msra.mxu0 %v5101
    %5206 = vmatprep.subr.bf16.mxu0 0
    %5207 = vmatpush1.bf16.msra.mxu0 %v5098
    %5208 = vmatprep.subr.bf16.mxu0 0
    %5209 = vmatpush1.bf16.msra.mxu0 %v5095
    %5210 = vmatprep.subr.bf16.mxu0 0
    %5211 = vmatpush1.bf16.msra.mxu0 %v5092
    %5212 = vmatprep.subr.bf16.mxu0 0
    %5213 = vmatpush1.bf16.msra.mxu0 %v5089
    %5214 = vmatprep.subr.bf16.mxu0 0
    %5215 = vmatpush1.bf16.msra.mxu0 %v5086
    %5216 = vmatprep.subr.bf16.mxu0 0
    %5217 = vmatpush1.bf16.msra.mxu0 %v5083
    %5218 = vmatprep.subr.bf16.mxu0 0
    %5219 = vmatpush2.bf16.msra.mxu0 0
    %5220 = vmatprep.subr.bf16.mxu0 0
    %5221 = vmatpush2.bf16.msra.mxu0 0
    %5222 = vmatprep.subr.bf16.mxu0 0
    %5223 = vmatpush2.bf16.msra.mxu0 0
    %5224 = vmatprep.subr.bf16.mxu0 0
    %5225 = vmatpush2.bf16.msra.mxu0 0
    %5226 = vmatprep.subr.bf16.mxu0 0
    %5227 = vmatpush2.bf16.msra.mxu0 0
    %5228 = vmatprep.subr.bf16.mxu0 0
    %5229 = vmatpush2.bf16.msra.mxu0 0
    %5230 = vmatprep.subr.bf16.mxu0 0
    %5231 = vmatpush2.bf16.msra.mxu0 0
    %5232 = vmatprep.subr.bf16.mxu0 0
    %5233 = vmatpush2.bf16.msra.mxu0 0
    %5234 = vmatprep.mubr.bf16.mxu0 0
    %5235 = vmatmul.mubr.bf16.gmra.mxu0 %v4997
    %v5236 = vpop.f32.mrf.mxu0
    %v5237 = vadd.f32 0.0, %v5236
    %v5238 = vpop.f32.mrf.mxu0
    %v5239 = vpop.f32.mrf.mxu0
    %v5240 = vadd.f32 0.0, %v5239
    %v5241 = vpop.f32.mrf.mxu0
    %5242 = vmatprep.mubr.bf16.mxu0 0
    %5243 = vmatmul.mubr.bf16.gmra.mxu0 %v4998
    %v5244 = vpop.f32.mrf.mxu0
    %v5245 = vadd.f32 0.0, %v5244
    %v5246 = vpop.f32.mrf.mxu0
    %v5247 = vpop.f32.mrf.mxu0
    %v5248 = vadd.f32 0.0, %v5247
    %v5249 = vpop.f32.mrf.mxu0
    %5250 = vmatprep.mubr.bf16.mxu0 0
    %5251 = vmatmul.mubr.bf16.gmra.mxu0 %v4999
    %v5252 = vpop.f32.mrf.mxu0
    %v5253 = vadd.f32 0.0, %v5252
    %v5254 = vpop.f32.mrf.mxu0
    %v5255 = vpop.f32.mrf.mxu0
    %v5256 = vadd.f32 0.0, %v5255
    %v5257 = vpop.f32.mrf.mxu0
    %5258 = vmatprep.mubr.bf16.mxu0 0
    %5259 = vmatmul.mubr.bf16.gmra.mxu0 %v5000
    %v5260 = vpop.f32.mrf.mxu0
    %v5261 = vadd.f32 0.0, %v5260
    %v5262 = vpop.f32.mrf.mxu0
    %v5263 = vpop.f32.mrf.mxu0
    %v5264 = vadd.f32 0.0, %v5263
    %v5265 = vpop.f32.mrf.mxu0
    %5266 = vdwg.mxu0
    %vm5267 = vcmp.gt.f32.partialorder %v5164, 0.0
    %vm5268 = vcmp.gt.f32.partialorder %v5168, 0.0
    %vm5269 = vcmp.gt.f32.partialorder %v5174, 0.0
    %vm5270 = vcmp.gt.f32.partialorder %v5178, 0.0
    %vm5271 = vcmp.gt.f32.partialorder %v5184, 0.0
    %vm5272 = vcmp.gt.f32.partialorder %v5188, 0.0
    %vm5273 = vcmp.gt.f32.partialorder %v5194, 0.0
    %vm5274 = vcmp.gt.f32.partialorder %v5198, 0.0
    %v5275 = vadd.f32 %v5164, 1.0
    %v5276 = vadd.f32 %v5168, 1.0
    %v5277 = vadd.f32 %v5174, 1.0
    %v5278 = vadd.f32 %v5178, 1.0
    %v5279 = vadd.f32 %v5184, 1.0
    %v5280 = vadd.f32 %v5188, 1.0
    %v5281 = vadd.f32 %v5194, 1.0
    %v5282 = vadd.f32 %v5198, 1.0
    %v5283 = vmul.f32 %v5164, 1.442695
    %v5284 = vpow.pop %v5283
    %v5285 = vmul.f32 %v5168, 1.442695
    %v5286 = vpow.pop %v5285
    %v5287 = vmul.f32 %v5174, 1.442695
    %v5288 = vpow.pop %v5287
    %v5289 = vmul.f32 %v5178, 1.442695
    %v5290 = vpow.pop %v5289
    %v5291 = vmul.f32 %v5184, 1.442695
    %v5292 = vpow.pop %v5291
    %v5293 = vmul.f32 %v5188, 1.442695
    %v5294 = vpow.pop %v5293
    %v5295 = vmul.f32 %v5194, 1.442695
    %v5296 = vpow.pop %v5295
    %v5297 = vmul.f32 %v5198, 1.442695
    %v5298 = vpow.pop %v5297
    %v5299 = vsel %vm5267, %v5275, %v5284
    %v5300 = vsel %vm5268, %v5276, %v5286
    %v5301 = vsel %vm5269, %v5277, %v5288
    %v5302 = vsel %vm5270, %v5278, %v5290
    %v5303 = vsel %vm5271, %v5279, %v5292
    %v5304 = vsel %vm5272, %v5280, %v5294
    %v5305 = vsel %vm5273, %v5281, %v5296
    %v5306 = vsel %vm5274, %v5282, %v5298
    %vm5307 = vcmp.gt.f32.partialorder %v5166, 0.0
    %vm5308 = vcmp.gt.f32.partialorder %v5170, 0.0
    %vm5309 = vcmp.gt.f32.partialorder %v5176, 0.0
    %vm5310 = vcmp.gt.f32.partialorder %v5180, 0.0
    %vm5311 = vcmp.gt.f32.partialorder %v5186, 0.0
    %vm5312 = vcmp.gt.f32.partialorder %v5190, 0.0
    %vm5313 = vcmp.gt.f32.partialorder %v5196, 0.0
    %vm5314 = vcmp.gt.f32.partialorder %v5200, 0.0
    %v5315 = vadd.f32 %v5166, 1.0
    %v5316 = vadd.f32 %v5170, 1.0
    %v5317 = vadd.f32 %v5176, 1.0
    %v5318 = vadd.f32 %v5180, 1.0
    %v5319 = vadd.f32 %v5186, 1.0
    %v5320 = vadd.f32 %v5190, 1.0
    %v5321 = vadd.f32 %v5196, 1.0
    %v5322 = vadd.f32 %v5200, 1.0
    %v5323 = vmul.f32 %v5166, 1.442695
    %v5324 = vpow.pop %v5323
    %v5325 = vmul.f32 %v5170, 1.442695
    %v5326 = vpow.pop %v5325
    %v5327 = vmul.f32 %v5176, 1.442695
    %v5328 = vpow.pop %v5327
    %v5329 = vmul.f32 %v5180, 1.442695
    %v5330 = vpow.pop %v5329
    %v5331 = vmul.f32 %v5186, 1.442695
    %v5332 = vpow.pop %v5331
    %v5333 = vmul.f32 %v5190, 1.442695
    %v5334 = vpow.pop %v5333
    %v5335 = vmul.f32 %v5196, 1.442695
    %v5336 = vpow.pop %v5335
    %v5337 = vmul.f32 %v5200, 1.442695
    %v5338 = vpow.pop %v5337
    %v5339 = vsel %vm5307, %v5315, %v5324
    %v5340 = vsel %vm5308, %v5316, %v5326
    %v5341 = vsel %vm5309, %v5317, %v5328
    %v5342 = vsel %vm5310, %v5318, %v5330
    %v5343 = vsel %vm5311, %v5319, %v5332
    %v5344 = vsel %vm5312, %v5320, %v5334
    %v5345 = vsel %vm5313, %v5321, %v5336
    %v5346 = vsel %vm5314, %v5322, %v5338
    %v5347 = vmul.f32 %v5237, 0.0625
    %v5348 = vmul.f32 %v5240, 0.0625
    %v5349 = vmul.f32 %v5245, 0.0625
    %v5350 = vmul.f32 %v5248, 0.0625
    %v5351 = vmul.f32 %v5253, 0.0625
    %v5352 = vmul.f32 %v5256, 0.0625
    %v5353 = vmul.f32 %v5261, 0.0625
    %v5354 = vmul.f32 %v5264, 0.0625
    %v5355 = vpack.c.bf16 %v5300, %v5299
    %v5356 = vpack.c.bf16 %v5302, %v5301
    %v5357 = vpack.c.bf16 %v5304, %v5303
    %v5358 = vpack.c.bf16 %v5306, %v5305
    %v5359 = vpack.c.bf16 %v5340, %v5339
    %v5360 = vpack.c.bf16 %v5342, %v5341
    %v5361 = vpack.c.bf16 %v5344, %v5343
    %v5362 = vpack.c.bf16 %v5346, %v5345
    %v5363 = vpack.c.bf16 %v5348, %v5347
    %v5364 = vpack.c.bf16 %v5350, %v5349
    %v5365 = vpack.c.bf16 %v5352, %v5351
    %v5366 = vpack.c.bf16 %v5354, %v5353
    %5367 = vxpose.xlu0.c.b16.start [1/8] %v5359, 128
    %5368 = vxpose.xlu0.c.b16.cont [2/8] 0, 128
    %5369 = vxpose.xlu0.c.b16.cont [3/8] 0, 128
    %5370 = vxpose.xlu0.c.b16.cont [4/8] 0, 128
    %5371 = vxpose.xlu0.c.b16.cont [5/8] 0, 128
    %5372 = vxpose.xlu0.c.b16.cont [6/8] 0, 128
    %5373 = vxpose.xlu0.c.b16.cont [7/8] 0, 128
    %5374 = vxpose.xlu0.c.b16.end [8/8] 0, 128
    %v5375 = vpop.trf.xlu0
    %v5376 = vpop.trf.xlu0
    %v5377 = vpop.trf.xlu0
    %v5378 = vpop.trf.xlu0
    %v5379 = vpop.trf.xlu0
    %v5380 = vpop.trf.xlu0
    %v5381 = vpop.trf.xlu0
    %v5382 = vpop.trf.xlu0
    %v5384 = vsel %vm643, %v5375, 0
    %v5387 = vsel %vm643, %v5376, 0
    %v5390 = vsel %vm643, %v5377, 0
    %v5393 = vsel %vm643, %v5378, 0
    %v5396 = vsel %vm643, %v5379, 0
    %v5399 = vsel %vm643, %v5380, 0
    %v5402 = vsel %vm643, %v5381, 0
    %v5405 = vsel %vm643, %v5382, 0
    %5407 = vmatprep.subr.bf16.mxu0 0
    %5408 = vmatpush1.bf16.msra.mxu0 0
    %5409 = vmatprep.subr.bf16.mxu0 0
    %5410 = vmatpush1.bf16.msra.mxu0 0
    %5411 = vmatprep.subr.bf16.mxu0 0
    %5412 = vmatpush1.bf16.msra.mxu0 0
    %5413 = vmatprep.subr.bf16.mxu0 0
    %5414 = vmatpush1.bf16.msra.mxu0 0
    %5415 = vmatprep.subr.bf16.mxu0 0
    %5416 = vmatpush1.bf16.msra.mxu0 0
    %5417 = vmatprep.subr.bf16.mxu0 0
    %5418 = vmatpush1.bf16.msra.mxu0 0
    %5419 = vmatprep.subr.bf16.mxu0 0
    %5420 = vmatpush1.bf16.msra.mxu0 0
    %5421 = vmatprep.subr.bf16.mxu0 0
    %5422 = vmatpush1.bf16.msra.mxu0 %v5363
    %5423 = vmatprep.subr.bf16.mxu0 0
    %5424 = vmatpush2.bf16.msra.mxu0 0
    %5425 = vmatprep.subr.bf16.mxu0 0
    %5426 = vmatpush2.bf16.msra.mxu0 0
    %5427 = vmatprep.subr.bf16.mxu0 0
    %5428 = vmatpush2.bf16.msra.mxu0 0
    %5429 = vmatprep.subr.bf16.mxu0 0
    %5430 = vmatpush2.bf16.msra.mxu0 0
    %5431 = vmatprep.subr.bf16.mxu0 0
    %5432 = vmatpush2.bf16.msra.mxu0 0
    %5433 = vmatprep.subr.bf16.mxu0 0
    %5434 = vmatpush2.bf16.msra.mxu0 0
    %5435 = vmatprep.subr.bf16.mxu0 0
    %5436 = vmatpush2.bf16.msra.mxu0 0
    %5437 = vmatprep.subr.bf16.mxu0 0
    %5438 = vmatpush2.bf16.msra.mxu0 0
    %5439 = vmatprep.mubr.bf16.mxu0 0
    %5440 = vmatmul.mubr.bf16.gmra.mxu0 %v5384
    %v5441 = vpop.f32.mrf.mxu0
    %v5442 = vadd.f32 0.0, %v5441
    %v5443 = vpop.f32.mrf.mxu0
    %v5444 = vpop.f32.mrf.mxu0
    %v5445 = vadd.f32 0.0, %v5444
    %v5446 = vpop.f32.mrf.mxu0
    %5447 = vmatprep.mubr.bf16.mxu0 0
    %5448 = vmatmul.mubr.bf16.gmra.mxu0 %v5387
    %v5449 = vpop.f32.mrf.mxu0
    %v5450 = vadd.f32 0.0, %v5449
    %v5451 = vpop.f32.mrf.mxu0
    %v5452 = vpop.f32.mrf.mxu0
    %v5453 = vadd.f32 0.0, %v5452
    %v5454 = vpop.f32.mrf.mxu0
    %5455 = vmatprep.mubr.bf16.mxu0 0
    %5456 = vmatmul.mubr.bf16.gmra.mxu0 %v5390
    %v5457 = vpop.f32.mrf.mxu0
    %v5458 = vadd.f32 0.0, %v5457
    %v5459 = vpop.f32.mrf.mxu0
    %v5460 = vpop.f32.mrf.mxu0
    %v5461 = vadd.f32 0.0, %v5460
    %v5462 = vpop.f32.mrf.mxu0
    %5463 = vmatprep.mubr.bf16.mxu0 0
    %5464 = vmatmul.mubr.bf16.gmra.mxu0 %v5393
    %v5465 = vpop.f32.mrf.mxu0
    %v5466 = vadd.f32 0.0, %v5465
    %v5467 = vpop.f32.mrf.mxu0
    %v5468 = vpop.f32.mrf.mxu0
    %v5469 = vadd.f32 0.0, %v5468
    %v5470 = vpop.f32.mrf.mxu0
    %5471 = vmatprep.mubr.bf16.mxu0 0
    %5472 = vmatmul.mubr.bf16.gmra.mxu0 %v5396
    %v5473 = vpop.f32.mrf.mxu0
    %v5474 = vadd.f32 0.0, %v5473
    %v5475 = vpop.f32.mrf.mxu0
    %v5476 = vpop.f32.mrf.mxu0
    %v5477 = vadd.f32 0.0, %v5476
    %v5478 = vpop.f32.mrf.mxu0
    %5479 = vmatprep.mubr.bf16.mxu0 0
    %5480 = vmatmul.mubr.bf16.gmra.mxu0 %v5399
    %v5481 = vpop.f32.mrf.mxu0
    %v5482 = vadd.f32 0.0, %v5481
    %v5483 = vpop.f32.mrf.mxu0
    %v5484 = vpop.f32.mrf.mxu0
    %v5485 = vadd.f32 0.0, %v5484
    %v5486 = vpop.f32.mrf.mxu0
    %5487 = vmatprep.mubr.bf16.mxu0 0
    %5488 = vmatmul.mubr.bf16.gmra.mxu0 %v5402
    %v5489 = vpop.f32.mrf.mxu0
    %v5490 = vadd.f32 0.0, %v5489
    %v5491 = vpop.f32.mrf.mxu0
    %v5492 = vpop.f32.mrf.mxu0
    %v5493 = vadd.f32 0.0, %v5492
    %v5494 = vpop.f32.mrf.mxu0
    %5495 = vmatprep.mubr.bf16.mxu0 0
    %5496 = vmatmul.mubr.bf16.gmra.mxu0 %v5405
    %v5497 = vpop.f32.mrf.mxu0
    %v5498 = vadd.f32 0.0, %v5497
    %v5499 = vpop.f32.mrf.mxu0
    %v5500 = vpop.f32.mrf.mxu0
    %v5501 = vadd.f32 0.0, %v5500
    %v5502 = vpop.f32.mrf.mxu0
    %5503 = vdwg.mxu0
    %v5504 = vmul.f32 %v5442, %v120
    %v5505 = vmul.f32 %v5445, %v121
    %v5506 = vmul.f32 %v5450, %v122
    %v5507 = vmul.f32 %v5453, %v123
    %v5508 = vmul.f32 %v5458, %v124
    %v5509 = vmul.f32 %v5461, %v125
    %v5510 = vmul.f32 %v5466, %v126
    %v5511 = vmul.f32 %v5469, %v127
    %v5512 = vmul.f32 %v5474, %v128
    %v5513 = vmul.f32 %v5477, %v129
    %v5514 = vmul.f32 %v5482, %v130
    %v5515 = vmul.f32 %v5485, %v131
    %v5516 = vmul.f32 %v5490, %v132
    %v5517 = vmul.f32 %v5493, %v133
    %v5518 = vmul.f32 %v5498, %v134
    %v5519 = vmul.f32 %v5501, %v135
    %v5520 = vpack.c.bf16 %v5505, %v5504
    %v5521 = vpack.c.bf16 %v5507, %v5506
    %v5522 = vpack.c.bf16 %v5509, %v5508
    %v5523 = vpack.c.bf16 %v5511, %v5510
    %v5524 = vpack.c.bf16 %v5513, %v5512
    %v5525 = vpack.c.bf16 %v5515, %v5514
    %v5526 = vpack.c.bf16 %v5517, %v5516
    %v5527 = vpack.c.bf16 %v5519, %v5518
    %5528 = vmatprep.subr.bf16.mxu0 0
    %5529 = vmatpush1.bf16.msra.mxu0 %v5527
    %5530 = vmatprep.subr.bf16.mxu0 0
    %5531 = vmatpush1.bf16.msra.mxu0 %v5526
    %5532 = vmatprep.subr.bf16.mxu0 0
    %5533 = vmatpush1.bf16.msra.mxu0 %v5525
    %5534 = vmatprep.subr.bf16.mxu0 0
    %5535 = vmatpush1.bf16.msra.mxu0 %v5524
    %5536 = vmatprep.subr.bf16.mxu0 0
    %5537 = vmatpush1.bf16.msra.mxu0 %v5523
    %5538 = vmatprep.subr.bf16.mxu0 0
    %5539 = vmatpush1.bf16.msra.mxu0 %v5522
    %5540 = vmatprep.subr.bf16.mxu0 0
    %5541 = vmatpush1.bf16.msra.mxu0 %v5521
    %5542 = vmatprep.subr.bf16.mxu0 0
    %5543 = vmatpush1.bf16.msra.mxu0 %v5520
    %5544 = vmatprep.subr.bf16.mxu0 0
    %5545 = vmatpush2.bf16.msra.mxu0 0
    %5546 = vmatprep.subr.bf16.mxu0 0
    %5547 = vmatpush2.bf16.msra.mxu0 0
    %5548 = vmatprep.subr.bf16.mxu0 0
    %5549 = vmatpush2.bf16.msra.mxu0 0
    %5550 = vmatprep.subr.bf16.mxu0 0
    %5551 = vmatpush2.bf16.msra.mxu0 0
    %5552 = vmatprep.subr.bf16.mxu0 0
    %5553 = vmatpush2.bf16.msra.mxu0 0
    %5554 = vmatprep.subr.bf16.mxu0 0
    %5555 = vmatpush2.bf16.msra.mxu0 0
    %5556 = vmatprep.subr.bf16.mxu0 0
    %5557 = vmatpush2.bf16.msra.mxu0 0
    %5558 = vmatprep.subr.bf16.mxu0 0
    %5559 = vmatpush2.bf16.msra.mxu0 0
    %5560 = vmatprep.mubr.bf16.mxu0 0
    %5561 = vmatmul.mubr.bf16.gmra.mxu0 %v5355
    %v5562 = vpop.f32.mrf.mxu0
    %v5563 = vadd.f32 0.0, %v5562
    %v5564 = vpop.f32.mrf.mxu0
    %v5565 = vpop.f32.mrf.mxu0
    %v5566 = vadd.f32 0.0, %v5565
    %v5567 = vpop.f32.mrf.mxu0
    %5568 = vdwg.mxu0
    %v5569 = vadd.f32 %v5339, %v5340
    %v5570 = vrot.slane %v5569, 4
    %v5571 = vadd.f32 %v5569, %v5570
    %v5572 = vrot.slane %v5571, 2
    %v5573 = vadd.f32 %v5571, %v5572
    %v5574 = vrot.slane %v5573, 1
    %v5575 = vadd.f32 %v5573, %v5574
    %v5576 = vmul.f32 %v5299, %v5575
    %v5577 = vmul.f32 %v5300, %v5575
    %v5578 = vpack.c.bf16 %v5577, %v5576
    %5579 = vmatprep.subr.bf16.mxu0 0
    %5580 = vmatpush1.bf16.msra.mxu0 %v143
    %5581 = vmatprep.subr.bf16.mxu0 0
    %5582 = vmatpush1.bf16.msra.mxu0 %v142
    %5583 = vmatprep.subr.bf16.mxu0 0
    %5584 = vmatpush1.bf16.msra.mxu0 %v141
    %5585 = vmatprep.subr.bf16.mxu0 0
    %5586 = vmatpush1.bf16.msra.mxu0 %v140
    %5587 = vmatprep.subr.bf16.mxu0 0
    %5588 = vmatpush1.bf16.msra.mxu0 %v139
    %5589 = vmatprep.subr.bf16.mxu0 0
    %5590 = vmatpush1.bf16.msra.mxu0 %v138
    %5591 = vmatprep.subr.bf16.mxu0 0
    %5592 = vmatpush1.bf16.msra.mxu0 %v137
    %5593 = vmatprep.subr.bf16.mxu0 0
    %5594 = vmatpush1.bf16.msra.mxu0 %v136
    %5595 = vmatprep.subr.bf16.mxu0 0
    %5596 = vmatpush2.bf16.msra.mxu0 0
    %5597 = vmatprep.subr.bf16.mxu0 0
    %5598 = vmatpush2.bf16.msra.mxu0 0
    %5599 = vmatprep.subr.bf16.mxu0 0
    %5600 = vmatpush2.bf16.msra.mxu0 0
    %5601 = vmatprep.subr.bf16.mxu0 0
    %5602 = vmatpush2.bf16.msra.mxu0 0
    %5603 = vmatprep.subr.bf16.mxu0 0
    %5604 = vmatpush2.bf16.msra.mxu0 0
    %5605 = vmatprep.subr.bf16.mxu0 0
    %5606 = vmatpush2.bf16.msra.mxu0 0
    %5607 = vmatprep.subr.bf16.mxu0 0
    %5608 = vmatpush2.bf16.msra.mxu0 0
    %5609 = vmatprep.subr.bf16.mxu0 0
    %5610 = vmatpush2.bf16.msra.mxu0 0
    %5611 = vmatprep.mubr.bf16.mxu0 0
    %5612 = vmatmul.mubr.bf16.gmra.mxu0 %v5578
    %v5613 = vpop.f32.mrf.mxu0
    %v5614 = vadd.f32 1e-06, %v5613
    %v5615 = vpop.f32.mrf.mxu0
    %v5616 = vpop.f32.mrf.mxu0
    %v5617 = vadd.f32 1e-06, %v5616
    %v5618 = vpop.f32.mrf.mxu0
    %5619 = vdwg.mxu0
    %v5620 = vrcp.pop %v5614
    %v5621 = vrcp.pop %v5617
    %v5622 = vmul.f32 %v5620, 16.0
    %v5623 = vmul.f32 %v5621, 16.0
    %v5624 = vmul.f32 %v5563, %v5622
    %v5625 = vmul.f32 %v5566, %v5623
    %5626 = vxpose.xlu0.c.b16.start [1/8] %v5360, 128
    %5627 = vxpose.xlu0.c.b16.cont [2/8] 0, 128
    %5628 = vxpose.xlu0.c.b16.cont [3/8] 0, 128
    %5629 = vxpose.xlu0.c.b16.cont [4/8] 0, 128
    %5630 = vxpose.xlu0.c.b16.cont [5/8] 0, 128
    %5631 = vxpose.xlu0.c.b16.cont [6/8] 0, 128
    %5632 = vxpose.xlu0.c.b16.cont [7/8] 0, 128
    %5633 = vxpose.xlu0.c.b16.end [8/8] 0, 128
    %v5634 = vpop.trf.xlu0
    %v5635 = vpop.trf.xlu0
    %v5636 = vpop.trf.xlu0
    %v5637 = vpop.trf.xlu0
    %v5638 = vpop.trf.xlu0
    %v5639 = vpop.trf.xlu0
    %v5640 = vpop.trf.xlu0
    %v5641 = vpop.trf.xlu0
    %v5643 = vsel %vm643, %v5634, 0
    %v5646 = vsel %vm643, %v5635, 0
    %v5649 = vsel %vm643, %v5636, 0
    %v5652 = vsel %vm643, %v5637, 0
    %v5655 = vsel %vm643, %v5638, 0
    %v5658 = vsel %vm643, %v5639, 0
    %v5661 = vsel %vm643, %v5640, 0
    %v5664 = vsel %vm643, %v5641, 0
    %5666 = vmatprep.subr.bf16.mxu0 0
    %5667 = vmatpush1.bf16.msra.mxu0 0
    %5668 = vmatprep.subr.bf16.mxu0 0
    %5669 = vmatpush1.bf16.msra.mxu0 0
    %5670 = vmatprep.subr.bf16.mxu0 0
    %5671 = vmatpush1.bf16.msra.mxu0 0
    %5672 = vmatprep.subr.bf16.mxu0 0
    %5673 = vmatpush1.bf16.msra.mxu0 0
    %5674 = vmatprep.subr.bf16.mxu0 0
    %5675 = vmatpush1.bf16.msra.mxu0 0
    %5676 = vmatprep.subr.bf16.mxu0 0
    %5677 = vmatpush1.bf16.msra.mxu0 0
    %5678 = vmatprep.subr.bf16.mxu0 0
    %5679 = vmatpush1.bf16.msra.mxu0 0
    %5680 = vmatprep.subr.bf16.mxu0 0
    %5681 = vmatpush1.bf16.msra.mxu0 %v5364
    %5682 = vmatprep.subr.bf16.mxu0 0
    %5683 = vmatpush2.bf16.msra.mxu0 0
    %5684 = vmatprep.subr.bf16.mxu0 0
    %5685 = vmatpush2.bf16.msra.mxu0 0
    %5686 = vmatprep.subr.bf16.mxu0 0
    %5687 = vmatpush2.bf16.msra.mxu0 0
    %5688 = vmatprep.subr.bf16.mxu0 0
    %5689 = vmatpush2.bf16.msra.mxu0 0
    %5690 = vmatprep.subr.bf16.mxu0 0
    %5691 = vmatpush2.bf16.msra.mxu0 0
    %5692 = vmatprep.subr.bf16.mxu0 0
    %5693 = vmatpush2.bf16.msra.mxu0 0
    %5694 = vmatprep.subr.bf16.mxu0 0
    %5695 = vmatpush2.bf16.msra.mxu0 0
    %5696 = vmatprep.subr.bf16.mxu0 0
    %5697 = vmatpush2.bf16.msra.mxu0 0
    %5698 = vmatprep.mubr.bf16.mxu0 0
    %5699 = vmatmul.mubr.bf16.gmra.mxu0 %v5643
    %v5700 = vpop.f32.mrf.mxu0
    %v5701 = vadd.f32 0.0, %v5700
    %v5702 = vpop.f32.mrf.mxu0
    %v5703 = vpop.f32.mrf.mxu0
    %v5704 = vadd.f32 0.0, %v5703
    %v5705 = vpop.f32.mrf.mxu0
    %5706 = vmatprep.mubr.bf16.mxu0 0
    %5707 = vmatmul.mubr.bf16.gmra.mxu0 %v5646
    %v5708 = vpop.f32.mrf.mxu0
    %v5709 = vadd.f32 0.0, %v5708
    %v5710 = vpop.f32.mrf.mxu0
    %v5711 = vpop.f32.mrf.mxu0
    %v5712 = vadd.f32 0.0, %v5711
    %v5713 = vpop.f32.mrf.mxu0
    %5714 = vmatprep.mubr.bf16.mxu0 0
    %5715 = vmatmul.mubr.bf16.gmra.mxu0 %v5649
    %v5716 = vpop.f32.mrf.mxu0
    %v5717 = vadd.f32 0.0, %v5716
    %v5718 = vpop.f32.mrf.mxu0
    %v5719 = vpop.f32.mrf.mxu0
    %v5720 = vadd.f32 0.0, %v5719
    %v5721 = vpop.f32.mrf.mxu0
    %5722 = vmatprep.mubr.bf16.mxu0 0
    %5723 = vmatmul.mubr.bf16.gmra.mxu0 %v5652
    %v5724 = vpop.f32.mrf.mxu0
    %v5725 = vadd.f32 0.0, %v5724
    %v5726 = vpop.f32.mrf.mxu0
    %v5727 = vpop.f32.mrf.mxu0
    %v5728 = vadd.f32 0.0, %v5727
    %v5729 = vpop.f32.mrf.mxu0
    %5730 = vmatprep.mubr.bf16.mxu0 0
    %5731 = vmatmul.mubr.bf16.gmra.mxu0 %v5655
    %v5732 = vpop.f32.mrf.mxu0
    %v5733 = vadd.f32 0.0, %v5732
    %v5734 = vpop.f32.mrf.mxu0
    %v5735 = vpop.f32.mrf.mxu0
    %v5736 = vadd.f32 0.0, %v5735
    %v5737 = vpop.f32.mrf.mxu0
    %5738 = vmatprep.mubr.bf16.mxu0 0
    %5739 = vmatmul.mubr.bf16.gmra.mxu0 %v5658
    %v5740 = vpop.f32.mrf.mxu0
    %v5741 = vadd.f32 0.0, %v5740
    %v5742 = vpop.f32.mrf.mxu0
    %v5743 = vpop.f32.mrf.mxu0
    %v5744 = vadd.f32 0.0, %v5743
    %v5745 = vpop.f32.mrf.mxu0
    %5746 = vmatprep.mubr.bf16.mxu0 0
    %5747 = vmatmul.mubr.bf16.gmra.mxu0 %v5661
    %v5748 = vpop.f32.mrf.mxu0
    %v5749 = vadd.f32 0.0, %v5748
    %v5750 = vpop.f32.mrf.mxu0
    %v5751 = vpop.f32.mrf.mxu0
    %v5752 = vadd.f32 0.0, %v5751
    %v5753 = vpop.f32.mrf.mxu0
    %5754 = vmatprep.mubr.bf16.mxu0 0
    %5755 = vmatmul.mubr.bf16.gmra.mxu0 %v5664
    %v5756 = vpop.f32.mrf.mxu0
    %v5757 = vadd.f32 0.0, %v5756
    %v5758 = vpop.f32.mrf.mxu0
    %v5759 = vpop.f32.mrf.mxu0
    %v5760 = vadd.f32 0.0, %v5759
    %v5761 = vpop.f32.mrf.mxu0
    %5762 = vdwg.mxu0
    %v5763 = vmul.f32 %v5701, %v120
    %v5764 = vmul.f32 %v5704, %v121
    %v5765 = vmul.f32 %v5709, %v122
    %v5766 = vmul.f32 %v5712, %v123
    %v5767 = vmul.f32 %v5717, %v124
    %v5768 = vmul.f32 %v5720, %v125
    %v5769 = vmul.f32 %v5725, %v126
    %v5770 = vmul.f32 %v5728, %v127
    %v5771 = vmul.f32 %v5733, %v128
    %v5772 = vmul.f32 %v5736, %v129
    %v5773 = vmul.f32 %v5741, %v130
    %v5774 = vmul.f32 %v5744, %v131
    %v5775 = vmul.f32 %v5749, %v132
    %v5776 = vmul.f32 %v5752, %v133
    %v5777 = vmul.f32 %v5757, %v134
    %v5778 = vmul.f32 %v5760, %v135
    %v5779 = vpack.c.bf16 %v5764, %v5763
    %v5780 = vpack.c.bf16 %v5766, %v5765
    %v5781 = vpack.c.bf16 %v5768, %v5767
    %v5782 = vpack.c.bf16 %v5770, %v5769
    %v5783 = vpack.c.bf16 %v5772, %v5771
    %v5784 = vpack.c.bf16 %v5774, %v5773
    %v5785 = vpack.c.bf16 %v5776, %v5775
    %v5786 = vpack.c.bf16 %v5778, %v5777
    %5787 = vmatprep.subr.bf16.mxu0 0
    %5788 = vmatpush1.bf16.msra.mxu0 %v5786
    %5789 = vmatprep.subr.bf16.mxu0 0
    %5790 = vmatpush1.bf16.msra.mxu0 %v5785
    %5791 = vmatprep.subr.bf16.mxu0 0
    %5792 = vmatpush1.bf16.msra.mxu0 %v5784
    %5793 = vmatprep.subr.bf16.mxu0 0
    %5794 = vmatpush1.bf16.msra.mxu0 %v5783
    %5795 = vmatprep.subr.bf16.mxu0 0
    %5796 = vmatpush1.bf16.msra.mxu0 %v5782
    %5797 = vmatprep.subr.bf16.mxu0 0
    %5798 = vmatpush1.bf16.msra.mxu0 %v5781
    %5799 = vmatprep.subr.bf16.mxu0 0
    %5800 = vmatpush1.bf16.msra.mxu0 %v5780
    %5801 = vmatprep.subr.bf16.mxu0 0
    %5802 = vmatpush1.bf16.msra.mxu0 %v5779
    %5803 = vmatprep.subr.bf16.mxu0 0
    %5804 = vmatpush2.bf16.msra.mxu0 0
    %5805 = vmatprep.subr.bf16.mxu0 0
    %5806 = vmatpush2.bf16.msra.mxu0 0
    %5807 = vmatprep.subr.bf16.mxu0 0
    %5808 = vmatpush2.bf16.msra.mxu0 0
    %5809 = vmatprep.subr.bf16.mxu0 0
    %5810 = vmatpush2.bf16.msra.mxu0 0
    %5811 = vmatprep.subr.bf16.mxu0 0
    %5812 = vmatpush2.bf16.msra.mxu0 0
    %5813 = vmatprep.subr.bf16.mxu0 0
    %5814 = vmatpush2.bf16.msra.mxu0 0
    %5815 = vmatprep.subr.bf16.mxu0 0
    %5816 = vmatpush2.bf16.msra.mxu0 0
    %5817 = vmatprep.subr.bf16.mxu0 0
    %5818 = vmatpush2.bf16.msra.mxu0 0
    %5819 = vmatprep.mubr.bf16.mxu0 0
    %5820 = vmatmul.mubr.bf16.gmra.mxu0 %v5356
    %v5821 = vpop.f32.mrf.mxu0
    %v5822 = vadd.f32 0.0, %v5821
    %v5823 = vpop.f32.mrf.mxu0
    %v5824 = vpop.f32.mrf.mxu0
    %v5825 = vadd.f32 0.0, %v5824
    %v5826 = vpop.f32.mrf.mxu0
    %5827 = vdwg.mxu0
    %v5828 = vadd.f32 %v5341, %v5342
    %v5829 = vrot.slane %v5828, 4
    %v5830 = vadd.f32 %v5828, %v5829
    %v5831 = vrot.slane %v5830, 2
    %v5832 = vadd.f32 %v5830, %v5831
    %v5833 = vrot.slane %v5832, 1
    %v5834 = vadd.f32 %v5832, %v5833
    %v5835 = vmul.f32 %v5301, %v5834
    %v5836 = vmul.f32 %v5302, %v5834
    %v5837 = vpack.c.bf16 %v5836, %v5835
    %5838 = vmatprep.subr.bf16.mxu0 0
    %5839 = vmatpush1.bf16.msra.mxu0 %v143
    %5840 = vmatprep.subr.bf16.mxu0 0
    %5841 = vmatpush1.bf16.msra.mxu0 %v142
    %5842 = vmatprep.subr.bf16.mxu0 0
    %5843 = vmatpush1.bf16.msra.mxu0 %v141
    %5844 = vmatprep.subr.bf16.mxu0 0
    %5845 = vmatpush1.bf16.msra.mxu0 %v140
    %5846 = vmatprep.subr.bf16.mxu0 0
    %5847 = vmatpush1.bf16.msra.mxu0 %v139
    %5848 = vmatprep.subr.bf16.mxu0 0
    %5849 = vmatpush1.bf16.msra.mxu0 %v138
    %5850 = vmatprep.subr.bf16.mxu0 0
    %5851 = vmatpush1.bf16.msra.mxu0 %v137
    %5852 = vmatprep.subr.bf16.mxu0 0
    %5853 = vmatpush1.bf16.msra.mxu0 %v136
    %5854 = vmatprep.subr.bf16.mxu0 0
    %5855 = vmatpush2.bf16.msra.mxu0 0
    %5856 = vmatprep.subr.bf16.mxu0 0
    %5857 = vmatpush2.bf16.msra.mxu0 0
    %5858 = vmatprep.subr.bf16.mxu0 0
    %5859 = vmatpush2.bf16.msra.mxu0 0
    %5860 = vmatprep.subr.bf16.mxu0 0
    %5861 = vmatpush2.bf16.msra.mxu0 0
    %5862 = vmatprep.subr.bf16.mxu0 0
    %5863 = vmatpush2.bf16.msra.mxu0 0
    %5864 = vmatprep.subr.bf16.mxu0 0
    %5865 = vmatpush2.bf16.msra.mxu0 0
    %5866 = vmatprep.subr.bf16.mxu0 0
    %5867 = vmatpush2.bf16.msra.mxu0 0
    %5868 = vmatprep.subr.bf16.mxu0 0
    %5869 = vmatpush2.bf16.msra.mxu0 0
    %5870 = vmatprep.mubr.bf16.mxu0 0
    %5871 = vmatmul.mubr.bf16.gmra.mxu0 %v5837
    %v5872 = vpop.f32.mrf.mxu0
    %v5873 = vadd.f32 1e-06, %v5872
    %v5874 = vpop.f32.mrf.mxu0
    %v5875 = vpop.f32.mrf.mxu0
    %v5876 = vadd.f32 1e-06, %v5875
    %v5877 = vpop.f32.mrf.mxu0
    %5878 = vdwg.mxu0
    %v5879 = vrcp.pop %v5873
    %v5880 = vrcp.pop %v5876
    %v5881 = vmul.f32 %v5879, 16.0
    %v5882 = vmul.f32 %v5880, 16.0
    %v5883 = vmul.f32 %v5822, %v5881
    %v5884 = vmul.f32 %v5825, %v5882
    %5885 = vxpose.xlu0.c.b16.start [1/8] %v5361, 128
    %5886 = vxpose.xlu0.c.b16.cont [2/8] 0, 128
    %5887 = vxpose.xlu0.c.b16.cont [3/8] 0, 128
    %5888 = vxpose.xlu0.c.b16.cont [4/8] 0, 128
    %5889 = vxpose.xlu0.c.b16.cont [5/8] 0, 128
    %5890 = vxpose.xlu0.c.b16.cont [6/8] 0, 128
    %5891 = vxpose.xlu0.c.b16.cont [7/8] 0, 128
    %5892 = vxpose.xlu0.c.b16.end [8/8] 0, 128
    %v5893 = vpop.trf.xlu0
    %v5894 = vpop.trf.xlu0
    %v5895 = vpop.trf.xlu0
    %v5896 = vpop.trf.xlu0
    %v5897 = vpop.trf.xlu0
    %v5898 = vpop.trf.xlu0
    %v5899 = vpop.trf.xlu0
    %v5900 = vpop.trf.xlu0
    %v5902 = vsel %vm643, %v5893, 0
    %v5905 = vsel %vm643, %v5894, 0
    %v5908 = vsel %vm643, %v5895, 0
    %v5911 = vsel %vm643, %v5896, 0
    %v5914 = vsel %vm643, %v5897, 0
    %v5917 = vsel %vm643, %v5898, 0
    %v5920 = vsel %vm643, %v5899, 0
    %v5923 = vsel %vm643, %v5900, 0
    %5925 = vmatprep.subr.bf16.mxu0 0
    %5926 = vmatpush1.bf16.msra.mxu0 0
    %5927 = vmatprep.subr.bf16.mxu0 0
    %5928 = vmatpush1.bf16.msra.mxu0 0
    %5929 = vmatprep.subr.bf16.mxu0 0
    %5930 = vmatpush1.bf16.msra.mxu0 0
    %5931 = vmatprep.subr.bf16.mxu0 0
    %5932 = vmatpush1.bf16.msra.mxu0 0
    %5933 = vmatprep.subr.bf16.mxu0 0
    %5934 = vmatpush1.bf16.msra.mxu0 0
    %5935 = vmatprep.subr.bf16.mxu0 0
    %5936 = vmatpush1.bf16.msra.mxu0 0
    %5937 = vmatprep.subr.bf16.mxu0 0
    %5938 = vmatpush1.bf16.msra.mxu0 0
    %5939 = vmatprep.subr.bf16.mxu0 0
    %5940 = vmatpush1.bf16.msra.mxu0 %v5365
    %5941 = vmatprep.subr.bf16.mxu0 0
    %5942 = vmatpush2.bf16.msra.mxu0 0
    %5943 = vmatprep.subr.bf16.mxu0 0
    %5944 = vmatpush2.bf16.msra.mxu0 0
    %5945 = vmatprep.subr.bf16.mxu0 0
    %5946 = vmatpush2.bf16.msra.mxu0 0
    %5947 = vmatprep.subr.bf16.mxu0 0
    %5948 = vmatpush2.bf16.msra.mxu0 0
    %5949 = vmatprep.subr.bf16.mxu0 0
    %5950 = vmatpush2.bf16.msra.mxu0 0
    %5951 = vmatprep.subr.bf16.mxu0 0
    %5952 = vmatpush2.bf16.msra.mxu0 0
    %5953 = vmatprep.subr.bf16.mxu0 0
    %5954 = vmatpush2.bf16.msra.mxu0 0
    %5955 = vmatprep.subr.bf16.mxu0 0
    %5956 = vmatpush2.bf16.msra.mxu0 0
    %5957 = vmatprep.mubr.bf16.mxu0 0
    %5958 = vmatmul.mubr.bf16.gmra.mxu0 %v5902
    %v5959 = vpop.f32.mrf.mxu0
    %v5960 = vadd.f32 0.0, %v5959
    %v5961 = vpop.f32.mrf.mxu0
    %v5962 = vpop.f32.mrf.mxu0
    %v5963 = vadd.f32 0.0, %v5962
    %v5964 = vpop.f32.mrf.mxu0
    %5965 = vmatprep.mubr.bf16.mxu0 0
    %5966 = vmatmul.mubr.bf16.gmra.mxu0 %v5905
    %v5967 = vpop.f32.mrf.mxu0
    %v5968 = vadd.f32 0.0, %v5967
    %v5969 = vpop.f32.mrf.mxu0
    %v5970 = vpop.f32.mrf.mxu0
    %v5971 = vadd.f32 0.0, %v5970
    %v5972 = vpop.f32.mrf.mxu0
    %5973 = vmatprep.mubr.bf16.mxu0 0
    %5974 = vmatmul.mubr.bf16.gmra.mxu0 %v5908
    %v5975 = vpop.f32.mrf.mxu0
    %v5976 = vadd.f32 0.0, %v5975
    %v5977 = vpop.f32.mrf.mxu0
    %v5978 = vpop.f32.mrf.mxu0
    %v5979 = vadd.f32 0.0, %v5978
    %v5980 = vpop.f32.mrf.mxu0
    %5981 = vmatprep.mubr.bf16.mxu0 0
    %5982 = vmatmul.mubr.bf16.gmra.mxu0 %v5911
    %v5983 = vpop.f32.mrf.mxu0
    %v5984 = vadd.f32 0.0, %v5983
    %v5985 = vpop.f32.mrf.mxu0
    %v5986 = vpop.f32.mrf.mxu0
    %v5987 = vadd.f32 0.0, %v5986
    %v5988 = vpop.f32.mrf.mxu0
    %5989 = vmatprep.mubr.bf16.mxu0 0
    %5990 = vmatmul.mubr.bf16.gmra.mxu0 %v5914
    %v5991 = vpop.f32.mrf.mxu0
    %v5992 = vadd.f32 0.0, %v5991
    %v5993 = vpop.f32.mrf.mxu0
    %v5994 = vpop.f32.mrf.mxu0
    %v5995 = vadd.f32 0.0, %v5994
    %v5996 = vpop.f32.mrf.mxu0
    %5997 = vmatprep.mubr.bf16.mxu0 0
    %5998 = vmatmul.mubr.bf16.gmra.mxu0 %v5917
    %v5999 = vpop.f32.mrf.mxu0
    %v6000 = vadd.f32 0.0, %v5999
    %v6001 = vpop.f32.mrf.mxu0
    %v6002 = vpop.f32.mrf.mxu0
    %v6003 = vadd.f32 0.0, %v6002
    %v6004 = vpop.f32.mrf.mxu0
    %6005 = vmatprep.mubr.bf16.mxu0 0
    %6006 = vmatmul.mubr.bf16.gmra.mxu0 %v5920
    %v6007 = vpop.f32.mrf.mxu0
    %v6008 = vadd.f32 0.0, %v6007
    %v6009 = vpop.f32.mrf.mxu0
    %v6010 = vpop.f32.mrf.mxu0
    %v6011 = vadd.f32 0.0, %v6010
    %v6012 = vpop.f32.mrf.mxu0
    %6013 = vmatprep.mubr.bf16.mxu0 0
    %6014 = vmatmul.mubr.bf16.gmra.mxu0 %v5923
    %v6015 = vpop.f32.mrf.mxu0
    %v6016 = vadd.f32 0.0, %v6015
    %v6017 = vpop.f32.mrf.mxu0
    %v6018 = vpop.f32.mrf.mxu0
    %v6019 = vadd.f32 0.0, %v6018
    %v6020 = vpop.f32.mrf.mxu0
    %6021 = vdwg.mxu0
    %v6022 = vmul.f32 %v5960, %v120
    %v6023 = vmul.f32 %v5963, %v121
    %v6024 = vmul.f32 %v5968, %v122
    %v6025 = vmul.f32 %v5971, %v123
    %v6026 = vmul.f32 %v5976, %v124
    %v6027 = vmul.f32 %v5979, %v125
    %v6028 = vmul.f32 %v5984, %v126
    %v6029 = vmul.f32 %v5987, %v127
    %v6030 = vmul.f32 %v5992, %v128
    %v6031 = vmul.f32 %v5995, %v129
    %v6032 = vmul.f32 %v6000, %v130
    %v6033 = vmul.f32 %v6003, %v131
    %v6034 = vmul.f32 %v6008, %v132
    %v6035 = vmul.f32 %v6011, %v133
    %v6036 = vmul.f32 %v6016, %v134
    %v6037 = vmul.f32 %v6019, %v135
    %v6038 = vpack.c.bf16 %v6023, %v6022
    %v6039 = vpack.c.bf16 %v6025, %v6024
    %v6040 = vpack.c.bf16 %v6027, %v6026
    %v6041 = vpack.c.bf16 %v6029, %v6028
    %v6042 = vpack.c.bf16 %v6031, %v6030
    %v6043 = vpack.c.bf16 %v6033, %v6032
    %v6044 = vpack.c.bf16 %v6035, %v6034
    %v6045 = vpack.c.bf16 %v6037, %v6036
    %6046 = vmatprep.subr.bf16.mxu0 0
    %6047 = vmatpush1.bf16.msra.mxu0 %v6045
    %6048 = vmatprep.subr.bf16.mxu0 0
    %6049 = vmatpush1.bf16.msra.mxu0 %v6044
    %6050 = vmatprep.subr.bf16.mxu0 0
    %6051 = vmatpush1.bf16.msra.mxu0 %v6043
    %6052 = vmatprep.subr.bf16.mxu0 0
    %6053 = vmatpush1.bf16.msra.mxu0 %v6042
    %6054 = vmatprep.subr.bf16.mxu0 0
    %6055 = vmatpush1.bf16.msra.mxu0 %v6041
    %6056 = vmatprep.subr.bf16.mxu0 0
    %6057 = vmatpush1.bf16.msra.mxu0 %v6040
    %6058 = vmatprep.subr.bf16.mxu0 0
    %6059 = vmatpush1.bf16.msra.mxu0 %v6039
    %6060 = vmatprep.subr.bf16.mxu0 0
    %6061 = vmatpush1.bf16.msra.mxu0 %v6038
    %6062 = vmatprep.subr.bf16.mxu0 0
    %6063 = vmatpush2.bf16.msra.mxu0 0
    %6064 = vmatprep.subr.bf16.mxu0 0
    %6065 = vmatpush2.bf16.msra.mxu0 0
    %6066 = vmatprep.subr.bf16.mxu0 0
    %6067 = vmatpush2.bf16.msra.mxu0 0
    %6068 = vmatprep.subr.bf16.mxu0 0
    %6069 = vmatpush2.bf16.msra.mxu0 0
    %6070 = vmatprep.subr.bf16.mxu0 0
    %6071 = vmatpush2.bf16.msra.mxu0 0
    %6072 = vmatprep.subr.bf16.mxu0 0
    %6073 = vmatpush2.bf16.msra.mxu0 0
    %6074 = vmatprep.subr.bf16.mxu0 0
    %6075 = vmatpush2.bf16.msra.mxu0 0
    %6076 = vmatprep.subr.bf16.mxu0 0
    %6077 = vmatpush2.bf16.msra.mxu0 0
    %6078 = vmatprep.mubr.bf16.mxu0 0
    %6079 = vmatmul.mubr.bf16.gmra.mxu0 %v5357
    %v6080 = vpop.f32.mrf.mxu0
    %v6081 = vadd.f32 0.0, %v6080
    %v6082 = vpop.f32.mrf.mxu0
    %v6083 = vpop.f32.mrf.mxu0
    %v6084 = vadd.f32 0.0, %v6083
    %v6085 = vpop.f32.mrf.mxu0
    %6086 = vdwg.mxu0
    %v6087 = vadd.f32 %v5343, %v5344
    %v6088 = vrot.slane %v6087, 4
    %v6089 = vadd.f32 %v6087, %v6088
    %v6090 = vrot.slane %v6089, 2
    %v6091 = vadd.f32 %v6089, %v6090
    %v6092 = vrot.slane %v6091, 1
    %v6093 = vadd.f32 %v6091, %v6092
    %v6094 = vmul.f32 %v5303, %v6093
    %v6095 = vmul.f32 %v5304, %v6093
    %v6096 = vpack.c.bf16 %v6095, %v6094
    %6097 = vmatprep.subr.bf16.mxu0 0
    %6098 = vmatpush1.bf16.msra.mxu0 %v143
    %6099 = vmatprep.subr.bf16.mxu0 0
    %6100 = vmatpush1.bf16.msra.mxu0 %v142
    %6101 = vmatprep.subr.bf16.mxu0 0
    %6102 = vmatpush1.bf16.msra.mxu0 %v141
    %6103 = vmatprep.subr.bf16.mxu0 0
    %6104 = vmatpush1.bf16.msra.mxu0 %v140
    %6105 = vmatprep.subr.bf16.mxu0 0
    %6106 = vmatpush1.bf16.msra.mxu0 %v139
    %6107 = vmatprep.subr.bf16.mxu0 0
    %6108 = vmatpush1.bf16.msra.mxu0 %v138
    %6109 = vmatprep.subr.bf16.mxu0 0
    %6110 = vmatpush1.bf16.msra.mxu0 %v137
    %6111 = vmatprep.subr.bf16.mxu0 0
    %6112 = vmatpush1.bf16.msra.mxu0 %v136
    %6113 = vmatprep.subr.bf16.mxu0 0
    %6114 = vmatpush2.bf16.msra.mxu0 0
    %6115 = vmatprep.subr.bf16.mxu0 0
    %6116 = vmatpush2.bf16.msra.mxu0 0
    %6117 = vmatprep.subr.bf16.mxu0 0
    %6118 = vmatpush2.bf16.msra.mxu0 0
    %6119 = vmatprep.subr.bf16.mxu0 0
    %6120 = vmatpush2.bf16.msra.mxu0 0
    %6121 = vmatprep.subr.bf16.mxu0 0
    %6122 = vmatpush2.bf16.msra.mxu0 0
    %6123 = vmatprep.subr.bf16.mxu0 0
    %6124 = vmatpush2.bf16.msra.mxu0 0
    %6125 = vmatprep.subr.bf16.mxu0 0
    %6126 = vmatpush2.bf16.msra.mxu0 0
    %6127 = vmatprep.subr.bf16.mxu0 0
    %6128 = vmatpush2.bf16.msra.mxu0 0
    %6129 = vmatprep.mubr.bf16.mxu0 0
    %6130 = vmatmul.mubr.bf16.gmra.mxu0 %v6096
    %v6131 = vpop.f32.mrf.mxu0
    %v6132 = vadd.f32 1e-06, %v6131
    %v6133 = vpop.f32.mrf.mxu0
    %v6134 = vpop.f32.mrf.mxu0
    %v6135 = vadd.f32 1e-06, %v6134
    %v6136 = vpop.f32.mrf.mxu0
    %6137 = vdwg.mxu0
    %v6138 = vrcp.pop %v6132
    %v6139 = vrcp.pop %v6135
    %v6140 = vmul.f32 %v6138, 16.0
    %v6141 = vmul.f32 %v6139, 16.0
    %v6142 = vmul.f32 %v6081, %v6140
    %v6143 = vmul.f32 %v6084, %v6141
    %6144 = vxpose.xlu0.c.b16.start [1/8] %v5362, 128
    %6145 = vxpose.xlu0.c.b16.cont [2/8] 0, 128
    %6146 = vxpose.xlu0.c.b16.cont [3/8] 0, 128
    %6147 = vxpose.xlu0.c.b16.cont [4/8] 0, 128
    %6148 = vxpose.xlu0.c.b16.cont [5/8] 0, 128
    %6149 = vxpose.xlu0.c.b16.cont [6/8] 0, 128
    %6150 = vxpose.xlu0.c.b16.cont [7/8] 0, 128
    %6151 = vxpose.xlu0.c.b16.end [8/8] 0, 128
    %v6152 = vpop.trf.xlu0
    %v6153 = vpop.trf.xlu0
    %v6154 = vpop.trf.xlu0
    %v6155 = vpop.trf.xlu0
    %v6156 = vpop.trf.xlu0
    %v6157 = vpop.trf.xlu0
    %v6158 = vpop.trf.xlu0
    %v6159 = vpop.trf.xlu0
    %v6161 = vsel %vm643, %v6152, 0
    %v6164 = vsel %vm643, %v6153, 0
    %v6167 = vsel %vm643, %v6154, 0
    %v6170 = vsel %vm643, %v6155, 0
    %v6173 = vsel %vm643, %v6156, 0
    %v6176 = vsel %vm643, %v6157, 0
    %v6179 = vsel %vm643, %v6158, 0
    %v6182 = vsel %vm643, %v6159, 0
    %6184 = vmatprep.subr.bf16.mxu0 0
    %6185 = vmatpush1.bf16.msra.mxu0 0
    %6186 = vmatprep.subr.bf16.mxu0 0
    %6187 = vmatpush1.bf16.msra.mxu0 0
    %6188 = vmatprep.subr.bf16.mxu0 0
    %6189 = vmatpush1.bf16.msra.mxu0 0
    %6190 = vmatprep.subr.bf16.mxu0 0
    %6191 = vmatpush1.bf16.msra.mxu0 0
    %6192 = vmatprep.subr.bf16.mxu0 0
    %6193 = vmatpush1.bf16.msra.mxu0 0
    %6194 = vmatprep.subr.bf16.mxu0 0
    %6195 = vmatpush1.bf16.msra.mxu0 0
    %6196 = vmatprep.subr.bf16.mxu0 0
    %6197 = vmatpush1.bf16.msra.mxu0 0
    %6198 = vmatprep.subr.bf16.mxu0 0
    %6199 = vmatpush1.bf16.msra.mxu0 %v5366
    %6200 = vmatprep.subr.bf16.mxu0 0
    %6201 = vmatpush2.bf16.msra.mxu0 0
    %6202 = vmatprep.subr.bf16.mxu0 0
    %6203 = vmatpush2.bf16.msra.mxu0 0
    %6204 = vmatprep.subr.bf16.mxu0 0
    %6205 = vmatpush2.bf16.msra.mxu0 0
    %6206 = vmatprep.subr.bf16.mxu0 0
    %6207 = vmatpush2.bf16.msra.mxu0 0
    %6208 = vmatprep.subr.bf16.mxu0 0
    %6209 = vmatpush2.bf16.msra.mxu0 0
    %6210 = vmatprep.subr.bf16.mxu0 0
    %6211 = vmatpush2.bf16.msra.mxu0 0
    %6212 = vmatprep.subr.bf16.mxu0 0
    %6213 = vmatpush2.bf16.msra.mxu0 0
    %6214 = vmatprep.subr.bf16.mxu0 0
    %6215 = vmatpush2.bf16.msra.mxu0 0
    %6216 = vmatprep.mubr.bf16.mxu0 0
    %6217 = vmatmul.mubr.bf16.gmra.mxu0 %v6161
    %v6218 = vpop.f32.mrf.mxu0
    %v6219 = vadd.f32 0.0, %v6218
    %v6220 = vpop.f32.mrf.mxu0
    %v6221 = vpop.f32.mrf.mxu0
    %v6222 = vadd.f32 0.0, %v6221
    %v6223 = vpop.f32.mrf.mxu0
    %6224 = vmatprep.mubr.bf16.mxu0 0
    %6225 = vmatmul.mubr.bf16.gmra.mxu0 %v6164
    %v6226 = vpop.f32.mrf.mxu0
    %v6227 = vadd.f32 0.0, %v6226
    %v6228 = vpop.f32.mrf.mxu0
    %v6229 = vpop.f32.mrf.mxu0
    %v6230 = vadd.f32 0.0, %v6229
    %v6231 = vpop.f32.mrf.mxu0
    %6232 = vmatprep.mubr.bf16.mxu0 0
    %6233 = vmatmul.mubr.bf16.gmra.mxu0 %v6167
    %v6234 = vpop.f32.mrf.mxu0
    %v6235 = vadd.f32 0.0, %v6234
    %v6236 = vpop.f32.mrf.mxu0
    %v6237 = vpop.f32.mrf.mxu0
    %v6238 = vadd.f32 0.0, %v6237
    %v6239 = vpop.f32.mrf.mxu0
    %6240 = vmatprep.mubr.bf16.mxu0 0
    %6241 = vmatmul.mubr.bf16.gmra.mxu0 %v6170
    %v6242 = vpop.f32.mrf.mxu0
    %v6243 = vadd.f32 0.0, %v6242
    %v6244 = vpop.f32.mrf.mxu0
    %v6245 = vpop.f32.mrf.mxu0
    %v6246 = vadd.f32 0.0, %v6245
    %v6247 = vpop.f32.mrf.mxu0
    %6248 = vmatprep.mubr.bf16.mxu0 0
    %6249 = vmatmul.mubr.bf16.gmra.mxu0 %v6173
    %v6250 = vpop.f32.mrf.mxu0
    %v6251 = vadd.f32 0.0, %v6250
    %v6252 = vpop.f32.mrf.mxu0
    %v6253 = vpop.f32.mrf.mxu0
    %v6254 = vadd.f32 0.0, %v6253
    %v6255 = vpop.f32.mrf.mxu0
    %6256 = vmatprep.mubr.bf16.mxu0 0
    %6257 = vmatmul.mubr.bf16.gmra.mxu0 %v6176
    %v6258 = vpop.f32.mrf.mxu0
    %v6259 = vadd.f32 0.0, %v6258
    %v6260 = vpop.f32.mrf.mxu0
    %v6261 = vpop.f32.mrf.mxu0
    %v6262 = vadd.f32 0.0, %v6261
    %v6263 = vpop.f32.mrf.mxu0
    %6264 = vmatprep.mubr.bf16.mxu0 0
    %6265 = vmatmul.mubr.bf16.gmra.mxu0 %v6179
    %v6266 = vpop.f32.mrf.mxu0
    %v6267 = vadd.f32 0.0, %v6266
    %v6268 = vpop.f32.mrf.mxu0
    %v6269 = vpop.f32.mrf.mxu0
    %v6270 = vadd.f32 0.0, %v6269
    %v6271 = vpop.f32.mrf.mxu0
    %6272 = vmatprep.mubr.bf16.mxu0 0
    %6273 = vmatmul.mubr.bf16.gmra.mxu0 %v6182
    %v6274 = vpop.f32.mrf.mxu0
    %v6275 = vadd.f32 0.0, %v6274
    %v6276 = vpop.f32.mrf.mxu0
    %v6277 = vpop.f32.mrf.mxu0
    %v6278 = vadd.f32 0.0, %v6277
    %v6279 = vpop.f32.mrf.mxu0
    %6280 = vdwg.mxu0
    %v6281 = vmul.f32 %v6219, %v120
    %v6282 = vmul.f32 %v6222, %v121
    %v6283 = vmul.f32 %v6227, %v122
    %v6284 = vmul.f32 %v6230, %v123
    %v6285 = vmul.f32 %v6235, %v124
    %v6286 = vmul.f32 %v6238, %v125
    %v6287 = vmul.f32 %v6243, %v126
    %v6288 = vmul.f32 %v6246, %v127
    %v6289 = vmul.f32 %v6251, %v128
    %v6290 = vmul.f32 %v6254, %v129
    %v6291 = vmul.f32 %v6259, %v130
    %v6292 = vmul.f32 %v6262, %v131
    %v6293 = vmul.f32 %v6267, %v132
    %v6294 = vmul.f32 %v6270, %v133
    %v6295 = vmul.f32 %v6275, %v134
    %v6296 = vmul.f32 %v6278, %v135
    %v6297 = vpack.c.bf16 %v6282, %v6281
    %v6298 = vpack.c.bf16 %v6284, %v6283
    %v6299 = vpack.c.bf16 %v6286, %v6285
    %v6300 = vpack.c.bf16 %v6288, %v6287
    %v6301 = vpack.c.bf16 %v6290, %v6289
    %v6302 = vpack.c.bf16 %v6292, %v6291
    %v6303 = vpack.c.bf16 %v6294, %v6293
    %v6304 = vpack.c.bf16 %v6296, %v6295
    %6305 = vmatprep.subr.bf16.mxu0 0
    %6306 = vmatpush1.bf16.msra.mxu0 %v6304
    %6307 = vmatprep.subr.bf16.mxu0 0
    %6308 = vmatpush1.bf16.msra.mxu0 %v6303
    %6309 = vmatprep.subr.bf16.mxu0 0
    %6310 = vmatpush1.bf16.msra.mxu0 %v6302
    %6311 = vmatprep.subr.bf16.mxu0 0
    %6312 = vmatpush1.bf16.msra.mxu0 %v6301
    %6313 = vmatprep.subr.bf16.mxu0 0
    %6314 = vmatpush1.bf16.msra.mxu0 %v6300
    %6315 = vmatprep.subr.bf16.mxu0 0
    %6316 = vmatpush1.bf16.msra.mxu0 %v6299
    %6317 = vmatprep.subr.bf16.mxu0 0
    %6318 = vmatpush1.bf16.msra.mxu0 %v6298
    %6319 = vmatprep.subr.bf16.mxu0 0
    %6320 = vmatpush1.bf16.msra.mxu0 %v6297
    %6321 = vmatprep.subr.bf16.mxu0 0
    %6322 = vmatpush2.bf16.msra.mxu0 0
    %6323 = vmatprep.subr.bf16.mxu0 0
    %6324 = vmatpush2.bf16.msra.mxu0 0
    %6325 = vmatprep.subr.bf16.mxu0 0
    %6326 = vmatpush2.bf16.msra.mxu0 0
    %6327 = vmatprep.subr.bf16.mxu0 0
    %6328 = vmatpush2.bf16.msra.mxu0 0
    %6329 = vmatprep.subr.bf16.mxu0 0
    %6330 = vmatpush2.bf16.msra.mxu0 0
    %6331 = vmatprep.subr.bf16.mxu0 0
    %6332 = vmatpush2.bf16.msra.mxu0 0
    %6333 = vmatprep.subr.bf16.mxu0 0
    %6334 = vmatpush2.bf16.msra.mxu0 0
    %6335 = vmatprep.subr.bf16.mxu0 0
    %6336 = vmatpush2.bf16.msra.mxu0 0
    %6337 = vmatprep.mubr.bf16.mxu0 0
    %6338 = vmatmul.mubr.bf16.gmra.mxu0 %v5358
    %v6339 = vpop.f32.mrf.mxu0
    %v6340 = vadd.f32 0.0, %v6339
    %v6341 = vpop.f32.mrf.mxu0
    %v6342 = vpop.f32.mrf.mxu0
    %v6343 = vadd.f32 0.0, %v6342
    %v6344 = vpop.f32.mrf.mxu0
    %6345 = vdwg.mxu0
    %v6346 = vadd.f32 %v5345, %v5346
    %v6347 = vrot.slane %v6346, 4
    %v6348 = vadd.f32 %v6346, %v6347
    %v6349 = vrot.slane %v6348, 2
    %v6350 = vadd.f32 %v6348, %v6349
    %v6351 = vrot.slane %v6350, 1
    %v6352 = vadd.f32 %v6350, %v6351
    %v6353 = vmul.f32 %v5305, %v6352
    %v6354 = vmul.f32 %v5306, %v6352
    %v6355 = vpack.c.bf16 %v6354, %v6353
    %6356 = vmatprep.subr.bf16.mxu0 0
    %6357 = vmatpush1.bf16.msra.mxu0 %v143
    %6358 = vmatprep.subr.bf16.mxu0 0
    %6359 = vmatpush1.bf16.msra.mxu0 %v142
    %6360 = vmatprep.subr.bf16.mxu0 0
    %6361 = vmatpush1.bf16.msra.mxu0 %v141
    %6362 = vmatprep.subr.bf16.mxu0 0
    %6363 = vmatpush1.bf16.msra.mxu0 %v140
    %6364 = vmatprep.subr.bf16.mxu0 0
    %6365 = vmatpush1.bf16.msra.mxu0 %v139
    %6366 = vmatprep.subr.bf16.mxu0 0
    %6367 = vmatpush1.bf16.msra.mxu0 %v138
    %6368 = vmatprep.subr.bf16.mxu0 0
    %6369 = vmatpush1.bf16.msra.mxu0 %v137
    %6370 = vmatprep.subr.bf16.mxu0 0
    %6371 = vmatpush1.bf16.msra.mxu0 %v136
    %6372 = vmatprep.subr.bf16.mxu0 0
    %6373 = vmatpush2.bf16.msra.mxu0 0
    %6374 = vmatprep.subr.bf16.mxu0 0
    %6375 = vmatpush2.bf16.msra.mxu0 0
    %6376 = vmatprep.subr.bf16.mxu0 0
    %6377 = vmatpush2.bf16.msra.mxu0 0
    %6378 = vmatprep.subr.bf16.mxu0 0
    %6379 = vmatpush2.bf16.msra.mxu0 0
    %6380 = vmatprep.subr.bf16.mxu0 0
    %6381 = vmatpush2.bf16.msra.mxu0 0
    %6382 = vmatprep.subr.bf16.mxu0 0
    %6383 = vmatpush2.bf16.msra.mxu0 0
    %6384 = vmatprep.subr.bf16.mxu0 0
    %6385 = vmatpush2.bf16.msra.mxu0 0
    %6386 = vmatprep.subr.bf16.mxu0 0
    %6387 = vmatpush2.bf16.msra.mxu0 0
    %6388 = vmatprep.mubr.bf16.mxu0 0
    %6389 = vmatmul.mubr.bf16.gmra.mxu0 %v6355
    %v6390 = vpop.f32.mrf.mxu0
    %v6391 = vadd.f32 1e-06, %v6390
    %v6392 = vpop.f32.mrf.mxu0
    %v6393 = vpop.f32.mrf.mxu0
    %v6394 = vadd.f32 1e-06, %v6393
    %v6395 = vpop.f32.mrf.mxu0
    %6396 = vdwg.mxu0
    %v6397 = vrcp.pop %v6391
    %v6398 = vrcp.pop %v6394
    %v6399 = vmul.f32 %v6397, 16.0
    %v6400 = vmul.f32 %v6398, 16.0
    %v6401 = vmul.f32 %v6340, %v6399
    %v6402 = vmul.f32 %v6343, %v6400
    %v6403 = vpack.c.bf16 %v5625, %v5624
    %v6404 = vpack.c.bf16 %v5884, %v5883
    %v6405 = vpack.c.bf16 %v6143, %v6142
    %v6406 = vpack.c.bf16 %v6402, %v6401
    %v6423 = vunpack.c.l.b16 %v4912
    %v6424 = vunpack.c.l.b16 %v4913
    %v6425 = vunpack.c.l.b16 %v4914
    %v6426 = vunpack.c.l.b16 %v4915
    %v6427 = vunpack.c.l.b16 %v4916
    %v6428 = vunpack.c.l.b16 %v4917
    %v6429 = vunpack.c.l.b16 %v4918
    %v6430 = vunpack.c.l.b16 %v4919
    %v6431 = vunpack.c.l.b16 %v4920
    %v6432 = vunpack.c.l.b16 %v4921
    %v6433 = vunpack.c.l.b16 %v4922
    %v6434 = vunpack.c.l.b16 %v4923
    %v6435 = vunpack.c.l.b16 %v4924
    %v6436 = vunpack.c.l.b16 %v4925
    %v6437 = vunpack.c.l.b16 %v4926
    %v6438 = vunpack.c.l.b16 %v4927
    %v6439 = vpack.c.b16 %v6424, %v6423
    %v6440 = vpack.c.b16 %v6426, %v6425
    %v6441 = vpack.c.b16 %v6428, %v6427
    %v6442 = vpack.c.b16 %v6430, %v6429
    %v6443 = vpack.c.b16 %v6432, %v6431
    %v6444 = vpack.c.b16 %v6434, %v6433
    %v6445 = vpack.c.b16 %v6436, %v6435
    %v6446 = vpack.c.b16 %v6438, %v6437
    %6455 = vmatprep.subr.bf16.mxu0 0
    %6456 = vmatpush1.bf16.msra.mxu0 %v6446
    %6457 = vmatprep.subr.bf16.mxu0 0
    %6458 = vmatpush1.bf16.msra.mxu0 %v6445
    %6459 = vmatprep.subr.bf16.mxu0 0
    %6460 = vmatpush1.bf16.msra.mxu0 %v6444
    %6461 = vmatprep.subr.bf16.mxu0 0
    %6462 = vmatpush1.bf16.msra.mxu0 %v6443
    %6463 = vmatprep.subr.bf16.mxu0 0
    %6464 = vmatpush1.bf16.msra.mxu0 %v6442
    %6465 = vmatprep.subr.bf16.mxu0 0
    %6466 = vmatpush1.bf16.msra.mxu0 %v6441
    %6467 = vmatprep.subr.bf16.mxu0 0
    %6468 = vmatpush1.bf16.msra.mxu0 %v6440
    %6469 = vmatprep.subr.bf16.mxu0 0
    %6470 = vmatpush1.bf16.msra.mxu0 %v6439
    %6471 = vmatprep.subr.bf16.mxu0 0
    %6472 = vmatpush2.bf16.msra.mxu0 0
    %6473 = vmatprep.subr.bf16.mxu0 0
    %6474 = vmatpush2.bf16.msra.mxu0 0
    %6475 = vmatprep.subr.bf16.mxu0 0
    %6476 = vmatpush2.bf16.msra.mxu0 0
    %6477 = vmatprep.subr.bf16.mxu0 0
    %6478 = vmatpush2.bf16.msra.mxu0 0
    %6479 = vmatprep.subr.bf16.mxu0 0
    %6480 = vmatpush2.bf16.msra.mxu0 0
    %6481 = vmatprep.subr.bf16.mxu0 0
    %6482 = vmatpush2.bf16.msra.mxu0 0
    %6483 = vmatprep.subr.bf16.mxu0 0
    %6484 = vmatpush2.bf16.msra.mxu0 0
    %6485 = vmatprep.subr.bf16.mxu0 0
    %6486 = vmatpush2.bf16.msra.mxu0 0
    %6487 = vmatprep.mubr.bf16.mxu0 0
    %6488 = vmatmul.mubr.bf16.gmra.mxu0 %v6403
    %v6489 = vpop.f32.mrf.mxu0
    %v6490 = vadd.f32 0.0, %v6489
    %v6491 = vpop.f32.mrf.mxu0
    %v6492 = vpop.f32.mrf.mxu0
    %v6493 = vadd.f32 0.0, %v6492
    %v6494 = vpop.f32.mrf.mxu0
    %6495 = vmatprep.mubr.bf16.mxu0 0
    %6496 = vmatmul.mubr.bf16.gmra.mxu0 %v6404
    %v6497 = vpop.f32.mrf.mxu0
    %v6498 = vadd.f32 0.0, %v6497
    %v6499 = vpop.f32.mrf.mxu0
    %v6500 = vpop.f32.mrf.mxu0
    %v6501 = vadd.f32 0.0, %v6500
    %v6502 = vpop.f32.mrf.mxu0
    %6503 = vmatprep.mubr.bf16.mxu0 0
    %6504 = vmatmul.mubr.bf16.gmra.mxu0 %v6405
    %v6505 = vpop.f32.mrf.mxu0
    %v6506 = vadd.f32 0.0, %v6505
    %v6507 = vpop.f32.mrf.mxu0
    %v6508 = vpop.f32.mrf.mxu0
    %v6509 = vadd.f32 0.0, %v6508
    %v6510 = vpop.f32.mrf.mxu0
    %6511 = vmatprep.mubr.bf16.mxu0 0
    %6512 = vmatmul.mubr.bf16.gmra.mxu0 %v6406
    %v6513 = vpop.f32.mrf.mxu0
    %v6514 = vadd.f32 0.0, %v6513
    %v6515 = vpop.f32.mrf.mxu0
    %v6516 = vpop.f32.mrf.mxu0
    %v6517 = vadd.f32 0.0, %v6516
    %v6518 = vpop.f32.mrf.mxu0
    %6519 = vdwg.mxu0
    %6520 = vadd.xlane.f32.xlu0 %v6490
    %v6521 = vpop.xlane.xlu0 %6520
    %6522 = vadd.xlane.f32.xlu0 %v6493
    %v6523 = vpop.xlane.xlu0 %6522
    %6524 = vadd.xlane.f32.xlu0 %v6498
    %v6525 = vpop.xlane.xlu0 %6524
    %6526 = vadd.xlane.f32.xlu0 %v6501
    %v6527 = vpop.xlane.xlu0 %6526
    %6528 = vadd.xlane.f32.xlu0 %v6506
    %v6529 = vpop.xlane.xlu0 %6528
    %6530 = vadd.xlane.f32.xlu0 %v6509
    %v6531 = vpop.xlane.xlu0 %6530
    %6532 = vadd.xlane.f32.xlu0 %v6514
    %v6533 = vpop.xlane.xlu0 %6532
    %6534 = vadd.xlane.f32.xlu0 %v6517
    %v6535 = vpop.xlane.xlu0 %6534
    %v6536 = vmul.f32 %v6521, %v1797
    %v6537 = vmul.f32 %v6523, %v1797
    %v6538 = vmul.f32 %v6525, %v1797
    %v6539 = vmul.f32 %v6527, %v1797
    %v6540 = vmul.f32 %v6529, %v1797
    %v6541 = vmul.f32 %v6531, %v1797
    %v6542 = vmul.f32 %v6533, %v1797
    %v6543 = vmul.f32 %v6535, %v1797
    %v6544 = vsub.f32 %v6490, %v6536
    %v6545 = vsub.f32 %v6493, %v6537
    %v6546 = vsub.f32 %v6498, %v6538
    %v6547 = vsub.f32 %v6501, %v6539
    %v6548 = vsub.f32 %v6506, %v6540
    %v6549 = vsub.f32 %v6509, %v6541
    %v6550 = vsub.f32 %v6514, %v6542
    %v6551 = vsub.f32 %v6517, %v6543
    %v6552 = vmul.f32 %v6544, %v6544
    %v6553 = vmul.f32 %v6545, %v6545
    %v6554 = vmul.f32 %v6546, %v6546
    %v6555 = vmul.f32 %v6547, %v6547
    %v6556 = vmul.f32 %v6548, %v6548
    %v6557 = vmul.f32 %v6549, %v6549
    %v6558 = vmul.f32 %v6550, %v6550
    %v6559 = vmul.f32 %v6551, %v6551
    %6560 = vadd.xlane.f32.xlu0 %v6552
    %v6561 = vpop.xlane.xlu0 %6560
    %6562 = vadd.xlane.f32.xlu0 %v6553
    %v6563 = vpop.xlane.xlu0 %6562
    %6564 = vadd.xlane.f32.xlu0 %v6554
    %v6565 = vpop.xlane.xlu0 %6564
    %6566 = vadd.xlane.f32.xlu0 %v6555
    %v6567 = vpop.xlane.xlu0 %6566
    %6568 = vadd.xlane.f32.xlu0 %v6556
    %v6569 = vpop.xlane.xlu0 %6568
    %6570 = vadd.xlane.f32.xlu0 %v6557
    %v6571 = vpop.xlane.xlu0 %6570
    %6572 = vadd.xlane.f32.xlu0 %v6558
    %v6573 = vpop.xlane.xlu0 %6572
    %6574 = vadd.xlane.f32.xlu0 %v6559
    %v6575 = vpop.xlane.xlu0 %6574
    %v6576 = vmul.f32 %v6561, %v1797
    %v6577 = vmul.f32 %v6563, %v1797
    %v6578 = vmul.f32 %v6565, %v1797
    %v6579 = vmul.f32 %v6567, %v1797
    %v6580 = vmul.f32 %v6569, %v1797
    %v6581 = vmul.f32 %v6571, %v1797
    %v6582 = vmul.f32 %v6573, %v1797
    %v6583 = vmul.f32 %v6575, %v1797
    %v6584 = vadd.f32 %v6576, 1e-05
    %v6585 = vadd.f32 %v6577, 1e-05
    %v6586 = vadd.f32 %v6578, 1e-05
    %v6587 = vadd.f32 %v6579, 1e-05
    %v6588 = vadd.f32 %v6580, 1e-05
    %v6589 = vadd.f32 %v6581, 1e-05
    %v6590 = vadd.f32 %v6582, 1e-05
    %v6591 = vadd.f32 %v6583, 1e-05
    %v6592 = vrsqrt.pop %v6584
    %v6593 = vrsqrt.pop %v6585
    %v6594 = vrsqrt.pop %v6586
    %v6595 = vrsqrt.pop %v6587
    %v6596 = vrsqrt.pop %v6588
    %v6597 = vrsqrt.pop %v6589
    %v6598 = vrsqrt.pop %v6590
    %v6599 = vrsqrt.pop %v6591
    %v6600 = vmul.f32 %v6544, %v6592
    %v6601 = vmul.f32 %v6545, %v6593
    %v6602 = vmul.f32 %v6546, %v6594
    %v6603 = vmul.f32 %v6547, %v6595
    %v6604 = vmul.f32 %v6548, %v6596
    %v6605 = vmul.f32 %v6549, %v6597
    %v6606 = vmul.f32 %v6550, %v6598
    %v6607 = vmul.f32 %v6551, %v6599
    %v6608 = vlaneseq
    %v6609 = vshrl.u32 %v6608, 7
    %v6610 = vsub.s32 0, %v6609
    %v6611 = vrot.slane %v4996, %v6610
    %v6612 = vmul.f32 %v6600, %v6611
    %v6613 = vmul.f32 %v6601, %v6611
    %v6614 = vmul.f32 %v6602, %v6611
    %v6615 = vmul.f32 %v6603, %v6611
    %v6616 = vmul.f32 %v6604, %v6611
    %v6617 = vmul.f32 %v6605, %v6611
    %v6618 = vmul.f32 %v6606, %v6611
    %v6619 = vmul.f32 %v6607, %v6611
    %v6620 = vlaneseq
    %v6621 = vshrl.u32 %v6620, 7
    %v6622 = vsub.s32 1, %v6621
    %v6623 = vrot.slane %v4996, %v6622
    %v6624 = vadd.f32 %v6612, %v6623
    %v6625 = vadd.f32 %v6613, %v6623
    %v6626 = vadd.f32 %v6614, %v6623
    %v6627 = vadd.f32 %v6615, %v6623
    %v6628 = vadd.f32 %v6616, %v6623
    %v6629 = vadd.f32 %v6617, %v6623
    %v6630 = vadd.f32 %v6618, %v6623
    %v6631 = vadd.f32 %v6619, %v6623
    %v6632 = vpack.c.bf16 %v6625, %v6624
    %v6633 = vpack.c.bf16 %v6627, %v6626
    %v6634 = vpack.c.bf16 %v6629, %v6628
    %v6635 = vpack.c.bf16 %v6631, %v6630
    %v6652 = vunpack.c.l.b16 %v4946
    %v6653 = vunpack.c.h.b16 %v4946
    %v6654 = vunpack.c.l.b16 %v4947
    %v6655 = vunpack.c.h.b16 %v4947
    %v6656 = vunpack.c.l.b16 %v4948
    %v6657 = vunpack.c.h.b16 %v4948
    %v6658 = vunpack.c.l.b16 %v4949
    %v6659 = vunpack.c.h.b16 %v4949
    %v6660 = vunpack.c.l.b16 %v4950
    %v6661 = vunpack.c.h.b16 %v4950
    %v6662 = vunpack.c.l.b16 %v4951
    %v6663 = vunpack.c.h.b16 %v4951
    %v6664 = vunpack.c.l.b16 %v4952
    %v6665 = vunpack.c.h.b16 %v4952
    %v6666 = vunpack.c.l.b16 %v4953
    %v6667 = vunpack.c.h.b16 %v4953
    %v6668 = vunpack.c.l.b16 %v4954
    %v6669 = vunpack.c.h.b16 %v4954
    %v6670 = vunpack.c.l.b16 %v4955
    %v6671 = vunpack.c.h.b16 %v4955
    %v6672 = vunpack.c.l.b16 %v4956
    %v6673 = vunpack.c.h.b16 %v4956
    %v6674 = vunpack.c.l.b16 %v4957
    %v6675 = vunpack.c.h.b16 %v4957
    %v6676 = vunpack.c.l.b16 %v4958
    %v6677 = vunpack.c.h.b16 %v4958
    %v6678 = vunpack.c.l.b16 %v4959
    %v6679 = vunpack.c.h.b16 %v4959
    %v6680 = vunpack.c.l.b16 %v4960
    %v6681 = vunpack.c.h.b16 %v4960
    %v6682 = vunpack.c.l.b16 %v4961
    %v6683 = vunpack.c.h.b16 %v4961
    %v6684 = vpack.c.b16 %v6654, %v6652
    %v6685 = vpack.c.b16 %v6655, %v6653
    %v6686 = vpack.c.b16 %v6658, %v6656
    %v6687 = vpack.c.b16 %v6659, %v6657
    %v6688 = vpack.c.b16 %v6662, %v6660
    %v6689 = vpack.c.b16 %v6663, %v6661
    %v6690 = vpack.c.b16 %v6666, %v6664
    %v6691 = vpack.c.b16 %v6667, %v6665
    %v6692 = vpack.c.b16 %v6670, %v6668
    %v6693 = vpack.c.b16 %v6671, %v6669
    %v6694 = vpack.c.b16 %v6674, %v6672
    %v6695 = vpack.c.b16 %v6675, %v6673
    %v6696 = vpack.c.b16 %v6678, %v6676
    %v6697 = vpack.c.b16 %v6679, %v6677
    %v6698 = vpack.c.b16 %v6682, %v6680
    %v6699 = vpack.c.b16 %v6683, %v6681
    %6716 = vmatprep.subr.bf16.mxu0 %v6699
    %6717 = vmatpush1.bf16.msra.mxu0 %v6698
    %6718 = vmatprep.subr.bf16.mxu0 %v6697
    %6719 = vmatpush1.bf16.msra.mxu0 %v6696
    %6720 = vmatprep.subr.bf16.mxu0 %v6695
    %6721 = vmatpush1.bf16.msra.mxu0 %v6694
    %6722 = vmatprep.subr.bf16.mxu0 %v6693
    %6723 = vmatpush1.bf16.msra.mxu0 %v6692
    %6724 = vmatprep.subr.bf16.mxu0 %v6691
    %6725 = vmatpush1.bf16.msra.mxu0 %v6690
    %6726 = vmatprep.subr.bf16.mxu0 %v6689
    %6727 = vmatpush1.bf16.msra.mxu0 %v6688
    %6728 = vmatprep.subr.bf16.mxu0 %v6687
    %6729 = vmatpush1.bf16.msra.mxu0 %v6686
    %6730 = vmatprep.subr.bf16.mxu0 %v6685
    %6731 = vmatpush1.bf16.msra.mxu0 %v6684
    %6732 = vmatprep.subr.bf16.mxu0 0
    %6733 = vmatpush2.bf16.msra.mxu0 0
    %6734 = vmatprep.subr.bf16.mxu0 0
    %6735 = vmatpush2.bf16.msra.mxu0 0
    %6736 = vmatprep.subr.bf16.mxu0 0
    %6737 = vmatpush2.bf16.msra.mxu0 0
    %6738 = vmatprep.subr.bf16.mxu0 0
    %6739 = vmatpush2.bf16.msra.mxu0 0
    %6740 = vmatprep.subr.bf16.mxu0 0
    %6741 = vmatpush2.bf16.msra.mxu0 0
    %6742 = vmatprep.subr.bf16.mxu0 0
    %6743 = vmatpush2.bf16.msra.mxu0 0
    %6744 = vmatprep.subr.bf16.mxu0 0
    %6745 = vmatpush2.bf16.msra.mxu0 0
    %6746 = vmatprep.subr.bf16.mxu0 0
    %6747 = vmatpush2.bf16.msra.mxu0 0
    %6748 = vmatprep.mubr.bf16.mxu0 0
    %6749 = vmatmul.mubr.bf16.gmra.mxu0 %v6632
    %v6750 = vpop.f32.mrf.mxu0
    %v6751 = vadd.f32 0.0, %v6750
    %v6752 = vpop.f32.mrf.mxu0
    %v6753 = vadd.f32 0.0, %v6752
    %v6754 = vpop.f32.mrf.mxu0
    %v6755 = vadd.f32 0.0, %v6754
    %v6756 = vpop.f32.mrf.mxu0
    %v6757 = vadd.f32 0.0, %v6756
    %6758 = vmatprep.mubr.bf16.mxu0 0
    %6759 = vmatmul.mubr.bf16.gmra.mxu0 %v6633
    %v6760 = vpop.f32.mrf.mxu0
    %v6761 = vadd.f32 0.0, %v6760
    %v6762 = vpop.f32.mrf.mxu0
    %v6763 = vadd.f32 0.0, %v6762
    %v6764 = vpop.f32.mrf.mxu0
    %v6765 = vadd.f32 0.0, %v6764
    %v6766 = vpop.f32.mrf.mxu0
    %v6767 = vadd.f32 0.0, %v6766
    %6768 = vmatprep.mubr.bf16.mxu0 0
    %6769 = vmatmul.mubr.bf16.gmra.mxu0 %v6634
    %v6770 = vpop.f32.mrf.mxu0
    %v6771 = vadd.f32 0.0, %v6770
    %v6772 = vpop.f32.mrf.mxu0
    %v6773 = vadd.f32 0.0, %v6772
    %v6774 = vpop.f32.mrf.mxu0
    %v6775 = vadd.f32 0.0, %v6774
    %v6776 = vpop.f32.mrf.mxu0
    %v6777 = vadd.f32 0.0, %v6776
    %6778 = vmatprep.mubr.bf16.mxu0 0
    %6779 = vmatmul.mubr.bf16.gmra.mxu0 %v6635
    %v6780 = vpop.f32.mrf.mxu0
    %v6781 = vadd.f32 0.0, %v6780
    %v6782 = vpop.f32.mrf.mxu0
    %v6783 = vadd.f32 0.0, %v6782
    %v6784 = vpop.f32.mrf.mxu0
    %v6785 = vadd.f32 0.0, %v6784
    %v6786 = vpop.f32.mrf.mxu0
    %v6787 = vadd.f32 0.0, %v6786
    %6788 = vdwg.mxu0
    %v6805 = vunpack.c.l.b16 %v4929
    %v6806 = vunpack.c.h.b16 %v4929
    %v6807 = vunpack.c.l.b16 %v4930
    %v6808 = vunpack.c.h.b16 %v4930
    %v6809 = vunpack.c.l.b16 %v4931
    %v6810 = vunpack.c.h.b16 %v4931
    %v6811 = vunpack.c.l.b16 %v4932
    %v6812 = vunpack.c.h.b16 %v4932
    %v6813 = vunpack.c.l.b16 %v4933
    %v6814 = vunpack.c.h.b16 %v4933
    %v6815 = vunpack.c.l.b16 %v4934
    %v6816 = vunpack.c.h.b16 %v4934
    %v6817 = vunpack.c.l.b16 %v4935
    %v6818 = vunpack.c.h.b16 %v4935
    %v6819 = vunpack.c.l.b16 %v4936
    %v6820 = vunpack.c.h.b16 %v4936
    %v6821 = vunpack.c.l.b16 %v4937
    %v6822 = vunpack.c.h.b16 %v4937
    %v6823 = vunpack.c.l.b16 %v4938
    %v6824 = vunpack.c.h.b16 %v4938
    %v6825 = vunpack.c.l.b16 %v4939
    %v6826 = vunpack.c.h.b16 %v4939
    %v6827 = vunpack.c.l.b16 %v4940
    %v6828 = vunpack.c.h.b16 %v4940
    %v6829 = vunpack.c.l.b16 %v4941
    %v6830 = vunpack.c.h.b16 %v4941
    %v6831 = vunpack.c.l.b16 %v4942
    %v6832 = vunpack.c.h.b16 %v4942
    %v6833 = vunpack.c.l.b16 %v4943
    %v6834 = vunpack.c.h.b16 %v4943
    %v6835 = vunpack.c.l.b16 %v4944
    %v6836 = vunpack.c.h.b16 %v4944
    %v6837 = vpack.c.b16 %v6807, %v6805
    %v6838 = vpack.c.b16 %v6808, %v6806
    %v6839 = vpack.c.b16 %v6811, %v6809
    %v6840 = vpack.c.b16 %v6812, %v6810
    %v6841 = vpack.c.b16 %v6815, %v6813
    %v6842 = vpack.c.b16 %v6816, %v6814
    %v6843 = vpack.c.b16 %v6819, %v6817
    %v6844 = vpack.c.b16 %v6820, %v6818
    %v6845 = vpack.c.b16 %v6823, %v6821
    %v6846 = vpack.c.b16 %v6824, %v6822
    %v6847 = vpack.c.b16 %v6827, %v6825
    %v6848 = vpack.c.b16 %v6828, %v6826
    %v6849 = vpack.c.b16 %v6831, %v6829
    %v6850 = vpack.c.b16 %v6832, %v6830
    %v6851 = vpack.c.b16 %v6835, %v6833
    %v6852 = vpack.c.b16 %v6836, %v6834
    %6869 = vmatprep.subr.bf16.mxu0 %v6852
    %6870 = vmatpush1.bf16.msra.mxu0 %v6851
    %6871 = vmatprep.subr.bf16.mxu0 %v6850
    %6872 = vmatpush1.bf16.msra.mxu0 %v6849
    %6873 = vmatprep.subr.bf16.mxu0 %v6848
    %6874 = vmatpush1.bf16.msra.mxu0 %v6847
    %6875 = vmatprep.subr.bf16.mxu0 %v6846
    %6876 = vmatpush1.bf16.msra.mxu0 %v6845
    %6877 = vmatprep.subr.bf16.mxu0 %v6844
    %6878 = vmatpush1.bf16.msra.mxu0 %v6843
    %6879 = vmatprep.subr.bf16.mxu0 %v6842
    %6880 = vmatpush1.bf16.msra.mxu0 %v6841
    %6881 = vmatprep.subr.bf16.mxu0 %v6840
    %6882 = vmatpush1.bf16.msra.mxu0 %v6839
    %6883 = vmatprep.subr.bf16.mxu0 %v6838
    %6884 = vmatpush1.bf16.msra.mxu0 %v6837
    %6885 = vmatprep.subr.bf16.mxu0 0
    %6886 = vmatpush2.bf16.msra.mxu0 0
    %6887 = vmatprep.subr.bf16.mxu0 0
    %6888 = vmatpush2.bf16.msra.mxu0 0
    %6889 = vmatprep.subr.bf16.mxu0 0
    %6890 = vmatpush2.bf16.msra.mxu0 0
    %6891 = vmatprep.subr.bf16.mxu0 0
    %6892 = vmatpush2.bf16.msra.mxu0 0
    %6893 = vmatprep.subr.bf16.mxu0 0
    %6894 = vmatpush2.bf16.msra.mxu0 0
    %6895 = vmatprep.subr.bf16.mxu0 0
    %6896 = vmatpush2.bf16.msra.mxu0 0
    %6897 = vmatprep.subr.bf16.mxu0 0
    %6898 = vmatpush2.bf16.msra.mxu0 0
    %6899 = vmatprep.subr.bf16.mxu0 0
    %6900 = vmatpush2.bf16.msra.mxu0 0
    %6901 = vmatprep.mubr.bf16.mxu0 0
    %6902 = vmatmul.mubr.bf16.gmra.mxu0 %v4997
    %v6903 = vpop.f32.mrf.mxu0
    %v6904 = vadd.f32 %v6751, %v6903
    %v6905 = vpop.f32.mrf.mxu0
    %v6906 = vadd.f32 %v6753, %v6905
    %v6907 = vpop.f32.mrf.mxu0
    %v6908 = vadd.f32 %v6755, %v6907
    %v6909 = vpop.f32.mrf.mxu0
    %v6910 = vadd.f32 %v6757, %v6909
    %6911 = vmatprep.mubr.bf16.mxu0 0
    %6912 = vmatmul.mubr.bf16.gmra.mxu0 %v4998
    %v6913 = vpop.f32.mrf.mxu0
    %v6914 = vadd.f32 %v6761, %v6913
    %v6915 = vpop.f32.mrf.mxu0
    %v6916 = vadd.f32 %v6763, %v6915
    %v6917 = vpop.f32.mrf.mxu0
    %v6918 = vadd.f32 %v6765, %v6917
    %v6919 = vpop.f32.mrf.mxu0
    %v6920 = vadd.f32 %v6767, %v6919
    %6921 = vmatprep.mubr.bf16.mxu0 0
    %6922 = vmatmul.mubr.bf16.gmra.mxu0 %v4999
    %v6923 = vpop.f32.mrf.mxu0
    %v6924 = vadd.f32 %v6771, %v6923
    %v6925 = vpop.f32.mrf.mxu0
    %v6926 = vadd.f32 %v6773, %v6925
    %v6927 = vpop.f32.mrf.mxu0
    %v6928 = vadd.f32 %v6775, %v6927
    %v6929 = vpop.f32.mrf.mxu0
    %v6930 = vadd.f32 %v6777, %v6929
    %6931 = vmatprep.mubr.bf16.mxu0 0
    %6932 = vmatmul.mubr.bf16.gmra.mxu0 %v5000
    %v6933 = vpop.f32.mrf.mxu0
    %v6934 = vadd.f32 %v6781, %v6933
    %v6935 = vpop.f32.mrf.mxu0
    %v6936 = vadd.f32 %v6783, %v6935
    %v6937 = vpop.f32.mrf.mxu0
    %v6938 = vadd.f32 %v6785, %v6937
    %v6939 = vpop.f32.mrf.mxu0
    %v6940 = vadd.f32 %v6787, %v6939
    %6941 = vdwg.mxu0
    %v6942 = vmax.f32 %v6904, 0.0
    %v6943 = vmax.f32 %v6906, 0.0
    %v6944 = vmax.f32 %v6908, 0.0
    %v6945 = vmax.f32 %v6910, 0.0
    %v6946 = vmax.f32 %v6914, 0.0
    %v6947 = vmax.f32 %v6916, 0.0
    %v6948 = vmax.f32 %v6918, 0.0
    %v6949 = vmax.f32 %v6920, 0.0
    %v6950 = vmax.f32 %v6924, 0.0
    %v6951 = vmax.f32 %v6926, 0.0
    %v6952 = vmax.f32 %v6928, 0.0
    %v6953 = vmax.f32 %v6930, 0.0
    %v6954 = vmax.f32 %v6934, 0.0
    %v6955 = vmax.f32 %v6936, 0.0
    %v6956 = vmax.f32 %v6938, 0.0
    %v6957 = vmax.f32 %v6940, 0.0
    %v6958 = vpack.c.bf16 %v6944, %v6942
    %v6959 = vpack.c.bf16 %v6945, %v6943
    %v6960 = vpack.c.bf16 %v6948, %v6946
    %v6961 = vpack.c.bf16 %v6949, %v6947
    %v6962 = vpack.c.bf16 %v6952, %v6950
    %v6963 = vpack.c.bf16 %v6953, %v6951
    %v6964 = vpack.c.bf16 %v6956, %v6954
    %v6965 = vpack.c.bf16 %v6957, %v6955
    %v6998 = vunpack.c.l.b16 %v4963
    %v6999 = vunpack.c.l.b16 %v4964
    %v7000 = vunpack.c.l.b16 %v4965
    %v7001 = vunpack.c.l.b16 %v4966
    %v7002 = vunpack.c.l.b16 %v4967
    %v7003 = vunpack.c.l.b16 %v4968
    %v7004 = vunpack.c.l.b16 %v4969
    %v7005 = vunpack.c.l.b16 %v4970
    %v7006 = vunpack.c.l.b16 %v4971
    %v7007 = vunpack.c.l.b16 %v4972
    %v7008 = vunpack.c.l.b16 %v4973
    %v7009 = vunpack.c.l.b16 %v4974
    %v7010 = vunpack.c.l.b16 %v4975
    %v7011 = vunpack.c.l.b16 %v4976
    %v7012 = vunpack.c.l.b16 %v4977
    %v7013 = vunpack.c.l.b16 %v4978
    %v7014 = vunpack.c.l.b16 %v4979
    %v7015 = vunpack.c.l.b16 %v4980
    %v7016 = vunpack.c.l.b16 %v4981
    %v7017 = vunpack.c.l.b16 %v4982
    %v7018 = vunpack.c.l.b16 %v4983
    %v7019 = vunpack.c.l.b16 %v4984
    %v7020 = vunpack.c.l.b16 %v4985
    %v7021 = vunpack.c.l.b16 %v4986
    %v7022 = vunpack.c.l.b16 %v4987
    %v7023 = vunpack.c.l.b16 %v4988
    %v7024 = vunpack.c.l.b16 %v4989
    %v7025 = vunpack.c.l.b16 %v4990
    %v7026 = vunpack.c.l.b16 %v4991
    %v7027 = vunpack.c.l.b16 %v4992
    %v7028 = vunpack.c.l.b16 %v4993
    %v7029 = vunpack.c.l.b16 %v4994
    %v7030 = vpack.c.b16 %v6999, %v6998
    %v7031 = vpack.c.b16 %v7001, %v7000
    %v7032 = vpack.c.b16 %v7003, %v7002
    %v7033 = vpack.c.b16 %v7005, %v7004
    %v7034 = vpack.c.b16 %v7007, %v7006
    %v7035 = vpack.c.b16 %v7009, %v7008
    %v7036 = vpack.c.b16 %v7011, %v7010
    %v7037 = vpack.c.b16 %v7013, %v7012
    %v7038 = vpack.c.b16 %v7015, %v7014
    %v7039 = vpack.c.b16 %v7017, %v7016
    %v7040 = vpack.c.b16 %v7019, %v7018
    %v7041 = vpack.c.b16 %v7021, %v7020
    %v7042 = vpack.c.b16 %v7023, %v7022
    %v7043 = vpack.c.b16 %v7025, %v7024
    %v7044 = vpack.c.b16 %v7027, %v7026
    %v7045 = vpack.c.b16 %v7029, %v7028
    %7062 = vmatprep.subr.bf16.mxu0 0
    %7063 = vmatpush1.bf16.msra.mxu0 %v7037
    %7064 = vmatprep.subr.bf16.mxu0 0
    %7065 = vmatpush1.bf16.msra.mxu0 %v7036
    %7066 = vmatprep.subr.bf16.mxu0 0
    %7067 = vmatpush1.bf16.msra.mxu0 %v7035
    %7068 = vmatprep.subr.bf16.mxu0 0
    %7069 = vmatpush1.bf16.msra.mxu0 %v7034
    %7070 = vmatprep.subr.bf16.mxu0 0
    %7071 = vmatpush1.bf16.msra.mxu0 %v7033
    %7072 = vmatprep.subr.bf16.mxu0 0
    %7073 = vmatpush1.bf16.msra.mxu0 %v7032
    %7074 = vmatprep.subr.bf16.mxu0 0
    %7075 = vmatpush1.bf16.msra.mxu0 %v7031
    %7076 = vmatprep.subr.bf16.mxu0 0
    %7077 = vmatpush1.bf16.msra.mxu0 %v7030
    %7078 = vmatprep.subr.bf16.mxu0 0
    %7079 = vmatpush2.bf16.msra.mxu0 %v7045
    %7080 = vmatprep.subr.bf16.mxu0 0
    %7081 = vmatpush2.bf16.msra.mxu0 %v7044
    %7082 = vmatprep.subr.bf16.mxu0 0
    %7083 = vmatpush2.bf16.msra.mxu0 %v7043
    %7084 = vmatprep.subr.bf16.mxu0 0
    %7085 = vmatpush2.bf16.msra.mxu0 %v7042
    %7086 = vmatprep.subr.bf16.mxu0 0
    %7087 = vmatpush2.bf16.msra.mxu0 %v7041
    %7088 = vmatprep.subr.bf16.mxu0 0
    %7089 = vmatpush2.bf16.msra.mxu0 %v7040
    %7090 = vmatprep.subr.bf16.mxu0 0
    %7091 = vmatpush2.bf16.msra.mxu0 %v7039
    %7092 = vmatprep.subr.bf16.mxu0 0
    %7093 = vmatpush2.bf16.msra.mxu0 %v7038
    %7094 = vmatprep.mubr.bf16.mxu0 %v6959
    %7095 = vmatmul.mubr.bf16.gmra.mxu0 %v6958
    %v7096 = vpop.f32.mrf.mxu0
    %v7097 = vadd.f32 0.0, %v7096
    %v7098 = vpop.f32.mrf.mxu0
    %v7099 = vpop.f32.mrf.mxu0
    %v7100 = vadd.f32 0.0, %v7099
    %v7101 = vpop.f32.mrf.mxu0
    %7102 = vmatprep.mubr.bf16.mxu0 %v6961
    %7103 = vmatmul.mubr.bf16.gmra.mxu0 %v6960
    %v7104 = vpop.f32.mrf.mxu0
    %v7105 = vadd.f32 0.0, %v7104
    %v7106 = vpop.f32.mrf.mxu0
    %v7107 = vpop.f32.mrf.mxu0
    %v7108 = vadd.f32 0.0, %v7107
    %v7109 = vpop.f32.mrf.mxu0
    %7110 = vmatprep.mubr.bf16.mxu0 %v6963
    %7111 = vmatmul.mubr.bf16.gmra.mxu0 %v6962
    %v7112 = vpop.f32.mrf.mxu0
    %v7113 = vadd.f32 0.0, %v7112
    %v7114 = vpop.f32.mrf.mxu0
    %v7115 = vpop.f32.mrf.mxu0
    %v7116 = vadd.f32 0.0, %v7115
    %v7117 = vpop.f32.mrf.mxu0
    %7118 = vmatprep.mubr.bf16.mxu0 %v6965
    %7119 = vmatmul.mubr.bf16.gmra.mxu0 %v6964
    %v7120 = vpop.f32.mrf.mxu0
    %v7121 = vadd.f32 0.0, %v7120
    %v7122 = vpop.f32.mrf.mxu0
    %v7123 = vpop.f32.mrf.mxu0
    %v7124 = vadd.f32 0.0, %v7123
    %v7125 = vpop.f32.mrf.mxu0
    %7126 = vdwg.mxu0
    %7127 = vadd.xlane.f32.xlu0 %v7097
    %v7128 = vpop.xlane.xlu0 %7127
    %7129 = vadd.xlane.f32.xlu0 %v7100
    %v7130 = vpop.xlane.xlu0 %7129
    %7131 = vadd.xlane.f32.xlu0 %v7105
    %v7132 = vpop.xlane.xlu0 %7131
    %7133 = vadd.xlane.f32.xlu0 %v7108
    %v7134 = vpop.xlane.xlu0 %7133
    %7135 = vadd.xlane.f32.xlu0 %v7113
    %v7136 = vpop.xlane.xlu0 %7135
    %7137 = vadd.xlane.f32.xlu0 %v7116
    %v7138 = vpop.xlane.xlu0 %7137
    %7139 = vadd.xlane.f32.xlu0 %v7121
    %v7140 = vpop.xlane.xlu0 %7139
    %7141 = vadd.xlane.f32.xlu0 %v7124
    %v7142 = vpop.xlane.xlu0 %7141
    %v7143 = vmul.f32 %v7128, %v1797
    %v7144 = vmul.f32 %v7130, %v1797
    %v7145 = vmul.f32 %v7132, %v1797
    %v7146 = vmul.f32 %v7134, %v1797
    %v7147 = vmul.f32 %v7136, %v1797
    %v7148 = vmul.f32 %v7138, %v1797
    %v7149 = vmul.f32 %v7140, %v1797
    %v7150 = vmul.f32 %v7142, %v1797
    %v7151 = vsub.f32 %v7097, %v7143
    %v7152 = vsub.f32 %v7100, %v7144
    %v7153 = vsub.f32 %v7105, %v7145
    %v7154 = vsub.f32 %v7108, %v7146
    %v7155 = vsub.f32 %v7113, %v7147
    %v7156 = vsub.f32 %v7116, %v7148
    %v7157 = vsub.f32 %v7121, %v7149
    %v7158 = vsub.f32 %v7124, %v7150
    %v7159 = vmul.f32 %v7151, %v7151
    %v7160 = vmul.f32 %v7152, %v7152
    %v7161 = vmul.f32 %v7153, %v7153
    %v7162 = vmul.f32 %v7154, %v7154
    %v7163 = vmul.f32 %v7155, %v7155
    %v7164 = vmul.f32 %v7156, %v7156
    %v7165 = vmul.f32 %v7157, %v7157
    %v7166 = vmul.f32 %v7158, %v7158
    %7167 = vadd.xlane.f32.xlu0 %v7159
    %v7168 = vpop.xlane.xlu0 %7167
    %7169 = vadd.xlane.f32.xlu0 %v7160
    %v7170 = vpop.xlane.xlu0 %7169
    %7171 = vadd.xlane.f32.xlu0 %v7161
    %v7172 = vpop.xlane.xlu0 %7171
    %7173 = vadd.xlane.f32.xlu0 %v7162
    %v7174 = vpop.xlane.xlu0 %7173
    %7175 = vadd.xlane.f32.xlu0 %v7163
    %v7176 = vpop.xlane.xlu0 %7175
    %7177 = vadd.xlane.f32.xlu0 %v7164
    %v7178 = vpop.xlane.xlu0 %7177
    %7179 = vadd.xlane.f32.xlu0 %v7165
    %v7180 = vpop.xlane.xlu0 %7179
    %7181 = vadd.xlane.f32.xlu0 %v7166
    %v7182 = vpop.xlane.xlu0 %7181
    %v7183 = vmul.f32 %v7168, %v1797
    %v7184 = vmul.f32 %v7170, %v1797
    %v7185 = vmul.f32 %v7172, %v1797
    %v7186 = vmul.f32 %v7174, %v1797
    %v7187 = vmul.f32 %v7176, %v1797
    %v7188 = vmul.f32 %v7178, %v1797
    %v7189 = vmul.f32 %v7180, %v1797
    %v7190 = vmul.f32 %v7182, %v1797
    %v7191 = vadd.f32 %v7183, 1e-05
    %v7192 = vadd.f32 %v7184, 1e-05
    %v7193 = vadd.f32 %v7185, 1e-05
    %v7194 = vadd.f32 %v7186, 1e-05
    %v7195 = vadd.f32 %v7187, 1e-05
    %v7196 = vadd.f32 %v7188, 1e-05
    %v7197 = vadd.f32 %v7189, 1e-05
    %v7198 = vadd.f32 %v7190, 1e-05
    %v7199 = vrsqrt.pop %v7191
    %v7200 = vrsqrt.pop %v7192
    %v7201 = vrsqrt.pop %v7193
    %v7202 = vrsqrt.pop %v7194
    %v7203 = vrsqrt.pop %v7195
    %v7204 = vrsqrt.pop %v7196
    %v7205 = vrsqrt.pop %v7197
    %v7206 = vrsqrt.pop %v7198
    %v7207 = vmul.f32 %v7151, %v7199
    %v7208 = vmul.f32 %v7152, %v7200
    %v7209 = vmul.f32 %v7153, %v7201
    %v7210 = vmul.f32 %v7154, %v7202
    %v7211 = vmul.f32 %v7155, %v7203
    %v7212 = vmul.f32 %v7156, %v7204
    %v7213 = vmul.f32 %v7157, %v7205
    %v7214 = vmul.f32 %v7158, %v7206
    %v7215 = vlaneseq
    %v7216 = vshrl.u32 %v7215, 7
    %v7217 = vsub.s32 2, %v7216
    %v7218 = vrot.slane %v4996, %v7217
    %v7219 = vmul.f32 %v7207, %v7218
    %v7220 = vmul.f32 %v7208, %v7218
    %v7221 = vmul.f32 %v7209, %v7218
    %v7222 = vmul.f32 %v7210, %v7218
    %v7223 = vmul.f32 %v7211, %v7218
    %v7224 = vmul.f32 %v7212, %v7218
    %v7225 = vmul.f32 %v7213, %v7218
    %v7226 = vmul.f32 %v7214, %v7218
    %v7227 = vlaneseq
    %v7228 = vshrl.u32 %v7227, 7
    %v7229 = vsub.s32 3, %v7228
    %v7230 = vrot.slane %v4996, %v7229
    %v7231 = vadd.f32 %v7219, %v7230
    %v7232 = vadd.f32 %v7220, %v7230
    %v7233 = vadd.f32 %v7221, %v7230
    %v7234 = vadd.f32 %v7222, %v7230
    %v7235 = vadd.f32 %v7223, %v7230
    %v7236 = vadd.f32 %v7224, %v7230
    %v7237 = vadd.f32 %v7225, %v7230
    %v7238 = vadd.f32 %v7226, %v7230
    %v7239 = vadd.f32 %v4870, %v7231
    %v7240 = vadd.f32 %v4871, %v7232
    %v7241 = vadd.f32 %v4872, %v7233
    %v7242 = vadd.f32 %v4873, %v7234
    %v7243 = vadd.f32 %v4874, %v7235
    %v7244 = vadd.f32 %v4875, %v7236
    %v7245 = vadd.f32 %v4876, %v7237
    %v7246 = vadd.f32 %v4877, %v7238
    %s7247 = scalar_lea.vmem [#allocation2], 576
    %v7248 = vld [vmem:[%s7247] sm:$0xff]
    %v7249 = vld [vmem:[%s7247 + $0x8] sm:$0xf]
    %v7250 = vld [vmem:[%s7247 + $0xc] sm:$0xff]
    %v7251 = vld [vmem:[%s7247 + $0x14] sm:$0xf]
    %v7252 = vld [vmem:[%s7247 + $0x18] sm:$0xff]
    %v7253 = vld [vmem:[%s7247 + $0x20] sm:$0xf]
    %v7254 = vld [vmem:[%s7247 + $0x24] sm:$0xff]
    %v7255 = vld [vmem:[%s7247 + $0x2c] sm:$0xf]
    %v7256 = vld [vmem:[%s7247 + $0x30] sm:$0xff]
    %v7257 = vld [vmem:[%s7247 + $0x38] sm:$0xf]
    %v7258 = vld [vmem:[%s7247 + $0x3c] sm:$0xff]
    %v7259 = vld [vmem:[%s7247 + $0x44] sm:$0xf]
    %v7260 = vld [vmem:[%s7247 + $0x48] sm:$0xff]
    %v7261 = vld [vmem:[%s7247 + $0x50] sm:$0xf]
    %v7262 = vld [vmem:[%s7247 + $0x54] sm:$0xff]
    %v7263 = vld [vmem:[%s7247 + $0x5c] sm:$0xf]
    %v7264 = vld [vmem:[%s7247 + $0x60] sm:$0xff]
    %v7265 = vld [vmem:[%s7247 + $0x68] sm:$0xf]
    %v7266 = vld [vmem:[%s7247 + $0x6c] sm:$0xff]
    %v7267 = vld [vmem:[%s7247 + $0x74] sm:$0xf]
    %v7268 = vld [vmem:[%s7247 + $0x78] sm:$0xff]
    %v7269 = vld [vmem:[%s7247 + $0x80] sm:$0xf]
    %v7270 = vld [vmem:[%s7247 + $0x84] sm:$0xff]
    %v7271 = vld [vmem:[%s7247 + $0x8c] sm:$0xf]
    %v7272 = vld [vmem:[%s7247 + $0x90] sm:$0xff]
    %v7273 = vld [vmem:[%s7247 + $0x98] sm:$0xf]
    %v7274 = vld [vmem:[%s7247 + $0x9c] sm:$0xff]
    %v7275 = vld [vmem:[%s7247 + $0xa4] sm:$0xf]
    %v7276 = vld [vmem:[%s7247 + $0xa8] sm:$0xff]
    %v7277 = vld [vmem:[%s7247 + $0xb0] sm:$0xf]
    %v7278 = vld [vmem:[%s7247 + $0xb4] sm:$0xff]
    %v7279 = vld [vmem:[%s7247 + $0xbc] sm:$0xf]
    %s7280 = scalar_lea.vmem [#allocation4], 192
    %v7281 = vld [vmem:[%s7280] sm:$0xf]
    %v7282 = vld [vmem:[%s7280 + $0x4] sm:$0xf]
    %v7283 = vld [vmem:[%s7280 + $0x8] sm:$0xf]
    %v7284 = vld [vmem:[%s7280 + $0xc] sm:$0xf]
    %v7285 = vld [vmem:[%s7280 + $0x10] sm:$0xf]
    %v7286 = vld [vmem:[%s7280 + $0x14] sm:$0xf]
    %v7287 = vld [vmem:[%s7280 + $0x18] sm:$0xf]
    %v7288 = vld [vmem:[%s7280 + $0x1c] sm:$0xf]
    %v7289 = vld [vmem:[%s7280 + $0x20] sm:$0xf]
    %v7290 = vld [vmem:[%s7280 + $0x24] sm:$0xf]
    %v7291 = vld [vmem:[%s7280 + $0x28] sm:$0xf]
    %v7292 = vld [vmem:[%s7280 + $0x2c] sm:$0xf]
    %v7293 = vld [vmem:[%s7280 + $0x30] sm:$0xf]
    %v7294 = vld [vmem:[%s7280 + $0x34] sm:$0xf]
    %v7295 = vld [vmem:[%s7280 + $0x38] sm:$0xf]
    %v7296 = vld [vmem:[%s7280 + $0x3c] sm:$0xf]
    %s7297 = scalar_lea.vmem [#allocation6], 384
    %v7298 = vld [vmem:[%s7297] sm:$0xff]
    %v7299 = vld [vmem:[%s7297 + $0x8] sm:$0xff]
    %v7300 = vld [vmem:[%s7297 + $0x10] sm:$0xff]
    %v7301 = vld [vmem:[%s7297 + $0x18] sm:$0xff]
    %v7302 = vld [vmem:[%s7297 + $0x20] sm:$0xff]
    %v7303 = vld [vmem:[%s7297 + $0x28] sm:$0xff]
    %v7304 = vld [vmem:[%s7297 + $0x30] sm:$0xff]
    %v7305 = vld [vmem:[%s7297 + $0x38] sm:$0xff]
    %v7306 = vld [vmem:[%s7297 + $0x40] sm:$0xff]
    %v7307 = vld [vmem:[%s7297 + $0x48] sm:$0xff]
    %v7308 = vld [vmem:[%s7297 + $0x50] sm:$0xff]
    %v7309 = vld [vmem:[%s7297 + $0x58] sm:$0xff]
    %v7310 = vld [vmem:[%s7297 + $0x60] sm:$0xff]
    %v7311 = vld [vmem:[%s7297 + $0x68] sm:$0xff]
    %v7312 = vld [vmem:[%s7297 + $0x70] sm:$0xff]
    %v7313 = vld [vmem:[%s7297 + $0x78] sm:$0xff]
    %s7314 = scalar_lea.vmem [#allocation7], 384
    %v7315 = vld [vmem:[%s7314] sm:$0xff]
    %v7316 = vld [vmem:[%s7314 + $0x8] sm:$0xff]
    %v7317 = vld [vmem:[%s7314 + $0x10] sm:$0xff]
    %v7318 = vld [vmem:[%s7314 + $0x18] sm:$0xff]
    %v7319 = vld [vmem:[%s7314 + $0x20] sm:$0xff]
    %v7320 = vld [vmem:[%s7314 + $0x28] sm:$0xff]
    %v7321 = vld [vmem:[%s7314 + $0x30] sm:$0xff]
    %v7322 = vld [vmem:[%s7314 + $0x38] sm:$0xff]
    %v7323 = vld [vmem:[%s7314 + $0x40] sm:$0xff]
    %v7324 = vld [vmem:[%s7314 + $0x48] sm:$0xff]
    %v7325 = vld [vmem:[%s7314 + $0x50] sm:$0xff]
    %v7326 = vld [vmem:[%s7314 + $0x58] sm:$0xff]
    %v7327 = vld [vmem:[%s7314 + $0x60] sm:$0xff]
    %v7328 = vld [vmem:[%s7314 + $0x68] sm:$0xff]
    %v7329 = vld [vmem:[%s7314 + $0x70] sm:$0xff]
    %v7330 = vld [vmem:[%s7314 + $0x78] sm:$0xff]
    %s7331 = scalar_lea.vmem [#allocation9], 384
    %v7332 = vld [vmem:[%s7331] sm:$0xf]
    %v7333 = vld [vmem:[%s7331 + $0x4] sm:$0xf]
    %v7334 = vld [vmem:[%s7331 + $0x8] sm:$0xf]
    %v7335 = vld [vmem:[%s7331 + $0xc] sm:$0xf]
    %v7336 = vld [vmem:[%s7331 + $0x10] sm:$0xf]
    %v7337 = vld [vmem:[%s7331 + $0x14] sm:$0xf]
    %v7338 = vld [vmem:[%s7331 + $0x18] sm:$0xf]
    %v7339 = vld [vmem:[%s7331 + $0x1c] sm:$0xf]
    %v7340 = vld [vmem:[%s7331 + $0x20] sm:$0xf]
    %v7341 = vld [vmem:[%s7331 + $0x24] sm:$0xf]
    %v7342 = vld [vmem:[%s7331 + $0x28] sm:$0xf]
    %v7343 = vld [vmem:[%s7331 + $0x2c] sm:$0xf]
    %v7344 = vld [vmem:[%s7331 + $0x30] sm:$0xf]
    %v7345 = vld [vmem:[%s7331 + $0x34] sm:$0xf]
    %v7346 = vld [vmem:[%s7331 + $0x38] sm:$0xf]
    %v7347 = vld [vmem:[%s7331 + $0x3c] sm:$0xf]
    %v7348 = vld [vmem:[%s7331 + $0x40] sm:$0xf]
    %v7349 = vld [vmem:[%s7331 + $0x44] sm:$0xf]
    %v7350 = vld [vmem:[%s7331 + $0x48] sm:$0xf]
    %v7351 = vld [vmem:[%s7331 + $0x4c] sm:$0xf]
    %v7352 = vld [vmem:[%s7331 + $0x50] sm:$0xf]
    %v7353 = vld [vmem:[%s7331 + $0x54] sm:$0xf]
    %v7354 = vld [vmem:[%s7331 + $0x58] sm:$0xf]
    %v7355 = vld [vmem:[%s7331 + $0x5c] sm:$0xf]
    %v7356 = vld [vmem:[%s7331 + $0x60] sm:$0xf]
    %v7357 = vld [vmem:[%s7331 + $0x64] sm:$0xf]
    %v7358 = vld [vmem:[%s7331 + $0x68] sm:$0xf]
    %v7359 = vld [vmem:[%s7331 + $0x6c] sm:$0xf]
    %v7360 = vld [vmem:[%s7331 + $0x70] sm:$0xf]
    %v7361 = vld [vmem:[%s7331 + $0x74] sm:$0xf]
    %v7362 = vld [vmem:[%s7331 + $0x78] sm:$0xf]
    %v7363 = vld [vmem:[%s7331 + $0x7c] sm:$0xf]
    %s7364 = scalar_lea.vmem [#allocation10], 12
    %v7365 = vld [vmem:[%s7364] sm:$0xf]
    %v7366 = vpack.c.bf16 %v7240, %v7239
    %v7367 = vpack.c.bf16 %v7242, %v7241
    %v7368 = vpack.c.bf16 %v7244, %v7243
    %v7369 = vpack.c.bf16 %v7246, %v7245
    %v7402 = vunpack.c.l.b16 %v7248
    %v7403 = vunpack.c.h.b16 %v7248
    %v7404 = vunpack.c.l.b16 %v7249
    %v7405 = vunpack.c.l.b16 %v7250
    %v7406 = vunpack.c.h.b16 %v7250
    %v7407 = vunpack.c.l.b16 %v7251
    %v7408 = vunpack.c.l.b16 %v7252
    %v7409 = vunpack.c.h.b16 %v7252
    %v7410 = vunpack.c.l.b16 %v7253
    %v7411 = vunpack.c.l.b16 %v7254
    %v7412 = vunpack.c.h.b16 %v7254
    %v7413 = vunpack.c.l.b16 %v7255
    %v7414 = vunpack.c.l.b16 %v7256
    %v7415 = vunpack.c.h.b16 %v7256
    %v7416 = vunpack.c.l.b16 %v7257
    %v7417 = vunpack.c.l.b16 %v7258
    %v7418 = vunpack.c.h.b16 %v7258
    %v7419 = vunpack.c.l.b16 %v7259
    %v7420 = vunpack.c.l.b16 %v7260
    %v7421 = vunpack.c.h.b16 %v7260
    %v7422 = vunpack.c.l.b16 %v7261
    %v7423 = vunpack.c.l.b16 %v7262
    %v7424 = vunpack.c.h.b16 %v7262
    %v7425 = vunpack.c.l.b16 %v7263
    %v7426 = vunpack.c.l.b16 %v7264
    %v7427 = vunpack.c.h.b16 %v7264
    %v7428 = vunpack.c.l.b16 %v7265
    %v7429 = vunpack.c.l.b16 %v7266
    %v7430 = vunpack.c.h.b16 %v7266
    %v7431 = vunpack.c.l.b16 %v7267
    %v7432 = vunpack.c.l.b16 %v7268
    %v7433 = vunpack.c.h.b16 %v7268
    %v7434 = vunpack.c.l.b16 %v7269
    %v7435 = vunpack.c.l.b16 %v7270
    %v7436 = vunpack.c.h.b16 %v7270
    %v7437 = vunpack.c.l.b16 %v7271
    %v7438 = vunpack.c.l.b16 %v7272
    %v7439 = vunpack.c.h.b16 %v7272
    %v7440 = vunpack.c.l.b16 %v7273
    %v7441 = vunpack.c.l.b16 %v7274
    %v7442 = vunpack.c.h.b16 %v7274
    %v7443 = vunpack.c.l.b16 %v7275
    %v7444 = vunpack.c.l.b16 %v7276
    %v7445 = vunpack.c.h.b16 %v7276
    %v7446 = vunpack.c.l.b16 %v7277
    %v7447 = vunpack.c.l.b16 %v7278
    %v7448 = vunpack.c.h.b16 %v7278
    %v7449 = vunpack.c.l.b16 %v7279
    %v7450 = vpack.c.b16 %v7405, %v7402
    %v7451 = vpack.c.b16 %v7406, %v7403
    %v7452 = vpack.c.b16 %v7407, %v7404
    %v7453 = vpack.c.b16 %v7411, %v7408
    %v7454 = vpack.c.b16 %v7412, %v7409
    %v7455 = vpack.c.b16 %v7413, %v7410
    %v7456 = vpack.c.b16 %v7417, %v7414
    %v7457 = vpack.c.b16 %v7418, %v7415
    %v7458 = vpack.c.b16 %v7419, %v7416
    %v7459 = vpack.c.b16 %v7423, %v7420
    %v7460 = vpack.c.b16 %v7424, %v7421
    %v7461 = vpack.c.b16 %v7425, %v7422
    %v7462 = vpack.c.b16 %v7429, %v7426
    %v7463 = vpack.c.b16 %v7430, %v7427
    %v7464 = vpack.c.b16 %v7431, %v7428
    %v7465 = vpack.c.b16 %v7435, %v7432
    %v7466 = vpack.c.b16 %v7436, %v7433
    %v7467 = vpack.c.b16 %v7437, %v7434
    %v7468 = vpack.c.b16 %v7441, %v7438
    %v7469 = vpack.c.b16 %v7442, %v7439
    %v7470 = vpack.c.b16 %v7443, %v7440
    %v7471 = vpack.c.b16 %v7447, %v7444
    %v7472 = vpack.c.b16 %v7448, %v7445
    %v7473 = vpack.c.b16 %v7449, %v7446
    %7498 = vmatprep.subr.bf16.mxu0 %v7472
    %7499 = vmatpush1.bf16.msra.mxu0 %v7471
    %7500 = vmatprep.subr.bf16.mxu0 %v7469
    %7501 = vmatpush1.bf16.msra.mxu0 %v7468
    %7502 = vmatprep.subr.bf16.mxu0 %v7466
    %7503 = vmatpush1.bf16.msra.mxu0 %v7465
    %7504 = vmatprep.subr.bf16.mxu0 %v7463
    %7505 = vmatpush1.bf16.msra.mxu0 %v7462
    %7506 = vmatprep.subr.bf16.mxu0 %v7460
    %7507 = vmatpush1.bf16.msra.mxu0 %v7459
    %7508 = vmatprep.subr.bf16.mxu0 %v7457
    %7509 = vmatpush1.bf16.msra.mxu0 %v7456
    %7510 = vmatprep.subr.bf16.mxu0 %v7454
    %7511 = vmatpush1.bf16.msra.mxu0 %v7453
    %7512 = vmatprep.subr.bf16.mxu0 %v7451
    %7513 = vmatpush1.bf16.msra.mxu0 %v7450
    %7514 = vmatprep.subr.bf16.mxu0 0
    %7515 = vmatpush2.bf16.msra.mxu0 0
    %7516 = vmatprep.subr.bf16.mxu0 0
    %7517 = vmatpush2.bf16.msra.mxu0 0
    %7518 = vmatprep.subr.bf16.mxu0 0
    %7519 = vmatpush2.bf16.msra.mxu0 0
    %7520 = vmatprep.subr.bf16.mxu0 0
    %7521 = vmatpush2.bf16.msra.mxu0 0
    %7522 = vmatprep.subr.bf16.mxu0 0
    %7523 = vmatpush2.bf16.msra.mxu0 0
    %7524 = vmatprep.subr.bf16.mxu0 0
    %7525 = vmatpush2.bf16.msra.mxu0 0
    %7526 = vmatprep.subr.bf16.mxu0 0
    %7527 = vmatpush2.bf16.msra.mxu0 0
    %7528 = vmatprep.subr.bf16.mxu0 0
    %7529 = vmatpush2.bf16.msra.mxu0 0
    %7530 = vmatprep.mubr.bf16.mxu0 0
    %7531 = vmatmul.mubr.bf16.gmra.mxu0 %v7366
    %v7532 = vpop.f32.mrf.mxu0
    %v7533 = vadd.f32 0.0, %v7532
    %v7534 = vpop.f32.mrf.mxu0
    %v7535 = vadd.f32 0.0, %v7534
    %v7536 = vpop.f32.mrf.mxu0
    %v7537 = vadd.f32 0.0, %v7536
    %v7538 = vpop.f32.mrf.mxu0
    %v7539 = vadd.f32 0.0, %v7538
    %7540 = vmatprep.mubr.bf16.mxu0 0
    %7541 = vmatmul.mubr.bf16.gmra.mxu0 %v7367
    %v7542 = vpop.f32.mrf.mxu0
    %v7543 = vadd.f32 0.0, %v7542
    %v7544 = vpop.f32.mrf.mxu0
    %v7545 = vadd.f32 0.0, %v7544
    %v7546 = vpop.f32.mrf.mxu0
    %v7547 = vadd.f32 0.0, %v7546
    %v7548 = vpop.f32.mrf.mxu0
    %v7549 = vadd.f32 0.0, %v7548
    %7550 = vmatprep.mubr.bf16.mxu0 0
    %7551 = vmatmul.mubr.bf16.gmra.mxu0 %v7368
    %v7552 = vpop.f32.mrf.mxu0
    %v7553 = vadd.f32 0.0, %v7552
    %v7554 = vpop.f32.mrf.mxu0
    %v7555 = vadd.f32 0.0, %v7554
    %v7556 = vpop.f32.mrf.mxu0
    %v7557 = vadd.f32 0.0, %v7556
    %v7558 = vpop.f32.mrf.mxu0
    %v7559 = vadd.f32 0.0, %v7558
    %7560 = vmatprep.mubr.bf16.mxu0 0
    %7561 = vmatmul.mubr.bf16.gmra.mxu0 %v7369
    %v7562 = vpop.f32.mrf.mxu0
    %v7563 = vadd.f32 0.0, %v7562
    %v7564 = vpop.f32.mrf.mxu0
    %v7565 = vadd.f32 0.0, %v7564
    %v7566 = vpop.f32.mrf.mxu0
    %v7567 = vadd.f32 0.0, %v7566
    %v7568 = vpop.f32.mrf.mxu0
    %v7569 = vadd.f32 0.0, %v7568
    %7570 = vdwg.mxu0
    %7571 = vmatprep.subr.bf16.mxu0 0
    %7572 = vmatpush1.bf16.msra.mxu0 %v7473
    %7573 = vmatprep.subr.bf16.mxu0 0
    %7574 = vmatpush1.bf16.msra.mxu0 %v7470
    %7575 = vmatprep.subr.bf16.mxu0 0
    %7576 = vmatpush1.bf16.msra.mxu0 %v7467
    %7577 = vmatprep.subr.bf16.mxu0 0
    %7578 = vmatpush1.bf16.msra.mxu0 %v7464
    %7579 = vmatprep.subr.bf16.mxu0 0
    %7580 = vmatpush1.bf16.msra.mxu0 %v7461
    %7581 = vmatprep.subr.bf16.mxu0 0
    %7582 = vmatpush1.bf16.msra.mxu0 %v7458
    %7583 = vmatprep.subr.bf16.mxu0 0
    %7584 = vmatpush1.bf16.msra.mxu0 %v7455
    %7585 = vmatprep.subr.bf16.mxu0 0
    %7586 = vmatpush1.bf16.msra.mxu0 %v7452
    %7587 = vmatprep.subr.bf16.mxu0 0
    %7588 = vmatpush2.bf16.msra.mxu0 0
    %7589 = vmatprep.subr.bf16.mxu0 0
    %7590 = vmatpush2.bf16.msra.mxu0 0
    %7591 = vmatprep.subr.bf16.mxu0 0
    %7592 = vmatpush2.bf16.msra.mxu0 0
    %7593 = vmatprep.subr.bf16.mxu0 0
    %7594 = vmatpush2.bf16.msra.mxu0 0
    %7595 = vmatprep.subr.bf16.mxu0 0
    %7596 = vmatpush2.bf16.msra.mxu0 0
    %7597 = vmatprep.subr.bf16.mxu0 0
    %7598 = vmatpush2.bf16.msra.mxu0 0
    %7599 = vmatprep.subr.bf16.mxu0 0
    %7600 = vmatpush2.bf16.msra.mxu0 0
    %7601 = vmatprep.subr.bf16.mxu0 0
    %7602 = vmatpush2.bf16.msra.mxu0 0
    %7603 = vmatprep.mubr.bf16.mxu0 0
    %7604 = vmatmul.mubr.bf16.gmra.mxu0 %v7366
    %v7605 = vpop.f32.mrf.mxu0
    %v7606 = vadd.f32 0.0, %v7605
    %v7607 = vpop.f32.mrf.mxu0
    %v7608 = vpop.f32.mrf.mxu0
    %v7609 = vadd.f32 0.0, %v7608
    %v7610 = vpop.f32.mrf.mxu0
    %7611 = vmatprep.mubr.bf16.mxu0 0
    %7612 = vmatmul.mubr.bf16.gmra.mxu0 %v7367
    %v7613 = vpop.f32.mrf.mxu0
    %v7614 = vadd.f32 0.0, %v7613
    %v7615 = vpop.f32.mrf.mxu0
    %v7616 = vpop.f32.mrf.mxu0
    %v7617 = vadd.f32 0.0, %v7616
    %v7618 = vpop.f32.mrf.mxu0
    %7619 = vmatprep.mubr.bf16.mxu0 0
    %7620 = vmatmul.mubr.bf16.gmra.mxu0 %v7368
    %v7621 = vpop.f32.mrf.mxu0
    %v7622 = vadd.f32 0.0, %v7621
    %v7623 = vpop.f32.mrf.mxu0
    %v7624 = vpop.f32.mrf.mxu0
    %v7625 = vadd.f32 0.0, %v7624
    %v7626 = vpop.f32.mrf.mxu0
    %7627 = vmatprep.mubr.bf16.mxu0 0
    %7628 = vmatmul.mubr.bf16.gmra.mxu0 %v7369
    %v7629 = vpop.f32.mrf.mxu0
    %v7630 = vadd.f32 0.0, %v7629
    %v7631 = vpop.f32.mrf.mxu0
    %v7632 = vpop.f32.mrf.mxu0
    %v7633 = vadd.f32 0.0, %v7632
    %v7634 = vpop.f32.mrf.mxu0
    %7635 = vdwg.mxu0
    %vm7636 = vcmp.gt.f32.partialorder %v7533, 0.0
    %vm7637 = vcmp.gt.f32.partialorder %v7537, 0.0
    %vm7638 = vcmp.gt.f32.partialorder %v7543, 0.0
    %vm7639 = vcmp.gt.f32.partialorder %v7547, 0.0
    %vm7640 = vcmp.gt.f32.partialorder %v7553, 0.0
    %vm7641 = vcmp.gt.f32.partialorder %v7557, 0.0
    %vm7642 = vcmp.gt.f32.partialorder %v7563, 0.0
    %vm7643 = vcmp.gt.f32.partialorder %v7567, 0.0
    %v7644 = vadd.f32 %v7533, 1.0
    %v7645 = vadd.f32 %v7537, 1.0
    %v7646 = vadd.f32 %v7543, 1.0
    %v7647 = vadd.f32 %v7547, 1.0
    %v7648 = vadd.f32 %v7553, 1.0
    %v7649 = vadd.f32 %v7557, 1.0
    %v7650 = vadd.f32 %v7563, 1.0
    %v7651 = vadd.f32 %v7567, 1.0
    %v7652 = vmul.f32 %v7533, 1.442695
    %v7653 = vpow.pop %v7652
    %v7654 = vmul.f32 %v7537, 1.442695
    %v7655 = vpow.pop %v7654
    %v7656 = vmul.f32 %v7543, 1.442695
    %v7657 = vpow.pop %v7656
    %v7658 = vmul.f32 %v7547, 1.442695
    %v7659 = vpow.pop %v7658
    %v7660 = vmul.f32 %v7553, 1.442695
    %v7661 = vpow.pop %v7660
    %v7662 = vmul.f32 %v7557, 1.442695
    %v7663 = vpow.pop %v7662
    %v7664 = vmul.f32 %v7563, 1.442695
    %v7665 = vpow.pop %v7664
    %v7666 = vmul.f32 %v7567, 1.442695
    %v7667 = vpow.pop %v7666
    %v7668 = vsel %vm7636, %v7644, %v7653
    %v7669 = vsel %vm7637, %v7645, %v7655
    %v7670 = vsel %vm7638, %v7646, %v7657
    %v7671 = vsel %vm7639, %v7647, %v7659
    %v7672 = vsel %vm7640, %v7648, %v7661
    %v7673 = vsel %vm7641, %v7649, %v7663
    %v7674 = vsel %vm7642, %v7650, %v7665
    %v7675 = vsel %vm7643, %v7651, %v7667
    %vm7676 = vcmp.gt.f32.partialorder %v7535, 0.0
    %vm7677 = vcmp.gt.f32.partialorder %v7539, 0.0
    %vm7678 = vcmp.gt.f32.partialorder %v7545, 0.0
    %vm7679 = vcmp.gt.f32.partialorder %v7549, 0.0
    %vm7680 = vcmp.gt.f32.partialorder %v7555, 0.0
    %vm7681 = vcmp.gt.f32.partialorder %v7559, 0.0
    %vm7682 = vcmp.gt.f32.partialorder %v7565, 0.0
    %vm7683 = vcmp.gt.f32.partialorder %v7569, 0.0
    %v7684 = vadd.f32 %v7535, 1.0
    %v7685 = vadd.f32 %v7539, 1.0
    %v7686 = vadd.f32 %v7545, 1.0
    %v7687 = vadd.f32 %v7549, 1.0
    %v7688 = vadd.f32 %v7555, 1.0
    %v7689 = vadd.f32 %v7559, 1.0
    %v7690 = vadd.f32 %v7565, 1.0
    %v7691 = vadd.f32 %v7569, 1.0
    %v7692 = vmul.f32 %v7535, 1.442695
    %v7693 = vpow.pop %v7692
    %v7694 = vmul.f32 %v7539, 1.442695
    %v7695 = vpow.pop %v7694
    %v7696 = vmul.f32 %v7545, 1.442695
    %v7697 = vpow.pop %v7696
    %v7698 = vmul.f32 %v7549, 1.442695
    %v7699 = vpow.pop %v7698
    %v7700 = vmul.f32 %v7555, 1.442695
    %v7701 = vpow.pop %v7700
    %v7702 = vmul.f32 %v7559, 1.442695
    %v7703 = vpow.pop %v7702
    %v7704 = vmul.f32 %v7565, 1.442695
    %v7705 = vpow.pop %v7704
    %v7706 = vmul.f32 %v7569, 1.442695
    %v7707 = vpow.pop %v7706
    %v7708 = vsel %vm7676, %v7684, %v7693
    %v7709 = vsel %vm7677, %v7685, %v7695
    %v7710 = vsel %vm7678, %v7686, %v7697
    %v7711 = vsel %vm7679, %v7687, %v7699
    %v7712 = vsel %vm7680, %v7688, %v7701
    %v7713 = vsel %vm7681, %v7689, %v7703
    %v7714 = vsel %vm7682, %v7690, %v7705
    %v7715 = vsel %vm7683, %v7691, %v7707
    %v7716 = vmul.f32 %v7606, 0.0625
    %v7717 = vmul.f32 %v7609, 0.0625
    %v7718 = vmul.f32 %v7614, 0.0625
    %v7719 = vmul.f32 %v7617, 0.0625
    %v7720 = vmul.f32 %v7622, 0.0625
    %v7721 = vmul.f32 %v7625, 0.0625
    %v7722 = vmul.f32 %v7630, 0.0625
    %v7723 = vmul.f32 %v7633, 0.0625
    %v7724 = vpack.c.bf16 %v7669, %v7668
    %v7725 = vpack.c.bf16 %v7671, %v7670
    %v7726 = vpack.c.bf16 %v7673, %v7672
    %v7727 = vpack.c.bf16 %v7675, %v7674
    %v7728 = vpack.c.bf16 %v7709, %v7708
    %v7729 = vpack.c.bf16 %v7711, %v7710
    %v7730 = vpack.c.bf16 %v7713, %v7712
    %v7731 = vpack.c.bf16 %v7715, %v7714
    %v7732 = vpack.c.bf16 %v7717, %v7716
    %v7733 = vpack.c.bf16 %v7719, %v7718
    %v7734 = vpack.c.bf16 %v7721, %v7720
    %v7735 = vpack.c.bf16 %v7723, %v7722
    %7736 = vxpose.xlu0.c.b16.start [1/8] %v7728, 128
    %7737 = vxpose.xlu0.c.b16.cont [2/8] 0, 128
    %7738 = vxpose.xlu0.c.b16.cont [3/8] 0, 128
    %7739 = vxpose.xlu0.c.b16.cont [4/8] 0, 128
    %7740 = vxpose.xlu0.c.b16.cont [5/8] 0, 128
    %7741 = vxpose.xlu0.c.b16.cont [6/8] 0, 128
    %7742 = vxpose.xlu0.c.b16.cont [7/8] 0, 128
    %7743 = vxpose.xlu0.c.b16.end [8/8] 0, 128
    %v7744 = vpop.trf.xlu0
    %v7745 = vpop.trf.xlu0
    %v7746 = vpop.trf.xlu0
    %v7747 = vpop.trf.xlu0
    %v7748 = vpop.trf.xlu0
    %v7749 = vpop.trf.xlu0
    %v7750 = vpop.trf.xlu0
    %v7751 = vpop.trf.xlu0
    %v7753 = vsel %vm643, %v7744, 0
    %v7756 = vsel %vm643, %v7745, 0
    %v7759 = vsel %vm643, %v7746, 0
    %v7762 = vsel %vm643, %v7747, 0
    %v7765 = vsel %vm643, %v7748, 0
    %v7768 = vsel %vm643, %v7749, 0
    %v7771 = vsel %vm643, %v7750, 0
    %v7774 = vsel %vm643, %v7751, 0
    %7776 = vmatprep.subr.bf16.mxu0 0
    %7777 = vmatpush1.bf16.msra.mxu0 0
    %7778 = vmatprep.subr.bf16.mxu0 0
    %7779 = vmatpush1.bf16.msra.mxu0 0
    %7780 = vmatprep.subr.bf16.mxu0 0
    %7781 = vmatpush1.bf16.msra.mxu0 0
    %7782 = vmatprep.subr.bf16.mxu0 0
    %7783 = vmatpush1.bf16.msra.mxu0 0
    %7784 = vmatprep.subr.bf16.mxu0 0
    %7785 = vmatpush1.bf16.msra.mxu0 0
    %7786 = vmatprep.subr.bf16.mxu0 0
    %7787 = vmatpush1.bf16.msra.mxu0 0
    %7788 = vmatprep.subr.bf16.mxu0 0
    %7789 = vmatpush1.bf16.msra.mxu0 0
    %7790 = vmatprep.subr.bf16.mxu0 0
    %7791 = vmatpush1.bf16.msra.mxu0 %v7732
    %7792 = vmatprep.subr.bf16.mxu0 0
    %7793 = vmatpush2.bf16.msra.mxu0 0
    %7794 = vmatprep.subr.bf16.mxu0 0
    %7795 = vmatpush2.bf16.msra.mxu0 0
    %7796 = vmatprep.subr.bf16.mxu0 0
    %7797 = vmatpush2.bf16.msra.mxu0 0
    %7798 = vmatprep.subr.bf16.mxu0 0
    %7799 = vmatpush2.bf16.msra.mxu0 0
    %7800 = vmatprep.subr.bf16.mxu0 0
    %7801 = vmatpush2.bf16.msra.mxu0 0
    %7802 = vmatprep.subr.bf16.mxu0 0
    %7803 = vmatpush2.bf16.msra.mxu0 0
    %7804 = vmatprep.subr.bf16.mxu0 0
    %7805 = vmatpush2.bf16.msra.mxu0 0
    %7806 = vmatprep.subr.bf16.mxu0 0
    %7807 = vmatpush2.bf16.msra.mxu0 0
    %7808 = vmatprep.mubr.bf16.mxu0 0
    %7809 = vmatmul.mubr.bf16.gmra.mxu0 %v7753
    %v7810 = vpop.f32.mrf.mxu0
    %v7811 = vadd.f32 0.0, %v7810
    %v7812 = vpop.f32.mrf.mxu0
    %v7813 = vpop.f32.mrf.mxu0
    %v7814 = vadd.f32 0.0, %v7813
    %v7815 = vpop.f32.mrf.mxu0
    %7816 = vmatprep.mubr.bf16.mxu0 0
    %7817 = vmatmul.mubr.bf16.gmra.mxu0 %v7756
    %v7818 = vpop.f32.mrf.mxu0
    %v7819 = vadd.f32 0.0, %v7818
    %v7820 = vpop.f32.mrf.mxu0
    %v7821 = vpop.f32.mrf.mxu0
    %v7822 = vadd.f32 0.0, %v7821
    %v7823 = vpop.f32.mrf.mxu0
    %7824 = vmatprep.mubr.bf16.mxu0 0
    %7825 = vmatmul.mubr.bf16.gmra.mxu0 %v7759
    %v7826 = vpop.f32.mrf.mxu0
    %v7827 = vadd.f32 0.0, %v7826
    %v7828 = vpop.f32.mrf.mxu0
    %v7829 = vpop.f32.mrf.mxu0
    %v7830 = vadd.f32 0.0, %v7829
    %v7831 = vpop.f32.mrf.mxu0
    %7832 = vmatprep.mubr.bf16.mxu0 0
    %7833 = vmatmul.mubr.bf16.gmra.mxu0 %v7762
    %v7834 = vpop.f32.mrf.mxu0
    %v7835 = vadd.f32 0.0, %v7834
    %v7836 = vpop.f32.mrf.mxu0
    %v7837 = vpop.f32.mrf.mxu0
    %v7838 = vadd.f32 0.0, %v7837
    %v7839 = vpop.f32.mrf.mxu0
    %7840 = vmatprep.mubr.bf16.mxu0 0
    %7841 = vmatmul.mubr.bf16.gmra.mxu0 %v7765
    %v7842 = vpop.f32.mrf.mxu0
    %v7843 = vadd.f32 0.0, %v7842
    %v7844 = vpop.f32.mrf.mxu0
    %v7845 = vpop.f32.mrf.mxu0
    %v7846 = vadd.f32 0.0, %v7845
    %v7847 = vpop.f32.mrf.mxu0
    %7848 = vmatprep.mubr.bf16.mxu0 0
    %7849 = vmatmul.mubr.bf16.gmra.mxu0 %v7768
    %v7850 = vpop.f32.mrf.mxu0
    %v7851 = vadd.f32 0.0, %v7850
    %v7852 = vpop.f32.mrf.mxu0
    %v7853 = vpop.f32.mrf.mxu0
    %v7854 = vadd.f32 0.0, %v7853
    %v7855 = vpop.f32.mrf.mxu0
    %7856 = vmatprep.mubr.bf16.mxu0 0
    %7857 = vmatmul.mubr.bf16.gmra.mxu0 %v7771
    %v7858 = vpop.f32.mrf.mxu0
    %v7859 = vadd.f32 0.0, %v7858
    %v7860 = vpop.f32.mrf.mxu0
    %v7861 = vpop.f32.mrf.mxu0
    %v7862 = vadd.f32 0.0, %v7861
    %v7863 = vpop.f32.mrf.mxu0
    %7864 = vmatprep.mubr.bf16.mxu0 0
    %7865 = vmatmul.mubr.bf16.gmra.mxu0 %v7774
    %v7866 = vpop.f32.mrf.mxu0
    %v7867 = vadd.f32 0.0, %v7866
    %v7868 = vpop.f32.mrf.mxu0
    %v7869 = vpop.f32.mrf.mxu0
    %v7870 = vadd.f32 0.0, %v7869
    %v7871 = vpop.f32.mrf.mxu0
    %7872 = vdwg.mxu0
    %v7873 = vmul.f32 %v7811, %v120
    %v7874 = vmul.f32 %v7814, %v121
    %v7875 = vmul.f32 %v7819, %v122
    %v7876 = vmul.f32 %v7822, %v123
    %v7877 = vmul.f32 %v7827, %v124
    %v7878 = vmul.f32 %v7830, %v125
    %v7879 = vmul.f32 %v7835, %v126
    %v7880 = vmul.f32 %v7838, %v127
    %v7881 = vmul.f32 %v7843, %v128
    %v7882 = vmul.f32 %v7846, %v129
    %v7883 = vmul.f32 %v7851, %v130
    %v7884 = vmul.f32 %v7854, %v131
    %v7885 = vmul.f32 %v7859, %v132
    %v7886 = vmul.f32 %v7862, %v133
    %v7887 = vmul.f32 %v7867, %v134
    %v7888 = vmul.f32 %v7870, %v135
    %v7889 = vpack.c.bf16 %v7874, %v7873
    %v7890 = vpack.c.bf16 %v7876, %v7875
    %v7891 = vpack.c.bf16 %v7878, %v7877
    %v7892 = vpack.c.bf16 %v7880, %v7879
    %v7893 = vpack.c.bf16 %v7882, %v7881
    %v7894 = vpack.c.bf16 %v7884, %v7883
    %v7895 = vpack.c.bf16 %v7886, %v7885
    %v7896 = vpack.c.bf16 %v7888, %v7887
    %7897 = vmatprep.subr.bf16.mxu0 0
    %7898 = vmatpush1.bf16.msra.mxu0 %v7896
    %7899 = vmatprep.subr.bf16.mxu0 0
    %7900 = vmatpush1.bf16.msra.mxu0 %v7895
    %7901 = vmatprep.subr.bf16.mxu0 0
    %7902 = vmatpush1.bf16.msra.mxu0 %v7894
    %7903 = vmatprep.subr.bf16.mxu0 0
    %7904 = vmatpush1.bf16.msra.mxu0 %v7893
    %7905 = vmatprep.subr.bf16.mxu0 0
    %7906 = vmatpush1.bf16.msra.mxu0 %v7892
    %7907 = vmatprep.subr.bf16.mxu0 0
    %7908 = vmatpush1.bf16.msra.mxu0 %v7891
    %7909 = vmatprep.subr.bf16.mxu0 0
    %7910 = vmatpush1.bf16.msra.mxu0 %v7890
    %7911 = vmatprep.subr.bf16.mxu0 0
    %7912 = vmatpush1.bf16.msra.mxu0 %v7889
    %7913 = vmatprep.subr.bf16.mxu0 0
    %7914 = vmatpush2.bf16.msra.mxu0 0
    %7915 = vmatprep.subr.bf16.mxu0 0
    %7916 = vmatpush2.bf16.msra.mxu0 0
    %7917 = vmatprep.subr.bf16.mxu0 0
    %7918 = vmatpush2.bf16.msra.mxu0 0
    %7919 = vmatprep.subr.bf16.mxu0 0
    %7920 = vmatpush2.bf16.msra.mxu0 0
    %7921 = vmatprep.subr.bf16.mxu0 0
    %7922 = vmatpush2.bf16.msra.mxu0 0
    %7923 = vmatprep.subr.bf16.mxu0 0
    %7924 = vmatpush2.bf16.msra.mxu0 0
    %7925 = vmatprep.subr.bf16.mxu0 0
    %7926 = vmatpush2.bf16.msra.mxu0 0
    %7927 = vmatprep.subr.bf16.mxu0 0
    %7928 = vmatpush2.bf16.msra.mxu0 0
    %7929 = vmatprep.mubr.bf16.mxu0 0
    %7930 = vmatmul.mubr.bf16.gmra.mxu0 %v7724
    %v7931 = vpop.f32.mrf.mxu0
    %v7932 = vadd.f32 0.0, %v7931
    %v7933 = vpop.f32.mrf.mxu0
    %v7934 = vpop.f32.mrf.mxu0
    %v7935 = vadd.f32 0.0, %v7934
    %v7936 = vpop.f32.mrf.mxu0
    %7937 = vdwg.mxu0
    %v7938 = vadd.f32 %v7708, %v7709
    %v7939 = vrot.slane %v7938, 4
    %v7940 = vadd.f32 %v7938, %v7939
    %v7941 = vrot.slane %v7940, 2
    %v7942 = vadd.f32 %v7940, %v7941
    %v7943 = vrot.slane %v7942, 1
    %v7944 = vadd.f32 %v7942, %v7943
    %v7945 = vmul.f32 %v7668, %v7944
    %v7946 = vmul.f32 %v7669, %v7944
    %v7947 = vpack.c.bf16 %v7946, %v7945
    %7948 = vmatprep.subr.bf16.mxu0 0
    %7949 = vmatpush1.bf16.msra.mxu0 %v143
    %7950 = vmatprep.subr.bf16.mxu0 0
    %7951 = vmatpush1.bf16.msra.mxu0 %v142
    %7952 = vmatprep.subr.bf16.mxu0 0
    %7953 = vmatpush1.bf16.msra.mxu0 %v141
    %7954 = vmatprep.subr.bf16.mxu0 0
    %7955 = vmatpush1.bf16.msra.mxu0 %v140
    %7956 = vmatprep.subr.bf16.mxu0 0
    %7957 = vmatpush1.bf16.msra.mxu0 %v139
    %7958 = vmatprep.subr.bf16.mxu0 0
    %7959 = vmatpush1.bf16.msra.mxu0 %v138
    %7960 = vmatprep.subr.bf16.mxu0 0
    %7961 = vmatpush1.bf16.msra.mxu0 %v137
    %7962 = vmatprep.subr.bf16.mxu0 0
    %7963 = vmatpush1.bf16.msra.mxu0 %v136
    %7964 = vmatprep.subr.bf16.mxu0 0
    %7965 = vmatpush2.bf16.msra.mxu0 0
    %7966 = vmatprep.subr.bf16.mxu0 0
    %7967 = vmatpush2.bf16.msra.mxu0 0
    %7968 = vmatprep.subr.bf16.mxu0 0
    %7969 = vmatpush2.bf16.msra.mxu0 0
    %7970 = vmatprep.subr.bf16.mxu0 0
    %7971 = vmatpush2.bf16.msra.mxu0 0
    %7972 = vmatprep.subr.bf16.mxu0 0
    %7973 = vmatpush2.bf16.msra.mxu0 0
    %7974 = vmatprep.subr.bf16.mxu0 0
    %7975 = vmatpush2.bf16.msra.mxu0 0
    %7976 = vmatprep.subr.bf16.mxu0 0
    %7977 = vmatpush2.bf16.msra.mxu0 0
    %7978 = vmatprep.subr.bf16.mxu0 0
    %7979 = vmatpush2.bf16.msra.mxu0 0
    %7980 = vmatprep.mubr.bf16.mxu0 0
    %7981 = vmatmul.mubr.bf16.gmra.mxu0 %v7947
    %v7982 = vpop.f32.mrf.mxu0
    %v7983 = vadd.f32 1e-06, %v7982
    %v7984 = vpop.f32.mrf.mxu0
    %v7985 = vpop.f32.mrf.mxu0
    %v7986 = vadd.f32 1e-06, %v7985
    %v7987 = vpop.f32.mrf.mxu0
    %7988 = vdwg.mxu0
    %v7989 = vrcp.pop %v7983
    %v7990 = vrcp.pop %v7986
    %v7991 = vmul.f32 %v7989, 16.0
    %v7992 = vmul.f32 %v7990, 16.0
    %v7993 = vmul.f32 %v7932, %v7991
    %v7994 = vmul.f32 %v7935, %v7992
    %7995 = vxpose.xlu0.c.b16.start [1/8] %v7729, 128
    %7996 = vxpose.xlu0.c.b16.cont [2/8] 0, 128
    %7997 = vxpose.xlu0.c.b16.cont [3/8] 0, 128
    %7998 = vxpose.xlu0.c.b16.cont [4/8] 0, 128
    %7999 = vxpose.xlu0.c.b16.cont [5/8] 0, 128
    %8000 = vxpose.xlu0.c.b16.cont [6/8] 0, 128
    %8001 = vxpose.xlu0.c.b16.cont [7/8] 0, 128
    %8002 = vxpose.xlu0.c.b16.end [8/8] 0, 128
    %v8003 = vpop.trf.xlu0
    %v8004 = vpop.trf.xlu0
    %v8005 = vpop.trf.xlu0
    %v8006 = vpop.trf.xlu0
    %v8007 = vpop.trf.xlu0
    %v8008 = vpop.trf.xlu0
    %v8009 = vpop.trf.xlu0
    %v8010 = vpop.trf.xlu0
    %v8012 = vsel %vm643, %v8003, 0
    %v8015 = vsel %vm643, %v8004, 0
    %v8018 = vsel %vm643, %v8005, 0
    %v8021 = vsel %vm643, %v8006, 0
    %v8024 = vsel %vm643, %v8007, 0
    %v8027 = vsel %vm643, %v8008, 0
    %v8030 = vsel %vm643, %v8009, 0
    %v8033 = vsel %vm643, %v8010, 0
    %8035 = vmatprep.subr.bf16.mxu0 0
    %8036 = vmatpush1.bf16.msra.mxu0 0
    %8037 = vmatprep.subr.bf16.mxu0 0
    %8038 = vmatpush1.bf16.msra.mxu0 0
    %8039 = vmatprep.subr.bf16.mxu0 0
    %8040 = vmatpush1.bf16.msra.mxu0 0
    %8041 = vmatprep.subr.bf16.mxu0 0
    %8042 = vmatpush1.bf16.msra.mxu0 0
    %8043 = vmatprep.subr.bf16.mxu0 0
    %8044 = vmatpush1.bf16.msra.mxu0 0
    %8045 = vmatprep.subr.bf16.mxu0 0
    %8046 = vmatpush1.bf16.msra.mxu0 0
    %8047 = vmatprep.subr.bf16.mxu0 0
    %8048 = vmatpush1.bf16.msra.mxu0 0
    %8049 = vmatprep.subr.bf16.mxu0 0
    %8050 = vmatpush1.bf16.msra.mxu0 %v7733
    %8051 = vmatprep.subr.bf16.mxu0 0
    %8052 = vmatpush2.bf16.msra.mxu0 0
    %8053 = vmatprep.subr.bf16.mxu0 0
    %8054 = vmatpush2.bf16.msra.mxu0 0
    %8055 = vmatprep.subr.bf16.mxu0 0
    %8056 = vmatpush2.bf16.msra.mxu0 0
    %8057 = vmatprep.subr.bf16.mxu0 0
    %8058 = vmatpush2.bf16.msra.mxu0 0
    %8059 = vmatprep.subr.bf16.mxu0 0
    %8060 = vmatpush2.bf16.msra.mxu0 0
    %8061 = vmatprep.subr.bf16.mxu0 0
    %8062 = vmatpush2.bf16.msra.mxu0 0
    %8063 = vmatprep.subr.bf16.mxu0 0
    %8064 = vmatpush2.bf16.msra.mxu0 0
    %8065 = vmatprep.subr.bf16.mxu0 0
    %8066 = vmatpush2.bf16.msra.mxu0 0
    %8067 = vmatprep.mubr.bf16.mxu0 0
    %8068 = vmatmul.mubr.bf16.gmra.mxu0 %v8012
    %v8069 = vpop.f32.mrf.mxu0
    %v8070 = vadd.f32 0.0, %v8069
    %v8071 = vpop.f32.mrf.mxu0
    %v8072 = vpop.f32.mrf.mxu0
    %v8073 = vadd.f32 0.0, %v8072
    %v8074 = vpop.f32.mrf.mxu0
    %8075 = vmatprep.mubr.bf16.mxu0 0
    %8076 = vmatmul.mubr.bf16.gmra.mxu0 %v8015
    %v8077 = vpop.f32.mrf.mxu0
    %v8078 = vadd.f32 0.0, %v8077
    %v8079 = vpop.f32.mrf.mxu0
    %v8080 = vpop.f32.mrf.mxu0
    %v8081 = vadd.f32 0.0, %v8080
    %v8082 = vpop.f32.mrf.mxu0
    %8083 = vmatprep.mubr.bf16.mxu0 0
    %8084 = vmatmul.mubr.bf16.gmra.mxu0 %v8018
    %v8085 = vpop.f32.mrf.mxu0
    %v8086 = vadd.f32 0.0, %v8085
    %v8087 = vpop.f32.mrf.mxu0
    %v8088 = vpop.f32.mrf.mxu0
    %v8089 = vadd.f32 0.0, %v8088
    %v8090 = vpop.f32.mrf.mxu0
    %8091 = vmatprep.mubr.bf16.mxu0 0
    %8092 = vmatmul.mubr.bf16.gmra.mxu0 %v8021
    %v8093 = vpop.f32.mrf.mxu0
    %v8094 = vadd.f32 0.0, %v8093
    %v8095 = vpop.f32.mrf.mxu0
    %v8096 = vpop.f32.mrf.mxu0
    %v8097 = vadd.f32 0.0, %v8096
    %v8098 = vpop.f32.mrf.mxu0
    %8099 = vmatprep.mubr.bf16.mxu0 0
    %8100 = vmatmul.mubr.bf16.gmra.mxu0 %v8024
    %v8101 = vpop.f32.mrf.mxu0
    %v8102 = vadd.f32 0.0, %v8101
    %v8103 = vpop.f32.mrf.mxu0
    %v8104 = vpop.f32.mrf.mxu0
    %v8105 = vadd.f32 0.0, %v8104
    %v8106 = vpop.f32.mrf.mxu0
    %8107 = vmatprep.mubr.bf16.mxu0 0
    %8108 = vmatmul.mubr.bf16.gmra.mxu0 %v8027
    %v8109 = vpop.f32.mrf.mxu0
    %v8110 = vadd.f32 0.0, %v8109
    %v8111 = vpop.f32.mrf.mxu0
    %v8112 = vpop.f32.mrf.mxu0
    %v8113 = vadd.f32 0.0, %v8112
    %v8114 = vpop.f32.mrf.mxu0
    %8115 = vmatprep.mubr.bf16.mxu0 0
    %8116 = vmatmul.mubr.bf16.gmra.mxu0 %v8030
    %v8117 = vpop.f32.mrf.mxu0
    %v8118 = vadd.f32 0.0, %v8117
    %v8119 = vpop.f32.mrf.mxu0
    %v8120 = vpop.f32.mrf.mxu0
    %v8121 = vadd.f32 0.0, %v8120
    %v8122 = vpop.f32.mrf.mxu0
    %8123 = vmatprep.mubr.bf16.mxu0 0
    %8124 = vmatmul.mubr.bf16.gmra.mxu0 %v8033
    %v8125 = vpop.f32.mrf.mxu0
    %v8126 = vadd.f32 0.0, %v8125
    %v8127 = vpop.f32.mrf.mxu0
    %v8128 = vpop.f32.mrf.mxu0
    %v8129 = vadd.f32 0.0, %v8128
    %v8130 = vpop.f32.mrf.mxu0
    %8131 = vdwg.mxu0
    %v8132 = vmul.f32 %v8070, %v120
    %v8133 = vmul.f32 %v8073, %v121
    %v8134 = vmul.f32 %v8078, %v122
    %v8135 = vmul.f32 %v8081, %v123
    %v8136 = vmul.f32 %v8086, %v124
    %v8137 = vmul.f32 %v8089, %v125
    %v8138 = vmul.f32 %v8094, %v126
    %v8139 = vmul.f32 %v8097, %v127
    %v8140 = vmul.f32 %v8102, %v128
    %v8141 = vmul.f32 %v8105, %v129
    %v8142 = vmul.f32 %v8110, %v130
    %v8143 = vmul.f32 %v8113, %v131
    %v8144 = vmul.f32 %v8118, %v132
    %v8145 = vmul.f32 %v8121, %v133
    %v8146 = vmul.f32 %v8126, %v134
    %v8147 = vmul.f32 %v8129, %v135
    %v8148 = vpack.c.bf16 %v8133, %v8132
    %v8149 = vpack.c.bf16 %v8135, %v8134
    %v8150 = vpack.c.bf16 %v8137, %v8136
    %v8151 = vpack.c.bf16 %v8139, %v8138
    %v8152 = vpack.c.bf16 %v8141, %v8140
    %v8153 = vpack.c.bf16 %v8143, %v8142
    %v8154 = vpack.c.bf16 %v8145, %v8144
    %v8155 = vpack.c.bf16 %v8147, %v8146
    %8156 = vmatprep.subr.bf16.mxu0 0
    %8157 = vmatpush1.bf16.msra.mxu0 %v8155
    %8158 = vmatprep.subr.bf16.mxu0 0
    %8159 = vmatpush1.bf16.msra.mxu0 %v8154
    %8160 = vmatprep.subr.bf16.mxu0 0
    %8161 = vmatpush1.bf16.msra.mxu0 %v8153
    %8162 = vmatprep.subr.bf16.mxu0 0
    %8163 = vmatpush1.bf16.msra.mxu0 %v8152
    %8164 = vmatprep.subr.bf16.mxu0 0
    %8165 = vmatpush1.bf16.msra.mxu0 %v8151
    %8166 = vmatprep.subr.bf16.mxu0 0
    %8167 = vmatpush1.bf16.msra.mxu0 %v8150
    %8168 = vmatprep.subr.bf16.mxu0 0
    %8169 = vmatpush1.bf16.msra.mxu0 %v8149
    %8170 = vmatprep.subr.bf16.mxu0 0
    %8171 = vmatpush1.bf16.msra.mxu0 %v8148
    %8172 = vmatprep.subr.bf16.mxu0 0
    %8173 = vmatpush2.bf16.msra.mxu0 0
    %8174 = vmatprep.subr.bf16.mxu0 0
    %8175 = vmatpush2.bf16.msra.mxu0 0
    %8176 = vmatprep.subr.bf16.mxu0 0
    %8177 = vmatpush2.bf16.msra.mxu0 0
    %8178 = vmatprep.subr.bf16.mxu0 0
    %8179 = vmatpush2.bf16.msra.mxu0 0
    %8180 = vmatprep.subr.bf16.mxu0 0
    %8181 = vmatpush2.bf16.msra.mxu0 0
    %8182 = vmatprep.subr.bf16.mxu0 0
    %8183 = vmatpush2.bf16.msra.mxu0 0
    %8184 = vmatprep.subr.bf16.mxu0 0
    %8185 = vmatpush2.bf16.msra.mxu0 0
    %8186 = vmatprep.subr.bf16.mxu0 0
    %8187 = vmatpush2.bf16.msra.mxu0 0
    %8188 = vmatprep.mubr.bf16.mxu0 0
    %8189 = vmatmul.mubr.bf16.gmra.mxu0 %v7725
    %v8190 = vpop.f32.mrf.mxu0
    %v8191 = vadd.f32 0.0, %v8190
    %v8192 = vpop.f32.mrf.mxu0
    %v8193 = vpop.f32.mrf.mxu0
    %v8194 = vadd.f32 0.0, %v8193
    %v8195 = vpop.f32.mrf.mxu0
    %8196 = vdwg.mxu0
    %v8197 = vadd.f32 %v7710, %v7711
    %v8198 = vrot.slane %v8197, 4
    %v8199 = vadd.f32 %v8197, %v8198
    %v8200 = vrot.slane %v8199, 2
    %v8201 = vadd.f32 %v8199, %v8200
    %v8202 = vrot.slane %v8201, 1
    %v8203 = vadd.f32 %v8201, %v8202
    %v8204 = vmul.f32 %v7670, %v8203
    %v8205 = vmul.f32 %v7671, %v8203
    %v8206 = vpack.c.bf16 %v8205, %v8204
    %8207 = vmatprep.subr.bf16.mxu0 0
    %8208 = vmatpush1.bf16.msra.mxu0 %v143
    %8209 = vmatprep.subr.bf16.mxu0 0
    %8210 = vmatpush1.bf16.msra.mxu0 %v142
    %8211 = vmatprep.subr.bf16.mxu0 0
    %8212 = vmatpush1.bf16.msra.mxu0 %v141
    %8213 = vmatprep.subr.bf16.mxu0 0
    %8214 = vmatpush1.bf16.msra.mxu0 %v140
    %8215 = vmatprep.subr.bf16.mxu0 0
    %8216 = vmatpush1.bf16.msra.mxu0 %v139
    %8217 = vmatprep.subr.bf16.mxu0 0
    %8218 = vmatpush1.bf16.msra.mxu0 %v138
    %8219 = vmatprep.subr.bf16.mxu0 0
    %8220 = vmatpush1.bf16.msra.mxu0 %v137
    %8221 = vmatprep.subr.bf16.mxu0 0
    %8222 = vmatpush1.bf16.msra.mxu0 %v136
    %8223 = vmatprep.subr.bf16.mxu0 0
    %8224 = vmatpush2.bf16.msra.mxu0 0
    %8225 = vmatprep.subr.bf16.mxu0 0
    %8226 = vmatpush2.bf16.msra.mxu0 0
    %8227 = vmatprep.subr.bf16.mxu0 0
    %8228 = vmatpush2.bf16.msra.mxu0 0
    %8229 = vmatprep.subr.bf16.mxu0 0
    %8230 = vmatpush2.bf16.msra.mxu0 0
    %8231 = vmatprep.subr.bf16.mxu0 0
    %8232 = vmatpush2.bf16.msra.mxu0 0
    %8233 = vmatprep.subr.bf16.mxu0 0
    %8234 = vmatpush2.bf16.msra.mxu0 0
    %8235 = vmatprep.subr.bf16.mxu0 0
    %8236 = vmatpush2.bf16.msra.mxu0 0
    %8237 = vmatprep.subr.bf16.mxu0 0
    %8238 = vmatpush2.bf16.msra.mxu0 0
    %8239 = vmatprep.mubr.bf16.mxu0 0
    %8240 = vmatmul.mubr.bf16.gmra.mxu0 %v8206
    %v8241 = vpop.f32.mrf.mxu0
    %v8242 = vadd.f32 1e-06, %v8241
    %v8243 = vpop.f32.mrf.mxu0
    %v8244 = vpop.f32.mrf.mxu0
    %v8245 = vadd.f32 1e-06, %v8244
    %v8246 = vpop.f32.mrf.mxu0
    %8247 = vdwg.mxu0
    %v8248 = vrcp.pop %v8242
    %v8249 = vrcp.pop %v8245
    %v8250 = vmul.f32 %v8248, 16.0
    %v8251 = vmul.f32 %v8249, 16.0
    %v8252 = vmul.f32 %v8191, %v8250
    %v8253 = vmul.f32 %v8194, %v8251
    %8254 = vxpose.xlu0.c.b16.start [1/8] %v7730, 128
    %8255 = vxpose.xlu0.c.b16.cont [2/8] 0, 128
    %8256 = vxpose.xlu0.c.b16.cont [3/8] 0, 128
    %8257 = vxpose.xlu0.c.b16.cont [4/8] 0, 128
    %8258 = vxpose.xlu0.c.b16.cont [5/8] 0, 128
    %8259 = vxpose.xlu0.c.b16.cont [6/8] 0, 128
    %8260 = vxpose.xlu0.c.b16.cont [7/8] 0, 128
    %8261 = vxpose.xlu0.c.b16.end [8/8] 0, 128
    %v8262 = vpop.trf.xlu0
    %v8263 = vpop.trf.xlu0
    %v8264 = vpop.trf.xlu0
    %v8265 = vpop.trf.xlu0
    %v8266 = vpop.trf.xlu0
    %v8267 = vpop.trf.xlu0
    %v8268 = vpop.trf.xlu0
    %v8269 = vpop.trf.xlu0
    %v8271 = vsel %vm643, %v8262, 0
    %v8274 = vsel %vm643, %v8263, 0
    %v8277 = vsel %vm643, %v8264, 0
    %v8280 = vsel %vm643, %v8265, 0
    %v8283 = vsel %vm643, %v8266, 0
    %v8286 = vsel %vm643, %v8267, 0
    %v8289 = vsel %vm643, %v8268, 0
    %v8292 = vsel %vm643, %v8269, 0
    %8294 = vmatprep.subr.bf16.mxu0 0
    %8295 = vmatpush1.bf16.msra.mxu0 0
    %8296 = vmatprep.subr.bf16.mxu0 0
    %8297 = vmatpush1.bf16.msra.mxu0 0
    %8298 = vmatprep.subr.bf16.mxu0 0
    %8299 = vmatpush1.bf16.msra.mxu0 0
    %8300 = vmatprep.subr.bf16.mxu0 0
    %8301 = vmatpush1.bf16.msra.mxu0 0
    %8302 = vmatprep.subr.bf16.mxu0 0
    %8303 = vmatpush1.bf16.msra.mxu0 0
    %8304 = vmatprep.subr.bf16.mxu0 0
    %8305 = vmatpush1.bf16.msra.mxu0 0
    %8306 = vmatprep.subr.bf16.mxu0 0
    %8307 = vmatpush1.bf16.msra.mxu0 0
    %8308 = vmatprep.subr.bf16.mxu0 0
    %8309 = vmatpush1.bf16.msra.mxu0 %v7734
    %8310 = vmatprep.subr.bf16.mxu0 0
    %8311 = vmatpush2.bf16.msra.mxu0 0
    %8312 = vmatprep.subr.bf16.mxu0 0
    %8313 = vmatpush2.bf16.msra.mxu0 0
    %8314 = vmatprep.subr.bf16.mxu0 0
    %8315 = vmatpush2.bf16.msra.mxu0 0
    %8316 = vmatprep.subr.bf16.mxu0 0
    %8317 = vmatpush2.bf16.msra.mxu0 0
    %8318 = vmatprep.subr.bf16.mxu0 0
    %8319 = vmatpush2.bf16.msra.mxu0 0
    %8320 = vmatprep.subr.bf16.mxu0 0
    %8321 = vmatpush2.bf16.msra.mxu0 0
    %8322 = vmatprep.subr.bf16.mxu0 0
    %8323 = vmatpush2.bf16.msra.mxu0 0
    %8324 = vmatprep.subr.bf16.mxu0 0
    %8325 = vmatpush2.bf16.msra.mxu0 0
    %8326 = vmatprep.mubr.bf16.mxu0 0
    %8327 = vmatmul.mubr.bf16.gmra.mxu0 %v8271
    %v8328 = vpop.f32.mrf.mxu0
    %v8329 = vadd.f32 0.0, %v8328
    %v8330 = vpop.f32.mrf.mxu0
    %v8331 = vpop.f32.mrf.mxu0
    %v8332 = vadd.f32 0.0, %v8331
    %v8333 = vpop.f32.mrf.mxu0
    %8334 = vmatprep.mubr.bf16.mxu0 0
    %8335 = vmatmul.mubr.bf16.gmra.mxu0 %v8274
    %v8336 = vpop.f32.mrf.mxu0
    %v8337 = vadd.f32 0.0, %v8336
    %v8338 = vpop.f32.mrf.mxu0
    %v8339 = vpop.f32.mrf.mxu0
    %v8340 = vadd.f32 0.0, %v8339
    %v8341 = vpop.f32.mrf.mxu0
    %8342 = vmatprep.mubr.bf16.mxu0 0
    %8343 = vmatmul.mubr.bf16.gmra.mxu0 %v8277
    %v8344 = vpop.f32.mrf.mxu0
    %v8345 = vadd.f32 0.0, %v8344
    %v8346 = vpop.f32.mrf.mxu0
    %v8347 = vpop.f32.mrf.mxu0
    %v8348 = vadd.f32 0.0, %v8347
    %v8349 = vpop.f32.mrf.mxu0
    %8350 = vmatprep.mubr.bf16.mxu0 0
    %8351 = vmatmul.mubr.bf16.gmra.mxu0 %v8280
    %v8352 = vpop.f32.mrf.mxu0
    %v8353 = vadd.f32 0.0, %v8352
    %v8354 = vpop.f32.mrf.mxu0
    %v8355 = vpop.f32.mrf.mxu0
    %v8356 = vadd.f32 0.0, %v8355
    %v8357 = vpop.f32.mrf.mxu0
    %8358 = vmatprep.mubr.bf16.mxu0 0
    %8359 = vmatmul.mubr.bf16.gmra.mxu0 %v8283
    %v8360 = vpop.f32.mrf.mxu0
    %v8361 = vadd.f32 0.0, %v8360
    %v8362 = vpop.f32.mrf.mxu0
    %v8363 = vpop.f32.mrf.mxu0
    %v8364 = vadd.f32 0.0, %v8363
    %v8365 = vpop.f32.mrf.mxu0
    %8366 = vmatprep.mubr.bf16.mxu0 0
    %8367 = vmatmul.mubr.bf16.gmra.mxu0 %v8286
    %v8368 = vpop.f32.mrf.mxu0
    %v8369 = vadd.f32 0.0, %v8368
    %v8370 = vpop.f32.mrf.mxu0
    %v8371 = vpop.f32.mrf.mxu0
    %v8372 = vadd.f32 0.0, %v8371
    %v8373 = vpop.f32.mrf.mxu0
    %8374 = vmatprep.mubr.bf16.mxu0 0
    %8375 = vmatmul.mubr.bf16.gmra.mxu0 %v8289
    %v8376 = vpop.f32.mrf.mxu0
    %v8377 = vadd.f32 0.0, %v8376
    %v8378 = vpop.f32.mrf.mxu0
    %v8379 = vpop.f32.mrf.mxu0
    %v8380 = vadd.f32 0.0, %v8379
    %v8381 = vpop.f32.mrf.mxu0
    %8382 = vmatprep.mubr.bf16.mxu0 0
    %8383 = vmatmul.mubr.bf16.gmra.mxu0 %v8292
    %v8384 = vpop.f32.mrf.mxu0
    %v8385 = vadd.f32 0.0, %v8384
    %v8386 = vpop.f32.mrf.mxu0
    %v8387 = vpop.f32.mrf.mxu0
    %v8388 = vadd.f32 0.0, %v8387
    %v8389 = vpop.f32.mrf.mxu0
    %8390 = vdwg.mxu0
    %v8391 = vmul.f32 %v8329, %v120
    %v8392 = vmul.f32 %v8332, %v121
    %v8393 = vmul.f32 %v8337, %v122
    %v8394 = vmul.f32 %v8340, %v123
    %v8395 = vmul.f32 %v8345, %v124
    %v8396 = vmul.f32 %v8348, %v125
    %v8397 = vmul.f32 %v8353, %v126
    %v8398 = vmul.f32 %v8356, %v127
    %v8399 = vmul.f32 %v8361, %v128
    %v8400 = vmul.f32 %v8364, %v129
    %v8401 = vmul.f32 %v8369, %v130
    %v8402 = vmul.f32 %v8372, %v131
    %v8403 = vmul.f32 %v8377, %v132
    %v8404 = vmul.f32 %v8380, %v133
    %v8405 = vmul.f32 %v8385, %v134
    %v8406 = vmul.f32 %v8388, %v135
    %v8407 = vpack.c.bf16 %v8392, %v8391
    %v8408 = vpack.c.bf16 %v8394, %v8393
    %v8409 = vpack.c.bf16 %v8396, %v8395
    %v8410 = vpack.c.bf16 %v8398, %v8397
    %v8411 = vpack.c.bf16 %v8400, %v8399
    %v8412 = vpack.c.bf16 %v8402, %v8401
    %v8413 = vpack.c.bf16 %v8404, %v8403
    %v8414 = vpack.c.bf16 %v8406, %v8405
    %8415 = vmatprep.subr.bf16.mxu0 0
    %8416 = vmatpush1.bf16.msra.mxu0 %v8414
    %8417 = vmatprep.subr.bf16.mxu0 0
    %8418 = vmatpush1.bf16.msra.mxu0 %v8413
    %8419 = vmatprep.subr.bf16.mxu0 0
    %8420 = vmatpush1.bf16.msra.mxu0 %v8412
    %8421 = vmatprep.subr.bf16.mxu0 0
    %8422 = vmatpush1.bf16.msra.mxu0 %v8411
    %8423 = vmatprep.subr.bf16.mxu0 0
    %8424 = vmatpush1.bf16.msra.mxu0 %v8410
    %8425 = vmatprep.subr.bf16.mxu0 0
    %8426 = vmatpush1.bf16.msra.mxu0 %v8409
    %8427 = vmatprep.subr.bf16.mxu0 0
    %8428 = vmatpush1.bf16.msra.mxu0 %v8408
    %8429 = vmatprep.subr.bf16.mxu0 0
    %8430 = vmatpush1.bf16.msra.mxu0 %v8407
    %8431 = vmatprep.subr.bf16.mxu0 0
    %8432 = vmatpush2.bf16.msra.mxu0 0
    %8433 = vmatprep.subr.bf16.mxu0 0
    %8434 = vmatpush2.bf16.msra.mxu0 0
    %8435 = vmatprep.subr.bf16.mxu0 0
    %8436 = vmatpush2.bf16.msra.mxu0 0
    %8437 = vmatprep.subr.bf16.mxu0 0
    %8438 = vmatpush2.bf16.msra.mxu0 0
    %8439 = vmatprep.subr.bf16.mxu0 0
    %8440 = vmatpush2.bf16.msra.mxu0 0
    %8441 = vmatprep.subr.bf16.mxu0 0
    %8442 = vmatpush2.bf16.msra.mxu0 0
    %8443 = vmatprep.subr.bf16.mxu0 0
    %8444 = vmatpush2.bf16.msra.mxu0 0
    %8445 = vmatprep.subr.bf16.mxu0 0
    %8446 = vmatpush2.bf16.msra.mxu0 0
    %8447 = vmatprep.mubr.bf16.mxu0 0
    %8448 = vmatmul.mubr.bf16.gmra.mxu0 %v7726
    %v8449 = vpop.f32.mrf.mxu0
    %v8450 = vadd.f32 0.0, %v8449
    %v8451 = vpop.f32.mrf.mxu0
    %v8452 = vpop.f32.mrf.mxu0
    %v8453 = vadd.f32 0.0, %v8452
    %v8454 = vpop.f32.mrf.mxu0
    %8455 = vdwg.mxu0
    %v8456 = vadd.f32 %v7712, %v7713
    %v8457 = vrot.slane %v8456, 4
    %v8458 = vadd.f32 %v8456, %v8457
    %v8459 = vrot.slane %v8458, 2
    %v8460 = vadd.f32 %v8458, %v8459
    %v8461 = vrot.slane %v8460, 1
    %v8462 = vadd.f32 %v8460, %v8461
    %v8463 = vmul.f32 %v7672, %v8462
    %v8464 = vmul.f32 %v7673, %v8462
    %v8465 = vpack.c.bf16 %v8464, %v8463
    %8466 = vmatprep.subr.bf16.mxu0 0
    %8467 = vmatpush1.bf16.msra.mxu0 %v143
    %8468 = vmatprep.subr.bf16.mxu0 0
    %8469 = vmatpush1.bf16.msra.mxu0 %v142
    %8470 = vmatprep.subr.bf16.mxu0 0
    %8471 = vmatpush1.bf16.msra.mxu0 %v141
    %8472 = vmatprep.subr.bf16.mxu0 0
    %8473 = vmatpush1.bf16.msra.mxu0 %v140
    %8474 = vmatprep.subr.bf16.mxu0 0
    %8475 = vmatpush1.bf16.msra.mxu0 %v139
    %8476 = vmatprep.subr.bf16.mxu0 0
    %8477 = vmatpush1.bf16.msra.mxu0 %v138
    %8478 = vmatprep.subr.bf16.mxu0 0
    %8479 = vmatpush1.bf16.msra.mxu0 %v137
    %8480 = vmatprep.subr.bf16.mxu0 0
    %8481 = vmatpush1.bf16.msra.mxu0 %v136
    %8482 = vmatprep.subr.bf16.mxu0 0
    %8483 = vmatpush2.bf16.msra.mxu0 0
    %8484 = vmatprep.subr.bf16.mxu0 0
    %8485 = vmatpush2.bf16.msra.mxu0 0
    %8486 = vmatprep.subr.bf16.mxu0 0
    %8487 = vmatpush2.bf16.msra.mxu0 0
    %8488 = vmatprep.subr.bf16.mxu0 0
    %8489 = vmatpush2.bf16.msra.mxu0 0
    %8490 = vmatprep.subr.bf16.mxu0 0
    %8491 = vmatpush2.bf16.msra.mxu0 0
    %8492 = vmatprep.subr.bf16.mxu0 0
    %8493 = vmatpush2.bf16.msra.mxu0 0
    %8494 = vmatprep.subr.bf16.mxu0 0
    %8495 = vmatpush2.bf16.msra.mxu0 0
    %8496 = vmatprep.subr.bf16.mxu0 0
    %8497 = vmatpush2.bf16.msra.mxu0 0
    %8498 = vmatprep.mubr.bf16.mxu0 0
    %8499 = vmatmul.mubr.bf16.gmra.mxu0 %v8465
    %v8500 = vpop.f32.mrf.mxu0
    %v8501 = vadd.f32 1e-06, %v8500
    %v8502 = vpop.f32.mrf.mxu0
    %v8503 = vpop.f32.mrf.mxu0
    %v8504 = vadd.f32 1e-06, %v8503
    %v8505 = vpop.f32.mrf.mxu0
    %8506 = vdwg.mxu0
    %v8507 = vrcp.pop %v8501
    %v8508 = vrcp.pop %v8504
    %v8509 = vmul.f32 %v8507, 16.0
    %v8510 = vmul.f32 %v8508, 16.0
    %v8511 = vmul.f32 %v8450, %v8509
    %v8512 = vmul.f32 %v8453, %v8510
    %8513 = vxpose.xlu0.c.b16.start [1/8] %v7731, 128
    %8514 = vxpose.xlu0.c.b16.cont [2/8] 0, 128
    %8515 = vxpose.xlu0.c.b16.cont [3/8] 0, 128
    %8516 = vxpose.xlu0.c.b16.cont [4/8] 0, 128
    %8517 = vxpose.xlu0.c.b16.cont [5/8] 0, 128
    %8518 = vxpose.xlu0.c.b16.cont [6/8] 0, 128
    %8519 = vxpose.xlu0.c.b16.cont [7/8] 0, 128
    %8520 = vxpose.xlu0.c.b16.end [8/8] 0, 128
    %v8521 = vpop.trf.xlu0
    %v8522 = vpop.trf.xlu0
    %v8523 = vpop.trf.xlu0
    %v8524 = vpop.trf.xlu0
    %v8525 = vpop.trf.xlu0
    %v8526 = vpop.trf.xlu0
    %v8527 = vpop.trf.xlu0
    %v8528 = vpop.trf.xlu0
    %v8530 = vsel %vm643, %v8521, 0
    %v8533 = vsel %vm643, %v8522, 0
    %v8536 = vsel %vm643, %v8523, 0
    %v8539 = vsel %vm643, %v8524, 0
    %v8542 = vsel %vm643, %v8525, 0
    %v8545 = vsel %vm643, %v8526, 0
    %v8548 = vsel %vm643, %v8527, 0
    %v8551 = vsel %vm643, %v8528, 0
    %8553 = vmatprep.subr.bf16.mxu0 0
    %8554 = vmatpush1.bf16.msra.mxu0 0
    %8555 = vmatprep.subr.bf16.mxu0 0
    %8556 = vmatpush1.bf16.msra.mxu0 0
    %8557 = vmatprep.subr.bf16.mxu0 0
    %8558 = vmatpush1.bf16.msra.mxu0 0
    %8559 = vmatprep.subr.bf16.mxu0 0
    %8560 = vmatpush1.bf16.msra.mxu0 0
    %8561 = vmatprep.subr.bf16.mxu0 0
    %8562 = vmatpush1.bf16.msra.mxu0 0
    %8563 = vmatprep.subr.bf16.mxu0 0
    %8564 = vmatpush1.bf16.msra.mxu0 0
    %8565 = vmatprep.subr.bf16.mxu0 0
    %8566 = vmatpush1.bf16.msra.mxu0 0
    %8567 = vmatprep.subr.bf16.mxu0 0
    %8568 = vmatpush1.bf16.msra.mxu0 %v7735
    %8569 = vmatprep.subr.bf16.mxu0 0
    %8570 = vmatpush2.bf16.msra.mxu0 0
    %8571 = vmatprep.subr.bf16.mxu0 0
    %8572 = vmatpush2.bf16.msra.mxu0 0
    %8573 = vmatprep.subr.bf16.mxu0 0
    %8574 = vmatpush2.bf16.msra.mxu0 0
    %8575 = vmatprep.subr.bf16.mxu0 0
    %8576 = vmatpush2.bf16.msra.mxu0 0
    %8577 = vmatprep.subr.bf16.mxu0 0
    %8578 = vmatpush2.bf16.msra.mxu0 0
    %8579 = vmatprep.subr.bf16.mxu0 0
    %8580 = vmatpush2.bf16.msra.mxu0 0
    %8581 = vmatprep.subr.bf16.mxu0 0
    %8582 = vmatpush2.bf16.msra.mxu0 0
    %8583 = vmatprep.subr.bf16.mxu0 0
    %8584 = vmatpush2.bf16.msra.mxu0 0
    %8585 = vmatprep.mubr.bf16.mxu0 0
    %8586 = vmatmul.mubr.bf16.gmra.mxu0 %v8530
    %v8587 = vpop.f32.mrf.mxu0
    %v8588 = vadd.f32 0.0, %v8587
    %v8589 = vpop.f32.mrf.mxu0
    %v8590 = vpop.f32.mrf.mxu0
    %v8591 = vadd.f32 0.0, %v8590
    %v8592 = vpop.f32.mrf.mxu0
    %8593 = vmatprep.mubr.bf16.mxu0 0
    %8594 = vmatmul.mubr.bf16.gmra.mxu0 %v8533
    %v8595 = vpop.f32.mrf.mxu0
    %v8596 = vadd.f32 0.0, %v8595
    %v8597 = vpop.f32.mrf.mxu0
    %v8598 = vpop.f32.mrf.mxu0
    %v8599 = vadd.f32 0.0, %v8598
    %v8600 = vpop.f32.mrf.mxu0
    %8601 = vmatprep.mubr.bf16.mxu0 0
    %8602 = vmatmul.mubr.bf16.gmra.mxu0 %v8536
    %v8603 = vpop.f32.mrf.mxu0
    %v8604 = vadd.f32 0.0, %v8603
    %v8605 = vpop.f32.mrf.mxu0
    %v8606 = vpop.f32.mrf.mxu0
    %v8607 = vadd.f32 0.0, %v8606
    %v8608 = vpop.f32.mrf.mxu0
    %8609 = vmatprep.mubr.bf16.mxu0 0
    %8610 = vmatmul.mubr.bf16.gmra.mxu0 %v8539
    %v8611 = vpop.f32.mrf.mxu0
    %v8612 = vadd.f32 0.0, %v8611
    %v8613 = vpop.f32.mrf.mxu0
    %v8614 = vpop.f32.mrf.mxu0
    %v8615 = vadd.f32 0.0, %v8614
    %v8616 = vpop.f32.mrf.mxu0
    %8617 = vmatprep.mubr.bf16.mxu0 0
    %8618 = vmatmul.mubr.bf16.gmra.mxu0 %v8542
    %v8619 = vpop.f32.mrf.mxu0
    %v8620 = vadd.f32 0.0, %v8619
    %v8621 = vpop.f32.mrf.mxu0
    %v8622 = vpop.f32.mrf.mxu0
    %v8623 = vadd.f32 0.0, %v8622
    %v8624 = vpop.f32.mrf.mxu0
    %8625 = vmatprep.mubr.bf16.mxu0 0
    %8626 = vmatmul.mubr.bf16.gmra.mxu0 %v8545
    %v8627 = vpop.f32.mrf.mxu0
    %v8628 = vadd.f32 0.0, %v8627
    %v8629 = vpop.f32.mrf.mxu0
    %v8630 = vpop.f32.mrf.mxu0
    %v8631 = vadd.f32 0.0, %v8630
    %v8632 = vpop.f32.mrf.mxu0
    %8633 = vmatprep.mubr.bf16.mxu0 0
    %8634 = vmatmul.mubr.bf16.gmra.mxu0 %v8548
    %v8635 = vpop.f32.mrf.mxu0
    %v8636 = vadd.f32 0.0, %v8635
    %v8637 = vpop.f32.mrf.mxu0
    %v8638 = vpop.f32.mrf.mxu0
    %v8639 = vadd.f32 0.0, %v8638
    %v8640 = vpop.f32.mrf.mxu0
    %8641 = vmatprep.mubr.bf16.mxu0 0
    %8642 = vmatmul.mubr.bf16.gmra.mxu0 %v8551
    %v8643 = vpop.f32.mrf.mxu0
    %v8644 = vadd.f32 0.0, %v8643
    %v8645 = vpop.f32.mrf.mxu0
    %v8646 = vpop.f32.mrf.mxu0
    %v8647 = vadd.f32 0.0, %v8646
    %v8648 = vpop.f32.mrf.mxu0
    %8649 = vdwg.mxu0
    %v8650 = vmul.f32 %v8588, %v120
    %v8651 = vmul.f32 %v8591, %v121
    %v8652 = vmul.f32 %v8596, %v122
    %v8653 = vmul.f32 %v8599, %v123
    %v8654 = vmul.f32 %v8604, %v124
    %v8655 = vmul.f32 %v8607, %v125
    %v8656 = vmul.f32 %v8612, %v126
    %v8657 = vmul.f32 %v8615, %v127
    %v8658 = vmul.f32 %v8620, %v128
    %v8659 = vmul.f32 %v8623, %v129
    %v8660 = vmul.f32 %v8628, %v130
    %v8661 = vmul.f32 %v8631, %v131
    %v8662 = vmul.f32 %v8636, %v132
    %v8663 = vmul.f32 %v8639, %v133
    %v8664 = vmul.f32 %v8644, %v134
    %v8665 = vmul.f32 %v8647, %v135
    %v8666 = vpack.c.bf16 %v8651, %v8650
    %v8667 = vpack.c.bf16 %v8653, %v8652
    %v8668 = vpack.c.bf16 %v8655, %v8654
    %v8669 = vpack.c.bf16 %v8657, %v8656
    %v8670 = vpack.c.bf16 %v8659, %v8658
    %v8671 = vpack.c.bf16 %v8661, %v8660
    %v8672 = vpack.c.bf16 %v8663, %v8662
    %v8673 = vpack.c.bf16 %v8665, %v8664
    %8674 = vmatprep.subr.bf16.mxu0 0
    %8675 = vmatpush1.bf16.msra.mxu0 %v8673
    %8676 = vmatprep.subr.bf16.mxu0 0
    %8677 = vmatpush1.bf16.msra.mxu0 %v8672
    %8678 = vmatprep.subr.bf16.mxu0 0
    %8679 = vmatpush1.bf16.msra.mxu0 %v8671
    %8680 = vmatprep.subr.bf16.mxu0 0
    %8681 = vmatpush1.bf16.msra.mxu0 %v8670
    %8682 = vmatprep.subr.bf16.mxu0 0
    %8683 = vmatpush1.bf16.msra.mxu0 %v8669
    %8684 = vmatprep.subr.bf16.mxu0 0
    %8685 = vmatpush1.bf16.msra.mxu0 %v8668
    %8686 = vmatprep.subr.bf16.mxu0 0
    %8687 = vmatpush1.bf16.msra.mxu0 %v8667
    %8688 = vmatprep.subr.bf16.mxu0 0
    %8689 = vmatpush1.bf16.msra.mxu0 %v8666
    %8690 = vmatprep.subr.bf16.mxu0 0
    %8691 = vmatpush2.bf16.msra.mxu0 0
    %8692 = vmatprep.subr.bf16.mxu0 0
    %8693 = vmatpush2.bf16.msra.mxu0 0
    %8694 = vmatprep.subr.bf16.mxu0 0
    %8695 = vmatpush2.bf16.msra.mxu0 0
    %8696 = vmatprep.subr.bf16.mxu0 0
    %8697 = vmatpush2.bf16.msra.mxu0 0
    %8698 = vmatprep.subr.bf16.mxu0 0
    %8699 = vmatpush2.bf16.msra.mxu0 0
    %8700 = vmatprep.subr.bf16.mxu0 0
    %8701 = vmatpush2.bf16.msra.mxu0 0
    %8702 = vmatprep.subr.bf16.mxu0 0
    %8703 = vmatpush2.bf16.msra.mxu0 0
    %8704 = vmatprep.subr.bf16.mxu0 0
    %8705 = vmatpush2.bf16.msra.mxu0 0
    %8706 = vmatprep.mubr.bf16.mxu0 0
    %8707 = vmatmul.mubr.bf16.gmra.mxu0 %v7727
    %v8708 = vpop.f32.mrf.mxu0
    %v8709 = vadd.f32 0.0, %v8708
    %v8710 = vpop.f32.mrf.mxu0
    %v8711 = vpop.f32.mrf.mxu0
    %v8712 = vadd.f32 0.0, %v8711
    %v8713 = vpop.f32.mrf.mxu0
    %8714 = vdwg.mxu0
    %v8715 = vadd.f32 %v7714, %v7715
    %v8716 = vrot.slane %v8715, 4
    %v8717 = vadd.f32 %v8715, %v8716
    %v8718 = vrot.slane %v8717, 2
    %v8719 = vadd.f32 %v8717, %v8718
    %v8720 = vrot.slane %v8719, 1
    %v8721 = vadd.f32 %v8719, %v8720
    %v8722 = vmul.f32 %v7674, %v8721
    %v8723 = vmul.f32 %v7675, %v8721
    %v8724 = vpack.c.bf16 %v8723, %v8722
    %8725 = vmatprep.subr.bf16.mxu0 0
    %8726 = vmatpush1.bf16.msra.mxu0 %v143
    %8727 = vmatprep.subr.bf16.mxu0 0
    %8728 = vmatpush1.bf16.msra.mxu0 %v142
    %8729 = vmatprep.subr.bf16.mxu0 0
    %8730 = vmatpush1.bf16.msra.mxu0 %v141
    %8731 = vmatprep.subr.bf16.mxu0 0
    %8732 = vmatpush1.bf16.msra.mxu0 %v140
    %8733 = vmatprep.subr.bf16.mxu0 0
    %8734 = vmatpush1.bf16.msra.mxu0 %v139
    %8735 = vmatprep.subr.bf16.mxu0 0
    %8736 = vmatpush1.bf16.msra.mxu0 %v138
    %8737 = vmatprep.subr.bf16.mxu0 0
    %8738 = vmatpush1.bf16.msra.mxu0 %v137
    %8739 = vmatprep.subr.bf16.mxu0 0
    %8740 = vmatpush1.bf16.msra.mxu0 %v136
    %8741 = vmatprep.subr.bf16.mxu0 0
    %8742 = vmatpush2.bf16.msra.mxu0 0
    %8743 = vmatprep.subr.bf16.mxu0 0
    %8744 = vmatpush2.bf16.msra.mxu0 0
    %8745 = vmatprep.subr.bf16.mxu0 0
    %8746 = vmatpush2.bf16.msra.mxu0 0
    %8747 = vmatprep.subr.bf16.mxu0 0
    %8748 = vmatpush2.bf16.msra.mxu0 0
    %8749 = vmatprep.subr.bf16.mxu0 0
    %8750 = vmatpush2.bf16.msra.mxu0 0
    %8751 = vmatprep.subr.bf16.mxu0 0
    %8752 = vmatpush2.bf16.msra.mxu0 0
    %8753 = vmatprep.subr.bf16.mxu0 0
    %8754 = vmatpush2.bf16.msra.mxu0 0
    %8755 = vmatprep.subr.bf16.mxu0 0
    %8756 = vmatpush2.bf16.msra.mxu0 0
    %8757 = vmatprep.mubr.bf16.mxu0 0
    %8758 = vmatmul.mubr.bf16.gmra.mxu0 %v8724
    %v8759 = vpop.f32.mrf.mxu0
    %v8760 = vadd.f32 1e-06, %v8759
    %v8761 = vpop.f32.mrf.mxu0
    %v8762 = vpop.f32.mrf.mxu0
    %v8763 = vadd.f32 1e-06, %v8762
    %v8764 = vpop.f32.mrf.mxu0
    %8765 = vdwg.mxu0
    %v8766 = vrcp.pop %v8760
    %v8767 = vrcp.pop %v8763
    %v8768 = vmul.f32 %v8766, 16.0
    %v8769 = vmul.f32 %v8767, 16.0
    %v8770 = vmul.f32 %v8709, %v8768
    %v8771 = vmul.f32 %v8712, %v8769
    %v8772 = vpack.c.bf16 %v7994, %v7993
    %v8773 = vpack.c.bf16 %v8253, %v8252
    %v8774 = vpack.c.bf16 %v8512, %v8511
    %v8775 = vpack.c.bf16 %v8771, %v8770
    %v8792 = vunpack.c.l.b16 %v7281
    %v8793 = vunpack.c.l.b16 %v7282
    %v8794 = vunpack.c.l.b16 %v7283
    %v8795 = vunpack.c.l.b16 %v7284
    %v8796 = vunpack.c.l.b16 %v7285
    %v8797 = vunpack.c.l.b16 %v7286
    %v8798 = vunpack.c.l.b16 %v7287
    %v8799 = vunpack.c.l.b16 %v7288
    %v8800 = vunpack.c.l.b16 %v7289
    %v8801 = vunpack.c.l.b16 %v7290
    %v8802 = vunpack.c.l.b16 %v7291
    %v8803 = vunpack.c.l.b16 %v7292
    %v8804 = vunpack.c.l.b16 %v7293
    %v8805 = vunpack.c.l.b16 %v7294
    %v8806 = vunpack.c.l.b16 %v7295
    %v8807 = vunpack.c.l.b16 %v7296
    %v8808 = vpack.c.b16 %v8793, %v8792
    %v8809 = vpack.c.b16 %v8795, %v8794
    %v8810 = vpack.c.b16 %v8797, %v8796
    %v8811 = vpack.c.b16 %v8799, %v8798
    %v8812 = vpack.c.b16 %v8801, %v8800
    %v8813 = vpack.c.b16 %v8803, %v8802
    %v8814 = vpack.c.b16 %v8805, %v8804
    %v8815 = vpack.c.b16 %v8807, %v8806
    %8824 = vmatprep.subr.bf16.mxu0 0
    %8825 = vmatpush1.bf16.msra.mxu0 %v8815
    %8826 = vmatprep.subr.bf16.mxu0 0
    %8827 = vmatpush1.bf16.msra.mxu0 %v8814
    %8828 = vmatprep.subr.bf16.mxu0 0
    %8829 = vmatpush1.bf16.msra.mxu0 %v8813
    %8830 = vmatprep.subr.bf16.mxu0 0
    %8831 = vmatpush1.bf16.msra.mxu0 %v8812
    %8832 = vmatprep.subr.bf16.mxu0 0
    %8833 = vmatpush1.bf16.msra.mxu0 %v8811
    %8834 = vmatprep.subr.bf16.mxu0 0
    %8835 = vmatpush1.bf16.msra.mxu0 %v8810
    %8836 = vmatprep.subr.bf16.mxu0 0
    %8837 = vmatpush1.bf16.msra.mxu0 %v8809
    %8838 = vmatprep.subr.bf16.mxu0 0
    %8839 = vmatpush1.bf16.msra.mxu0 %v8808
    %8840 = vmatprep.subr.bf16.mxu0 0
    %8841 = vmatpush2.bf16.msra.mxu0 0
    %8842 = vmatprep.subr.bf16.mxu0 0
    %8843 = vmatpush2.bf16.msra.mxu0 0
    %8844 = vmatprep.subr.bf16.mxu0 0
    %8845 = vmatpush2.bf16.msra.mxu0 0
    %8846 = vmatprep.subr.bf16.mxu0 0
    %8847 = vmatpush2.bf16.msra.mxu0 0
    %8848 = vmatprep.subr.bf16.mxu0 0
    %8849 = vmatpush2.bf16.msra.mxu0 0
    %8850 = vmatprep.subr.bf16.mxu0 0
    %8851 = vmatpush2.bf16.msra.mxu0 0
    %8852 = vmatprep.subr.bf16.mxu0 0
    %8853 = vmatpush2.bf16.msra.mxu0 0
    %8854 = vmatprep.subr.bf16.mxu0 0
    %8855 = vmatpush2.bf16.msra.mxu0 0
    %8856 = vmatprep.mubr.bf16.mxu0 0
    %8857 = vmatmul.mubr.bf16.gmra.mxu0 %v8772
    %v8858 = vpop.f32.mrf.mxu0
    %v8859 = vadd.f32 0.0, %v8858
    %v8860 = vpop.f32.mrf.mxu0
    %v8861 = vpop.f32.mrf.mxu0
    %v8862 = vadd.f32 0.0, %v8861
    %v8863 = vpop.f32.mrf.mxu0
    %8864 = vmatprep.mubr.bf16.mxu0 0
    %8865 = vmatmul.mubr.bf16.gmra.mxu0 %v8773
    %v8866 = vpop.f32.mrf.mxu0
    %v8867 = vadd.f32 0.0, %v8866
    %v8868 = vpop.f32.mrf.mxu0
    %v8869 = vpop.f32.mrf.mxu0
    %v8870 = vadd.f32 0.0, %v8869
    %v8871 = vpop.f32.mrf.mxu0
    %8872 = vmatprep.mubr.bf16.mxu0 0
    %8873 = vmatmul.mubr.bf16.gmra.mxu0 %v8774
    %v8874 = vpop.f32.mrf.mxu0
    %v8875 = vadd.f32 0.0, %v8874
    %v8876 = vpop.f32.mrf.mxu0
    %v8877 = vpop.f32.mrf.mxu0
    %v8878 = vadd.f32 0.0, %v8877
    %v8879 = vpop.f32.mrf.mxu0
    %8880 = vmatprep.mubr.bf16.mxu0 0
    %8881 = vmatmul.mubr.bf16.gmra.mxu0 %v8775
    %v8882 = vpop.f32.mrf.mxu0
    %v8883 = vadd.f32 0.0, %v8882
    %v8884 = vpop.f32.mrf.mxu0
    %v8885 = vpop.f32.mrf.mxu0
    %v8886 = vadd.f32 0.0, %v8885
    %v8887 = vpop.f32.mrf.mxu0
    %8888 = vdwg.mxu0
    %8889 = vadd.xlane.f32.xlu0 %v8859
    %v8890 = vpop.xlane.xlu0 %8889
    %8891 = vadd.xlane.f32.xlu0 %v8862
    %v8892 = vpop.xlane.xlu0 %8891
    %8893 = vadd.xlane.f32.xlu0 %v8867
    %v8894 = vpop.xlane.xlu0 %8893
    %8895 = vadd.xlane.f32.xlu0 %v8870
    %v8896 = vpop.xlane.xlu0 %8895
    %8897 = vadd.xlane.f32.xlu0 %v8875
    %v8898 = vpop.xlane.xlu0 %8897
    %8899 = vadd.xlane.f32.xlu0 %v8878
    %v8900 = vpop.xlane.xlu0 %8899
    %8901 = vadd.xlane.f32.xlu0 %v8883
    %v8902 = vpop.xlane.xlu0 %8901
    %8903 = vadd.xlane.f32.xlu0 %v8886
    %v8904 = vpop.xlane.xlu0 %8903
    %v8905 = vmul.f32 %v8890, %v1797
    %v8906 = vmul.f32 %v8892, %v1797
    %v8907 = vmul.f32 %v8894, %v1797
    %v8908 = vmul.f32 %v8896, %v1797
    %v8909 = vmul.f32 %v8898, %v1797
    %v8910 = vmul.f32 %v8900, %v1797
    %v8911 = vmul.f32 %v8902, %v1797
    %v8912 = vmul.f32 %v8904, %v1797
    %v8913 = vsub.f32 %v8859, %v8905
    %v8914 = vsub.f32 %v8862, %v8906
    %v8915 = vsub.f32 %v8867, %v8907
    %v8916 = vsub.f32 %v8870, %v8908
    %v8917 = vsub.f32 %v8875, %v8909
    %v8918 = vsub.f32 %v8878, %v8910
    %v8919 = vsub.f32 %v8883, %v8911
    %v8920 = vsub.f32 %v8886, %v8912
    %v8921 = vmul.f32 %v8913, %v8913
    %v8922 = vmul.f32 %v8914, %v8914
    %v8923 = vmul.f32 %v8915, %v8915
    %v8924 = vmul.f32 %v8916, %v8916
    %v8925 = vmul.f32 %v8917, %v8917
    %v8926 = vmul.f32 %v8918, %v8918
    %v8927 = vmul.f32 %v8919, %v8919
    %v8928 = vmul.f32 %v8920, %v8920
    %8929 = vadd.xlane.f32.xlu0 %v8921
    %v8930 = vpop.xlane.xlu0 %8929
    %8931 = vadd.xlane.f32.xlu0 %v8922
    %v8932 = vpop.xlane.xlu0 %8931
    %8933 = vadd.xlane.f32.xlu0 %v8923
    %v8934 = vpop.xlane.xlu0 %8933
    %8935 = vadd.xlane.f32.xlu0 %v8924
    %v8936 = vpop.xlane.xlu0 %8935
    %8937 = vadd.xlane.f32.xlu0 %v8925
    %v8938 = vpop.xlane.xlu0 %8937
    %8939 = vadd.xlane.f32.xlu0 %v8926
    %v8940 = vpop.xlane.xlu0 %8939
    %8941 = vadd.xlane.f32.xlu0 %v8927
    %v8942 = vpop.xlane.xlu0 %8941
    %8943 = vadd.xlane.f32.xlu0 %v8928
    %v8944 = vpop.xlane.xlu0 %8943
    %v8945 = vmul.f32 %v8930, %v1797
    %v8946 = vmul.f32 %v8932, %v1797
    %v8947 = vmul.f32 %v8934, %v1797
    %v8948 = vmul.f32 %v8936, %v1797
    %v8949 = vmul.f32 %v8938, %v1797
    %v8950 = vmul.f32 %v8940, %v1797
    %v8951 = vmul.f32 %v8942, %v1797
    %v8952 = vmul.f32 %v8944, %v1797
    %v8953 = vadd.f32 %v8945, 1e-05
    %v8954 = vadd.f32 %v8946, 1e-05
    %v8955 = vadd.f32 %v8947, 1e-05
    %v8956 = vadd.f32 %v8948, 1e-05
    %v8957 = vadd.f32 %v8949, 1e-05
    %v8958 = vadd.f32 %v8950, 1e-05
    %v8959 = vadd.f32 %v8951, 1e-05
    %v8960 = vadd.f32 %v8952, 1e-05
    %v8961 = vrsqrt.pop %v8953
    %v8962 = vrsqrt.pop %v8954
    %v8963 = vrsqrt.pop %v8955
    %v8964 = vrsqrt.pop %v8956
    %v8965 = vrsqrt.pop %v8957
    %v8966 = vrsqrt.pop %v8958
    %v8967 = vrsqrt.pop %v8959
    %v8968 = vrsqrt.pop %v8960
    %v8969 = vmul.f32 %v8913, %v8961
    %v8970 = vmul.f32 %v8914, %v8962
    %v8971 = vmul.f32 %v8915, %v8963
    %v8972 = vmul.f32 %v8916, %v8964
    %v8973 = vmul.f32 %v8917, %v8965
    %v8974 = vmul.f32 %v8918, %v8966
    %v8975 = vmul.f32 %v8919, %v8967
    %v8976 = vmul.f32 %v8920, %v8968
    %v8977 = vlaneseq
    %v8978 = vshrl.u32 %v8977, 7
    %v8979 = vsub.s32 0, %v8978
    %v8980 = vrot.slane %v7365, %v8979
    %v8981 = vmul.f32 %v8969, %v8980
    %v8982 = vmul.f32 %v8970, %v8980
    %v8983 = vmul.f32 %v8971, %v8980
    %v8984 = vmul.f32 %v8972, %v8980
    %v8985 = vmul.f32 %v8973, %v8980
    %v8986 = vmul.f32 %v8974, %v8980
    %v8987 = vmul.f32 %v8975, %v8980
    %v8988 = vmul.f32 %v8976, %v8980
    %v8989 = vlaneseq
    %v8990 = vshrl.u32 %v8989, 7
    %v8991 = vsub.s32 1, %v8990
    %v8992 = vrot.slane %v7365, %v8991
    %v8993 = vadd.f32 %v8981, %v8992
    %v8994 = vadd.f32 %v8982, %v8992
    %v8995 = vadd.f32 %v8983, %v8992
    %v8996 = vadd.f32 %v8984, %v8992
    %v8997 = vadd.f32 %v8985, %v8992
    %v8998 = vadd.f32 %v8986, %v8992
    %v8999 = vadd.f32 %v8987, %v8992
    %v9000 = vadd.f32 %v8988, %v8992
    %v9001 = vpack.c.bf16 %v8994, %v8993
    %v9002 = vpack.c.bf16 %v8996, %v8995
    %v9003 = vpack.c.bf16 %v8998, %v8997
    %v9004 = vpack.c.bf16 %v9000, %v8999
    %v9021 = vunpack.c.l.b16 %v7315
    %v9022 = vunpack.c.h.b16 %v7315
    %v9023 = vunpack.c.l.b16 %v7316
    %v9024 = vunpack.c.h.b16 %v7316
    %v9025 = vunpack.c.l.b16 %v7317
    %v9026 = vunpack.c.h.b16 %v7317
    %v9027 = vunpack.c.l.b16 %v7318
    %v9028 = vunpack.c.h.b16 %v7318
    %v9029 = vunpack.c.l.b16 %v7319
    %v9030 = vunpack.c.h.b16 %v7319
    %v9031 = vunpack.c.l.b16 %v7320
    %v9032 = vunpack.c.h.b16 %v7320
    %v9033 = vunpack.c.l.b16 %v7321
    %v9034 = vunpack.c.h.b16 %v7321
    %v9035 = vunpack.c.l.b16 %v7322
    %v9036 = vunpack.c.h.b16 %v7322
    %v9037 = vunpack.c.l.b16 %v7323
    %v9038 = vunpack.c.h.b16 %v7323
    %v9039 = vunpack.c.l.b16 %v7324
    %v9040 = vunpack.c.h.b16 %v7324
    %v9041 = vunpack.c.l.b16 %v7325
    %v9042 = vunpack.c.h.b16 %v7325
    %v9043 = vunpack.c.l.b16 %v7326
    %v9044 = vunpack.c.h.b16 %v7326
    %v9045 = vunpack.c.l.b16 %v7327
    %v9046 = vunpack.c.h.b16 %v7327
    %v9047 = vunpack.c.l.b16 %v7328
    %v9048 = vunpack.c.h.b16 %v7328
    %v9049 = vunpack.c.l.b16 %v7329
    %v9050 = vunpack.c.h.b16 %v7329
    %v9051 = vunpack.c.l.b16 %v7330
    %v9052 = vunpack.c.h.b16 %v7330
    %v9053 = vpack.c.b16 %v9023, %v9021
    %v9054 = vpack.c.b16 %v9024, %v9022
    %v9055 = vpack.c.b16 %v9027, %v9025
    %v9056 = vpack.c.b16 %v9028, %v9026
    %v9057 = vpack.c.b16 %v9031, %v9029
    %v9058 = vpack.c.b16 %v9032, %v9030
    %v9059 = vpack.c.b16 %v9035, %v9033
    %v9060 = vpack.c.b16 %v9036, %v9034
    %v9061 = vpack.c.b16 %v9039, %v9037
    %v9062 = vpack.c.b16 %v9040, %v9038
    %v9063 = vpack.c.b16 %v9043, %v9041
    %v9064 = vpack.c.b16 %v9044, %v9042
    %v9065 = vpack.c.b16 %v9047, %v9045
    %v9066 = vpack.c.b16 %v9048, %v9046
    %v9067 = vpack.c.b16 %v9051, %v9049
    %v9068 = vpack.c.b16 %v9052, %v9050
    %9085 = vmatprep.subr.bf16.mxu0 %v9068
    %9086 = vmatpush1.bf16.msra.mxu0 %v9067
    %9087 = vmatprep.subr.bf16.mxu0 %v9066
    %9088 = vmatpush1.bf16.msra.mxu0 %v9065
    %9089 = vmatprep.subr.bf16.mxu0 %v9064
    %9090 = vmatpush1.bf16.msra.mxu0 %v9063
    %9091 = vmatprep.subr.bf16.mxu0 %v9062
    %9092 = vmatpush1.bf16.msra.mxu0 %v9061
    %9093 = vmatprep.subr.bf16.mxu0 %v9060
    %9094 = vmatpush1.bf16.msra.mxu0 %v9059
    %9095 = vmatprep.subr.bf16.mxu0 %v9058
    %9096 = vmatpush1.bf16.msra.mxu0 %v9057
    %9097 = vmatprep.subr.bf16.mxu0 %v9056
    %9098 = vmatpush1.bf16.msra.mxu0 %v9055
    %9099 = vmatprep.subr.bf16.mxu0 %v9054
    %9100 = vmatpush1.bf16.msra.mxu0 %v9053
    %9101 = vmatprep.subr.bf16.mxu0 0
    %9102 = vmatpush2.bf16.msra.mxu0 0
    %9103 = vmatprep.subr.bf16.mxu0 0
    %9104 = vmatpush2.bf16.msra.mxu0 0
    %9105 = vmatprep.subr.bf16.mxu0 0
    %9106 = vmatpush2.bf16.msra.mxu0 0
    %9107 = vmatprep.subr.bf16.mxu0 0
    %9108 = vmatpush2.bf16.msra.mxu0 0
    %9109 = vmatprep.subr.bf16.mxu0 0
    %9110 = vmatpush2.bf16.msra.mxu0 0
    %9111 = vmatprep.subr.bf16.mxu0 0
    %9112 = vmatpush2.bf16.msra.mxu0 0
    %9113 = vmatprep.subr.bf16.mxu0 0
    %9114 = vmatpush2.bf16.msra.mxu0 0
    %9115 = vmatprep.subr.bf16.mxu0 0
    %9116 = vmatpush2.bf16.msra.mxu0 0
    %9117 = vmatprep.mubr.bf16.mxu0 0
    %9118 = vmatmul.mubr.bf16.gmra.mxu0 %v9001
    %v9119 = vpop.f32.mrf.mxu0
    %v9120 = vadd.f32 0.0, %v9119
    %v9121 = vpop.f32.mrf.mxu0
    %v9122 = vadd.f32 0.0, %v9121
    %v9123 = vpop.f32.mrf.mxu0
    %v9124 = vadd.f32 0.0, %v9123
    %v9125 = vpop.f32.mrf.mxu0
    %v9126 = vadd.f32 0.0, %v9125
    %9127 = vmatprep.mubr.bf16.mxu0 0
    %9128 = vmatmul.mubr.bf16.gmra.mxu0 %v9002
    %v9129 = vpop.f32.mrf.mxu0
    %v9130 = vadd.f32 0.0, %v9129
    %v9131 = vpop.f32.mrf.mxu0
    %v9132 = vadd.f32 0.0, %v9131
    %v9133 = vpop.f32.mrf.mxu0
    %v9134 = vadd.f32 0.0, %v9133
    %v9135 = vpop.f32.mrf.mxu0
    %v9136 = vadd.f32 0.0, %v9135
    %9137 = vmatprep.mubr.bf16.mxu0 0
    %9138 = vmatmul.mubr.bf16.gmra.mxu0 %v9003
    %v9139 = vpop.f32.mrf.mxu0
    %v9140 = vadd.f32 0.0, %v9139
    %v9141 = vpop.f32.mrf.mxu0
    %v9142 = vadd.f32 0.0, %v9141
    %v9143 = vpop.f32.mrf.mxu0
    %v9144 = vadd.f32 0.0, %v9143
    %v9145 = vpop.f32.mrf.mxu0
    %v9146 = vadd.f32 0.0, %v9145
    %9147 = vmatprep.mubr.bf16.mxu0 0
    %9148 = vmatmul.mubr.bf16.gmra.mxu0 %v9004
    %v9149 = vpop.f32.mrf.mxu0
    %v9150 = vadd.f32 0.0, %v9149
    %v9151 = vpop.f32.mrf.mxu0
    %v9152 = vadd.f32 0.0, %v9151
    %v9153 = vpop.f32.mrf.mxu0
    %v9154 = vadd.f32 0.0, %v9153
    %v9155 = vpop.f32.mrf.mxu0
    %v9156 = vadd.f32 0.0, %v9155
    %9157 = vdwg.mxu0
    %v9174 = vunpack.c.l.b16 %v7298
    %v9175 = vunpack.c.h.b16 %v7298
    %v9176 = vunpack.c.l.b16 %v7299
    %v9177 = vunpack.c.h.b16 %v7299
    %v9178 = vunpack.c.l.b16 %v7300
    %v9179 = vunpack.c.h.b16 %v7300
    %v9180 = vunpack.c.l.b16 %v7301
    %v9181 = vunpack.c.h.b16 %v7301
    %v9182 = vunpack.c.l.b16 %v7302
    %v9183 = vunpack.c.h.b16 %v7302
    %v9184 = vunpack.c.l.b16 %v7303
    %v9185 = vunpack.c.h.b16 %v7303
    %v9186 = vunpack.c.l.b16 %v7304
    %v9187 = vunpack.c.h.b16 %v7304
    %v9188 = vunpack.c.l.b16 %v7305
    %v9189 = vunpack.c.h.b16 %v7305
    %v9190 = vunpack.c.l.b16 %v7306
    %v9191 = vunpack.c.h.b16 %v7306
    %v9192 = vunpack.c.l.b16 %v7307
    %v9193 = vunpack.c.h.b16 %v7307
    %v9194 = vunpack.c.l.b16 %v7308
    %v9195 = vunpack.c.h.b16 %v7308
    %v9196 = vunpack.c.l.b16 %v7309
    %v9197 = vunpack.c.h.b16 %v7309
    %v9198 = vunpack.c.l.b16 %v7310
    %v9199 = vunpack.c.h.b16 %v7310
    %v9200 = vunpack.c.l.b16 %v7311
    %v9201 = vunpack.c.h.b16 %v7311
    %v9202 = vunpack.c.l.b16 %v7312
    %v9203 = vunpack.c.h.b16 %v7312
    %v9204 = vunpack.c.l.b16 %v7313
    %v9205 = vunpack.c.h.b16 %v7313
    %v9206 = vpack.c.b16 %v9176, %v9174
    %v9207 = vpack.c.b16 %v9177, %v9175
    %v9208 = vpack.c.b16 %v9180, %v9178
    %v9209 = vpack.c.b16 %v9181, %v9179
    %v9210 = vpack.c.b16 %v9184, %v9182
    %v9211 = vpack.c.b16 %v9185, %v9183
    %v9212 = vpack.c.b16 %v9188, %v9186
    %v9213 = vpack.c.b16 %v9189, %v9187
    %v9214 = vpack.c.b16 %v9192, %v9190
    %v9215 = vpack.c.b16 %v9193, %v9191
    %v9216 = vpack.c.b16 %v9196, %v9194
    %v9217 = vpack.c.b16 %v9197, %v9195
    %v9218 = vpack.c.b16 %v9200, %v9198
    %v9219 = vpack.c.b16 %v9201, %v9199
    %v9220 = vpack.c.b16 %v9204, %v9202
    %v9221 = vpack.c.b16 %v9205, %v9203
    %9238 = vmatprep.subr.bf16.mxu0 %v9221
    %9239 = vmatpush1.bf16.msra.mxu0 %v9220
    %9240 = vmatprep.subr.bf16.mxu0 %v9219
    %9241 = vmatpush1.bf16.msra.mxu0 %v9218
    %9242 = vmatprep.subr.bf16.mxu0 %v9217
    %9243 = vmatpush1.bf16.msra.mxu0 %v9216
    %9244 = vmatprep.subr.bf16.mxu0 %v9215
    %9245 = vmatpush1.bf16.msra.mxu0 %v9214
    %9246 = vmatprep.subr.bf16.mxu0 %v9213
    %9247 = vmatpush1.bf16.msra.mxu0 %v9212
    %9248 = vmatprep.subr.bf16.mxu0 %v9211
    %9249 = vmatpush1.bf16.msra.mxu0 %v9210
    %9250 = vmatprep.subr.bf16.mxu0 %v9209
    %9251 = vmatpush1.bf16.msra.mxu0 %v9208
    %9252 = vmatprep.subr.bf16.mxu0 %v9207
    %9253 = vmatpush1.bf16.msra.mxu0 %v9206
    %9254 = vmatprep.subr.bf16.mxu0 0
    %9255 = vmatpush2.bf16.msra.mxu0 0
    %9256 = vmatprep.subr.bf16.mxu0 0
    %9257 = vmatpush2.bf16.msra.mxu0 0
    %9258 = vmatprep.subr.bf16.mxu0 0
    %9259 = vmatpush2.bf16.msra.mxu0 0
    %9260 = vmatprep.subr.bf16.mxu0 0
    %9261 = vmatpush2.bf16.msra.mxu0 0
    %9262 = vmatprep.subr.bf16.mxu0 0
    %9263 = vmatpush2.bf16.msra.mxu0 0
    %9264 = vmatprep.subr.bf16.mxu0 0
    %9265 = vmatpush2.bf16.msra.mxu0 0
    %9266 = vmatprep.subr.bf16.mxu0 0
    %9267 = vmatpush2.bf16.msra.mxu0 0
    %9268 = vmatprep.subr.bf16.mxu0 0
    %9269 = vmatpush2.bf16.msra.mxu0 0
    %9270 = vmatprep.mubr.bf16.mxu0 0
    %9271 = vmatmul.mubr.bf16.gmra.mxu0 %v7366
    %v9272 = vpop.f32.mrf.mxu0
    %v9273 = vadd.f32 %v9120, %v9272
    %v9274 = vpop.f32.mrf.mxu0
    %v9275 = vadd.f32 %v9122, %v9274
    %v9276 = vpop.f32.mrf.mxu0
    %v9277 = vadd.f32 %v9124, %v9276
    %v9278 = vpop.f32.mrf.mxu0
    %v9279 = vadd.f32 %v9126, %v9278
    %9280 = vmatprep.mubr.bf16.mxu0 0
    %9281 = vmatmul.mubr.bf16.gmra.mxu0 %v7367
    %v9282 = vpop.f32.mrf.mxu0
    %v9283 = vadd.f32 %v9130, %v9282
    %v9284 = vpop.f32.mrf.mxu0
    %v9285 = vadd.f32 %v9132, %v9284
    %v9286 = vpop.f32.mrf.mxu0
    %v9287 = vadd.f32 %v9134, %v9286
    %v9288 = vpop.f32.mrf.mxu0
    %v9289 = vadd.f32 %v9136, %v9288
    %9290 = vmatprep.mubr.bf16.mxu0 0
    %9291 = vmatmul.mubr.bf16.gmra.mxu0 %v7368
    %v9292 = vpop.f32.mrf.mxu0
    %v9293 = vadd.f32 %v9140, %v9292
    %v9294 = vpop.f32.mrf.mxu0
    %v9295 = vadd.f32 %v9142, %v9294
    %v9296 = vpop.f32.mrf.mxu0
    %v9297 = vadd.f32 %v9144, %v9296
    %v9298 = vpop.f32.mrf.mxu0
    %v9299 = vadd.f32 %v9146, %v9298
    %9300 = vmatprep.mubr.bf16.mxu0 0
    %9301 = vmatmul.mubr.bf16.gmra.mxu0 %v7369
    %v9302 = vpop.f32.mrf.mxu0
    %v9303 = vadd.f32 %v9150, %v9302
    %v9304 = vpop.f32.mrf.mxu0
    %v9305 = vadd.f32 %v9152, %v9304
    %v9306 = vpop.f32.mrf.mxu0
    %v9307 = vadd.f32 %v9154, %v9306
    %v9308 = vpop.f32.mrf.mxu0
    %v9309 = vadd.f32 %v9156, %v9308
    %9310 = vdwg.mxu0
    %v9311 = vmax.f32 %v9273, 0.0
    %v9312 = vmax.f32 %v9275, 0.0
    %v9313 = vmax.f32 %v9277, 0.0
    %v9314 = vmax.f32 %v9279, 0.0
    %v9315 = vmax.f32 %v9283, 0.0
    %v9316 = vmax.f32 %v9285, 0.0
    %v9317 = vmax.f32 %v9287, 0.0
    %v9318 = vmax.f32 %v9289, 0.0
    %v9319 = vmax.f32 %v9293, 0.0
    %v9320 = vmax.f32 %v9295, 0.0
    %v9321 = vmax.f32 %v9297, 0.0
    %v9322 = vmax.f32 %v9299, 0.0
    %v9323 = vmax.f32 %v9303, 0.0
    %v9324 = vmax.f32 %v9305, 0.0
    %v9325 = vmax.f32 %v9307, 0.0
    %v9326 = vmax.f32 %v9309, 0.0
    %v9327 = vpack.c.bf16 %v9313, %v9311
    %v9328 = vpack.c.bf16 %v9314, %v9312
    %v9329 = vpack.c.bf16 %v9317, %v9315
    %v9330 = vpack.c.bf16 %v9318, %v9316
    %v9331 = vpack.c.bf16 %v9321, %v9319
    %v9332 = vpack.c.bf16 %v9322, %v9320
    %v9333 = vpack.c.bf16 %v9325, %v9323
    %v9334 = vpack.c.bf16 %v9326, %v9324
    %v9367 = vunpack.c.l.b16 %v7332
    %v9368 = vunpack.c.l.b16 %v7333
    %v9369 = vunpack.c.l.b16 %v7334
    %v9370 = vunpack.c.l.b16 %v7335
    %v9371 = vunpack.c.l.b16 %v7336
    %v9372 = vunpack.c.l.b16 %v7337
    %v9373 = vunpack.c.l.b16 %v7338
    %v9374 = vunpack.c.l.b16 %v7339
    %v9375 = vunpack.c.l.b16 %v7340
    %v9376 = vunpack.c.l.b16 %v7341
    %v9377 = vunpack.c.l.b16 %v7342
    %v9378 = vunpack.c.l.b16 %v7343
    %v9379 = vunpack.c.l.b16 %v7344
    %v9380 = vunpack.c.l.b16 %v7345
    %v9381 = vunpack.c.l.b16 %v7346
    %v9382 = vunpack.c.l.b16 %v7347
    %v9383 = vunpack.c.l.b16 %v7348
    %v9384 = vunpack.c.l.b16 %v7349
    %v9385 = vunpack.c.l.b16 %v7350
    %v9386 = vunpack.c.l.b16 %v7351
    %v9387 = vunpack.c.l.b16 %v7352
    %v9388 = vunpack.c.l.b16 %v7353
    %v9389 = vunpack.c.l.b16 %v7354
    %v9390 = vunpack.c.l.b16 %v7355
    %v9391 = vunpack.c.l.b16 %v7356
    %v9392 = vunpack.c.l.b16 %v7357
    %v9393 = vunpack.c.l.b16 %v7358
    %v9394 = vunpack.c.l.b16 %v7359
    %v9395 = vunpack.c.l.b16 %v7360
    %v9396 = vunpack.c.l.b16 %v7361
    %v9397 = vunpack.c.l.b16 %v7362
    %v9398 = vunpack.c.l.b16 %v7363
    %v9399 = vpack.c.b16 %v9368, %v9367
    %v9400 = vpack.c.b16 %v9370, %v9369
    %v9401 = vpack.c.b16 %v9372, %v9371
    %v9402 = vpack.c.b16 %v9374, %v9373
    %v9403 = vpack.c.b16 %v9376, %v9375
    %v9404 = vpack.c.b16 %v9378, %v9377
    %v9405 = vpack.c.b16 %v9380, %v9379
    %v9406 = vpack.c.b16 %v9382, %v9381
    %v9407 = vpack.c.b16 %v9384, %v9383
    %v9408 = vpack.c.b16 %v9386, %v9385
    %v9409 = vpack.c.b16 %v9388, %v9387
    %v9410 = vpack.c.b16 %v9390, %v9389
    %v9411 = vpack.c.b16 %v9392, %v9391
    %v9412 = vpack.c.b16 %v9394, %v9393
    %v9413 = vpack.c.b16 %v9396, %v9395
    %v9414 = vpack.c.b16 %v9398, %v9397
    %9431 = vmatprep.subr.bf16.mxu0 0
    %9432 = vmatpush1.bf16.msra.mxu0 %v9406
    %9433 = vmatprep.subr.bf16.mxu0 0
    %9434 = vmatpush1.bf16.msra.mxu0 %v9405
    %9435 = vmatprep.subr.bf16.mxu0 0
    %9436 = vmatpush1.bf16.msra.mxu0 %v9404
    %9437 = vmatprep.subr.bf16.mxu0 0
    %9438 = vmatpush1.bf16.msra.mxu0 %v9403
    %9439 = vmatprep.subr.bf16.mxu0 0
    %9440 = vmatpush1.bf16.msra.mxu0 %v9402
    %9441 = vmatprep.subr.bf16.mxu0 0
    %9442 = vmatpush1.bf16.msra.mxu0 %v9401
    %9443 = vmatprep.subr.bf16.mxu0 0
    %9444 = vmatpush1.bf16.msra.mxu0 %v9400
    %9445 = vmatprep.subr.bf16.mxu0 0
    %9446 = vmatpush1.bf16.msra.mxu0 %v9399
    %9447 = vmatprep.subr.bf16.mxu0 0
    %9448 = vmatpush2.bf16.msra.mxu0 %v9414
    %9449 = vmatprep.subr.bf16.mxu0 0
    %9450 = vmatpush2.bf16.msra.mxu0 %v9413
    %9451 = vmatprep.subr.bf16.mxu0 0
    %9452 = vmatpush2.bf16.msra.mxu0 %v9412
    %9453 = vmatprep.subr.bf16.mxu0 0
    %9454 = vmatpush2.bf16.msra.mxu0 %v9411
    %9455 = vmatprep.subr.bf16.mxu0 0
    %9456 = vmatpush2.bf16.msra.mxu0 %v9410
    %9457 = vmatprep.subr.bf16.mxu0 0
    %9458 = vmatpush2.bf16.msra.mxu0 %v9409
    %9459 = vmatprep.subr.bf16.mxu0 0
    %9460 = vmatpush2.bf16.msra.mxu0 %v9408
    %9461 = vmatprep.subr.bf16.mxu0 0
    %9462 = vmatpush2.bf16.msra.mxu0 %v9407
    %9463 = vmatprep.mubr.bf16.mxu0 %v9328
    %9464 = vmatmul.mubr.bf16.gmra.mxu0 %v9327
    %v9465 = vpop.f32.mrf.mxu0
    %v9466 = vadd.f32 0.0, %v9465
    %v9467 = vpop.f32.mrf.mxu0
    %v9468 = vpop.f32.mrf.mxu0
    %v9469 = vadd.f32 0.0, %v9468
    %v9470 = vpop.f32.mrf.mxu0
    %9471 = vmatprep.mubr.bf16.mxu0 %v9330
    %9472 = vmatmul.mubr.bf16.gmra.mxu0 %v9329
    %v9473 = vpop.f32.mrf.mxu0
    %v9474 = vadd.f32 0.0, %v9473
    %v9475 = vpop.f32.mrf.mxu0
    %v9476 = vpop.f32.mrf.mxu0
    %v9477 = vadd.f32 0.0, %v9476
    %v9478 = vpop.f32.mrf.mxu0
    %9479 = vmatprep.mubr.bf16.mxu0 %v9332
    %9480 = vmatmul.mubr.bf16.gmra.mxu0 %v9331
    %v9481 = vpop.f32.mrf.mxu0
    %v9482 = vadd.f32 0.0, %v9481
    %v9483 = vpop.f32.mrf.mxu0
    %v9484 = vpop.f32.mrf.mxu0
    %v9485 = vadd.f32 0.0, %v9484
    %v9486 = vpop.f32.mrf.mxu0
    %9487 = vmatprep.mubr.bf16.mxu0 %v9334
    %9488 = vmatmul.mubr.bf16.gmra.mxu0 %v9333
    %v9489 = vpop.f32.mrf.mxu0
    %v9490 = vadd.f32 0.0, %v9489
    %v9491 = vpop.f32.mrf.mxu0
    %v9492 = vpop.f32.mrf.mxu0
    %v9493 = vadd.f32 0.0, %v9492
    %v9494 = vpop.f32.mrf.mxu0
    %9495 = vdwg.mxu0
    %9496 = vadd.xlane.f32.xlu0 %v9466
    %v9497 = vpop.xlane.xlu0 %9496
    %9498 = vadd.xlane.f32.xlu0 %v9469
    %v9499 = vpop.xlane.xlu0 %9498
    %9500 = vadd.xlane.f32.xlu0 %v9474
    %v9501 = vpop.xlane.xlu0 %9500
    %9502 = vadd.xlane.f32.xlu0 %v9477
    %v9503 = vpop.xlane.xlu0 %9502
    %9504 = vadd.xlane.f32.xlu0 %v9482
    %v9505 = vpop.xlane.xlu0 %9504
    %9506 = vadd.xlane.f32.xlu0 %v9485
    %v9507 = vpop.xlane.xlu0 %9506
    %9508 = vadd.xlane.f32.xlu0 %v9490
    %v9509 = vpop.xlane.xlu0 %9508
    %9510 = vadd.xlane.f32.xlu0 %v9493
    %v9511 = vpop.xlane.xlu0 %9510
    %v9512 = vmul.f32 %v9497, %v1797
    %v9513 = vmul.f32 %v9499, %v1797
    %v9514 = vmul.f32 %v9501, %v1797
    %v9515 = vmul.f32 %v9503, %v1797
    %v9516 = vmul.f32 %v9505, %v1797
    %v9517 = vmul.f32 %v9507, %v1797
    %v9518 = vmul.f32 %v9509, %v1797
    %v9519 = vmul.f32 %v9511, %v1797
    %v9520 = vsub.f32 %v9466, %v9512
    %v9521 = vsub.f32 %v9469, %v9513
    %v9522 = vsub.f32 %v9474, %v9514
    %v9523 = vsub.f32 %v9477, %v9515
    %v9524 = vsub.f32 %v9482, %v9516
    %v9525 = vsub.f32 %v9485, %v9517
    %v9526 = vsub.f32 %v9490, %v9518
    %v9527 = vsub.f32 %v9493, %v9519
    %v9528 = vmul.f32 %v9520, %v9520
    %v9529 = vmul.f32 %v9521, %v9521
    %v9530 = vmul.f32 %v9522, %v9522
    %v9531 = vmul.f32 %v9523, %v9523
    %v9532 = vmul.f32 %v9524, %v9524
    %v9533 = vmul.f32 %v9525, %v9525
    %v9534 = vmul.f32 %v9526, %v9526
    %v9535 = vmul.f32 %v9527, %v9527
    %9536 = vadd.xlane.f32.xlu0 %v9528
    %v9537 = vpop.xlane.xlu0 %9536
    %9538 = vadd.xlane.f32.xlu0 %v9529
    %v9539 = vpop.xlane.xlu0 %9538
    %9540 = vadd.xlane.f32.xlu0 %v9530
    %v9541 = vpop.xlane.xlu0 %9540
    %9542 = vadd.xlane.f32.xlu0 %v9531
    %v9543 = vpop.xlane.xlu0 %9542
    %9544 = vadd.xlane.f32.xlu0 %v9532
    %v9545 = vpop.xlane.xlu0 %9544
    %9546 = vadd.xlane.f32.xlu0 %v9533
    %v9547 = vpop.xlane.xlu0 %9546
    %9548 = vadd.xlane.f32.xlu0 %v9534
    %v9549 = vpop.xlane.xlu0 %9548
    %9550 = vadd.xlane.f32.xlu0 %v9535
    %v9551 = vpop.xlane.xlu0 %9550
    %v9552 = vmul.f32 %v9537, %v1797
    %v9553 = vmul.f32 %v9539, %v1797
    %v9554 = vmul.f32 %v9541, %v1797
    %v9555 = vmul.f32 %v9543, %v1797
    %v9556 = vmul.f32 %v9545, %v1797
    %v9557 = vmul.f32 %v9547, %v1797
    %v9558 = vmul.f32 %v9549, %v1797
    %v9559 = vmul.f32 %v9551, %v1797
    %v9560 = vadd.f32 %v9552, 1e-05
    %v9561 = vadd.f32 %v9553, 1e-05
    %v9562 = vadd.f32 %v9554, 1e-05
    %v9563 = vadd.f32 %v9555, 1e-05
    %v9564 = vadd.f32 %v9556, 1e-05
    %v9565 = vadd.f32 %v9557, 1e-05
    %v9566 = vadd.f32 %v9558, 1e-05
    %v9567 = vadd.f32 %v9559, 1e-05
    %v9568 = vrsqrt.pop %v9560
    %v9569 = vrsqrt.pop %v9561
    %v9570 = vrsqrt.pop %v9562
    %v9571 = vrsqrt.pop %v9563
    %v9572 = vrsqrt.pop %v9564
    %v9573 = vrsqrt.pop %v9565
    %v9574 = vrsqrt.pop %v9566
    %v9575 = vrsqrt.pop %v9567
    %v9576 = vmul.f32 %v9520, %v9568
    %v9577 = vmul.f32 %v9521, %v9569
    %v9578 = vmul.f32 %v9522, %v9570
    %v9579 = vmul.f32 %v9523, %v9571
    %v9580 = vmul.f32 %v9524, %v9572
    %v9581 = vmul.f32 %v9525, %v9573
    %v9582 = vmul.f32 %v9526, %v9574
    %v9583 = vmul.f32 %v9527, %v9575
    %v9584 = vlaneseq
    %v9585 = vshrl.u32 %v9584, 7
    %v9586 = vsub.s32 2, %v9585
    %v9587 = vrot.slane %v7365, %v9586
    %v9588 = vmul.f32 %v9576, %v9587
    %v9589 = vmul.f32 %v9577, %v9587
    %v9590 = vmul.f32 %v9578, %v9587
    %v9591 = vmul.f32 %v9579, %v9587
    %v9592 = vmul.f32 %v9580, %v9587
    %v9593 = vmul.f32 %v9581, %v9587
    %v9594 = vmul.f32 %v9582, %v9587
    %v9595 = vmul.f32 %v9583, %v9587
    %v9596 = vlaneseq
    %v9597 = vshrl.u32 %v9596, 7
    %v9598 = vsub.s32 3, %v9597
    %v9599 = vrot.slane %v7365, %v9598
    %v9600 = vadd.f32 %v9588, %v9599
    %v9601 = vadd.f32 %v9589, %v9599
    %v9602 = vadd.f32 %v9590, %v9599
    %v9603 = vadd.f32 %v9591, %v9599
    %v9604 = vadd.f32 %v9592, %v9599
    %v9605 = vadd.f32 %v9593, %v9599
    %v9606 = vadd.f32 %v9594, %v9599
    %v9607 = vadd.f32 %v9595, %v9599
    %v9608 = vadd.f32 %v7239, %v9600
    %v9609 = vadd.f32 %v7240, %v9601
    %v9610 = vadd.f32 %v7241, %v9602
    %v9611 = vadd.f32 %v7242, %v9603
    %v9612 = vadd.f32 %v7243, %v9604
    %v9613 = vadd.f32 %v7244, %v9605
    %v9614 = vadd.f32 %v7245, %v9606
    %v9615 = vadd.f32 %v7246, %v9607
    %9616 = vst [vmem:[%s8] sm:$0xff] %v9608
    %9617 = vst [vmem:[%s8 + $0x8] sm:$0xff] %v9609
    %9618 = vst [vmem:[%s8 + $0x10] sm:$0xff] %v9610
    %9619 = vst [vmem:[%s8 + $0x18] sm:$0xff] %v9611
    %9620 = vst [vmem:[%s8 + $0x20] sm:$0xff] %v9612
    %9621 = vst [vmem:[%s8 + $0x28] sm:$0xff] %v9613
    %9622 = vst [vmem:[%s8 + $0x30] sm:$0xff] %v9614
    %9623 = vst [vmem:[%s8 + $0x38] sm:$0xff] %v9615
    // Predicated region
    $region58: #{local_feature_transformer.1} parent=1 // pred_check
      _
    $region59: #{local_feature_transformer.1} parent=1 // pred_check_branch
      %9625 = sbr.rel (0) target = $region61
    $region60: #{local_feature_transformer.1} parent=1 // pred_region
      _
    $region61: #{local_feature_transformer.1} parent=1 // pred_fallthru
      _
    // Predicated region
    $region62: #{local_feature_transformer.1} parent=1 // pred_check
      _
    $region63: #{local_feature_transformer.1} parent=1 // pred_check_branch
      %9627 = sbr.rel (0) target = $region65
    $region64: #{local_feature_transformer.1} parent=1 // pred_region
      _
    $region65: #{local_feature_transformer.1} parent=1 // pred_fallthru
      _
    %9628 = vsyncpa [#allocation3], 1
    %9629 = vsyncpa [#allocation5], 1
    %9630 = vsyncpa [#allocation8], 1
    %9631 = vsyncpa [#allocation11], 1

</llo_original>
